<compile_context>
chip_gen: v6e
topology: v6e:2x2x1
jax: 0.10.0
libtpu: 0.0.40
codegen_flags: <defaults>
</compile_context>

<pallas_src>
import math
from functools import partial

import jax
import jax.numpy as jnp
from jax.experimental import pallas as pl
from jax.experimental.pallas import tpu as pltpu

EPS = 1e-5


def _round_up(x, m):
    return ((x + m - 1) // m) * m


def _choose_m_tiling(M):
    """M tile: multiple of 8, ~<=512 rows, >=2 blocks for moderate M."""
    Mp = _round_up(M, 8)
    nb = max(1, -(-Mp // 512))
    if nb == 1 and Mp > 256:
        nb = 2                      # expose >=2 parallel blocks (v7x megacore)
    tm = _round_up(-(-Mp // nb), 8)
    return tm, tm * nb


# ----------------------------------------------------------------------------
# 1x1x1 conv == matmul with fused bias (+ residual) (+ ReLU) epilogue.
# K is a single full-extent block, so there is no VMEM accumulator: the MXU
# result stays in vregs through the epilogue and is written exactly once.
# ----------------------------------------------------------------------------
def _mm_bias_kernel(a_ref, b_ref, c_ref, *rest, relu, has_res):
    if has_res:
        r_ref, o_ref = rest
    else:
        (o_ref,) = rest
    y = jnp.dot(a_ref[...], b_ref[...], preferred_element_type=jnp.float32)
    y = y + c_ref[...]
    if has_res:
        y = y + r_ref[...].astype(jnp.float32)
    if relu:
        y = jnp.maximum(y, 0.0)
    o_ref[...] = y.astype(o_ref.dtype)


def matmul_bias_act(a, b, bias, *, relu, residual=None, out_dtype=jnp.float32):
    """(M, K) @ (K, N) + bias [+ residual] [+ ReLU].

    a: (M, K) activation (cast to bf16 here), b: (K, N) weight with the BN
    scale already folded in, bias: (N,) f32, residual: optional (M, N).
    """
    M, K = a.shape
    K2, N = b.shape
    assert K == K2
    tm, Mp = _choose_m_tiling(M)

    a = a.astype(jnp.bfloat16)
    if Mp != M:
        a = jnp.pad(a, ((0, Mp - M), (0, 0)))
    b = b.astype(jnp.bfloat16)
    bias2d = bias.reshape(1, N).astype(jnp.float32)

    has_res = residual is not None
    in_specs = [
        pl.BlockSpec((tm, K), lambda i: (i, 0)),      # stream A (full K, no pad)
        pl.BlockSpec((K, N), lambda i: (0, 0)),       # weights stay resident
        pl.BlockSpec((1, N), lambda i: (0, 0)),       # bias resident
    ]
    inputs = [a, b, bias2d]
    if has_res:
        r = residual.astype(jnp.bfloat16)             # bf16 residual stream
        if Mp != M:
            r = jnp.pad(r, ((0, Mp - M), (0, 0)))
        in_specs.append(pl.BlockSpec((tm, N), lambda i: (i, 0)))
        inputs.append(r)

    out = pl.pallas_call(
        partial(_mm_bias_kernel, relu=relu, has_res=has_res),
        out_shape=jax.ShapeDtypeStruct((Mp, N), out_dtype),
        grid_spec=pltpu.PrefetchScalarGridSpec(
            num_scalar_prefetch=0,
            grid=(Mp // tm,),
            in_specs=in_specs,
            out_specs=pl.BlockSpec((tm, N), lambda i: (i, 0)),
        ),
        compiler_params=pltpu.CompilerParams(
            dimension_semantics=("parallel",)),
    )(*inputs)
    if Mp != M:
        out = out[:M]
    return out


# ----------------------------------------------------------------------------
# conv2: 3x3x3, stride s, pad 1, fused BN bias + ReLU.  Grid = (N, out_depth);
# each step gets the 3 halo depth-planes it needs and accumulates the 27 taps
# in-kernel (no im2col materialization in HBM).
# ----------------------------------------------------------------------------
def _conv2_kernel(x0_ref, x1_ref, x2_ref, w_ref, c_ref, o_ref, *,
                  stride, oh, ow):
    cin = x0_ref.shape[-1]
    x_refs = (x0_ref, x1_ref, x2_ref)          # depth planes d*s + {0,1,2}
    acc = jnp.zeros(o_ref.shape, jnp.float32)  # (oh*ow, cout), lives in vregs
    for dz in range(3):
        for dy in range(3):
            for dx in range(3):
                if stride == 1:
                    slab = x_refs[dz][pl.ds(dy, oh), pl.ds(dx, ow), :]
                else:
                    slab = x_refs[dz][pl.ds(dy, oh, stride),
                                      pl.ds(dx, ow, stride), :]
                a = slab.reshape(oh * ow, cin)
                acc = acc + jnp.dot(a, w_ref[dz, dy, dx],
                                    preferred_element_type=jnp.float32)
    y = jnp.maximum(acc + c_ref[...], 0.0)
    o_ref[...] = y.astype(o_ref.dtype)


def conv3x3x3_bn_relu(x, w_scaled, bias, stride):
    """x: (N,D,H,W,Cin) NDHWC; w_scaled: (3,3,3,Cin,Cout) with BN scale folded.

    Returns (N, od, oh*ow, Cout) bf16 (flat spatial rows, ready for conv3).
    """
    N, D, H, W, cin = x.shape
    cout = w_scaled.shape[-1]
    od = (D - 1) // stride + 1
    oh = (H - 1) // stride + 1
    ow = (W - 1) // stride + 1

    xp = jnp.pad(x.astype(jnp.bfloat16),
                 ((0, 0), (1, 1), (1, 1), (1, 1), (0, 0)))
    Dp, Hp, Wp = D + 2, H + 2, W + 2
    wb = w_scaled.astype(jnp.bfloat16)
    bias2d = bias.reshape(1, cout).astype(jnp.float32)

    def x_spec(dz):
        return pl.BlockSpec(
            (None, None, Hp, Wp, cin),
            lambda n, d, dz=dz: (n, d * stride + dz, 0, 0, 0))

    out = pl.pallas_call(
        partial(_conv2_kernel, stride=stride, oh=oh, ow=ow),
        out_shape=jax.ShapeDtypeStruct((N, od, oh * ow, cout), jnp.bfloat16),
        grid_spec=pltpu.PrefetchScalarGridSpec(
            num_scalar_prefetch=0,
            grid=(N, od),
            in_specs=[x_spec(0), x_spec(1), x_spec(2),
                      pl.BlockSpec((3, 3, 3, cin, cout),
                                   lambda n, d: (0, 0, 0, 0, 0)),
                      pl.BlockSpec((1, cout), lambda n, d: (0, 0))],
            out_specs=pl.BlockSpec((None, None, oh * ow, cout),
                                   lambda n, d: (n, d, 0, 0)),
        ),
        compiler_params=pltpu.CompilerParams(
            dimension_semantics=("parallel", "parallel")),
    )(xp, xp, xp, wb, bias2d)
    return out, (N, od, oh, ow)


# ----------------------------------------------------------------------------
# Parameters (Bottleneck __init__ shapes; BatchNorm eval-mode, fresh init)
# ----------------------------------------------------------------------------
def _bn_affine(channels):
    # gamma=1, beta=0, running_mean=0, running_var=1, eps=1e-5
    scale = jnp.full((channels,), 1.0 / math.sqrt(1.0 + EPS), jnp.float32)
    bias = jnp.zeros((channels,), jnp.float32)
    return scale, bias


def init_bottleneck_params(key, inplanes, planes, stride, with_downsample):
    expansion = 4
    k1, k2, k3, k4 = jax.random.split(key, 4)

    def conv1x1_w(k, cin, cout):
        std = math.sqrt(2.0 / cout)
        return jax.random.normal(k, (cin, cout), jnp.float32) * std

    def conv3x3_w(k, cin, cout):
        std = math.sqrt(2.0 / (27 * cout))
        return jax.random.normal(k, (3, 3, 3, cin, cout), jnp.float32) * std

    params = {
        "w1": conv1x1_w(k1, inplanes, planes), "bn1": _bn_affine(planes),
        "w2": conv3x3_w(k2, planes, planes), "bn2": _bn_affine(planes),
        "w3": conv1x1_w(k3, planes, planes * expansion),
        "bn3": _bn_affine(planes * expansion),
    }
    if with_downsample:
        params["downsample"] = (conv1x1_w(k4, inplanes, planes * expansion),
                                _bn_affine(planes * expansion))
    else:
        params["downsample"] = None
    return params


# ----------------------------------------------------------------------------
# Bottleneck forward (Pallas) and pure-XLA reference
# ----------------------------------------------------------------------------
@partial(jax.jit, static_argnames=("stride",))
def bottleneck_forward(params, x_ncdhw, *, stride):
    x = jnp.transpose(x_ncdhw.astype(jnp.float32), (0, 2, 3, 4, 1))  # NDHWC
    N, D, H, W, cin = x.shape
    x_bf = x.astype(jnp.bfloat16)
    M = N * D * H * W

    # Fold BN scale into the conv weights (one-time, parameter-sized XLA op).
    s1, b1 = params["bn1"]
    s2, b2 = params["bn2"]
    s3, b3 = params["bn3"]
    w1 = params["w1"] * s1[None, :]
    w2 = params["w2"] * s2[None, None, None, None, :]
    w3 = params["w3"] * s3[None, :]
    planes = w1.shape[1]
    cout = w3.shape[1]

    # conv1 (1x1x1) + bn1 + relu  — direct (M, Cin) matmul, no im2col
    out = matmul_bias_act(x_bf.reshape(M, cin), w1, b1,
                          relu=True, out_dtype=jnp.bfloat16)
    out = out.reshape(N, D, H, W, planes)

    # conv2 (3x3x3, stride, pad=1) + bn2 + relu — 27 taps accumulated in-kernel
    out, (N2, od, oh, ow) = conv3x3x3_bn_relu(out, w2, b2, stride)
    M2 = N2 * od * oh * ow

    # residual branch (bf16 stream, fused into conv3's epilogue)
    if params["downsample"] is not None:
        wd, (sd, bd) = params["downsample"]
        xr = x_bf[:, ::stride, ::stride, ::stride, :]
        residual = matmul_bias_act(xr.reshape(M2, cin), wd * sd[None, :], bd,
                                   relu=False, out_dtype=jnp.bfloat16)
    else:
        assert stride == 1 and cin == cout, \
            "identity shortcut requires stride==1 and inplanes == planes*4"
        residual = x_bf.reshape(M2, cin)

    # conv3 (1x1x1) + bn3 + fused residual add + relu
    y = matmul_bias_act(out.reshape(M2, planes), w3, b3,
                        relu=True, residual=residual, out_dtype=jnp.float32)
    y = y.reshape(N2, od, oh, ow, cout)
    return jnp.transpose(y, (0, 4, 1, 2, 3))   # back to NCDHW


@partial(jax.jit, static_argnames=("stride",))
def reference_forward(params, x_ncdhw, *, stride):
    """Pure-XLA f32 reference of the same Bottleneck forward (for checking)."""
    x = x_ncdhw.astype(jnp.float32)

    def bn(y, sb):
        s, b = sb
        return y * s.reshape(1, -1, 1, 1, 1) + b.reshape(1, -1, 1, 1, 1)

    def conv1x1(y, w, s):
        w_oidhw = w.T.reshape(w.shape[1], w.shape[0], 1, 1, 1)
        return jax.lax.conv_general_dilated(
            y, w_oidhw, window_strides=(s, s, s), padding=[(0, 0)] * 3,
            dimension_numbers=("NCDHW", "OIDHW", "NCDHW"))

    def conv3x3(y, w, s):
        w_oidhw = jnp.transpose(w, (4, 3, 0, 1, 2))
        return jax.lax.conv_general_dilated(
            y, w_oidhw, window_strides=(s, s, s), padding=[(1, 1)] * 3,
            dimension_numbers=("NCDHW", "OIDHW", "NCDHW"))

    out = jax.nn.relu(bn(conv1x1(x, params["w1"], 1), params["bn1"]))
    out = jax.nn.relu(bn(conv3x3(out, params["w2"], stride), params["bn2"]))
    out = bn(conv1x1(out, params["w3"], 1), params["bn3"])
    if params["downsample"] is not None:
        wd, bnd = params["downsample"]
        residual = bn(conv1x1(x, wd, stride), bnd)
    else:
        residual = x
    return jax.nn.relu(out + residual)


# ----------------------------------------------------------------------------
if __name__ == "__main__":
    key = jax.random.PRNGKey(0)
    kp1, kp2, kx1, kx2 = jax.random.split(key, 4)

    # Config A: identity shortcut (inplanes == planes*4, stride=1)
    pA = init_bottleneck_params(kp1, inplanes=64, planes=16, stride=1,
                                with_downsample=False)
    xA = jax.random.normal(kx1, (2, 64, 4, 8, 8), jnp.float32)
    yA = jax.block_until_ready(bottleneck_forward(pA, xA, stride=1))
    rA = jax.block_until_ready(reference_forward(pA, xA, stride=1))
    assert yA.shape == (2, 64, 4, 8, 8), yA.shape
    assert bool(jnp.all(jnp.isfinite(yA)))
    errA = float(jnp.max(jnp.abs(yA - rA)))
    tolA = 5e-2 * float(jnp.max(jnp.abs(rA))) + 5e-2
    assert errA <= tolA, (errA, tolA)

    # Config B: projection shortcut (stride=2, 1x1x1 downsample conv + BN)
    pB = init_bottleneck_params(kp2, inplanes=32, planes=16, stride=2,
                                with_downsample=True)
    xB = jax.random.normal(kx2, (2, 32, 4, 8, 8), jnp.float32)
    yB = jax.block_until_ready(bottleneck_forward(pB, xB, stride=2))
    rB = jax.block_until_ready(reference_forward(pB, xB, stride=2))
    assert yB.shape == (2, 64, 2, 4, 4), yB.shape
    assert bool(jnp.all(jnp.isfinite(yB)))
    errB = float(jnp.max(jnp.abs(yB - rB)))
    tolB = 5e-2 * float(jnp.max(jnp.abs(rB))) + 5e-2
    assert errB <= tolB, (errB, tolB)

    print("KERNEL_OK")
</pallas_src>

<mosaic_0001>
module attributes {stable_mosaic.version = 11 : i64} {
  func.func @_mm_bias_kernel(%arg0: i32, %arg1: memref<256x64xbf16, #tpu.memory_space<vmem>>, %arg2: memref<64x16xbf16, #tpu.memory_space<vmem>>, %arg3: memref<1x16xf32, #tpu.memory_space<vmem>>, %arg4: memref<256x16xbf16, #tpu.memory_space<vmem>>) attributes {dimension_semantics = [#tpu.dimension_semantics<parallel>], iteration_bounds = array<i64: 2>, scalar_prefetch = 0 : i64, scratch_operands = 0 : i64, tpu.core_type = #tpu.core_type<tc>, window_params = [{transform_indices = @transform_0, window_bounds = array<i64: 256, 64>}, {pipeline_mode = #tpu.pipeline_mode<synchronous>, transform_indices = @transform_1, window_bounds = array<i64: 64, 16>}, {pipeline_mode = #tpu.pipeline_mode<synchronous>, transform_indices = @transform_2, window_bounds = array<i64: 1, 16>}, {transform_indices = @transform_3, window_bounds = array<i64: 256, 16>}]} {
    %c0 = arith.constant 0 : index
    %c0_0 = arith.constant 0 : index
    %0 = vector.load %arg1[%c0, %c0_0] : memref<256x64xbf16, #tpu.memory_space<vmem>>, vector<256x64xbf16>
    %c0_1 = arith.constant 0 : index
    %c0_2 = arith.constant 0 : index
    %1 = vector.load %arg2[%c0_1, %c0_2] : memref<64x16xbf16, #tpu.memory_space<vmem>>, vector<64x16xbf16>
    %cst = arith.constant dense<0.000000e+00> : vector<256x16xf32>
    %2 = tpu.matmul %0, %1, %cst {dimension_numbers = #tpu.dot_dimension_numbers<[1], [0], [0], [1], [0, 0, 1, 1], [], []>} : vector<256x64xbf16>, vector<64x16xbf16>, vector<256x16xf32> -> vector<256x16xf32>
    %c0_3 = arith.constant 0 : index
    %c0_4 = arith.constant 0 : index
    %3 = vector.load %arg3[%c0_3, %c0_4] : memref<1x16xf32, #tpu.memory_space<vmem>>, vector<1x16xf32>
    %4 = vector.broadcast %3 : vector<1x16xf32> to vector<256x16xf32>
    %5 = arith.addf %2, %4 : vector<256x16xf32>
    %cst_5 = arith.constant 0.000000e+00 : f32
    %6 = vector.broadcast %cst_5 : f32 to vector<256x16xf32>
    %7 = arith.maximumf %5, %6 : vector<256x16xf32>
    %8 = arith.truncf %7 : vector<256x16xf32> to vector<256x16xbf16>
    %c0_6 = arith.constant 0 : index
    %c0_7 = arith.constant 0 : index
    %9 = vector.load %arg4[%c0_6, %c0_7] : memref<256x16xbf16, #tpu.memory_space<vmem>>, vector<256x16xbf16>
    tpu.vector_store %arg4[%c0_6, %c0_7], %8 {strides = array<i32>} : memref<256x16xbf16, #tpu.memory_space<vmem>>, vector<256x16xbf16>,
    return
  }
  func.func @transform_0(%arg0: i32) -> (i32, i32) {
    %c0_i32 = arith.constant 0 : i32
    %c0_i32_0 = arith.constant 0 : i32
    return %arg0, %c0_i32 : i32, i32
  }
  func.func @transform_1(%arg0: i32) -> (i32, i32) {
    %c0_i32 = arith.constant 0 : i32
    %c0_i32_0 = arith.constant 0 : i32
    %c0_i32_1 = arith.constant 0 : i32
    return %c0_i32, %c0_i32_0 : i32, i32
  }
  func.func @transform_2(%arg0: i32) -> (i32, i32) {
    %c0_i32 = arith.constant 0 : i32
    %c0_i32_0 = arith.constant 0 : i32
    %c0_i32_1 = arith.constant 0 : i32
    return %c0_i32, %c0_i32_0 : i32, i32
  }
  func.func @transform_3(%arg0: i32) -> (i32, i32) {
    %c0_i32 = arith.constant 0 : i32
    %c0_i32_0 = arith.constant 0 : i32
    return %arg0, %c0_i32 : i32, i32
  }
}

module attributes {stable_mosaic.version = 11 : i64} {
  func.func @_conv2_kernel(%arg0: i32, %arg1: i32, %arg2: memref<1x1x10x10x16xbf16, #tpu.memory_space<vmem>>, %arg3: memref<1x1x10x10x16xbf16, #tpu.memory_space<vmem>>, %arg4: memref<1x1x10x10x16xbf16, #tpu.memory_space<vmem>>, %arg5: memref<3x3x3x16x16xbf16, #tpu.memory_space<vmem>>, %arg6: memref<1x16xf32, #tpu.memory_space<vmem>>, %arg7: memref<1x1x64x16xbf16, #tpu.memory_space<vmem>>) attributes {dimension_semantics = [#tpu.dimension_semantics<parallel>, #tpu.dimension_semantics<parallel>], iteration_bounds = array<i64: 2, 4>, scalar_prefetch = 0 : i64, scratch_operands = 0 : i64, tpu.core_type = #tpu.core_type<tc>, window_params = [{transform_indices = @transform_0, window_bounds = array<i64: 1, 1, 10, 10, 16>}, {transform_indices = @transform_1, window_bounds = array<i64: 1, 1, 10, 10, 16>}, {transform_indices = @transform_2, window_bounds = array<i64: 1, 1, 10, 10, 16>}, {pipeline_mode = #tpu.pipeline_mode<synchronous>, transform_indices = @transform_3, window_bounds = array<i64: 3, 3, 3, 16, 16>}, {pipeline_mode = #tpu.pipeline_mode<synchronous>, transform_indices = @transform_4, window_bounds = array<i64: 1, 16>}, {transform_indices = @transform_5, window_bounds = array<i64: 1, 1, 64, 16>}]} {
    %cst = arith.constant 0.000000e+00 : f32
    %0 = vector.broadcast %cst : f32 to vector<64x16xf32>
    %c0 = arith.constant 0 : index
    %c0_0 = arith.constant 0 : index
    %c0_1 = arith.constant 0 : index
    %c0_2 = arith.constant 0 : index
    %c0_3 = arith.constant 0 : index
    %1 = vector.load %arg2[%c0, %c0_0, %c0_1, %c0_2, %c0_3] : memref<1x1x10x10x16xbf16, #tpu.memory_space<vmem>>, vector<1x1x8x8x16xbf16>
    %2 = vector.shape_cast %1 : vector<1x1x8x8x16xbf16> to vector<8x8x16xbf16>
    %3 = vector.shape_cast %2 : vector<8x8x16xbf16> to vector<64x16xbf16>
    %c0_4 = arith.constant 0 : index
    %c0_5 = arith.constant 0 : index
    %c0_6 = arith.constant 0 : index
    %c0_7 = arith.constant 0 : index
    %c0_8 = arith.constant 0 : index
    %4 = vector.load %arg5[%c0_4, %c0_5, %c0_6, %c0_7, %c0_8] : memref<3x3x3x16x16xbf16, #tpu.memory_space<vmem>>, vector<1x1x1x16x16xbf16>
    %5 = vector.shape_cast %4 : vector<1x1x1x16x16xbf16> to vector<16x16xbf16>
    %cst_9 = arith.constant dense<0.000000e+00> : vector<64x16xf32>
    %6 = tpu.matmul %3, %5, %cst_9 {dimension_numbers = #tpu.dot_dimension_numbers<[1], [0], [0], [1], [0, 0, 1, 1], [], []>} : vector<64x16xbf16>, vector<16x16xbf16>, vector<64x16xf32> -> vector<64x16xf32>
    %7 = arith.addf %0, %6 : vector<64x16xf32>
    %c0_10 = arith.constant 0 : index
    %c0_11 = arith.constant 0 : index
    %c0_12 = arith.constant 0 : index
    %c1 = arith.constant 1 : index
    %c0_13 = arith.constant 0 : index
    %8 = vector.load %arg2[%c0_10, %c0_11, %c0_12, %c1, %c0_13] : memref<1x1x10x10x16xbf16, #tpu.memory_space<vmem>>, vector<1x1x8x8x16xbf16>
    %9 = vector.shape_cast %8 : vector<1x1x8x8x16xbf16> to vector<8x8x16xbf16>
    %10 = vector.shape_cast %9 : vector<8x8x16xbf16> to vector<64x16xbf16>
    %c0_14 = arith.constant 0 : index
    %c0_15 = arith.constant 0 : index
    %c1_16 = arith.constant 1 : index
    %c0_17 = arith.constant 0 : index
    %c0_18 = arith.constant 0 : index
    %11 = vector.load %arg5[%c0_14, %c0_15, %c1_16, %c0_17, %c0_18] : memref<3x3x3x16x16xbf16, #tpu.memory_space<vmem>>, vector<1x1x1x16x16xbf16>
    %12 = vector.shape_cast %11 : vector<1x1x1x16x16xbf16> to vector<16x16xbf16>
    %cst_19 = arith.constant dense<0.000000e+00> : vector<64x16xf32>
    %13 = tpu.matmul %10, %12, %cst_19 {dimension_numbers = #tpu.dot_dimension_numbers<[1], [0], [0], [1], [0, 0, 1, 1], [], []>} : vector<64x16xbf16>, vector<16x16xbf16>, vector<64x16xf32> -> vector<64x16xf32>
    %14 = arith.addf %7, %13 : vector<64x16xf32>
    %c0_20 = arith.constant 0 : index
    %c0_21 = arith.constant 0 : index
    %c0_22 = arith.constant 0 : index
    %c2 = arith.constant 2 : index
    %c0_23 = arith.constant 0 : index
    %15 = vector.load %arg2[%c0_20, %c0_21, %c0_22, %c2, %c0_23] : memref<1x1x10x10x16xbf16, #tpu.memory_space<vmem>>, vector<1x1x8x8x16xbf16>
    %16 = vector.shape_cast %15 : vector<1x1x8x8x16xbf16> to vector<8x8x16xbf16>
    %17 = vector.shape_cast %16 : vector<8x8x16xbf16> to vector<64x16xbf16>
    %c0_24 = arith.constant 0 : index
    %c0_25 = arith.constant 0 : index
    %c2_26 = arith.constant 2 : index
    %c0_27 = arith.constant 0 : index
    %c0_28 = arith.constant 0 : index
    %18 = vector.load %arg5[%c0_24, %c0_25, %c2_26, %c0_27, %c0_28] : memref<3x3x3x16x16xbf16, #tpu.memory_space<vmem>>, vector<1x1x1x16x16xbf16>
    %19 = vector.shape_cast %18 : vector<1x1x1x16x16xbf16> to vector<16x16xbf16>
    %cst_29 = arith.constant dense<0.000000e+00> : vector<64x16xf32>
    %20 = tpu.matmul %17, %19, %cst_29 {dimension_numbers = #tpu.dot_dimension_numbers<[1], [0], [0], [1], [0, 0, 1, 1], [], []>} : vector<64x16xbf16>, vector<16x16xbf16>, vector<64x16xf32> -> vector<64x16xf32>
    %21 = arith.addf %14, %20 : vector<64x16xf32>
    %c0_30 = arith.constant 0 : index
    %c0_31 = arith.constant 0 : index
    %c1_32 = arith.constant 1 : index
    %c0_33 = arith.constant 0 : index
    %c0_34 = arith.constant 0 : index
    %22 = vector.load %arg2[%c0_30, %c0_31, %c1_32, %c0_33, %c0_34] : memref<1x1x10x10x16xbf16, #tpu.memory_space<vmem>>, vector<1x1x8x8x16xbf16>
    %23 = vector.shape_cast %22 : vector<1x1x8x8x16xbf16> to vector<8x8x16xbf16>
    %24 = vector.shape_cast %23 : vector<8x8x16xbf16> to vector<64x16xbf16>
    %c0_35 = arith.constant 0 : index
    %c1_36 = arith.constant 1 : index
    %c0_37 = arith.constant 0 : index
    %c0_38 = arith.constant 0 : index
    %c0_39 = arith.constant 0 : index
    %25 = vector.load %arg5[%c0_35, %c1_36, %c0_37, %c0_38, %c0_39] : memref<3x3x3x16x16xbf16, #tpu.memory_space<vmem>>, vector<1x1x1x16x16xbf16>
    %26 = vector.shape_cast %25 : vector<1x1x1x16x16xbf16> to vector<16x16xbf16>
    %cst_40 = arith.constant dense<0.000000e+00> : vector<64x16xf32>
    %27 = tpu.matmul %24, %26, %cst_40 {dimension_numbers = #tpu.dot_dimension_numbers<[1], [0], [0], [1], [0, 0, 1, 1], [], []>} : vector<64x16xbf16>, vector<16x16xbf16>, vector<64x16xf32> -> vector<64x16xf32>
    %28 = arith.addf %21, %27 : vector<64x16xf32>
    %c0_41 = arith.constant 0 : index
    %c0_42 = arith.constant 0 : index
    %c1_43 = arith.constant 1 : index
    %c1_44 = arith.constant 1 : index
    %c0_45 = arith.constant 0 : index
    %29 = vector.load %arg2[%c0_41, %c0_42, %c1_43, %c1_44, %c0_45] : memref<1x1x10x10x16xbf16, #tpu.memory_space<vmem>>, vector<1x1x8x8x16xbf16>
    %30 = vector.shape_cast %29 : vector<1x1x8x8x16xbf16> to vector<8x8x16xbf16>
    %31 = vector.shape_cast %30 : vector<8x8x16xbf16> to vector<64x16xbf16>
    %c0_46 = arith.constant 0 : index
    %c1_47 = arith.constant 1 : index
    %c1_48 = arith.constant 1 : index
    %c0_49 = arith.constant 0 : index
    %c0_50 = arith.constant 0 : index
    %32 = vector.load %arg5[%c0_46, %c1_47, %c1_48, %c0_49, %c0_50] : memref<3x3x3x16x16xbf16, #tpu.memory_space<vmem>>, vector<1x1x1x16x16xbf16>
    %33 = vector.shape_cast %32 : vector<1x1x1x16x16xbf16> to vector<16x16xbf16>
    %cst_51 = arith.constant dense<0.000000e+00> : vector<64x16xf32>
    %34 = tpu.matmul %31, %33, %cst_51 {dimension_numbers = #tpu.dot_dimension_numbers<[1], [0], [0], [1], [0, 0, 1, 1], [], []>} : vector<64x16xbf16>, vector<16x16xbf16>, vector<64x16xf32> -> vector<64x16xf32>
    %35 = arith.addf %28, %34 : vector<64x16xf32>
    %c0_52 = arith.constant 0 : index
    %c0_53 = arith.constant 0 : index
    %c1_54 = arith.constant 1 : index
    %c2_55 = arith.constant 2 : index
    %c0_56 = arith.constant 0 : index
    %36 = vector.load %arg2[%c0_52, %c0_53, %c1_54, %c2_55, %c0_56] : memref<1x1x10x10x16xbf16, #tpu.memory_space<vmem>>, vector<1x1x8x8x16xbf16>
    %37 = vector.shape_cast %36 : vector<1x1x8x8x16xbf16> to vector<8x8x16xbf16>
    %38 = vector.shape_cast %37 : vector<8x8x16xbf16> to vector<64x16xbf16>
    %c0_57 = arith.constant 0 : index
    %c1_58 = arith.constant 1 : index
    %c2_59 = arith.constant 2 : index
    %c0_60 = arith.constant 0 : index
    %c0_61 = arith.constant 0 : index
    %39 = vector.load %arg5[%c0_57, %c1_58, %c2_59, %c0_60, %c0_61] : memref<3x3x3x16x16xbf16, #tpu.memory_space<vmem>>, vector<1x1x1x16x16xbf16>
    %40 = vector.shape_cast %39 : vector<1x1x1x16x16xbf16> to vector<16x16xbf16>
    %cst_62 = arith.constant dense<0.000000e+00> : vector<64x16xf32>
    %41 = tpu.matmul %38, %40, %cst_62 {dimension_numbers = #tpu.dot_dimension_numbers<[1], [0], [0], [1], [0, 0, 1, 1], [], []>} : vector<64x16xbf16>, vector<16x16xbf16>, vector<64x16xf32> -> vector<64x16xf32>
    %42 = arith.addf %35, %41 : vector<64x16xf32>
    %c0_63 = arith.constant 0 : index
    %c0_64 = arith.constant 0 : index
    %c2_65 = arith.constant 2 : index
    %c0_66 = arith.constant 0 : index
    %c0_67 = arith.constant 0 : index
    %43 = vector.load %arg2[%c0_63, %c0_64, %c2_65, %c0_66, %c0_67] : memref<1x1x10x10x16xbf16, #tpu.memory_space<vmem>>, vector<1x1x8x8x16xbf16>
    %44 = vector.shape_cast %43 : vector<1x1x8x8x16xbf16> to vector<8x8x16xbf16>
    %45 = vector.shape_cast %44 : vector<8x8x16xbf16> to vector<64x16xbf16>
    %c0_68 = arith.constant 0 : index
    %c2_69 = arith.constant 2 : index
    %c0_70 = arith.constant 0 : index
    %c0_71 = arith.constant 0 : index
    %c0_72 = arith.constant 0 : index
    %46 = vector.load %arg5[%c0_68, %c2_69, %c0_70, %c0_71, %c0_72] : memref<3x3x3x16x16xbf16, #tpu.memory_space<vmem>>, vector<1x1x1x16x16xbf16>
    %47 = vector.shape_cast %46 : vector<1x1x1x16x16xbf16> to vector<16x16xbf16>
    %cst_73 = arith.constant dense<0.000000e+00> : vector<64x16xf32>
    %48 = tpu.matmul %45, %47, %cst_73 {dimension_numbers = #tpu.dot_dimension_numbers<[1], [0], [0], [1], [0, 0, 1, 1], [], []>} : vector<64x16xbf16>, vector<16x16xbf16>, vector<64x16xf32> -> vector<64x16xf32>
    %49 = arith.addf %42, %48 : vector<64x16xf32>
    %c0_74 = arith.constant 0 : index
    %c0_75 = arith.constant 0 : index
    %c2_76 = arith.constant 2 : index
    %c1_77 = arith.constant 1 : index
    %c0_78 = arith.constant 0 : index
    %50 = vector.load %arg2[%c0_74, %c0_75, %c2_76, %c1_77, %c0_78] : memref<1x1x10x10x16xbf16, #tpu.memory_space<vmem>>, vector<1x1x8x8x16xbf16>
    %51 = vector.shape_cast %50 : vector<1x1x8x8x16xbf16> to vector<8x8x16xbf16>
    %52 = vector.shape_cast %51 : vector<8x8x16xbf16> to vector<64x16xbf16>
    %c0_79 = arith.constant 0 : index
    %c2_80 = arith.constant 2 : index
    %c1_81 = arith.constant 1 : index
    %c0_82 = arith.constant 0 : index
    %c0_83 = arith.constant 0 : index
    %53 = vector.load %arg5[%c0_79, %c2_80, %c1_81, %c0_82, %c0_83] : memref<3x3x3x16x16xbf16, #tpu.memory_space<vmem>>, vector<1x1x1x16x16xbf16>
    %54 = vector.shape_cast %53 : vector<1x1x1x16x16xbf16> to vector<16x16xbf16>
    %cst_84 = arith.constant dense<0.000000e+00> : vector<64x16xf32>
    %55 = tpu.matmul %52, %54, %cst_84 {dimension_numbers = #tpu.dot_dimension_numbers<[1], [0], [0], [1], [0, 0, 1, 1], [], []>} : vector<64x16xbf16>, vector<16x16xbf16>, vector<64x16xf32> -> vector<64x16xf32>
    %56 = arith.addf %49, %55 : vector<64x16xf32>
    %c0_85 = arith.constant 0 : index
    %c0_86 = arith.constant 0 : index
    %c2_87 = arith.constant 2 : index
    %c2_88 = arith.constant 2 : index
    %c0_89 = arith.constant 0 : index
    %57 = vector.load %arg2[%c0_85, %c0_86, %c2_87, %c2_88, %c0_89] : memref<1x1x10x10x16xbf16, #tpu.memory_space<vmem>>, vector<1x1x8x8x16xbf16>
    %58 = vector.shape_cast %57 : vector<1x1x8x8x16xbf16> to vector<8x8x16xbf16>
    %59 = vector.shape_cast %58 : vector<8x8x16xbf16> to vector<64x16xbf16>
    %c0_90 = arith.constant 0 : index
    %c2_91 = arith.constant 2 : index
    %c2_92 = arith.constant 2 : index
    %c0_93 = arith.constant 0 : index
    %c0_94 = arith.constant 0 : index
    %60 = vector.load %arg5[%c0_90, %c2_91, %c2_92, %c0_93, %c0_94] : memref<3x3x3x16x16xbf16, #tpu.memory_space<vmem>>, vector<1x1x1x16x16xbf16>
    %61 = vector.shape_cast %60 : vector<1x1x1x16x16xbf16> to vector<16x16xbf16>
    %cst_95 = arith.constant dense<0.000000e+00> : vector<64x16xf32>
    %62 = tpu.matmul %59, %61, %cst_95 {dimension_numbers = #tpu.dot_dimension_numbers<[1], [0], [0], [1], [0, 0, 1, 1], [], []>} : vector<64x16xbf16>, vector<16x16xbf16>, vector<64x16xf32> -> vector<64x16xf32>
    %63 = arith.addf %56, %62 : vector<64x16xf32>
    %c0_96 = arith.constant 0 : index
    %c0_97 = arith.constant 0 : index
    %c0_98 = arith.constant 0 : index
    %c0_99 = arith.constant 0 : index
    %c0_100 = arith.constant 0 : index
    %64 = vector.load %arg3[%c0_96, %c0_97, %c0_98, %c0_99, %c0_100] : memref<1x1x10x10x16xbf16, #tpu.memory_space<vmem>>, vector<1x1x8x8x16xbf16>
    %65 = vector.shape_cast %64 : vector<1x1x8x8x16xbf16> to vector<8x8x16xbf16>
    %66 = vector.shape_cast %65 : vector<8x8x16xbf16> to vector<64x16xbf16>
    %c1_101 = arith.constant 1 : index
    %c0_102 = arith.constant 0 : index
    %c0_103 = arith.constant 0 : index
    %c0_104 = arith.constant 0 : index
    %c0_105 = arith.constant 0 : index
    %67 = vector.load %arg5[%c1_101, %c0_102, %c0_103, %c0_104, %c0_105] : memref<3x3x3x16x16xbf16, #tpu.memory_space<vmem>>, vector<1x1x1x16x16xbf16>
    %68 = vector.shape_cast %67 : vector<1x1x1x16x16xbf16> to vector<16x16xbf16>
    %cst_106 = arith.constant dense<0.000000e+00> : vector<64x16xf32>
    %69 = tpu.matmul %66, %68, %cst_106 {dimension_numbers = #tpu.dot_dimension_numbers<[1], [0], [0], [1], [0, 0, 1, 1], [], []>} : vector<64x16xbf16>, vector<16x16xbf16>, vector<64x16xf32> -> vector<64x16xf32>
    %70 = arith.addf %63, %69 : vector<64x16xf32>
    %c0_107 = arith.constant 0 : index
    %c0_108 = arith.constant 0 : index
    %c0_109 = arith.constant 0 : index
    %c1_110 = arith.constant 1 : index
    %c0_111 = arith.constant 0 : index
    %71 = vector.load %arg3[%c0_107, %c0_108, %c0_109, %c1_110, %c0_111] : memref<1x1x10x10x16xbf16, #tpu.memory_space<vmem>>, vector<1x1x8x8x16xbf16>
    %72 = vector.shape_cast %71 : vector<1x1x8x8x16xbf16> to vector<8x8x16xbf16>
    %73 = vector.shape_cast %72 : vector<8x8x16xbf16> to vector<64x16xbf16>
    %c1_112 = arith.constant 1 : index
    %c0_113 = arith.constant 0 : index
    %c1_114 = arith.constant 1 : index
    %c0_115 = arith.constant 0 : index
    %c0_116 = arith.constant 0 : index
    %74 = vector.load %arg5[%c1_112, %c0_113, %c1_114, %c0_115, %c0_116] : memref<3x3x3x16x16xbf16, #tpu.memory_space<vmem>>, vector<1x1x1x16x16xbf16>
    %75 = vector.shape_cast %74 : vector<1x1x1x16x16xbf16> to vector<16x16xbf16>
    %cst_117 = arith.constant dense<0.000000e+00> : vector<64x16xf32>
    %76 = tpu.matmul %73, %75, %cst_117 {dimension_numbers = #tpu.dot_dimension_numbers<[1], [0], [0], [1], [0, 0, 1, 1], [], []>} : vector<64x16xbf16>, vector<16x16xbf16>, vector<64x16xf32> -> vector<64x16xf32>
    %77 = arith.addf %70, %76 : vector<64x16xf32>
    %c0_118 = arith.constant 0 : index
    %c0_119 = arith.constant 0 : index
    %c0_120 = arith.constant 0 : index
    %c2_121 = arith.constant 2 : index
    %c0_122 = arith.constant 0 : index
    %78 = vector.load %arg3[%c0_118, %c0_119, %c0_120, %c2_121, %c0_122] : memref<1x1x10x10x16xbf16, #tpu.memory_space<vmem>>, vector<1x1x8x8x16xbf16>
    %79 = vector.shape_cast %78 : vector<1x1x8x8x16xbf16> to vector<8x8x16xbf16>
    %80 = vector.shape_cast %79 : vector<8x8x16xbf16> to vector<64x16xbf16>
    %c1_123 = arith.constant 1 : index
    %c0_124 = arith.constant 0 : index
    %c2_125 = arith.constant 2 : index
    %c0_126 = arith.constant 0 : index
    %c0_127 = arith.constant 0 : index
    %81 = vector.load %arg5[%c1_123, %c0_124, %c2_125, %c0_126, %c0_127] : memref<3x3x3x16x16xbf16, #tpu.memory_space<vmem>>, vector<1x1x1x16x16xbf16>
    %82 = vector.shape_cast %81 : vector<1x1x1x16x16xbf16> to vector<16x16xbf16>
    %cst_128 = arith.constant dense<0.000000e+00> : vector<64x16xf32>
    %83 = tpu.matmul %80, %82, %cst_128 {dimension_numbers = #tpu.dot_dimension_numbers<[1], [0], [0], [1], [0, 0, 1, 1], [], []>} : vector<64x16xbf16>, vector<16x16xbf16>, vector<64x16xf32> -> vector<64x16xf32>
    %84 = arith.addf %77, %83 : vector<64x16xf32>
    %c0_129 = arith.constant 0 : index
    %c0_130 = arith.constant 0 : index
    %c1_131 = arith.constant 1 : index
    %c0_132 = arith.constant 0 : index
    %c0_133 = arith.constant 0 : index
    %85 = vector.load %arg3[%c0_129, %c0_130, %c1_131, %c0_132, %c0_133] : memref<1x1x10x10x16xbf16, #tpu.memory_space<vmem>>, vector<1x1x8x8x16xbf16>
    %86 = vector.shape_cast %85 : vector<1x1x8x8x16xbf16> to vector<8x8x16xbf16>
    %87 = vector.shape_cast %86 : vector<8x8x16xbf16> to vector<64x16xbf16>
    %c1_134 = arith.constant 1 : index
    %c1_135 = arith.constant 1 : index
    %c0_136 = arith.constant 0 : index
    %c0_137 = arith.constant 0 : index
    %c0_138 = arith.constant 0 : index
    %88 = vector.load %arg5[%c1_134, %c1_135, %c0_136, %c0_137, %c0_138] : memref<3x3x3x16x16xbf16, #tpu.memory_space<vmem>>, vector<1x1x1x16x16xbf16>
    %89 = vector.shape_cast %88 : vector<1x1x1x16x16xbf16> to vector<16x16xbf16>
    %cst_139 = arith.constant dense<0.000000e+00> : vector<64x16xf32>
    %90 = tpu.matmul %87, %89, %cst_139 {dimension_numbers = #tpu.dot_dimension_numbers<[1], [0], [0], [1], [0, 0, 1, 1], [], []>} : vector<64x16xbf16>, vector<16x16xbf16>, vector<64x16xf32> -> vector<64x16xf32>
    %91 = arith.addf %84, %90 : vector<64x16xf32>
    %c0_140 = arith.constant 0 : index
    %c0_141 = arith.constant 0 : index
    %c1_142 = arith.constant 1 : index
    %c1_143 = arith.constant 1 : index
    %c0_144 = arith.constant 0 : index
    %92 = vector.load %arg3[%c0_140, %c0_141, %c1_142, %c1_143, %c0_144] : memref<1x1x10x10x16xbf16, #tpu.memory_space<vmem>>, vector<1x1x8x8x16xbf16>
    %93 = vector.shape_cast %92 : vector<1x1x8x8x16xbf16> to vector<8x8x16xbf16>
    %94 = vector.shape_cast %93 : vector<8x8x16xbf16> to vector<64x16xbf16>
    %c1_145 = arith.constant 1 : index
    %c1_146 = arith.constant 1 : index
    %c1_147 = arith.constant 1 : index
    %c0_148 = arith.constant 0 : index
    %c0_149 = arith.constant 0 : index
    %95 = vector.load %arg5[%c1_145, %c1_146, %c1_147, %c0_148, %c0_149] : memref<3x3x3x16x16xbf16, #tpu.memory_space<vmem>>, vector<1x1x1x16x16xbf16>
    %96 = vector.shape_cast %95 : vector<1x1x1x16x16xbf16> to vector<16x16xbf16>
    %cst_150 = arith.constant dense<0.000000e+00> : vector<64x16xf32>
    %97 = tpu.matmul %94, %96, %cst_150 {dimension_numbers = #tpu.dot_dimension_numbers<[1], [0], [0], [1], [0, 0, 1, 1], [], []>} : vector<64x16xbf16>, vector<16x16xbf16>, vector<64x16xf32> -> vector<64x16xf32>
    %98 = arith.addf %91, %97 : vector<64x16xf32>
    %c0_151 = arith.constant 0 : index
    %c0_152 = arith.constant 0 : index
    %c1_153 = arith.constant 1 : index
    %c2_154 = arith.constant 2 : index
    %c0_155 = arith.constant 0 : index
    %99 = vector.load %arg3[%c0_151, %c0_152, %c1_153, %c2_154, %c0_155] : memref<1x1x10x10x16xbf16, #tpu.memory_space<vmem>>, vector<1x1x8x8x16xbf16>
    %100 = vector.shape_cast %99 : vector<1x1x8x8x16xbf16> to vector<8x8x16xbf16>
    %101 = vector.shape_cast %100 : vector<8x8x16xbf16> to vector<64x16xbf16>
    %c1_156 = arith.constant 1 : index
    %c1_157 = arith.constant 1 : index
    %c2_158 = arith.constant 2 : index
    %c0_159 = arith.constant 0 : index
    %c0_160 = arith.constant 0 : index
    %102 = vector.load %arg5[%c1_156, %c1_157, %c2_158, %c0_159, %c0_160] : memref<3x3x3x16x16xbf16, #tpu.memory_space<vmem>>, vector<1x1x1x16x16xbf16>
    %103 = vector.shape_cast %102 : vector<1x1x1x16x16xbf16> to vector<16x16xbf16>
    %cst_161 = arith.constant dense<0.000000e+00> : vector<64x16xf32>
    %104 = tpu.matmul %101, %103, %cst_161 {dimension_numbers = #tpu.dot_dimension_numbers<[1], [0], [0], [1], [0, 0, 1, 1], [], []>} : vector<64x16xbf16>, vector<16x16xbf16>, vector<64x16xf32> -> vector<64x16xf32>
    %105 = arith.addf %98, %104 : vector<64x16xf32>
    %c0_162 = arith.constant 0 : index
    %c0_163 = arith.constant 0 : index
    %c2_164 = arith.constant 2 : index
    %c0_165 = arith.constant 0 : index
    %c0_166 = arith.constant 0 : index
    %106 = vector.load %arg3[%c0_162, %c0_163, %c2_164, %c0_165, %c0_166] : memref<1x1x10x10x16xbf16, #tpu.memory_space<vmem>>, vector<1x1x8x8x16xbf16>
    %107 = vector.shape_cast %106 : vector<1x1x8x8x16xbf16> to vector<8x8x16xbf16>
    %108 = vector.shape_cast %107 : vector<8x8x16xbf16> to vector<64x16xbf16>
    %c1_167 = arith.constant 1 : index
    %c2_168 = arith.constant 2 : index
    %c0_169 = arith.constant 0 : index
    %c0_170 = arith.constant 0 : index
    %c0_171 = arith.constant 0 : index
    %109 = vector.load %arg5[%c1_167, %c2_168, %c0_169, %c0_170, %c0_171] : memref<3x3x3x16x16xbf16, #tpu.memory_space<vmem>>, vector<1x1x1x16x16xbf16>
    %110 = vector.shape_cast %109 : vector<1x1x1x16x16xbf16> to vector<16x16xbf16>
    %cst_172 = arith.constant dense<0.000000e+00> : vector<64x16xf32>
    %111 = tpu.matmul %108, %110, %cst_172 {dimension_numbers = #tpu.dot_dimension_numbers<[1], [0], [0], [1], [0, 0, 1, 1], [], []>} : vector<64x16xbf16>, vector<16x16xbf16>, vector<64x16xf32> -> vector<64x16xf32>
    %112 = arith.addf %105, %111 : vector<64x16xf32>
    %c0_173 = arith.constant 0 : index
    %c0_174 = arith.constant 0 : index
    %c2_175 = arith.constant 2 : index
    %c1_176 = arith.constant 1 : index
    %c0_177 = arith.constant 0 : index
    %113 = vector.load %arg3[%c0_173, %c0_174, %c2_175, %c1_176, %c0_177] : memref<1x1x10x10x16xbf16, #tpu.memory_space<vmem>>, vector<1x1x8x8x16xbf16>
    %114 = vector.shape_cast %113 : vector<1x1x8x8x16xbf16> to vector<8x8x16xbf16>
    %115 = vector.shape_cast %114 : vector<8x8x16xbf16> to vector<64x16xbf16>
    %c1_178 = arith.constant 1 : index
    %c2_179 = arith.constant 2 : index
    %c1_180 = arith.constant 1 : index
    %c0_181 = arith.constant 0 : index
    %c0_182 = arith.constant 0 : index
    %116 = vector.load %arg5[%c1_178, %c2_179, %c1_180, %c0_181, %c0_182] : memref<3x3x3x16x16xbf16, #tpu.memory_space<vmem>>, vector<1x1x1x16x16xbf16>
    %117 = vector.shape_cast %116 : vector<1x1x1x16x16xbf16> to vector<16x16xbf16>
    %cst_183 = arith.constant dense<0.000000e+00> : vector<64x16xf32>
    %118 = tpu.matmul %115, %117, %cst_183 {dimension_numbers = #tpu.dot_dimension_numbers<[1], [0], [0], [1], [0, 0, 1, 1], [], []>} : vector<64x16xbf16>, vector<16x16xbf16>, vector<64x16xf32> -> vector<64x16xf32>
    %119 = arith.addf %112, %118 : vector<64x16xf32>
    %c0_184 = arith.constant 0 : index
    %c0_185 = arith.constant 0 : index
    %c2_186 = arith.constant 2 : index
    %c2_187 = arith.constant 2 : index
    %c0_188 = arith.constant 0 : index
    %120 = vector.load %arg3[%c0_184, %c0_185, %c2_186, %c2_187, %c0_188] : memref<1x1x10x10x16xbf16, #tpu.memory_space<vmem>>, vector<1x1x8x8x16xbf16>
    %121 = vector.shape_cast %120 : vector<1x1x8x8x16xbf16> to vector<8x8x16xbf16>
    %122 = vector.shape_cast %121 : vector<8x8x16xbf16> to vector<64x16xbf16>
    %c1_189 = arith.constant 1 : index
    %c2_190 = arith.constant 2 : index
    %c2_191 = arith.constant 2 : index
    %c0_192 = arith.constant 0 : index
    %c0_193 = arith.constant 0 : index
    %123 = vector.load %arg5[%c1_189, %c2_190, %c2_191, %c0_192, %c0_193] : memref<3x3x3x16x16xbf16, #tpu.memory_space<vmem>>, vector<1x1x1x16x16xbf16>
    %124 = vector.shape_cast %123 : vector<1x1x1x16x16xbf16> to vector<16x16xbf16>
    %cst_194 = arith.constant dense<0.000000e+00> : vector<64x16xf32>
    %125 = tpu.matmul %122, %124, %cst_194 {dimension_numbers = #tpu.dot_dimension_numbers<[1], [0], [0], [1], [0, 0, 1, 1], [], []>} : vector<64x16xbf16>, vector<16x16xbf16>, vector<64x16xf32> -> vector<64x16xf32>
    %126 = arith.addf %119, %125 : vector<64x16xf32>
    %c0_195 = arith.constant 0 : index
    %c0_196 = arith.constant 0 : index
    %c0_197 = arith.constant 0 : index
    %c0_198 = arith.constant 0 : index
    %c0_199 = arith.constant 0 : index
    %127 = vector.load %arg4[%c0_195, %c0_196, %c0_197, %c0_198, %c0_199] : memref<1x1x10x10x16xbf16, #tpu.memory_space<vmem>>, vector<1x1x8x8x16xbf16>
    %128 = vector.shape_cast %127 : vector<1x1x8x8x16xbf16> to vector<8x8x16xbf16>
    %129 = vector.shape_cast %128 : vector<8x8x16xbf16> to vector<64x16xbf16>
    %c2_200 = arith.constant 2 : index
    %c0_201 = arith.constant 0 : index
    %c0_202 = arith.constant 0 : index
    %c0_203 = arith.constant 0 : index
    %c0_204 = arith.constant 0 : index
    %130 = vector.load %arg5[%c2_200, %c0_201, %c0_202, %c0_203, %c0_204] : memref<3x3x3x16x16xbf16, #tpu.memory_space<vmem>>, vector<1x1x1x16x16xbf16>
    %131 = vector.shape_cast %130 : vector<1x1x1x16x16xbf16> to vector<16x16xbf16>
    %cst_205 = arith.constant dense<0.000000e+00> : vector<64x16xf32>
    %132 = tpu.matmul %129, %131, %cst_205 {dimension_numbers = #tpu.dot_dimension_numbers<[1], [0], [0], [1], [0, 0, 1, 1], [], []>} : vector<64x16xbf16>, vector<16x16xbf16>, vector<64x16xf32> -> vector<64x16xf32>
    %133 = arith.addf %126, %132 : vector<64x16xf32>
    %c0_206 = arith.constant 0 : index
    %c0_207 = arith.constant 0 : index
    %c0_208 = arith.constant 0 : index
    %c1_209 = arith.constant 1 : index
    %c0_210 = arith.constant 0 : index
    %134 = vector.load %arg4[%c0_206, %c0_207, %c0_208, %c1_209, %c0_210] : memref<1x1x10x10x16xbf16, #tpu.memory_space<vmem>>, vector<1x1x8x8x16xbf16>
    %135 = vector.shape_cast %134 : vector<1x1x8x8x16xbf16> to vector<8x8x16xbf16>
    %136 = vector.shape_cast %135 : vector<8x8x16xbf16> to vector<64x16xbf16>
    %c2_211 = arith.constant 2 : index
    %c0_212 = arith.constant 0 : index
    %c1_213 = arith.constant 1 : index
    %c0_214 = arith.constant 0 : index
    %c0_215 = arith.constant 0 : index
    %137 = vector.load %arg5[%c2_211, %c0_212, %c1_213, %c0_214, %c0_215] : memref<3x3x3x16x16xbf16, #tpu.memory_space<vmem>>, vector<1x1x1x16x16xbf16>
    %138 = vector.shape_cast %137 : vector<1x1x1x16x16xbf16> to vector<16x16xbf16>
    %cst_216 = arith.constant dense<0.000000e+00> : vector<64x16xf32>
    %139 = tpu.matmul %136, %138, %cst_216 {dimension_numbers = #tpu.dot_dimension_numbers<[1], [0], [0], [1], [0, 0, 1, 1], [], []>} : vector<64x16xbf16>, vector<16x16xbf16>, vector<64x16xf32> -> vector<64x16xf32>
    %140 = arith.addf %133, %139 : vector<64x16xf32>
    %c0_217 = arith.constant 0 : index
    %c0_218 = arith.constant 0 : index
    %c0_219 = arith.constant 0 : index
    %c2_220 = arith.constant 2 : index
    %c0_221 = arith.constant 0 : index
    %141 = vector.load %arg4[%c0_217, %c0_218, %c0_219, %c2_220, %c0_221] : memref<1x1x10x10x16xbf16, #tpu.memory_space<vmem>>, vector<1x1x8x8x16xbf16>
    %142 = vector.shape_cast %141 : vector<1x1x8x8x16xbf16> to vector<8x8x16xbf16>
    %143 = vector.shape_cast %142 : vector<8x8x16xbf16> to vector<64x16xbf16>
    %c2_222 = arith.constant 2 : index
    %c0_223 = arith.constant 0 : index
    %c2_224 = arith.constant 2 : index
    %c0_225 = arith.constant 0 : index
    %c0_226 = arith.constant 0 : index
    %144 = vector.load %arg5[%c2_222, %c0_223, %c2_224, %c0_225, %c0_226] : memref<3x3x3x16x16xbf16, #tpu.memory_space<vmem>>, vector<1x1x1x16x16xbf16>
    %145 = vector.shape_cast %144 : vector<1x1x1x16x16xbf16> to vector<16x16xbf16>
    %cst_227 = arith.constant dense<0.000000e+00> : vector<64x16xf32>
    %146 = tpu.matmul %143, %145, %cst_227 {dimension_numbers = #tpu.dot_dimension_numbers<[1], [0], [0], [1], [0, 0, 1, 1], [], []>} : vector<64x16xbf16>, vector<16x16xbf16>, vector<64x16xf32> -> vector<64x16xf32>
    %147 = arith.addf %140, %146 : vector<64x16xf32>
    %c0_228 = arith.constant 0 : index
    %c0_229 = arith.constant 0 : index
    %c1_230 = arith.constant 1 : index
    %c0_231 = arith.constant 0 : index
    %c0_232 = arith.constant 0 : index
    %148 = vector.load %arg4[%c0_228, %c0_229, %c1_230, %c0_231, %c0_232] : memref<1x1x10x10x16xbf16, #tpu.memory_space<vmem>>, vector<1x1x8x8x16xbf16>
    %149 = vector.shape_cast %148 : vector<1x1x8x8x16xbf16> to vector<8x8x16xbf16>
    %150 = vector.shape_cast %149 : vector<8x8x16xbf16> to vector<64x16xbf16>
    %c2_233 = arith.constant 2 : index
    %c1_234 = arith.constant 1 : index
    %c0_235 = arith.constant 0 : index
    %c0_236 = arith.constant 0 : index
    %c0_237 = arith.constant 0 : index
    %151 = vector.load %arg5[%c2_233, %c1_234, %c0_235, %c0_236, %c0_237] : memref<3x3x3x16x16xbf16, #tpu.memory_space<vmem>>, vector<1x1x1x16x16xbf16>
    %152 = vector.shape_cast %151 : vector<1x1x1x16x16xbf16> to vector<16x16xbf16>
    %cst_238 = arith.constant dense<0.000000e+00> : vector<64x16xf32>
    %153 = tpu.matmul %150, %152, %cst_238 {dimension_numbers = #tpu.dot_dimension_numbers<[1], [0], [0], [1], [0, 0, 1, 1], [], []>} : vector<64x16xbf16>, vector<16x16xbf16>, vector<64x16xf32> -> vector<64x16xf32>
    %154 = arith.addf %147, %153 : vector<64x16xf32>
    %c0_239 = arith.constant 0 : index
    %c0_240 = arith.constant 0 : index
    %c1_241 = arith.constant 1 : index
    %c1_242 = arith.constant 1 : index
    %c0_243 = arith.constant 0 : index
    %155 = vector.load %arg4[%c0_239, %c0_240, %c1_241, %c1_242, %c0_243] : memref<1x1x10x10x16xbf16, #tpu.memory_space<vmem>>, vector<1x1x8x8x16xbf16>
    %156 = vector.shape_cast %155 : vector<1x1x8x8x16xbf16> to vector<8x8x16xbf16>
    %157 = vector.shape_cast %156 : vector<8x8x16xbf16> to vector<64x16xbf16>
    %c2_244 = arith.constant 2 : index
    %c1_245 = arith.constant 1 : index
    %c1_246 = arith.constant 1 : index
    %c0_247 = arith.constant 0 : index
    %c0_248 = arith.constant 0 : index
    %158 = vector.load %arg5[%c2_244, %c1_245, %c1_246, %c0_247, %c0_248] : memref<3x3x3x16x16xbf16, #tpu.memory_space<vmem>>, vector<1x1x1x16x16xbf16>
    %159 = vector.shape_cast %158 : vector<1x1x1x16x16xbf16> to vector<16x16xbf16>
    %cst_249 = arith.constant dense<0.000000e+00> : vector<64x16xf32>
    %160 = tpu.matmul %157, %159, %cst_249 {dimension_numbers = #tpu.dot_dimension_numbers<[1], [0], [0], [1], [0, 0, 1, 1], [], []>} : vector<64x16xbf16>, vector<16x16xbf16>, vector<64x16xf32> -> vector<64x16xf32>
    %161 = arith.addf %154, %160 : vector<64x16xf32>
    %c0_250 = arith.constant 0 : index
    %c0_251 = arith.constant 0 : index
    %c1_252 = arith.constant 1 : index
    %c2_253 = arith.constant 2 : index
    %c0_254 = arith.constant 0 : index
    %162 = vector.load %arg4[%c0_250, %c0_251, %c1_252, %c2_253, %c0_254] : memref<1x1x10x10x16xbf16, #tpu.memory_space<vmem>>, vector<1x1x8x8x16xbf16>
    %163 = vector.shape_cast %162 : vector<1x1x8x8x16xbf16> to vector<8x8x16xbf16>
    %164 = vector.shape_cast %163 : vector<8x8x16xbf16> to vector<64x16xbf16>
    %c2_255 = arith.constant 2 : index
    %c1_256 = arith.constant 1 : index
    %c2_257 = arith.constant 2 : index
    %c0_258 = arith.constant 0 : index
    %c0_259 = arith.constant 0 : index
    %165 = vector.load %arg5[%c2_255, %c1_256, %c2_257, %c0_258, %c0_259] : memref<3x3x3x16x16xbf16, #tpu.memory_space<vmem>>, vector<1x1x1x16x16xbf16>
    %166 = vector.shape_cast %165 : vector<1x1x1x16x16xbf16> to vector<16x16xbf16>
    %cst_260 = arith.constant dense<0.000000e+00> : vector<64x16xf32>
    %167 = tpu.matmul %164, %166, %cst_260 {dimension_numbers = #tpu.dot_dimension_numbers<[1], [0], [0], [1], [0, 0, 1, 1], [], []>} : vector<64x16xbf16>, vector<16x16xbf16>, vector<64x16xf32> -> vector<64x16xf32>
    %168 = arith.addf %161, %167 : vector<64x16xf32>
    %c0_261 = arith.constant 0 : index
    %c0_262 = arith.constant 0 : index
    %c2_263 = arith.constant 2 : index
    %c0_264 = arith.constant 0 : index
    %c0_265 = arith.constant 0 : index
    %169 = vector.load %arg4[%c0_261, %c0_262, %c2_263, %c0_264, %c0_265] : memref<1x1x10x10x16xbf16, #tpu.memory_space<vmem>>, vector<1x1x8x8x16xbf16>
    %170 = vector.shape_cast %169 : vector<1x1x8x8x16xbf16> to vector<8x8x16xbf16>
    %171 = vector.shape_cast %170 : vector<8x8x16xbf16> to vector<64x16xbf16>
    %c2_266 = arith.constant 2 : index
    %c2_267 = arith.constant 2 : index
    %c0_268 = arith.constant 0 : index
    %c0_269 = arith.constant 0 : index
    %c0_270 = arith.constant 0 : index
    %172 = vector.load %arg5[%c2_266, %c2_267, %c0_268, %c0_269, %c0_270] : memref<3x3x3x16x16xbf16, #tpu.memory_space<vmem>>, vector<1x1x1x16x16xbf16>
    %173 = vector.shape_cast %172 : vector<1x1x1x16x16xbf16> to vector<16x16xbf16>
    %cst_271 = arith.constant dense<0.000000e+00> : vector<64x16xf32>
    %174 = tpu.matmul %171, %173, %cst_271 {dimension_numbers = #tpu.dot_dimension_numbers<[1], [0], [0], [1], [0, 0, 1, 1], [], []>} : vector<64x16xbf16>, vector<16x16xbf16>, vector<64x16xf32> -> vector<64x16xf32>
    %175 = arith.addf %168, %174 : vector<64x16xf32>
    %c0_272 = arith.constant 0 : index
    %c0_273 = arith.constant 0 : index
    %c2_274 = arith.constant 2 : index
    %c1_275 = arith.constant 1 : index
    %c0_276 = arith.constant 0 : index
    %176 = vector.load %arg4[%c0_272, %c0_273, %c2_274, %c1_275, %c0_276] : memref<1x1x10x10x16xbf16, #tpu.memory_space<vmem>>, vector<1x1x8x8x16xbf16>
    %177 = vector.shape_cast %176 : vector<1x1x8x8x16xbf16> to vector<8x8x16xbf16>
    %178 = vector.shape_cast %177 : vector<8x8x16xbf16> to vector<64x16xbf16>
    %c2_277 = arith.constant 2 : index
    %c2_278 = arith.constant 2 : index
    %c1_279 = arith.constant 1 : index
    %c0_280 = arith.constant 0 : index
    %c0_281 = arith.constant 0 : index
    %179 = vector.load %arg5[%c2_277, %c2_278, %c1_279, %c0_280, %c0_281] : memref<3x3x3x16x16xbf16, #tpu.memory_space<vmem>>, vector<1x1x1x16x16xbf16>
    %180 = vector.shape_cast %179 : vector<1x1x1x16x16xbf16> to vector<16x16xbf16>
    %cst_282 = arith.constant dense<0.000000e+00> : vector<64x16xf32>
    %181 = tpu.matmul %178, %180, %cst_282 {dimension_numbers = #tpu.dot_dimension_numbers<[1], [0], [0], [1], [0, 0, 1, 1], [], []>} : vector<64x16xbf16>, vector<16x16xbf16>, vector<64x16xf32> -> vector<64x16xf32>
    %182 = arith.addf %175, %181 : vector<64x16xf32>
    %c0_283 = arith.constant 0 : index
    %c0_284 = arith.constant 0 : index
    %c2_285 = arith.constant 2 : index
    %c2_286 = arith.constant 2 : index
    %c0_287 = arith.constant 0 : index
    %183 = vector.load %arg4[%c0_283, %c0_284, %c2_285, %c2_286, %c0_287] : memref<1x1x10x10x16xbf16, #tpu.memory_space<vmem>>, vector<1x1x8x8x16xbf16>
    %184 = vector.shape_cast %183 : vector<1x1x8x8x16xbf16> to vector<8x8x16xbf16>
    %185 = vector.shape_cast %184 : vector<8x8x16xbf16> to vector<64x16xbf16>
    %c2_288 = arith.constant 2 : index
    %c2_289 = arith.constant 2 : index
    %c2_290 = arith.constant 2 : index
    %c0_291 = arith.constant 0 : index
    %c0_292 = arith.constant 0 : index
    %186 = vector.load %arg5[%c2_288, %c2_289, %c2_290, %c0_291, %c0_292] : memref<3x3x3x16x16xbf16, #tpu.memory_space<vmem>>, vector<1x1x1x16x16xbf16>
    %187 = vector.shape_cast %186 : vector<1x1x1x16x16xbf16> to vector<16x16xbf16>
    %cst_293 = arith.constant dense<0.000000e+00> : vector<64x16xf32>
    %188 = tpu.matmul %185, %187, %cst_293 {dimension_numbers = #tpu.dot_dimension_numbers<[1], [0], [0], [1], [0, 0, 1, 1], [], []>} : vector<64x16xbf16>, vector<16x16xbf16>, vector<64x16xf32> -> vector<64x16xf32>
    %189 = arith.addf %182, %188 : vector<64x16xf32>
    %c0_294 = arith.constant 0 : index
    %c0_295 = arith.constant 0 : index
    %190 = vector.load %arg6[%c0_294, %c0_295] : memref<1x16xf32, #tpu.memory_space<vmem>>, vector<1x16xf32>
    %191 = vector.broadcast %190 : vector<1x16xf32> to vector<64x16xf32>
    %192 = arith.addf %189, %191 : vector<64x16xf32>
    %cst_296 = arith.constant 0.000000e+00 : f32
    %193 = vector.broadcast %cst_296 : f32 to vector<64x16xf32>
    %194 = arith.maximumf %192, %193 : vector<64x16xf32>
    %195 = arith.truncf %194 : vector<64x16xf32> to vector<64x16xbf16>
    %c0_297 = arith.constant 0 : index
    %c0_298 = arith.constant 0 : index
    %c0_299 = arith.constant 0 : index
    %c0_300 = arith.constant 0 : index
    %196 = vector.load %arg7[%c0_297, %c0_298, %c0_299, %c0_300] : memref<1x1x64x16xbf16, #tpu.memory_space<vmem>>, vector<1x1x64x16xbf16>
    %197 = vector.shape_cast %196 : vector<1x1x64x16xbf16> to vector<64x16xbf16>
    %198 = vector.shape_cast %195 : vector<64x16xbf16> to vector<1x1x64x16xbf16>
    tpu.vector_store %arg7[%c0_297, %c0_298, %c0_299, %c0_300], %198 {strides = array<i32>} : memref<1x1x64x16xbf16, #tpu.memory_space<vmem>>, vector<1x1x64x16xbf16>,
    return
  }
  func.func @transform_0(%arg0: i32, %arg1: i32) -> (i32, i32, i32, i32, i32) {
    %c1_i32 = arith.constant 1 : i32
    %0 = arith.muli %arg1, %c1_i32 : i32
    %c0_i32 = arith.constant 0 : i32
    %1 = arith.addi %0, %c0_i32 : i32
    %c0_i32_0 = arith.constant 0 : i32
    %c0_i32_1 = arith.constant 0 : i32
    %c0_i32_2 = arith.constant 0 : i32
    %c0_i32_3 = arith.constant 0 : i32
    return %arg0, %1, %c0_i32_0, %c0_i32_1, %c0_i32_2 : i32, i32, i32, i32, i32
  }
  func.func @transform_1(%arg0: i32, %arg1: i32) -> (i32, i32, i32, i32, i32) {
    %c1_i32 = arith.constant 1 : i32
    %0 = arith.muli %arg1, %c1_i32 : i32
    %c1_i32_0 = arith.constant 1 : i32
    %1 = arith.addi %0, %c1_i32_0 : i32
    %c0_i32 = arith.constant 0 : i32
    %c0_i32_1 = arith.constant 0 : i32
    %c0_i32_2 = arith.constant 0 : i32
    %c0_i32_3 = arith.constant 0 : i32
    return %arg0, %1, %c0_i32, %c0_i32_1, %c0_i32_2 : i32, i32, i32, i32, i32
  }
  func.func @transform_2(%arg0: i32, %arg1: i32) -> (i32, i32, i32, i32, i32) {
    %c1_i32 = arith.constant 1 : i32
    %0 = arith.muli %arg1, %c1_i32 : i32
    %c2_i32 = arith.constant 2 : i32
    %1 = arith.addi %0, %c2_i32 : i32
    %c0_i32 = arith.constant 0 : i32
    %c0_i32_0 = arith.constant 0 : i32
    %c0_i32_1 = arith.constant 0 : i32
    %c0_i32_2 = arith.constant 0 : i32
    return %arg0, %1, %c0_i32, %c0_i32_0, %c0_i32_1 : i32, i32, i32, i32, i32
  }
  func.func @transform_3(%arg0: i32, %arg1: i32) -> (i32, i32, i32, i32, i32) {
    %c0_i32 = arith.constant 0 : i32
    %c0_i32_0 = arith.constant 0 : i32
    %c0_i32_1 = arith.constant 0 : i32
    %c0_i32_2 = arith.constant 0 : i32
    %c0_i32_3 = arith.constant 0 : i32
    %c0_i32_4 = arith.constant 0 : i32
    return %c0_i32, %c0_i32_0, %c0_i32_1, %c0_i32_2, %c0_i32_3 : i32, i32, i32, i32, i32
  }
  func.func @transform_4(%arg0: i32, %arg1: i32) -> (i32, i32) {
    %c0_i32 = arith.constant 0 : i32
    %c0_i32_0 = arith.constant 0 : i32
    %c0_i32_1 = arith.constant 0 : i32
    return %c0_i32, %c0_i32_0 : i32, i32
  }
  func.func @transform_5(%arg0: i32, %arg1: i32) -> (i32, i32, i32, i32) {
    %c0_i32 = arith.constant 0 : i32
    %c0_i32_0 = arith.constant 0 : i32
    %c0_i32_1 = arith.constant 0 : i32
    return %arg0, %arg1, %c0_i32, %c0_i32_0 : i32, i32, i32, i32
  }
}

module attributes {stable_mosaic.version = 11 : i64} {
  func.func @_mm_bias_kernel(%arg0: i32, %arg1: memref<256x16xbf16, #tpu.memory_space<vmem>>, %arg2: memref<16x64xbf16, #tpu.memory_space<vmem>>, %arg3: memref<1x64xf32, #tpu.memory_space<vmem>>, %arg4: memref<256x64xbf16, #tpu.memory_space<vmem>>, %arg5: memref<256x64xf32, #tpu.memory_space<vmem>>) attributes {dimension_semantics = [#tpu.dimension_semantics<parallel>], iteration_bounds = array<i64: 2>, scalar_prefetch = 0 : i64, scratch_operands = 0 : i64, tpu.core_type = #tpu.core_type<tc>, window_params = [{transform_indices = @transform_0, window_bounds = array<i64: 256, 16>}, {pipeline_mode = #tpu.pipeline_mode<synchronous>, transform_indices = @transform_1, window_bounds = array<i64: 16, 64>}, {pipeline_mode = #tpu.pipeline_mode<synchronous>, transform_indices = @transform_2, window_bounds = array<i64: 1, 64>}, {transform_indices = @transform_3, window_bounds = array<i64: 256, 64>}, {transform_indices = @transform_4, window_bounds = array<i64: 256, 64>}]} {
    %c0 = arith.constant 0 : index
    %c0_0 = arith.constant 0 : index
    %0 = vector.load %arg1[%c0, %c0_0] : memref<256x16xbf16, #tpu.memory_space<vmem>>, vector<256x16xbf16>
    %c0_1 = arith.constant 0 : index
    %c0_2 = arith.constant 0 : index
    %1 = vector.load %arg2[%c0_1, %c0_2] : memref<16x64xbf16, #tpu.memory_space<vmem>>, vector<16x64xbf16>
    %cst = arith.constant dense<0.000000e+00> : vector<256x64xf32>
    %2 = tpu.matmul %0, %1, %cst {dimension_numbers = #tpu.dot_dimension_numbers<[1], [0], [0], [1], [0, 0, 1, 1], [], []>} : vector<256x16xbf16>, vector<16x64xbf16>, vector<256x64xf32> -> vector<256x64xf32>
    %c0_3 = arith.constant 0 : index
    %c0_4 = arith.constant 0 : index
    %3 = vector.load %arg3[%c0_3, %c0_4] : memref<1x64xf32, #tpu.memory_space<vmem>>, vector<1x64xf32>
    %4 = vector.broadcast %3 : vector<1x64xf32> to vector<256x64xf32>
    %5 = arith.addf %2, %4 : vector<256x64xf32>
    %c0_5 = arith.constant 0 : index
    %c0_6 = arith.constant 0 : index
    %6 = vector.load %arg4[%c0_5, %c0_6] : memref<256x64xbf16, #tpu.memory_space<vmem>>, vector<256x64xbf16>
    %7 = arith.extf %6 : vector<256x64xbf16> to vector<256x64xf32>
    %8 = arith.addf %5, %7 : vector<256x64xf32>
    %cst_7 = arith.constant 0.000000e+00 : f32
    %9 = vector.broadcast %cst_7 : f32 to vector<256x64xf32>
    %10 = arith.maximumf %8, %9 : vector<256x64xf32>
    %c0_8 = arith.constant 0 : index
    %c0_9 = arith.constant 0 : index
    %11 = vector.load %arg5[%c0_8, %c0_9] : memref<256x64xf32, #tpu.memory_space<vmem>>, vector<256x64xf32>
    tpu.vector_store %arg5[%c0_8, %c0_9], %10 {strides = array<i32>} : memref<256x64xf32, #tpu.memory_space<vmem>>, vector<256x64xf32>,
    return
  }
  func.func @transform_0(%arg0: i32) -> (i32, i32) {
    %c0_i32 = arith.constant 0 : i32
    %c0_i32_0 = arith.constant 0 : i32
    return %arg0, %c0_i32 : i32, i32
  }
  func.func @transform_1(%arg0: i32) -> (i32, i32) {
    %c0_i32 = arith.constant 0 : i32
    %c0_i32_0 = arith.constant 0 : i32
    %c0_i32_1 = arith.constant 0 : i32
    return %c0_i32, %c0_i32_0 : i32, i32
  }
  func.func @transform_2(%arg0: i32) -> (i32, i32) {
    %c0_i32 = arith.constant 0 : i32
    %c0_i32_0 = arith.constant 0 : i32
    %c0_i32_1 = arith.constant 0 : i32
    return %c0_i32, %c0_i32_0 : i32, i32
  }
  func.func @transform_3(%arg0: i32) -> (i32, i32) {
    %c0_i32 = arith.constant 0 : i32
    %c0_i32_0 = arith.constant 0 : i32
    return %arg0, %c0_i32 : i32, i32
  }
  func.func @transform_4(%arg0: i32) -> (i32, i32) {
    %c0_i32 = arith.constant 0 : i32
    %c0_i32_0 = arith.constant 0 : i32
    return %arg0, %c0_i32 : i32, i32
  }
}

</mosaic_0001>

<llo_original>
// kernel: bottleneck_forward.3
$region0: #{bottleneck_forward.3}
  #allocation0 [shape = 'u32[]', space=smem, size = 0x4, offset = 0x4, fixed_abs, tag = 'smem constant byte address 0x4 - core index']
  #allocation1 [shape = 'u32[144,128]{1,0:T(1,128)}', space=vmem, size = 0x12000, scoped, tag = 'internal scratch']
  %s0 = inlined_call_operand.vmem [shape: bf16[512,64], index: 0, kind: input, shape index: {}]
  %s1 = inlined_call_operand.vmem [shape: bf16[64,16], index: 1, kind: input, shape index: {}]
  %s2 = inlined_call_operand.vmem [shape: f32[1,16], index: 2, kind: input, shape index: {}]
  %s3 = inlined_call_operand.vmem [shape: bf16[512,16], index: 3, kind: output, shape index: {}]
  %s4 = sld [smem:[#allocation0]]
  $region45: #{bottleneck_forward.3} parent=0
    _
  %s6 = ssub.s32 1, %s4
  %s7 = scalar_select 0, %s6, %s4
  loop: start=0, step=1, limit=4
  $region2: #{bottleneck_forward.3} parent=0 // loop_pre_header
    _
  $region3: #{bottleneck_forward.3} parent=0 // loop_header
    %s9 = sphi 0, %s13
    %p10 = scmp.ge.s32.totalorder %s9, 4
    %s19 = sphi 0, %s21
    %s22 = sphi 0, %s19
    %s23 = sphi 0, %s22
    %s39 = sphi 0, %s23
    %s43 = sphi 0, %s43
    %s45 = sphi 0, %s43
    %s46 = sphi 0, %s45
    %s60 = sphi 0, %s46
    %s64 = sphi 0, %s64
    %s66 = sphi 0, %s64
    %s67 = sphi 0, %s66
    %s81 = sphi 0, %s67
    %s87 = sphi 0, %s89
    %s90 = sphi 0, %s87
    %s91 = sphi 0, %s90
    %s107 = sphi 0, %s91
  $region4: #{bottleneck_forward.3} parent=0 // loop_header_branch
    %12 = sbr.rel (%p10) target = $region8
  $region5: #{bottleneck_forward.3} parent=0 // loop_body
    %s14 = ssub.s32 %s9, 1
    %s15 = ssub.s32 %s9, 2
    %s16 = sadd.s32 %s9, 1
    %s17 = ssub.s32 %s9, %s16
    %p18 = scmp.eq.s32.totalorder %s17, 0
    %s20 = sadd.s32 %s19, 1
    %s21 = scalar_select %p18, %s19, %s20
    %p24 = pneg %p18
    %p25 = scmp.eq.s32.totalorder %s9, 1
    %p26 = por %p24, %p25
    %p27 = scmp.ne.s32.totalorder %s19, %s22
    %p28 = scmp.eq.s32.totalorder %s9, 0
    %p29 = por %p27, %p28
    %p30 = scmp.ne.s32.totalorder %s19, %s22
    %p31 = scmp.eq.s32.totalorder %s14, 1
    %p32 = por %p30, %p31
    %p33 = scmp.ne.s32.totalorder %s22, %s23
    %p34 = scmp.eq.s32.totalorder %s14, 0
    %p35 = por %p33, %p34
    %p36 = scmp.ne.s32.totalorder %s22, %s23
    %p37 = scmp.eq.s32.totalorder %s15, 1
    %p38 = por %p36, %p37
    %p40 = scmp.ne.s32.totalorder %s23, %s39
    %p41 = scmp.eq.s32.totalorder %s15, 0
    %p42 = por %p40, %p41
    %s44 = sadd.s32 %s43, 1
    %p47 = scmp.eq.s32.totalorder %s9, 1
    %p48 = scmp.ne.s32.totalorder %s43, %s45
    %p49 = scmp.eq.s32.totalorder %s9, 0
    %p50 = por %p48, %p49
    %p51 = scmp.ne.s32.totalorder %s43, %s45
    %p52 = scmp.eq.s32.totalorder %s14, 1
    %p53 = por %p51, %p52
    %p54 = scmp.ne.s32.totalorder %s45, %s46
    %p55 = scmp.eq.s32.totalorder %s14, 0
    %p56 = por %p54, %p55
    %p57 = scmp.ne.s32.totalorder %s45, %s46
    %p58 = scmp.eq.s32.totalorder %s15, 1
    %p59 = por %p57, %p58
    %p61 = scmp.ne.s32.totalorder %s46, %s60
    %p62 = scmp.eq.s32.totalorder %s15, 0
    %p63 = por %p61, %p62
    %s65 = sadd.s32 %s64, 1
    %p68 = scmp.eq.s32.totalorder %s9, 1
    %p69 = scmp.ne.s32.totalorder %s64, %s66
    %p70 = scmp.eq.s32.totalorder %s9, 0
    %p71 = por %p69, %p70
    %p72 = scmp.ne.s32.totalorder %s64, %s66
    %p73 = scmp.eq.s32.totalorder %s14, 1
    %p74 = por %p72, %p73
    %p75 = scmp.ne.s32.totalorder %s66, %s67
    %p76 = scmp.eq.s32.totalorder %s14, 0
    %p77 = por %p75, %p76
    %p78 = scmp.ne.s32.totalorder %s66, %s67
    %p79 = scmp.eq.s32.totalorder %s15, 1
    %p80 = por %p78, %p79
    %p82 = scmp.ne.s32.totalorder %s67, %s81
    %p83 = scmp.eq.s32.totalorder %s15, 0
    %p84 = por %p82, %p83
    %s85 = ssub.s32 %s9, %s16
    %p86 = scmp.eq.s32.totalorder %s85, 0
    %s88 = sadd.s32 %s87, 1
    %s89 = scalar_select %p86, %s87, %s88
    %p92 = pneg %p86
    %p93 = scmp.eq.s32.totalorder %s9, 1
    %p94 = por %p92, %p93
    %p95 = scmp.ne.s32.totalorder %s87, %s90
    %p96 = scmp.eq.s32.totalorder %s9, 0
    %p97 = por %p95, %p96
    %p98 = scmp.ne.s32.totalorder %s87, %s90
    %p99 = scmp.eq.s32.totalorder %s14, 1
    %p100 = por %p98, %p99
    %p101 = scmp.ne.s32.totalorder %s90, %s91
    %p102 = scmp.eq.s32.totalorder %s14, 0
    %p103 = por %p101, %p102
    %p104 = scmp.ne.s32.totalorder %s90, %s91
    %p105 = scmp.eq.s32.totalorder %s15, 1
    %p106 = por %p104, %p105
    %p108 = scmp.ne.s32.totalorder %s91, %s107
    %p109 = scmp.eq.s32.totalorder %s15, 0
    %p110 = por %p108, %p109
    %p111 = scmp.le.s32.totalorder 1, %s9
    %p112 = scmp.lt.s32.totalorder %s9, 3
    %p113 = pnand %p111, %p112
    %p114 = pneg %p113
    // Predicated region
    $region9: #{bottleneck_forward.3} parent=5 // pred_check
      _
    $region10: #{bottleneck_forward.3} parent=5 // pred_check_branch
      %116 = sbr.rel (%p113) target = $region12
    $region11: #{bottleneck_forward.3} parent=5 // pred_region
      %s117 = ssub.s32 %s9, 1
      // Predicated region
      $region13: #{bottleneck_forward.3} parent=11 // pred_check
        %p118 = pneg %p56
      $region14: #{bottleneck_forward.3} parent=11 // pred_check_branch
        %120 = sbr.rel (%p118) target = $region16
      $region15: #{bottleneck_forward.3} parent=11 // pred_region
        _
      $region16: #{bottleneck_forward.3} parent=11 // pred_fallthru
        _
      // Predicated region
      $region17: #{bottleneck_forward.3} parent=11 // pred_check
        %p121 = pneg %p77
      $region18: #{bottleneck_forward.3} parent=11 // pred_check_branch
        %123 = sbr.rel (%p121) target = $region20
      $region19: #{bottleneck_forward.3} parent=11 // pred_region
        _
      $region20: #{bottleneck_forward.3} parent=11 // pred_fallthru
        _
    $region12: #{bottleneck_forward.3} parent=5 // pred_fallthru
      _
    %p124 = scmp.lt.s32.totalorder %s9, 2
    // Predicated region
    $region21: #{bottleneck_forward.3} parent=5 // pred_check
      %p125 = pneg %p124
    $region22: #{bottleneck_forward.3} parent=5 // pred_check_branch
      %127 = sbr.rel (%p125) target = $region24
    $region23: #{bottleneck_forward.3} parent=5 // pred_region
      // Predicated region
      $region25: #{bottleneck_forward.3} parent=23 // pred_check
        %p128 = pneg %p29
      $region26: #{bottleneck_forward.3} parent=23 // pred_check_branch
        %130 = sbr.rel (%p128) target = $region28
      $region27: #{bottleneck_forward.3} parent=23 // pred_region
        %s131 = smul.u32 32, %s9
        %p132 = scmp.lt.s32.totalorder %s131, 63
        %s133 = scalar_select %p132, %s131, 63
        %s134 = smul.addr %s133, 4
        %s135 = scalar_lea.vmem %s0, %s134
        %s136 = smul.u32 32, %s9
      $region28: #{bottleneck_forward.3} parent=23 // pred_fallthru
        _
    $region24: #{bottleneck_forward.3} parent=5 // pred_fallthru
      _
    %p137 = scmp.le.s32.totalorder 1, %s9
    %p138 = scmp.lt.s32.totalorder %s9, 3
    %p139 = pnand %p137, %p138
    %p140 = pneg %p139
    // Predicated region
    $region29: #{bottleneck_forward.3} parent=5 // pred_check
      _
    $region30: #{bottleneck_forward.3} parent=5 // pred_check_branch
      %142 = sbr.rel (%p139) target = $region32
    $region31: #{bottleneck_forward.3} parent=5 // pred_region
      %s143 = ssub.s32 %s9, 1
      %s144 = smul.u32 32, %s14
      %p145 = scmp.lt.s32.totalorder %s144, 63
      %s146 = scalar_select %p145, %s144, 63
      %s147 = smul.addr %s146, 4
      %s148 = scalar_lea.vmem %s0, %s147
      %p149 = pneg %p35
      %p150 = pneg %p32
      %p151 = pneg %p56
      %p152 = pneg %p53
      %p153 = pneg %p77
      %p154 = pneg %p74
      %p155 = pneg %p103
      %p156 = pneg %p100
      %s157 = smul.u32 32, %s14
      %p158 = scmp.lt.s32.totalorder %s157, 63
      %s159 = scalar_select %p158, %s157, 63
      %s160 = smul.addr %s159, 4
      %s161 = scalar_lea.vmem %s3, %s160
      %s162 = smul.u32 32, %s14
      %p163 = scmp.lt.s32.totalorder %s162, 63
      %s164 = scalar_select %p163, %s162, 63
      %s165 = smul.addr %s164, 4
      %s166 = scalar_lea.vmem %s0, %s165
      %s167 = smul.u32 32, %s14
      %s168 = smul.u32 32, %s14
      %p169 = scmp.lt.s32.totalorder %s168, 63
      %s170 = scalar_select %p169, %s168, 63
      %s171 = smul.addr %s170, 4
      %s172 = scalar_lea.vmem %s3, %s171
      %s173 = smul.u32 32, %s14
      %v175 = vld [vmem:[%s166] sm:$0xf]
      %v176 = vld [vmem:[%s166 + $0x4] sm:$0xf]
      %v177 = vld [vmem:[%s166 + $0x8] sm:$0xf]
      %v178 = vld [vmem:[%s166 + $0xc] sm:$0xf]
      %v179 = vld [vmem:[%s166 + $0x10] sm:$0xf]
      %v180 = vld [vmem:[%s166 + $0x14] sm:$0xf]
      %v181 = vld [vmem:[%s166 + $0x18] sm:$0xf]
      %v182 = vld [vmem:[%s166 + $0x1c] sm:$0xf]
      %v183 = vld [vmem:[%s166 + $0x20] sm:$0xf]
      %v184 = vld [vmem:[%s166 + $0x24] sm:$0xf]
      %v185 = vld [vmem:[%s166 + $0x28] sm:$0xf]
      %v186 = vld [vmem:[%s166 + $0x2c] sm:$0xf]
      %v187 = vld [vmem:[%s166 + $0x30] sm:$0xf]
      %v188 = vld [vmem:[%s166 + $0x34] sm:$0xf]
      %v189 = vld [vmem:[%s166 + $0x38] sm:$0xf]
      %v190 = vld [vmem:[%s166 + $0x3c] sm:$0xf]
      %v191 = vld [vmem:[%s166 + $0x40] sm:$0xf]
      %v192 = vld [vmem:[%s166 + $0x44] sm:$0xf]
      %v193 = vld [vmem:[%s166 + $0x48] sm:$0xf]
      %v194 = vld [vmem:[%s166 + $0x4c] sm:$0xf]
      %v195 = vld [vmem:[%s166 + $0x50] sm:$0xf]
      %v196 = vld [vmem:[%s166 + $0x54] sm:$0xf]
      %v197 = vld [vmem:[%s166 + $0x58] sm:$0xf]
      %v198 = vld [vmem:[%s166 + $0x5c] sm:$0xf]
      %v199 = vld [vmem:[%s166 + $0x60] sm:$0xf]
      %v200 = vld [vmem:[%s166 + $0x64] sm:$0xf]
      %v201 = vld [vmem:[%s166 + $0x68] sm:$0xf]
      %v202 = vld [vmem:[%s166 + $0x6c] sm:$0xf]
      %v203 = vld [vmem:[%s166 + $0x70] sm:$0xf]
      %v204 = vld [vmem:[%s166 + $0x74] sm:$0xf]
      %v205 = vld [vmem:[%s166 + $0x78] sm:$0xf]
      %v206 = vld [vmem:[%s166 + $0x7c] sm:$0xf]
      %v207 = vld [vmem:[%s1] sm:$0xf]
      %v208 = vld [vmem:[%s1 + $0x4] sm:$0xf]
      %v209 = vld [vmem:[%s1 + $0x8] sm:$0xf]
      %v210 = vld [vmem:[%s1 + $0xc] sm:$0xf]
      %v211 = vld [vmem:[%s1 + $0x10] sm:$0xf]
      %v212 = vld [vmem:[%s1 + $0x14] sm:$0xf]
      %v213 = vld [vmem:[%s1 + $0x18] sm:$0xf]
      %v214 = vld [vmem:[%s1 + $0x1c] sm:$0xf]
      %v215 = vld [vmem:[%s2] sm:$0x1]
      %v217 = vlaneseq
      %v218 = vshrl.u32 %v217, 7
      %v219 = vsub.s32 0, %v218
      %v220 = vrot.slane %v215, %v219
      %v254 = vunpack.c.l.b16 %v175
      %v255 = vunpack.c.l.b16 %v176
      %v256 = vunpack.c.l.b16 %v177
      %v257 = vunpack.c.l.b16 %v178
      %v258 = vunpack.c.l.b16 %v179
      %v259 = vunpack.c.l.b16 %v180
      %v260 = vunpack.c.l.b16 %v181
      %v261 = vunpack.c.l.b16 %v182
      %v262 = vunpack.c.l.b16 %v183
      %v263 = vunpack.c.l.b16 %v184
      %v264 = vunpack.c.l.b16 %v185
      %v265 = vunpack.c.l.b16 %v186
      %v266 = vunpack.c.l.b16 %v187
      %v267 = vunpack.c.l.b16 %v188
      %v268 = vunpack.c.l.b16 %v189
      %v269 = vunpack.c.l.b16 %v190
      %v270 = vunpack.c.l.b16 %v191
      %v271 = vunpack.c.l.b16 %v192
      %v272 = vunpack.c.l.b16 %v193
      %v273 = vunpack.c.l.b16 %v194
      %v274 = vunpack.c.l.b16 %v195
      %v275 = vunpack.c.l.b16 %v196
      %v276 = vunpack.c.l.b16 %v197
      %v277 = vunpack.c.l.b16 %v198
      %v278 = vunpack.c.l.b16 %v199
      %v279 = vunpack.c.l.b16 %v200
      %v280 = vunpack.c.l.b16 %v201
      %v281 = vunpack.c.l.b16 %v202
      %v282 = vunpack.c.l.b16 %v203
      %v283 = vunpack.c.l.b16 %v204
      %v284 = vunpack.c.l.b16 %v205
      %v285 = vunpack.c.l.b16 %v206
      %v286 = vpack.c.b16 %v255, %v254
      %v287 = vpack.c.b16 %v257, %v256
      %v288 = vpack.c.b16 %v259, %v258
      %v289 = vpack.c.b16 %v261, %v260
      %v290 = vpack.c.b16 %v263, %v262
      %v291 = vpack.c.b16 %v265, %v264
      %v292 = vpack.c.b16 %v267, %v266
      %v293 = vpack.c.b16 %v269, %v268
      %v294 = vpack.c.b16 %v271, %v270
      %v295 = vpack.c.b16 %v273, %v272
      %v296 = vpack.c.b16 %v275, %v274
      %v297 = vpack.c.b16 %v277, %v276
      %v298 = vpack.c.b16 %v279, %v278
      %v299 = vpack.c.b16 %v281, %v280
      %v300 = vpack.c.b16 %v283, %v282
      %v301 = vpack.c.b16 %v285, %v284
      %v310 = vunpack.c.l.b16 %v207
      %v311 = vunpack.c.l.b16 %v208
      %v312 = vunpack.c.l.b16 %v209
      %v313 = vunpack.c.l.b16 %v210
      %v314 = vunpack.c.l.b16 %v211
      %v315 = vunpack.c.l.b16 %v212
      %v316 = vunpack.c.l.b16 %v213
      %v317 = vunpack.c.l.b16 %v214
      %v318 = vpack.c.b16 %v311, %v310
      %v319 = vpack.c.b16 %v313, %v312
      %v320 = vpack.c.b16 %v315, %v314
      %v321 = vpack.c.b16 %v317, %v316
      %vm326 = vcmask 523264
      %v328 = vsel %vm326, %v286, 0
      %v331 = vsel %vm326, %v287, 0
      %v334 = vsel %vm326, %v288, 0
      %v337 = vsel %vm326, %v289, 0
      %v340 = vsel %vm326, %v290, 0
      %v343 = vsel %vm326, %v291, 0
      %v346 = vsel %vm326, %v292, 0
      %v349 = vsel %vm326, %v293, 0
      %v352 = vsel %vm326, %v294, 0
      %v355 = vsel %vm326, %v295, 0
      %v358 = vsel %vm326, %v296, 0
      %v361 = vsel %vm326, %v297, 0
      %v364 = vsel %vm326, %v298, 0
      %v367 = vsel %vm326, %v299, 0
      %v370 = vsel %vm326, %v300, 0
      %v373 = vsel %vm326, %v301, 0
      %375 = vmatprep.subr.bf16.mxu0 0
      %376 = vmatpush1.bf16.msra.mxu0 0
      %377 = vmatprep.subr.bf16.mxu0 0
      %378 = vmatpush1.bf16.msra.mxu0 0
      %379 = vmatprep.subr.bf16.mxu0 0
      %380 = vmatpush1.bf16.msra.mxu0 0
      %381 = vmatprep.subr.bf16.mxu0 0
      %382 = vmatpush1.bf16.msra.mxu0 0
      %383 = vmatprep.subr.bf16.mxu0 0
      %384 = vmatpush1.bf16.msra.mxu0 %v321
      %385 = vmatprep.subr.bf16.mxu0 0
      %386 = vmatpush1.bf16.msra.mxu0 %v320
      %387 = vmatprep.subr.bf16.mxu0 0
      %388 = vmatpush1.bf16.msra.mxu0 %v319
      %389 = vmatprep.subr.bf16.mxu0 0
      %390 = vmatpush1.bf16.msra.mxu0 %v318
      %391 = vmatprep.subr.bf16.mxu0 0
      %392 = vmatpush2.bf16.msra.mxu0 0
      %393 = vmatprep.subr.bf16.mxu0 0
      %394 = vmatpush2.bf16.msra.mxu0 0
      %395 = vmatprep.subr.bf16.mxu0 0
      %396 = vmatpush2.bf16.msra.mxu0 0
      %397 = vmatprep.subr.bf16.mxu0 0
      %398 = vmatpush2.bf16.msra.mxu0 0
      %399 = vmatprep.subr.bf16.mxu0 0
      %400 = vmatpush2.bf16.msra.mxu0 0
      %401 = vmatprep.subr.bf16.mxu0 0
      %402 = vmatpush2.bf16.msra.mxu0 0
      %403 = vmatprep.subr.bf16.mxu0 0
      %404 = vmatpush2.bf16.msra.mxu0 0
      %405 = vmatprep.subr.bf16.mxu0 0
      %406 = vmatpush2.bf16.msra.mxu0 0
      %407 = vmatprep.mubr.bf16.mxu0 0
      %408 = vmatmul.mubr.bf16.gmra.mxu0 %v328
      %v409 = vpop.f32.mrf.mxu0
      %v410 = vadd.f32 %v220, %v409
      %v411 = vpop.f32.mrf.mxu0
      %v412 = vpop.f32.mrf.mxu0
      %v413 = vadd.f32 %v220, %v412
      %v414 = vpop.f32.mrf.mxu0
      %415 = vmatprep.mubr.bf16.mxu0 0
      %416 = vmatmul.mubr.bf16.gmra.mxu0 %v331
      %v417 = vpop.f32.mrf.mxu0
      %v418 = vadd.f32 %v220, %v417
      %v419 = vpop.f32.mrf.mxu0
      %v420 = vpop.f32.mrf.mxu0
      %v421 = vadd.f32 %v220, %v420
      %v422 = vpop.f32.mrf.mxu0
      %423 = vmatprep.mubr.bf16.mxu0 0
      %424 = vmatmul.mubr.bf16.gmra.mxu0 %v334
      %v425 = vpop.f32.mrf.mxu0
      %v426 = vadd.f32 %v220, %v425
      %v427 = vpop.f32.mrf.mxu0
      %v428 = vpop.f32.mrf.mxu0
      %v429 = vadd.f32 %v220, %v428
      %v430 = vpop.f32.mrf.mxu0
      %431 = vmatprep.mubr.bf16.mxu0 0
      %432 = vmatmul.mubr.bf16.gmra.mxu0 %v337
      %v433 = vpop.f32.mrf.mxu0
      %v434 = vadd.f32 %v220, %v433
      %v435 = vpop.f32.mrf.mxu0
      %v436 = vpop.f32.mrf.mxu0
      %v437 = vadd.f32 %v220, %v436
      %v438 = vpop.f32.mrf.mxu0
      %439 = vmatprep.mubr.bf16.mxu0 0
      %440 = vmatmul.mubr.bf16.gmra.mxu0 %v340
      %v441 = vpop.f32.mrf.mxu0
      %v442 = vadd.f32 %v220, %v441
      %v443 = vpop.f32.mrf.mxu0
      %v444 = vpop.f32.mrf.mxu0
      %v445 = vadd.f32 %v220, %v444
      %v446 = vpop.f32.mrf.mxu0
      %447 = vmatprep.mubr.bf16.mxu0 0
      %448 = vmatmul.mubr.bf16.gmra.mxu0 %v343
      %v449 = vpop.f32.mrf.mxu0
      %v450 = vadd.f32 %v220, %v449
      %v451 = vpop.f32.mrf.mxu0
      %v452 = vpop.f32.mrf.mxu0
      %v453 = vadd.f32 %v220, %v452
      %v454 = vpop.f32.mrf.mxu0
      %455 = vmatprep.mubr.bf16.mxu0 0
      %456 = vmatmul.mubr.bf16.gmra.mxu0 %v346
      %v457 = vpop.f32.mrf.mxu0
      %v458 = vadd.f32 %v220, %v457
      %v459 = vpop.f32.mrf.mxu0
      %v460 = vpop.f32.mrf.mxu0
      %v461 = vadd.f32 %v220, %v460
      %v462 = vpop.f32.mrf.mxu0
      %463 = vmatprep.mubr.bf16.mxu0 0
      %464 = vmatmul.mubr.bf16.gmra.mxu0 %v349
      %v465 = vpop.f32.mrf.mxu0
      %v466 = vadd.f32 %v220, %v465
      %v467 = vpop.f32.mrf.mxu0
      %v468 = vpop.f32.mrf.mxu0
      %v469 = vadd.f32 %v220, %v468
      %v470 = vpop.f32.mrf.mxu0
      %471 = vmatprep.mubr.bf16.mxu0 0
      %472 = vmatmul.mubr.bf16.gmra.mxu0 %v352
      %v473 = vpop.f32.mrf.mxu0
      %v474 = vadd.f32 %v220, %v473
      %v475 = vpop.f32.mrf.mxu0
      %v476 = vpop.f32.mrf.mxu0
      %v477 = vadd.f32 %v220, %v476
      %v478 = vpop.f32.mrf.mxu0
      %479 = vmatprep.mubr.bf16.mxu0 0
      %480 = vmatmul.mubr.bf16.gmra.mxu0 %v355
      %v481 = vpop.f32.mrf.mxu0
      %v482 = vadd.f32 %v220, %v481
      %v483 = vpop.f32.mrf.mxu0
      %v484 = vpop.f32.mrf.mxu0
      %v485 = vadd.f32 %v220, %v484
      %v486 = vpop.f32.mrf.mxu0
      %487 = vmatprep.mubr.bf16.mxu0 0
      %488 = vmatmul.mubr.bf16.gmra.mxu0 %v358
      %v489 = vpop.f32.mrf.mxu0
      %v490 = vadd.f32 %v220, %v489
      %v491 = vpop.f32.mrf.mxu0
      %v492 = vpop.f32.mrf.mxu0
      %v493 = vadd.f32 %v220, %v492
      %v494 = vpop.f32.mrf.mxu0
      %495 = vmatprep.mubr.bf16.mxu0 0
      %496 = vmatmul.mubr.bf16.gmra.mxu0 %v361
      %v497 = vpop.f32.mrf.mxu0
      %v498 = vadd.f32 %v220, %v497
      %v499 = vpop.f32.mrf.mxu0
      %v500 = vpop.f32.mrf.mxu0
      %v501 = vadd.f32 %v220, %v500
      %v502 = vpop.f32.mrf.mxu0
      %503 = vmatprep.mubr.bf16.mxu0 0
      %504 = vmatmul.mubr.bf16.gmra.mxu0 %v364
      %v505 = vpop.f32.mrf.mxu0
      %v506 = vadd.f32 %v220, %v505
      %v507 = vpop.f32.mrf.mxu0
      %v508 = vpop.f32.mrf.mxu0
      %v509 = vadd.f32 %v220, %v508
      %v510 = vpop.f32.mrf.mxu0
      %511 = vmatprep.mubr.bf16.mxu0 0
      %512 = vmatmul.mubr.bf16.gmra.mxu0 %v367
      %v513 = vpop.f32.mrf.mxu0
      %v514 = vadd.f32 %v220, %v513
      %v515 = vpop.f32.mrf.mxu0
      %v516 = vpop.f32.mrf.mxu0
      %v517 = vadd.f32 %v220, %v516
      %v518 = vpop.f32.mrf.mxu0
      %519 = vmatprep.mubr.bf16.mxu0 0
      %520 = vmatmul.mubr.bf16.gmra.mxu0 %v370
      %v521 = vpop.f32.mrf.mxu0
      %v522 = vadd.f32 %v220, %v521
      %v523 = vpop.f32.mrf.mxu0
      %v524 = vpop.f32.mrf.mxu0
      %v525 = vadd.f32 %v220, %v524
      %v526 = vpop.f32.mrf.mxu0
      %527 = vmatprep.mubr.bf16.mxu0 0
      %528 = vmatmul.mubr.bf16.gmra.mxu0 %v373
      %v529 = vpop.f32.mrf.mxu0
      %v530 = vadd.f32 %v220, %v529
      %v531 = vpop.f32.mrf.mxu0
      %v532 = vpop.f32.mrf.mxu0
      %v533 = vadd.f32 %v220, %v532
      %v534 = vpop.f32.mrf.mxu0
      %535 = vdwg.mxu0
      %v536 = vmax.f32 %v410, 0.0
      %v537 = vmax.f32 %v413, 0.0
      %v538 = vmax.f32 %v418, 0.0
      %v539 = vmax.f32 %v421, 0.0
      %v540 = vmax.f32 %v426, 0.0
      %v541 = vmax.f32 %v429, 0.0
      %v542 = vmax.f32 %v434, 0.0
      %v543 = vmax.f32 %v437, 0.0
      %v544 = vmax.f32 %v442, 0.0
      %v545 = vmax.f32 %v445, 0.0
      %v546 = vmax.f32 %v450, 0.0
      %v547 = vmax.f32 %v453, 0.0
      %v548 = vmax.f32 %v458, 0.0
      %v549 = vmax.f32 %v461, 0.0
      %v550 = vmax.f32 %v466, 0.0
      %v551 = vmax.f32 %v469, 0.0
      %v552 = vmax.f32 %v474, 0.0
      %v553 = vmax.f32 %v477, 0.0
      %v554 = vmax.f32 %v482, 0.0
      %v555 = vmax.f32 %v485, 0.0
      %v556 = vmax.f32 %v490, 0.0
      %v557 = vmax.f32 %v493, 0.0
      %v558 = vmax.f32 %v498, 0.0
      %v559 = vmax.f32 %v501, 0.0
      %v560 = vmax.f32 %v506, 0.0
      %v561 = vmax.f32 %v509, 0.0
      %v562 = vmax.f32 %v514, 0.0
      %v563 = vmax.f32 %v517, 0.0
      %v564 = vmax.f32 %v522, 0.0
      %v565 = vmax.f32 %v525, 0.0
      %v566 = vmax.f32 %v530, 0.0
      %v567 = vmax.f32 %v533, 0.0
      %v568 = vpack.c.bf16 %v537, %v536
      %v569 = vpack.c.bf16 %v539, %v538
      %v570 = vpack.c.bf16 %v541, %v540
      %v571 = vpack.c.bf16 %v543, %v542
      %v572 = vpack.c.bf16 %v545, %v544
      %v573 = vpack.c.bf16 %v547, %v546
      %v574 = vpack.c.bf16 %v549, %v548
      %v575 = vpack.c.bf16 %v551, %v550
      %v576 = vpack.c.bf16 %v553, %v552
      %v577 = vpack.c.bf16 %v555, %v554
      %v578 = vpack.c.bf16 %v557, %v556
      %v579 = vpack.c.bf16 %v559, %v558
      %v580 = vpack.c.bf16 %v561, %v560
      %v581 = vpack.c.bf16 %v563, %v562
      %v582 = vpack.c.bf16 %v565, %v564
      %v583 = vpack.c.bf16 %v567, %v566
      %v600 = vunpack.c.l.b16 %v568
      %v601 = vunpack.c.h.b16 %v568
      %v602 = vunpack.c.l.b16 %v569
      %v603 = vunpack.c.h.b16 %v569
      %v604 = vunpack.c.l.b16 %v570
      %v605 = vunpack.c.h.b16 %v570
      %v606 = vunpack.c.l.b16 %v571
      %v607 = vunpack.c.h.b16 %v571
      %v608 = vunpack.c.l.b16 %v572
      %v609 = vunpack.c.h.b16 %v572
      %v610 = vunpack.c.l.b16 %v573
      %v611 = vunpack.c.h.b16 %v573
      %v612 = vunpack.c.l.b16 %v574
      %v613 = vunpack.c.h.b16 %v574
      %v614 = vunpack.c.l.b16 %v575
      %v615 = vunpack.c.h.b16 %v575
      %v616 = vunpack.c.l.b16 %v576
      %v617 = vunpack.c.h.b16 %v576
      %v618 = vunpack.c.l.b16 %v577
      %v619 = vunpack.c.h.b16 %v577
      %v620 = vunpack.c.l.b16 %v578
      %v621 = vunpack.c.h.b16 %v578
      %v622 = vunpack.c.l.b16 %v579
      %v623 = vunpack.c.h.b16 %v579
      %v624 = vunpack.c.l.b16 %v580
      %v625 = vunpack.c.h.b16 %v580
      %v626 = vunpack.c.l.b16 %v581
      %v627 = vunpack.c.h.b16 %v581
      %v628 = vunpack.c.l.b16 %v582
      %v629 = vunpack.c.h.b16 %v582
      %v630 = vunpack.c.l.b16 %v583
      %v631 = vunpack.c.h.b16 %v583
      %v632 = vpack.c.b16 %v600, %v600
      %v633 = vpack.c.b16 %v601, %v601
      %v634 = vpack.c.b16 %v602, %v602
      %v635 = vpack.c.b16 %v603, %v603
      %v636 = vpack.c.b16 %v604, %v604
      %v637 = vpack.c.b16 %v605, %v605
      %v638 = vpack.c.b16 %v606, %v606
      %v639 = vpack.c.b16 %v607, %v607
      %v640 = vpack.c.b16 %v608, %v608
      %v641 = vpack.c.b16 %v609, %v609
      %v642 = vpack.c.b16 %v610, %v610
      %v643 = vpack.c.b16 %v611, %v611
      %v644 = vpack.c.b16 %v612, %v612
      %v645 = vpack.c.b16 %v613, %v613
      %v646 = vpack.c.b16 %v614, %v614
      %v647 = vpack.c.b16 %v615, %v615
      %v648 = vpack.c.b16 %v616, %v616
      %v649 = vpack.c.b16 %v617, %v617
      %v650 = vpack.c.b16 %v618, %v618
      %v651 = vpack.c.b16 %v619, %v619
      %v652 = vpack.c.b16 %v620, %v620
      %v653 = vpack.c.b16 %v621, %v621
      %v654 = vpack.c.b16 %v622, %v622
      %v655 = vpack.c.b16 %v623, %v623
      %v656 = vpack.c.b16 %v624, %v624
      %v657 = vpack.c.b16 %v625, %v625
      %v658 = vpack.c.b16 %v626, %v626
      %v659 = vpack.c.b16 %v627, %v627
      %v660 = vpack.c.b16 %v628, %v628
      %v661 = vpack.c.b16 %v629, %v629
      %v662 = vpack.c.b16 %v630, %v630
      %v663 = vpack.c.b16 %v631, %v631
      %vm696 = vcmask 125952
      %697 = vst.msk [vmem:[%s172] sm:$0xf] %vm696, %v632
      %698 = vst.msk [vmem:[%s172 + $0x4] sm:$0xf] %vm696, %v633
      %699 = vst.msk [vmem:[%s172 + $0x8] sm:$0xf] %vm696, %v634
      %700 = vst.msk [vmem:[%s172 + $0xc] sm:$0xf] %vm696, %v635
      %701 = vst.msk [vmem:[%s172 + $0x10] sm:$0xf] %vm696, %v636
      %702 = vst.msk [vmem:[%s172 + $0x14] sm:$0xf] %vm696, %v637
      %703 = vst.msk [vmem:[%s172 + $0x18] sm:$0xf] %vm696, %v638
      %704 = vst.msk [vmem:[%s172 + $0x1c] sm:$0xf] %vm696, %v639
      %705 = vst.msk [vmem:[%s172 + $0x20] sm:$0xf] %vm696, %v640
      %706 = vst.msk [vmem:[%s172 + $0x24] sm:$0xf] %vm696, %v641
      %707 = vst.msk [vmem:[%s172 + $0x28] sm:$0xf] %vm696, %v642
      %708 = vst.msk [vmem:[%s172 + $0x2c] sm:$0xf] %vm696, %v643
      %709 = vst.msk [vmem:[%s172 + $0x30] sm:$0xf] %vm696, %v644
      %710 = vst.msk [vmem:[%s172 + $0x34] sm:$0xf] %vm696, %v645
      %711 = vst.msk [vmem:[%s172 + $0x38] sm:$0xf] %vm696, %v646
      %712 = vst.msk [vmem:[%s172 + $0x3c] sm:$0xf] %vm696, %v647
      %713 = vst.msk [vmem:[%s172 + $0x40] sm:$0xf] %vm696, %v648
      %714 = vst.msk [vmem:[%s172 + $0x44] sm:$0xf] %vm696, %v649
      %715 = vst.msk [vmem:[%s172 + $0x48] sm:$0xf] %vm696, %v650
      %716 = vst.msk [vmem:[%s172 + $0x4c] sm:$0xf] %vm696, %v651
      %717 = vst.msk [vmem:[%s172 + $0x50] sm:$0xf] %vm696, %v652
      %718 = vst.msk [vmem:[%s172 + $0x54] sm:$0xf] %vm696, %v653
      %719 = vst.msk [vmem:[%s172 + $0x58] sm:$0xf] %vm696, %v654
      %720 = vst.msk [vmem:[%s172 + $0x5c] sm:$0xf] %vm696, %v655
      %721 = vst.msk [vmem:[%s172 + $0x60] sm:$0xf] %vm696, %v656
      %722 = vst.msk [vmem:[%s172 + $0x64] sm:$0xf] %vm696, %v657
      %723 = vst.msk [vmem:[%s172 + $0x68] sm:$0xf] %vm696, %v658
      %724 = vst.msk [vmem:[%s172 + $0x6c] sm:$0xf] %vm696, %v659
      %725 = vst.msk [vmem:[%s172 + $0x70] sm:$0xf] %vm696, %v660
      %726 = vst.msk [vmem:[%s172 + $0x74] sm:$0xf] %vm696, %v661
      %727 = vst.msk [vmem:[%s172 + $0x78] sm:$0xf] %vm696, %v662
      %728 = vst.msk [vmem:[%s172 + $0x7c] sm:$0xf] %vm696, %v663
      %s729 = smul.u32 32, %s14
      %p730 = scmp.lt.s32.totalorder %s729, 63
      %s731 = scalar_select %p730, %s729, 63
      %s732 = smul.addr %s731, 4
      %s733 = scalar_lea.vmem %s3, %s732
      // Predicated region
      $region33: #{bottleneck_forward.3} parent=31 // pred_check
        %p734 = pneg %p100
      $region34: #{bottleneck_forward.3} parent=31 // pred_check_branch
        %736 = sbr.rel (%p734) target = $region36
      $region35: #{bottleneck_forward.3} parent=31 // pred_region
        %s737 = smul.u32 32, %s14
      $region36: #{bottleneck_forward.3} parent=31 // pred_fallthru
        _
    $region32: #{bottleneck_forward.3} parent=5 // pred_fallthru
      _
    %p738 = scmp.le.s32.totalorder 2, %s9
    // Predicated region
    $region37: #{bottleneck_forward.3} parent=5 // pred_check
      %p739 = pneg %p738
    $region38: #{bottleneck_forward.3} parent=5 // pred_check_branch
      %741 = sbr.rel (%p739) target = $region40
    $region39: #{bottleneck_forward.3} parent=5 // pred_region
      %s742 = ssub.s32 %s9, 2
      // Predicated region
      $region41: #{bottleneck_forward.3} parent=39 // pred_check
        %p743 = pneg %p106
      $region42: #{bottleneck_forward.3} parent=39 // pred_check_branch
        %745 = sbr.rel (%p743) target = $region44
      $region43: #{bottleneck_forward.3} parent=39 // pred_region
        %s746 = smul.u32 32, %s15
        %p747 = scmp.lt.s32.totalorder %s746, 63
        %s748 = scalar_select %p747, %s746, 63
        %s749 = smul.addr %s748, 4
        %s750 = scalar_lea.vmem %s3, %s749
      $region44: #{bottleneck_forward.3} parent=39 // pred_fallthru
        _
    $region40: #{bottleneck_forward.3} parent=5 // pred_fallthru
      _
  $region6: #{bottleneck_forward.3} parent=0 // loop_footer
    %s13 = sadd.s32 1, %s9
  $region7: #{bottleneck_forward.3} parent=0 // loop_footer_branch
    %8 = sbr.rel target = $region3
  $region8: #{bottleneck_forward.3} parent=0 // loop_exit
    _

// kernel: bottleneck_forward.5
$region0: #{bottleneck_forward.5}
  #allocation0 [shape = 'u32[]', space=smem, size = 0x4, offset = 0x4, fixed_abs, tag = 'smem constant byte address 0x4 - core index']
  #allocation1 [shape = 'u32[144,128]{1,0:T(1,128)}', space=vmem, size = 0x12000, scoped, tag = 'internal scratch']
  %s0 = inlined_call_operand.vmem [shape: bf16[512,16], index: 0, kind: input, shape index: {}]
  %s1 = inlined_call_operand.vmem [shape: bf16[16,64], index: 1, kind: input, shape index: {}]
  %s2 = inlined_call_operand.vmem [shape: f32[1,64], index: 2, kind: input, shape index: {}]
  %s3 = inlined_call_operand.vmem [shape: bf16[512,64], index: 3, kind: input, shape index: {}]
  %s4 = inlined_call_operand.hbm [shape: f32[512,64], index: 4, kind: output, shape index: {}]
  %s5 = sld [smem:[#allocation0]]
  $region49: #{bottleneck_forward.5} parent=0
    _
  %s7 = ssub.s32 1, %s5
  %s8 = scalar_select 0, %s7, %s5
  $region1: #{bottleneck_forward.5} parent=0
    #allocation2 [shape = 'u8[262144]{0}', space=vmem, size = 0x40000, scoped, tag = 'output window, operand 0']
    #allocation3 [shape = 's32[2]{0}', space=sflag, size = 0x8, scoped, tag = 'scoped memory for bottleneck_forward.5']
    %9 = vsyncpa [#allocation3], 0
    %s10 = scalar_lea.sflag [#allocation3], 1
    %11 = vsyncpa %s10, 0
    loop: start=0, step=1, limit=4
    $region2: #{bottleneck_forward.5} parent=1 // loop_pre_header
      _
    $region3: #{bottleneck_forward.5} parent=1 // loop_header
      %s13 = sphi 0, %s17
      %p14 = scmp.ge.s32.totalorder %s13, 4
      %s23 = sphi 0, %s25
      %s26 = sphi 0, %s23
      %s27 = sphi 0, %s26
      %s43 = sphi 0, %s27
      %s47 = sphi 0, %s47
      %s49 = sphi 0, %s47
      %s50 = sphi 0, %s49
      %s64 = sphi 0, %s50
      %s68 = sphi 0, %s68
      %s70 = sphi 0, %s68
      %s71 = sphi 0, %s70
      %s85 = sphi 0, %s71
      %s91 = sphi 0, %s93
      %s94 = sphi 0, %s91
      %s95 = sphi 0, %s94
      %s111 = sphi 0, %s95
      %s117 = sphi 0, %s119
      %s120 = sphi 0, %s117
      %s121 = sphi 0, %s120
      %s137 = sphi 0, %s121
    $region4: #{bottleneck_forward.5} parent=1 // loop_header_branch
      %16 = sbr.rel (%p14) target = $region8
    $region5: #{bottleneck_forward.5} parent=1 // loop_body
      %s18 = ssub.s32 %s13, 1
      %s19 = ssub.s32 %s13, 2
      %s20 = sadd.s32 %s13, 1
      %s21 = ssub.s32 %s13, %s20
      %p22 = scmp.eq.s32.totalorder %s21, 0
      %s24 = sadd.s32 %s23, 1
      %s25 = scalar_select %p22, %s23, %s24
      %p28 = pneg %p22
      %p29 = scmp.eq.s32.totalorder %s13, 1
      %p30 = por %p28, %p29
      %p31 = scmp.ne.s32.totalorder %s23, %s26
      %p32 = scmp.eq.s32.totalorder %s13, 0
      %p33 = por %p31, %p32
      %p34 = scmp.ne.s32.totalorder %s23, %s26
      %p35 = scmp.eq.s32.totalorder %s18, 1
      %p36 = por %p34, %p35
      %p37 = scmp.ne.s32.totalorder %s26, %s27
      %p38 = scmp.eq.s32.totalorder %s18, 0
      %p39 = por %p37, %p38
      %p40 = scmp.ne.s32.totalorder %s26, %s27
      %p41 = scmp.eq.s32.totalorder %s19, 1
      %p42 = por %p40, %p41
      %p44 = scmp.ne.s32.totalorder %s27, %s43
      %p45 = scmp.eq.s32.totalorder %s19, 0
      %p46 = por %p44, %p45
      %s48 = sadd.s32 %s47, 1
      %p51 = scmp.eq.s32.totalorder %s13, 1
      %p52 = scmp.ne.s32.totalorder %s47, %s49
      %p53 = scmp.eq.s32.totalorder %s13, 0
      %p54 = por %p52, %p53
      %p55 = scmp.ne.s32.totalorder %s47, %s49
      %p56 = scmp.eq.s32.totalorder %s18, 1
      %p57 = por %p55, %p56
      %p58 = scmp.ne.s32.totalorder %s49, %s50
      %p59 = scmp.eq.s32.totalorder %s18, 0
      %p60 = por %p58, %p59
      %p61 = scmp.ne.s32.totalorder %s49, %s50
      %p62 = scmp.eq.s32.totalorder %s19, 1
      %p63 = por %p61, %p62
      %p65 = scmp.ne.s32.totalorder %s50, %s64
      %p66 = scmp.eq.s32.totalorder %s19, 0
      %p67 = por %p65, %p66
      %s69 = sadd.s32 %s68, 1
      %p72 = scmp.eq.s32.totalorder %s13, 1
      %p73 = scmp.ne.s32.totalorder %s68, %s70
      %p74 = scmp.eq.s32.totalorder %s13, 0
      %p75 = por %p73, %p74
      %p76 = scmp.ne.s32.totalorder %s68, %s70
      %p77 = scmp.eq.s32.totalorder %s18, 1
      %p78 = por %p76, %p77
      %p79 = scmp.ne.s32.totalorder %s70, %s71
      %p80 = scmp.eq.s32.totalorder %s18, 0
      %p81 = por %p79, %p80
      %p82 = scmp.ne.s32.totalorder %s70, %s71
      %p83 = scmp.eq.s32.totalorder %s19, 1
      %p84 = por %p82, %p83
      %p86 = scmp.ne.s32.totalorder %s71, %s85
      %p87 = scmp.eq.s32.totalorder %s19, 0
      %p88 = por %p86, %p87
      %s89 = ssub.s32 %s13, %s20
      %p90 = scmp.eq.s32.totalorder %s89, 0
      %s92 = sadd.s32 %s91, 1
      %s93 = scalar_select %p90, %s91, %s92
      %p96 = pneg %p90
      %p97 = scmp.eq.s32.totalorder %s13, 1
      %p98 = por %p96, %p97
      %p99 = scmp.ne.s32.totalorder %s91, %s94
      %p100 = scmp.eq.s32.totalorder %s13, 0
      %p101 = por %p99, %p100
      %p102 = scmp.ne.s32.totalorder %s91, %s94
      %p103 = scmp.eq.s32.totalorder %s18, 1
      %p104 = por %p102, %p103
      %p105 = scmp.ne.s32.totalorder %s94, %s95
      %p106 = scmp.eq.s32.totalorder %s18, 0
      %p107 = por %p105, %p106
      %p108 = scmp.ne.s32.totalorder %s94, %s95
      %p109 = scmp.eq.s32.totalorder %s19, 1
      %p110 = por %p108, %p109
      %p112 = scmp.ne.s32.totalorder %s95, %s111
      %p113 = scmp.eq.s32.totalorder %s19, 0
      %p114 = por %p112, %p113
      %s115 = ssub.s32 %s13, %s20
      %p116 = scmp.eq.s32.totalorder %s115, 0
      %s118 = sadd.s32 %s117, 1
      %s119 = scalar_select %p116, %s117, %s118
      %p122 = pneg %p116
      %p123 = scmp.eq.s32.totalorder %s13, 1
      %p124 = por %p122, %p123
      %p125 = scmp.ne.s32.totalorder %s117, %s120
      %p126 = scmp.eq.s32.totalorder %s13, 0
      %p127 = por %p125, %p126
      %p128 = scmp.ne.s32.totalorder %s117, %s120
      %p129 = scmp.eq.s32.totalorder %s18, 1
      %p130 = por %p128, %p129
      %p131 = scmp.ne.s32.totalorder %s120, %s121
      %p132 = scmp.eq.s32.totalorder %s18, 0
      %p133 = por %p131, %p132
      %p134 = scmp.ne.s32.totalorder %s120, %s121
      %p135 = scmp.eq.s32.totalorder %s19, 1
      %p136 = por %p134, %p135
      %p138 = scmp.ne.s32.totalorder %s121, %s137
      %p139 = scmp.eq.s32.totalorder %s19, 0
      %p140 = por %p138, %p139
      %p141 = scmp.le.s32.totalorder 1, %s13
      %p142 = scmp.lt.s32.totalorder %s13, 3
      %p143 = pnand %p141, %p142
      %p144 = pneg %p143
      // Predicated region
      $region9: #{bottleneck_forward.5} parent=5 // pred_check
        _
      $region10: #{bottleneck_forward.5} parent=5 // pred_check_branch
        %146 = sbr.rel (%p143) target = $region12
      $region11: #{bottleneck_forward.5} parent=5 // pred_region
        %s147 = ssub.s32 %s13, 1
        // Predicated region
        $region13: #{bottleneck_forward.5} parent=11 // pred_check
          %p148 = pneg %p60
        $region14: #{bottleneck_forward.5} parent=11 // pred_check_branch
          %150 = sbr.rel (%p148) target = $region16
        $region15: #{bottleneck_forward.5} parent=11 // pred_region
          _
        $region16: #{bottleneck_forward.5} parent=11 // pred_fallthru
          _
        // Predicated region
        $region17: #{bottleneck_forward.5} parent=11 // pred_check
          %p151 = pneg %p81
        $region18: #{bottleneck_forward.5} parent=11 // pred_check_branch
          %153 = sbr.rel (%p151) target = $region20
        $region19: #{bottleneck_forward.5} parent=11 // pred_region
          _
        $region20: #{bottleneck_forward.5} parent=11 // pred_fallthru
          _
      $region12: #{bottleneck_forward.5} parent=5 // pred_fallthru
        _
      %p154 = scmp.lt.s32.totalorder %s13, 2
      // Predicated region
      $region21: #{bottleneck_forward.5} parent=5 // pred_check
        %p155 = pneg %p154
      $region22: #{bottleneck_forward.5} parent=5 // pred_check_branch
        %157 = sbr.rel (%p155) target = $region24
      $region23: #{bottleneck_forward.5} parent=5 // pred_region
        // Predicated region
        $region25: #{bottleneck_forward.5} parent=23 // pred_check
          %p158 = pneg %p33
        $region26: #{bottleneck_forward.5} parent=23 // pred_check_branch
          %160 = sbr.rel (%p158) target = $region28
        $region27: #{bottleneck_forward.5} parent=23 // pred_region
          %s161 = smul.u32 32, %s13
          %p162 = scmp.lt.s32.totalorder %s161, 63
          %s163 = scalar_select %p162, %s161, 63
          %s164 = smul.addr %s163, 4
          %s165 = scalar_lea.vmem %s0, %s164
          %s166 = smul.u32 32, %s13
        $region28: #{bottleneck_forward.5} parent=23 // pred_fallthru
          _
        // Predicated region
        $region29: #{bottleneck_forward.5} parent=23 // pred_check
          %p167 = pneg %p101
        $region30: #{bottleneck_forward.5} parent=23 // pred_check_branch
          %169 = sbr.rel (%p167) target = $region32
        $region31: #{bottleneck_forward.5} parent=23 // pred_region
          %s170 = smul.u32 32, %s13
          %p171 = scmp.lt.s32.totalorder %s170, 63
          %s172 = scalar_select %p171, %s170, 63
          %s173 = smul.addr %s172, 4
          %s174 = scalar_lea.vmem %s3, %s173
          %s175 = smul.u32 32, %s13
        $region32: #{bottleneck_forward.5} parent=23 // pred_fallthru
          _
      $region24: #{bottleneck_forward.5} parent=5 // pred_fallthru
        _
      %p176 = scmp.le.s32.totalorder 1, %s13
      %p177 = scmp.lt.s32.totalorder %s13, 3
      %p178 = pnand %p176, %p177
      %p179 = pneg %p178
      // Predicated region
      $region33: #{bottleneck_forward.5} parent=5 // pred_check
        _
      $region34: #{bottleneck_forward.5} parent=5 // pred_check_branch
        %181 = sbr.rel (%p178) target = $region36
      $region35: #{bottleneck_forward.5} parent=5 // pred_region
        %s182 = ssub.s32 %s13, 1
        %s183 = smul.u32 32, %s18
        %p184 = scmp.lt.s32.totalorder %s183, 63
        %s185 = scalar_select %p184, %s183, 63
        %s186 = smul.addr %s185, 4
        %s187 = scalar_lea.vmem %s0, %s186
        %p188 = pneg %p39
        %p189 = pneg %p36
        %p190 = pneg %p60
        %p191 = pneg %p57
        %p192 = pneg %p81
        %p193 = pneg %p78
        %s194 = smul.u32 32, %s18
        %p195 = scmp.lt.s32.totalorder %s194, 63
        %s196 = scalar_select %p195, %s194, 63
        %s197 = smul.addr %s196, 4
        %s198 = scalar_lea.vmem %s3, %s197
        %p199 = pneg %p107
        %p200 = pneg %p104
        %p201 = pneg %p133
        %p202 = pneg %p130
        %s203 = sand.u32 %s120, 1
        %s204 = scalar_lea.sflag [#allocation3], %s203
        %s205 = sand.u32 %s120, 1
        %s206 = smul.addr %s205, 256
        %s207 = scalar_lea.vmem [#allocation2], %s206
        %s208 = smul.u32 32, %s18
        %p209 = scmp.lt.s32.totalorder %s208, 63
        %s210 = scalar_select %p209, %s208, 63
        %s211 = smul.addr %s210, 4
        %s212 = scalar_lea.vmem %s0, %s211
        %s213 = smul.u32 32, %s18
        %s214 = smul.u32 32, %s18
        %p215 = scmp.lt.s32.totalorder %s214, 63
        %s216 = scalar_select %p215, %s214, 63
        %s217 = smul.addr %s216, 4
        %s218 = scalar_lea.vmem %s3, %s217
        %s219 = smul.u32 32, %s18
        %s220 = smul.u32 32, %s18
        %v222 = vld [vmem:[%s212] sm:$0xf]
        %v223 = vld [vmem:[%s212 + $0x4] sm:$0xf]
        %v224 = vld [vmem:[%s212 + $0x8] sm:$0xf]
        %v225 = vld [vmem:[%s212 + $0xc] sm:$0xf]
        %v226 = vld [vmem:[%s212 + $0x10] sm:$0xf]
        %v227 = vld [vmem:[%s212 + $0x14] sm:$0xf]
        %v228 = vld [vmem:[%s212 + $0x18] sm:$0xf]
        %v229 = vld [vmem:[%s212 + $0x1c] sm:$0xf]
        %v230 = vld [vmem:[%s212 + $0x20] sm:$0xf]
        %v231 = vld [vmem:[%s212 + $0x24] sm:$0xf]
        %v232 = vld [vmem:[%s212 + $0x28] sm:$0xf]
        %v233 = vld [vmem:[%s212 + $0x2c] sm:$0xf]
        %v234 = vld [vmem:[%s212 + $0x30] sm:$0xf]
        %v235 = vld [vmem:[%s212 + $0x34] sm:$0xf]
        %v236 = vld [vmem:[%s212 + $0x38] sm:$0xf]
        %v237 = vld [vmem:[%s212 + $0x3c] sm:$0xf]
        %v238 = vld [vmem:[%s212 + $0x40] sm:$0xf]
        %v239 = vld [vmem:[%s212 + $0x44] sm:$0xf]
        %v240 = vld [vmem:[%s212 + $0x48] sm:$0xf]
        %v241 = vld [vmem:[%s212 + $0x4c] sm:$0xf]
        %v242 = vld [vmem:[%s212 + $0x50] sm:$0xf]
        %v243 = vld [vmem:[%s212 + $0x54] sm:$0xf]
        %v244 = vld [vmem:[%s212 + $0x58] sm:$0xf]
        %v245 = vld [vmem:[%s212 + $0x5c] sm:$0xf]
        %v246 = vld [vmem:[%s212 + $0x60] sm:$0xf]
        %v247 = vld [vmem:[%s212 + $0x64] sm:$0xf]
        %v248 = vld [vmem:[%s212 + $0x68] sm:$0xf]
        %v249 = vld [vmem:[%s212 + $0x6c] sm:$0xf]
        %v250 = vld [vmem:[%s212 + $0x70] sm:$0xf]
        %v251 = vld [vmem:[%s212 + $0x74] sm:$0xf]
        %v252 = vld [vmem:[%s212 + $0x78] sm:$0xf]
        %v253 = vld [vmem:[%s212 + $0x7c] sm:$0xf]
        %v254 = vld [vmem:[%s1] sm:$0xf]
        %v255 = vld [vmem:[%s1 + $0x4] sm:$0xf]
        %v256 = vld [vmem:[%s2] sm:$0x1]
        %v258 = vlaneseq
        %v259 = vshrl.u32 %v258, 7
        %v260 = vsub.s32 0, %v259
        %v261 = vrot.slane %v256, %v260
        %v295 = vunpack.c.l.b16 %v222
        %v296 = vunpack.c.l.b16 %v223
        %v297 = vunpack.c.l.b16 %v224
        %v298 = vunpack.c.l.b16 %v225
        %v299 = vunpack.c.l.b16 %v226
        %v300 = vunpack.c.l.b16 %v227
        %v301 = vunpack.c.l.b16 %v228
        %v302 = vunpack.c.l.b16 %v229
        %v303 = vunpack.c.l.b16 %v230
        %v304 = vunpack.c.l.b16 %v231
        %v305 = vunpack.c.l.b16 %v232
        %v306 = vunpack.c.l.b16 %v233
        %v307 = vunpack.c.l.b16 %v234
        %v308 = vunpack.c.l.b16 %v235
        %v309 = vunpack.c.l.b16 %v236
        %v310 = vunpack.c.l.b16 %v237
        %v311 = vunpack.c.l.b16 %v238
        %v312 = vunpack.c.l.b16 %v239
        %v313 = vunpack.c.l.b16 %v240
        %v314 = vunpack.c.l.b16 %v241
        %v315 = vunpack.c.l.b16 %v242
        %v316 = vunpack.c.l.b16 %v243
        %v317 = vunpack.c.l.b16 %v244
        %v318 = vunpack.c.l.b16 %v245
        %v319 = vunpack.c.l.b16 %v246
        %v320 = vunpack.c.l.b16 %v247
        %v321 = vunpack.c.l.b16 %v248
        %v322 = vunpack.c.l.b16 %v249
        %v323 = vunpack.c.l.b16 %v250
        %v324 = vunpack.c.l.b16 %v251
        %v325 = vunpack.c.l.b16 %v252
        %v326 = vunpack.c.l.b16 %v253
        %v327 = vpack.c.b16 %v296, %v295
        %v328 = vpack.c.b16 %v298, %v297
        %v329 = vpack.c.b16 %v300, %v299
        %v330 = vpack.c.b16 %v302, %v301
        %v331 = vpack.c.b16 %v304, %v303
        %v332 = vpack.c.b16 %v306, %v305
        %v333 = vpack.c.b16 %v308, %v307
        %v334 = vpack.c.b16 %v310, %v309
        %v335 = vpack.c.b16 %v312, %v311
        %v336 = vpack.c.b16 %v314, %v313
        %v337 = vpack.c.b16 %v316, %v315
        %v338 = vpack.c.b16 %v318, %v317
        %v339 = vpack.c.b16 %v320, %v319
        %v340 = vpack.c.b16 %v322, %v321
        %v341 = vpack.c.b16 %v324, %v323
        %v342 = vpack.c.b16 %v326, %v325
        %v345 = vunpack.c.l.b16 %v254
        %v346 = vunpack.c.l.b16 %v255
        %v347 = vpack.c.b16 %v346, %v345
        %vm349 = vcmask 130048
        %v351 = vsel %vm349, %v327, 0
        %v354 = vsel %vm349, %v328, 0
        %v357 = vsel %vm349, %v329, 0
        %v360 = vsel %vm349, %v330, 0
        %v363 = vsel %vm349, %v331, 0
        %v366 = vsel %vm349, %v332, 0
        %v369 = vsel %vm349, %v333, 0
        %v372 = vsel %vm349, %v334, 0
        %v375 = vsel %vm349, %v335, 0
        %v378 = vsel %vm349, %v336, 0
        %v381 = vsel %vm349, %v337, 0
        %v384 = vsel %vm349, %v338, 0
        %v387 = vsel %vm349, %v339, 0
        %v390 = vsel %vm349, %v340, 0
        %v393 = vsel %vm349, %v341, 0
        %v396 = vsel %vm349, %v342, 0
        %398 = vmatprep.subr.bf16.mxu0 0
        %399 = vmatpush1.bf16.msra.mxu0 0
        %400 = vmatprep.subr.bf16.mxu0 0
        %401 = vmatpush1.bf16.msra.mxu0 0
        %402 = vmatprep.subr.bf16.mxu0 0
        %403 = vmatpush1.bf16.msra.mxu0 0
        %404 = vmatprep.subr.bf16.mxu0 0
        %405 = vmatpush1.bf16.msra.mxu0 0
        %406 = vmatprep.subr.bf16.mxu0 0
        %407 = vmatpush1.bf16.msra.mxu0 0
        %408 = vmatprep.subr.bf16.mxu0 0
        %409 = vmatpush1.bf16.msra.mxu0 0
        %410 = vmatprep.subr.bf16.mxu0 0
        %411 = vmatpush1.bf16.msra.mxu0 0
        %412 = vmatprep.subr.bf16.mxu0 0
        %413 = vmatpush1.bf16.msra.mxu0 %v347
        %414 = vmatprep.subr.bf16.mxu0 0
        %415 = vmatpush2.bf16.msra.mxu0 0
        %416 = vmatprep.subr.bf16.mxu0 0
        %417 = vmatpush2.bf16.msra.mxu0 0
        %418 = vmatprep.subr.bf16.mxu0 0
        %419 = vmatpush2.bf16.msra.mxu0 0
        %420 = vmatprep.subr.bf16.mxu0 0
        %421 = vmatpush2.bf16.msra.mxu0 0
        %422 = vmatprep.subr.bf16.mxu0 0
        %423 = vmatpush2.bf16.msra.mxu0 0
        %424 = vmatprep.subr.bf16.mxu0 0
        %425 = vmatpush2.bf16.msra.mxu0 0
        %426 = vmatprep.subr.bf16.mxu0 0
        %427 = vmatpush2.bf16.msra.mxu0 0
        %428 = vmatprep.subr.bf16.mxu0 0
        %429 = vmatpush2.bf16.msra.mxu0 0
        %430 = vmatprep.mubr.bf16.mxu0 0
        %431 = vmatmul.mubr.bf16.gmra.mxu0 %v351
        %v432 = vpop.f32.mrf.mxu0
        %v433 = vadd.f32 %v261, %v432
        %v434 = vpop.f32.mrf.mxu0
        %v435 = vpop.f32.mrf.mxu0
        %v436 = vadd.f32 %v261, %v435
        %v437 = vpop.f32.mrf.mxu0
        %438 = vmatprep.mubr.bf16.mxu0 0
        %439 = vmatmul.mubr.bf16.gmra.mxu0 %v354
        %v440 = vpop.f32.mrf.mxu0
        %v441 = vadd.f32 %v261, %v440
        %v442 = vpop.f32.mrf.mxu0
        %v443 = vpop.f32.mrf.mxu0
        %v444 = vadd.f32 %v261, %v443
        %v445 = vpop.f32.mrf.mxu0
        %446 = vmatprep.mubr.bf16.mxu0 0
        %447 = vmatmul.mubr.bf16.gmra.mxu0 %v357
        %v448 = vpop.f32.mrf.mxu0
        %v449 = vadd.f32 %v261, %v448
        %v450 = vpop.f32.mrf.mxu0
        %v451 = vpop.f32.mrf.mxu0
        %v452 = vadd.f32 %v261, %v451
        %v453 = vpop.f32.mrf.mxu0
        %454 = vmatprep.mubr.bf16.mxu0 0
        %455 = vmatmul.mubr.bf16.gmra.mxu0 %v360
        %v456 = vpop.f32.mrf.mxu0
        %v457 = vadd.f32 %v261, %v456
        %v458 = vpop.f32.mrf.mxu0
        %v459 = vpop.f32.mrf.mxu0
        %v460 = vadd.f32 %v261, %v459
        %v461 = vpop.f32.mrf.mxu0
        %462 = vmatprep.mubr.bf16.mxu0 0
        %463 = vmatmul.mubr.bf16.gmra.mxu0 %v363
        %v464 = vpop.f32.mrf.mxu0
        %v465 = vadd.f32 %v261, %v464
        %v466 = vpop.f32.mrf.mxu0
        %v467 = vpop.f32.mrf.mxu0
        %v468 = vadd.f32 %v261, %v467
        %v469 = vpop.f32.mrf.mxu0
        %470 = vmatprep.mubr.bf16.mxu0 0
        %471 = vmatmul.mubr.bf16.gmra.mxu0 %v366
        %v472 = vpop.f32.mrf.mxu0
        %v473 = vadd.f32 %v261, %v472
        %v474 = vpop.f32.mrf.mxu0
        %v475 = vpop.f32.mrf.mxu0
        %v476 = vadd.f32 %v261, %v475
        %v477 = vpop.f32.mrf.mxu0
        %478 = vmatprep.mubr.bf16.mxu0 0
        %479 = vmatmul.mubr.bf16.gmra.mxu0 %v369
        %v480 = vpop.f32.mrf.mxu0
        %v481 = vadd.f32 %v261, %v480
        %v482 = vpop.f32.mrf.mxu0
        %v483 = vpop.f32.mrf.mxu0
        %v484 = vadd.f32 %v261, %v483
        %v485 = vpop.f32.mrf.mxu0
        %486 = vmatprep.mubr.bf16.mxu0 0
        %487 = vmatmul.mubr.bf16.gmra.mxu0 %v372
        %v488 = vpop.f32.mrf.mxu0
        %v489 = vadd.f32 %v261, %v488
        %v490 = vpop.f32.mrf.mxu0
        %v491 = vpop.f32.mrf.mxu0
        %v492 = vadd.f32 %v261, %v491
        %v493 = vpop.f32.mrf.mxu0
        %494 = vmatprep.mubr.bf16.mxu0 0
        %495 = vmatmul.mubr.bf16.gmra.mxu0 %v375
        %v496 = vpop.f32.mrf.mxu0
        %v497 = vadd.f32 %v261, %v496
        %v498 = vpop.f32.mrf.mxu0
        %v499 = vpop.f32.mrf.mxu0
        %v500 = vadd.f32 %v261, %v499
        %v501 = vpop.f32.mrf.mxu0
        %502 = vmatprep.mubr.bf16.mxu0 0
        %503 = vmatmul.mubr.bf16.gmra.mxu0 %v378
        %v504 = vpop.f32.mrf.mxu0
        %v505 = vadd.f32 %v261, %v504
        %v506 = vpop.f32.mrf.mxu0
        %v507 = vpop.f32.mrf.mxu0
        %v508 = vadd.f32 %v261, %v507
        %v509 = vpop.f32.mrf.mxu0
        %510 = vmatprep.mubr.bf16.mxu0 0
        %511 = vmatmul.mubr.bf16.gmra.mxu0 %v381
        %v512 = vpop.f32.mrf.mxu0
        %v513 = vadd.f32 %v261, %v512
        %v514 = vpop.f32.mrf.mxu0
        %v515 = vpop.f32.mrf.mxu0
        %v516 = vadd.f32 %v261, %v515
        %v517 = vpop.f32.mrf.mxu0
        %518 = vmatprep.mubr.bf16.mxu0 0
        %519 = vmatmul.mubr.bf16.gmra.mxu0 %v384
        %v520 = vpop.f32.mrf.mxu0
        %v521 = vadd.f32 %v261, %v520
        %v522 = vpop.f32.mrf.mxu0
        %v523 = vpop.f32.mrf.mxu0
        %v524 = vadd.f32 %v261, %v523
        %v525 = vpop.f32.mrf.mxu0
        %526 = vmatprep.mubr.bf16.mxu0 0
        %527 = vmatmul.mubr.bf16.gmra.mxu0 %v387
        %v528 = vpop.f32.mrf.mxu0
        %v529 = vadd.f32 %v261, %v528
        %v530 = vpop.f32.mrf.mxu0
        %v531 = vpop.f32.mrf.mxu0
        %v532 = vadd.f32 %v261, %v531
        %v533 = vpop.f32.mrf.mxu0
        %534 = vmatprep.mubr.bf16.mxu0 0
        %535 = vmatmul.mubr.bf16.gmra.mxu0 %v390
        %v536 = vpop.f32.mrf.mxu0
        %v537 = vadd.f32 %v261, %v536
        %v538 = vpop.f32.mrf.mxu0
        %v539 = vpop.f32.mrf.mxu0
        %v540 = vadd.f32 %v261, %v539
        %v541 = vpop.f32.mrf.mxu0
        %542 = vmatprep.mubr.bf16.mxu0 0
        %543 = vmatmul.mubr.bf16.gmra.mxu0 %v393
        %v544 = vpop.f32.mrf.mxu0
        %v545 = vadd.f32 %v261, %v544
        %v546 = vpop.f32.mrf.mxu0
        %v547 = vpop.f32.mrf.mxu0
        %v548 = vadd.f32 %v261, %v547
        %v549 = vpop.f32.mrf.mxu0
        %550 = vmatprep.mubr.bf16.mxu0 0
        %551 = vmatmul.mubr.bf16.gmra.mxu0 %v396
        %v552 = vpop.f32.mrf.mxu0
        %v553 = vadd.f32 %v261, %v552
        %v554 = vpop.f32.mrf.mxu0
        %v555 = vpop.f32.mrf.mxu0
        %v556 = vadd.f32 %v261, %v555
        %v557 = vpop.f32.mrf.mxu0
        %558 = vdwg.mxu0
        %v559 = vld [vmem:[%s218] sm:$0xf]
        %v560 = vld [vmem:[%s218 + $0x4] sm:$0xf]
        %v561 = vld [vmem:[%s218 + $0x8] sm:$0xf]
        %v562 = vld [vmem:[%s218 + $0xc] sm:$0xf]
        %v563 = vld [vmem:[%s218 + $0x10] sm:$0xf]
        %v564 = vld [vmem:[%s218 + $0x14] sm:$0xf]
        %v565 = vld [vmem:[%s218 + $0x18] sm:$0xf]
        %v566 = vld [vmem:[%s218 + $0x1c] sm:$0xf]
        %v567 = vld [vmem:[%s218 + $0x20] sm:$0xf]
        %v568 = vld [vmem:[%s218 + $0x24] sm:$0xf]
        %v569 = vld [vmem:[%s218 + $0x28] sm:$0xf]
        %v570 = vld [vmem:[%s218 + $0x2c] sm:$0xf]
        %v571 = vld [vmem:[%s218 + $0x30] sm:$0xf]
        %v572 = vld [vmem:[%s218 + $0x34] sm:$0xf]
        %v573 = vld [vmem:[%s218 + $0x38] sm:$0xf]
        %v574 = vld [vmem:[%s218 + $0x3c] sm:$0xf]
        %v575 = vld [vmem:[%s218 + $0x40] sm:$0xf]
        %v576 = vld [vmem:[%s218 + $0x44] sm:$0xf]
        %v577 = vld [vmem:[%s218 + $0x48] sm:$0xf]
        %v578 = vld [vmem:[%s218 + $0x4c] sm:$0xf]
        %v579 = vld [vmem:[%s218 + $0x50] sm:$0xf]
        %v580 = vld [vmem:[%s218 + $0x54] sm:$0xf]
        %v581 = vld [vmem:[%s218 + $0x58] sm:$0xf]
        %v582 = vld [vmem:[%s218 + $0x5c] sm:$0xf]
        %v583 = vld [vmem:[%s218 + $0x60] sm:$0xf]
        %v584 = vld [vmem:[%s218 + $0x64] sm:$0xf]
        %v585 = vld [vmem:[%s218 + $0x68] sm:$0xf]
        %v586 = vld [vmem:[%s218 + $0x6c] sm:$0xf]
        %v587 = vld [vmem:[%s218 + $0x70] sm:$0xf]
        %v588 = vld [vmem:[%s218 + $0x74] sm:$0xf]
        %v589 = vld [vmem:[%s218 + $0x78] sm:$0xf]
        %v590 = vld [vmem:[%s218 + $0x7c] sm:$0xf]
        %v591 = vunpack.c.l.bf16 %v559
        %v592 = vunpack.c.l.bf16 %v560
        %v593 = vunpack.c.l.bf16 %v561
        %v594 = vunpack.c.l.bf16 %v562
        %v595 = vunpack.c.l.bf16 %v563
        %v596 = vunpack.c.l.bf16 %v564
        %v597 = vunpack.c.l.bf16 %v565
        %v598 = vunpack.c.l.bf16 %v566
        %v599 = vunpack.c.l.bf16 %v567
        %v600 = vunpack.c.l.bf16 %v568
        %v601 = vunpack.c.l.bf16 %v569
        %v602 = vunpack.c.l.bf16 %v570
        %v603 = vunpack.c.l.bf16 %v571
        %v604 = vunpack.c.l.bf16 %v572
        %v605 = vunpack.c.l.bf16 %v573
        %v606 = vunpack.c.l.bf16 %v574
        %v607 = vunpack.c.l.bf16 %v575
        %v608 = vunpack.c.l.bf16 %v576
        %v609 = vunpack.c.l.bf16 %v577
        %v610 = vunpack.c.l.bf16 %v578
        %v611 = vunpack.c.l.bf16 %v579
        %v612 = vunpack.c.l.bf16 %v580
        %v613 = vunpack.c.l.bf16 %v581
        %v614 = vunpack.c.l.bf16 %v582
        %v615 = vunpack.c.l.bf16 %v583
        %v616 = vunpack.c.l.bf16 %v584
        %v617 = vunpack.c.l.bf16 %v585
        %v618 = vunpack.c.l.bf16 %v586
        %v619 = vunpack.c.l.bf16 %v587
        %v620 = vunpack.c.l.bf16 %v588
        %v621 = vunpack.c.l.bf16 %v589
        %v622 = vunpack.c.l.bf16 %v590
        %v623 = vadd.f32 %v433, %v591
        %v624 = vadd.f32 %v436, %v592
        %v625 = vadd.f32 %v441, %v593
        %v626 = vadd.f32 %v444, %v594
        %v627 = vadd.f32 %v449, %v595
        %v628 = vadd.f32 %v452, %v596
        %v629 = vadd.f32 %v457, %v597
        %v630 = vadd.f32 %v460, %v598
        %v631 = vadd.f32 %v465, %v599
        %v632 = vadd.f32 %v468, %v600
        %v633 = vadd.f32 %v473, %v601
        %v634 = vadd.f32 %v476, %v602
        %v635 = vadd.f32 %v481, %v603
        %v636 = vadd.f32 %v484, %v604
        %v637 = vadd.f32 %v489, %v605
        %v638 = vadd.f32 %v492, %v606
        %v639 = vadd.f32 %v497, %v607
        %v640 = vadd.f32 %v500, %v608
        %v641 = vadd.f32 %v505, %v609
        %v642 = vadd.f32 %v508, %v610
        %v643 = vadd.f32 %v513, %v611
        %v644 = vadd.f32 %v516, %v612
        %v645 = vadd.f32 %v521, %v613
        %v646 = vadd.f32 %v524, %v614
        %v647 = vadd.f32 %v529, %v615
        %v648 = vadd.f32 %v532, %v616
        %v649 = vadd.f32 %v537, %v617
        %v650 = vadd.f32 %v540, %v618
        %v651 = vadd.f32 %v545, %v619
        %v652 = vadd.f32 %v548, %v620
        %v653 = vadd.f32 %v553, %v621
        %v654 = vadd.f32 %v556, %v622
        %v655 = vmax.f32 %v623, 0.0
        %v656 = vmax.f32 %v624, 0.0
        %v657 = vmax.f32 %v625, 0.0
        %v658 = vmax.f32 %v626, 0.0
        %v659 = vmax.f32 %v627, 0.0
        %v660 = vmax.f32 %v628, 0.0
        %v661 = vmax.f32 %v629, 0.0
        %v662 = vmax.f32 %v630, 0.0
        %v663 = vmax.f32 %v631, 0.0
        %v664 = vmax.f32 %v632, 0.0
        %v665 = vmax.f32 %v633, 0.0
        %v666 = vmax.f32 %v634, 0.0
        %v667 = vmax.f32 %v635, 0.0
        %v668 = vmax.f32 %v636, 0.0
        %v669 = vmax.f32 %v637, 0.0
        %v670 = vmax.f32 %v638, 0.0
        %v671 = vmax.f32 %v639, 0.0
        %v672 = vmax.f32 %v640, 0.0
        %v673 = vmax.f32 %v641, 0.0
        %v674 = vmax.f32 %v642, 0.0
        %v675 = vmax.f32 %v643, 0.0
        %v676 = vmax.f32 %v644, 0.0
        %v677 = vmax.f32 %v645, 0.0
        %v678 = vmax.f32 %v646, 0.0
        %v679 = vmax.f32 %v647, 0.0
        %v680 = vmax.f32 %v648, 0.0
        %v681 = vmax.f32 %v649, 0.0
        %v682 = vmax.f32 %v650, 0.0
        %v683 = vmax.f32 %v651, 0.0
        %v684 = vmax.f32 %v652, 0.0
        %v685 = vmax.f32 %v653, 0.0
        %v686 = vmax.f32 %v654, 0.0
        %vm687 = vcmask 523264
        %688 = vst.msk [vmem:[%s207] sm:$0xff] %vm687, %v655
        %689 = vst.msk [vmem:[%s207 + $0x8] sm:$0xff] %vm687, %v656
        %690 = vst.msk [vmem:[%s207 + $0x10] sm:$0xff] %vm687, %v657
        %691 = vst.msk [vmem:[%s207 + $0x18] sm:$0xff] %vm687, %v658
        %692 = vst.msk [vmem:[%s207 + $0x20] sm:$0xff] %vm687, %v659
        %693 = vst.msk [vmem:[%s207 + $0x28] sm:$0xff] %vm687, %v660
        %694 = vst.msk [vmem:[%s207 + $0x30] sm:$0xff] %vm687, %v661
        %695 = vst.msk [vmem:[%s207 + $0x38] sm:$0xff] %vm687, %v662
        %696 = vst.msk [vmem:[%s207 + $0x40] sm:$0xff] %vm687, %v663
        %697 = vst.msk [vmem:[%s207 + $0x48] sm:$0xff] %vm687, %v664
        %698 = vst.msk [vmem:[%s207 + $0x50] sm:$0xff] %vm687, %v665
        %699 = vst.msk [vmem:[%s207 + $0x58] sm:$0xff] %vm687, %v666
        %700 = vst.msk [vmem:[%s207 + $0x60] sm:$0xff] %vm687, %v667
        %701 = vst.msk [vmem:[%s207 + $0x68] sm:$0xff] %vm687, %v668
        %702 = vst.msk [vmem:[%s207 + $0x70] sm:$0xff] %vm687, %v669
        %703 = vst.msk [vmem:[%s207 + $0x78] sm:$0xff] %vm687, %v670
        %704 = vst.msk [vmem:[%s207 + $0x80] sm:$0xff] %vm687, %v671
        %705 = vst.msk [vmem:[%s207 + $0x88] sm:$0xff] %vm687, %v672
        %706 = vst.msk [vmem:[%s207 + $0x90] sm:$0xff] %vm687, %v673
        %707 = vst.msk [vmem:[%s207 + $0x98] sm:$0xff] %vm687, %v674
        %708 = vst.msk [vmem:[%s207 + $0xa0] sm:$0xff] %vm687, %v675
        %709 = vst.msk [vmem:[%s207 + $0xa8] sm:$0xff] %vm687, %v676
        %710 = vst.msk [vmem:[%s207 + $0xb0] sm:$0xff] %vm687, %v677
        %711 = vst.msk [vmem:[%s207 + $0xb8] sm:$0xff] %vm687, %v678
        %712 = vst.msk [vmem:[%s207 + $0xc0] sm:$0xff] %vm687, %v679
        %713 = vst.msk [vmem:[%s207 + $0xc8] sm:$0xff] %vm687, %v680
        %714 = vst.msk [vmem:[%s207 + $0xd0] sm:$0xff] %vm687, %v681
        %715 = vst.msk [vmem:[%s207 + $0xd8] sm:$0xff] %vm687, %v682
        %716 = vst.msk [vmem:[%s207 + $0xe0] sm:$0xff] %vm687, %v683
        %717 = vst.msk [vmem:[%s207 + $0xe8] sm:$0xff] %vm687, %v684
        %718 = vst.msk [vmem:[%s207 + $0xf0] sm:$0xff] %vm687, %v685
        %719 = vst.msk [vmem:[%s207 + $0xf8] sm:$0xff] %vm687, %v686
        %s720 = sand.u32 %s120, 1
        %s721 = scalar_lea.sflag [#allocation3], %s720
        %s722 = sand.u32 %s120, 1
        %s723 = smul.addr %s722, 256
        %s724 = scalar_lea.vmem [#allocation2], %s723
        // Predicated region
        $region37: #{bottleneck_forward.5} parent=35 // pred_check
          %p725 = pneg %p130
        $region38: #{bottleneck_forward.5} parent=35 // pred_check_branch
          %727 = sbr.rel (%p725) target = $region40
        $region39: #{bottleneck_forward.5} parent=35 // pred_region
          %s728 = smul.u32 32, %s18
          %s730 = ssub.s32 4096, 4096
          %731 = vsyncadd %s721, %s730
          %s732 = smul.addr %s728, 128
          %s733 = scalar_lea.hbm %s4, %s732
          %s734 = sshll.u32 %s724, 4
          %s735 = int_to_ptr.vmem [resolvable:$true] %s734
          %740 = dma.vmem_to_hbm [thread:$0]  %s735, 4096, %s733, %s721, 128, 128, 8
        $region40: #{bottleneck_forward.5} parent=35 // pred_fallthru
          _
      $region36: #{bottleneck_forward.5} parent=5 // pred_fallthru
        _
      %p741 = scmp.le.s32.totalorder 2, %s13
      // Predicated region
      $region41: #{bottleneck_forward.5} parent=5 // pred_check
        %p742 = pneg %p741
      $region42: #{bottleneck_forward.5} parent=5 // pred_check_branch
        %744 = sbr.rel (%p742) target = $region44
      $region43: #{bottleneck_forward.5} parent=5 // pred_region
        %s745 = ssub.s32 %s13, 2
        // Predicated region
        $region45: #{bottleneck_forward.5} parent=43 // pred_check
          %p746 = pneg %p136
        $region46: #{bottleneck_forward.5} parent=43 // pred_check_branch
          %748 = sbr.rel (%p746) target = $region48
        $region47: #{bottleneck_forward.5} parent=43 // pred_region
          %s749 = sand.u32 %s121, 1
          %s750 = scalar_lea.sflag [#allocation3], %s749
          %s751 = sand.u32 %s121, 1
          %s752 = smul.addr %s751, 256
          %s753 = scalar_lea.vmem [#allocation2], %s752
          %754 = dma.done %s750, 4096
        $region48: #{bottleneck_forward.5} parent=43 // pred_fallthru
          _
      $region44: #{bottleneck_forward.5} parent=5 // pred_fallthru
        _
    $region6: #{bottleneck_forward.5} parent=1 // loop_footer
      %s17 = sadd.s32 1, %s13
    $region7: #{bottleneck_forward.5} parent=1 // loop_footer_branch
      %12 = sbr.rel target = $region3
    $region8: #{bottleneck_forward.5} parent=1 // loop_exit
      _
    %755 = vsyncpa [#allocation3], 1
    %s756 = scalar_lea.sflag [#allocation3], 1
    %757 = vsyncpa %s756, 1

// kernel: bottleneck_forward.4
$region0: #{bottleneck_forward.4}
  #allocation0 [shape = 'u32[]', space=smem, size = 0x4, offset = 0x4, fixed_abs, tag = 'smem constant byte address 0x4 - core index']
  #allocation1 [shape = 'u32[144,128]{1,0:T(1,128)}', space=vmem, size = 0x12000, scoped, tag = 'internal scratch']
  %s0 = inlined_call_operand.vmem [shape: bf16[2,6,10,10,16], index: 0, kind: input, shape index: {}, may-alias: {0,1,2}]
  %s1 = inlined_call_operand.vmem [shape: bf16[2,6,10,10,16], index: 1, kind: input, shape index: {}, may-alias: {0,1,2}]
  %s2 = inlined_call_operand.vmem [shape: bf16[2,6,10,10,16], index: 2, kind: input, shape index: {}, may-alias: {0,1,2}]
  %s3 = inlined_call_operand.vmem [shape: bf16[3,3,3,16,16], index: 3, kind: input, shape index: {}]
  %s4 = inlined_call_operand.vmem [shape: f32[1,16], index: 4, kind: input, shape index: {}]
  %s5 = inlined_call_operand.vmem [shape: bf16[2,4,64,16], index: 5, kind: output, shape index: {}]
  %s6 = sld [smem:[#allocation0]]
  $region53: #{bottleneck_forward.4} parent=0
    _
  %s8 = ssub.s32 1, %s6
  %s9 = scalar_select 0, %s8, %s6
  loop: start=0, step=1, limit=10
  $region2: #{bottleneck_forward.4} parent=0 // loop_pre_header
    _
  $region3: #{bottleneck_forward.4} parent=0 // loop_header
    %s11 = sphi 0, %s15
    %p12 = scmp.ge.s32.totalorder %s11, 10
    %s18 = sphi 0, %s30
    %s19 = sphi 0, %s26
    %s20 = sphi 0, %s18
    %s21 = sphi 0, %s19
    %s22 = sphi 0, %s20
    %s23 = sphi 0, %s21
    %s35 = sphi 0, %s37
    %s38 = sphi 0, %s35
    %s39 = sphi 0, %s38
    %s55 = sphi 0, %s39
    %s65 = sphi 0, %s67
    %s68 = sphi 0, %s65
    %s69 = sphi 0, %s68
    %s85 = sphi 0, %s69
    %s95 = sphi 0, %s97
    %s98 = sphi 0, %s95
    %s99 = sphi 0, %s98
    %s115 = sphi 0, %s99
    %s119 = sphi 0, %s119
    %s121 = sphi 0, %s119
    %s122 = sphi 0, %s121
    %s136 = sphi 0, %s122
    %s140 = sphi 0, %s140
    %s142 = sphi 0, %s140
    %s143 = sphi 0, %s142
    %s157 = sphi 0, %s143
    %s165 = sphi 0, %s167
    %s168 = sphi 0, %s165
    %s169 = sphi 0, %s168
    %s185 = sphi 0, %s169
  $region4: #{bottleneck_forward.4} parent=0 // loop_header_branch
    %14 = sbr.rel (%p12) target = $region8
  $region5: #{bottleneck_forward.4} parent=0 // loop_body
    %s16 = ssub.s32 %s11, 1
    %s17 = ssub.s32 %s11, 2
    %s24 = sadd.s32 1, %s19
    %p25 = scmp.ge.s32.totalorder %s24, 4
    %s26 = scalar_select %p25, 0, %s24
    %s27 = sadd.s32 1, %s18
    %s28 = scalar_select %p25, %s27, %s18
    %p29 = scmp.ge.s32.totalorder %s28, 2
    %s30 = scalar_select %p29, 0, %s28
    %s31 = ssub.s32 %s18, %s30
    %s32 = ssub.s32 %s19, %s26
    %s33 = sor.u32 %s31, %s32
    %p34 = scmp.eq.s32.totalorder %s33, 0
    %s36 = sadd.s32 %s35, 1
    %s37 = scalar_select %p34, %s35, %s36
    %p40 = pneg %p34
    %p41 = scmp.eq.s32.totalorder %s11, 7
    %p42 = por %p40, %p41
    %p43 = scmp.ne.s32.totalorder %s35, %s38
    %p44 = scmp.eq.s32.totalorder %s11, 0
    %p45 = por %p43, %p44
    %p46 = scmp.ne.s32.totalorder %s35, %s38
    %p47 = scmp.eq.s32.totalorder %s16, 7
    %p48 = por %p46, %p47
    %p49 = scmp.ne.s32.totalorder %s38, %s39
    %p50 = scmp.eq.s32.totalorder %s16, 0
    %p51 = por %p49, %p50
    %p52 = scmp.ne.s32.totalorder %s38, %s39
    %p53 = scmp.eq.s32.totalorder %s17, 7
    %p54 = por %p52, %p53
    %p56 = scmp.ne.s32.totalorder %s39, %s55
    %p57 = scmp.eq.s32.totalorder %s17, 0
    %p58 = por %p56, %p57
    %s59 = sadd.s32 %s19, 1
    %s60 = sadd.s32 %s26, 1
    %s61 = ssub.s32 %s18, %s30
    %s62 = ssub.s32 %s59, %s60
    %s63 = sor.u32 %s61, %s62
    %p64 = scmp.eq.s32.totalorder %s63, 0
    %s66 = sadd.s32 %s65, 1
    %s67 = scalar_select %p64, %s65, %s66
    %p70 = pneg %p64
    %p71 = scmp.eq.s32.totalorder %s11, 7
    %p72 = por %p70, %p71
    %p73 = scmp.ne.s32.totalorder %s65, %s68
    %p74 = scmp.eq.s32.totalorder %s11, 0
    %p75 = por %p73, %p74
    %p76 = scmp.ne.s32.totalorder %s65, %s68
    %p77 = scmp.eq.s32.totalorder %s16, 7
    %p78 = por %p76, %p77
    %p79 = scmp.ne.s32.totalorder %s68, %s69
    %p80 = scmp.eq.s32.totalorder %s16, 0
    %p81 = por %p79, %p80
    %p82 = scmp.ne.s32.totalorder %s68, %s69
    %p83 = scmp.eq.s32.totalorder %s17, 7
    %p84 = por %p82, %p83
    %p86 = scmp.ne.s32.totalorder %s69, %s85
    %p87 = scmp.eq.s32.totalorder %s17, 0
    %p88 = por %p86, %p87
    %s89 = sadd.s32 %s19, 2
    %s90 = sadd.s32 %s26, 2
    %s91 = ssub.s32 %s18, %s30
    %s92 = ssub.s32 %s89, %s90
    %s93 = sor.u32 %s91, %s92
    %p94 = scmp.eq.s32.totalorder %s93, 0
    %s96 = sadd.s32 %s95, 1
    %s97 = scalar_select %p94, %s95, %s96
    %p100 = pneg %p94
    %p101 = scmp.eq.s32.totalorder %s11, 7
    %p102 = por %p100, %p101
    %p103 = scmp.ne.s32.totalorder %s95, %s98
    %p104 = scmp.eq.s32.totalorder %s11, 0
    %p105 = por %p103, %p104
    %p106 = scmp.ne.s32.totalorder %s95, %s98
    %p107 = scmp.eq.s32.totalorder %s16, 7
    %p108 = por %p106, %p107
    %p109 = scmp.ne.s32.totalorder %s98, %s99
    %p110 = scmp.eq.s32.totalorder %s16, 0
    %p111 = por %p109, %p110
    %p112 = scmp.ne.s32.totalorder %s98, %s99
    %p113 = scmp.eq.s32.totalorder %s17, 7
    %p114 = por %p112, %p113
    %p116 = scmp.ne.s32.totalorder %s99, %s115
    %p117 = scmp.eq.s32.totalorder %s17, 0
    %p118 = por %p116, %p117
    %s120 = sadd.s32 %s119, 1
    %p123 = scmp.eq.s32.totalorder %s11, 7
    %p124 = scmp.ne.s32.totalorder %s119, %s121
    %p125 = scmp.eq.s32.totalorder %s11, 0
    %p126 = por %p124, %p125
    %p127 = scmp.ne.s32.totalorder %s119, %s121
    %p128 = scmp.eq.s32.totalorder %s16, 7
    %p129 = por %p127, %p128
    %p130 = scmp.ne.s32.totalorder %s121, %s122
    %p131 = scmp.eq.s32.totalorder %s16, 0
    %p132 = por %p130, %p131
    %p133 = scmp.ne.s32.totalorder %s121, %s122
    %p134 = scmp.eq.s32.totalorder %s17, 7
    %p135 = por %p133, %p134
    %p137 = scmp.ne.s32.totalorder %s122, %s136
    %p138 = scmp.eq.s32.totalorder %s17, 0
    %p139 = por %p137, %p138
    %s141 = sadd.s32 %s140, 1
    %p144 = scmp.eq.s32.totalorder %s11, 7
    %p145 = scmp.ne.s32.totalorder %s140, %s142
    %p146 = scmp.eq.s32.totalorder %s11, 0
    %p147 = por %p145, %p146
    %p148 = scmp.ne.s32.totalorder %s140, %s142
    %p149 = scmp.eq.s32.totalorder %s16, 7
    %p150 = por %p148, %p149
    %p151 = scmp.ne.s32.totalorder %s142, %s143
    %p152 = scmp.eq.s32.totalorder %s16, 0
    %p153 = por %p151, %p152
    %p154 = scmp.ne.s32.totalorder %s142, %s143
    %p155 = scmp.eq.s32.totalorder %s17, 7
    %p156 = por %p154, %p155
    %p158 = scmp.ne.s32.totalorder %s143, %s157
    %p159 = scmp.eq.s32.totalorder %s17, 0
    %p160 = por %p158, %p159
    %s161 = ssub.s32 %s18, %s30
    %s162 = ssub.s32 %s19, %s26
    %s163 = sor.u32 %s161, %s162
    %p164 = scmp.eq.s32.totalorder %s163, 0
    %s166 = sadd.s32 %s165, 1
    %s167 = scalar_select %p164, %s165, %s166
    %p170 = pneg %p164
    %p171 = scmp.eq.s32.totalorder %s11, 7
    %p172 = por %p170, %p171
    %p173 = scmp.ne.s32.totalorder %s165, %s168
    %p174 = scmp.eq.s32.totalorder %s11, 0
    %p175 = por %p173, %p174
    %p176 = scmp.ne.s32.totalorder %s165, %s168
    %p177 = scmp.eq.s32.totalorder %s16, 7
    %p178 = por %p176, %p177
    %p179 = scmp.ne.s32.totalorder %s168, %s169
    %p180 = scmp.eq.s32.totalorder %s16, 0
    %p181 = por %p179, %p180
    %p182 = scmp.ne.s32.totalorder %s168, %s169
    %p183 = scmp.eq.s32.totalorder %s17, 7
    %p184 = por %p182, %p183
    %p186 = scmp.ne.s32.totalorder %s169, %s185
    %p187 = scmp.eq.s32.totalorder %s17, 0
    %p188 = por %p186, %p187
    %p189 = scmp.le.s32.totalorder 1, %s11
    %p190 = scmp.lt.s32.totalorder %s11, 9
    %p191 = pnand %p189, %p190
    %p192 = pneg %p191
    // Predicated region
    $region9: #{bottleneck_forward.4} parent=5 // pred_check
      _
    $region10: #{bottleneck_forward.4} parent=5 // pred_check_branch
      %194 = sbr.rel (%p191) target = $region12
    $region11: #{bottleneck_forward.4} parent=5 // pred_region
      %s195 = ssub.s32 %s11, 1
      // Predicated region
      $region13: #{bottleneck_forward.4} parent=11 // pred_check
        %p196 = pneg %p132
      $region14: #{bottleneck_forward.4} parent=11 // pred_check_branch
        %198 = sbr.rel (%p196) target = $region16
      $region15: #{bottleneck_forward.4} parent=11 // pred_region
        _
      $region16: #{bottleneck_forward.4} parent=11 // pred_fallthru
        _
      // Predicated region
      $region17: #{bottleneck_forward.4} parent=11 // pred_check
        %p199 = pneg %p153
      $region18: #{bottleneck_forward.4} parent=11 // pred_check_branch
        %201 = sbr.rel (%p199) target = $region20
      $region19: #{bottleneck_forward.4} parent=11 // pred_region
        _
      $region20: #{bottleneck_forward.4} parent=11 // pred_fallthru
        _
    $region12: #{bottleneck_forward.4} parent=5 // pred_fallthru
      _
    %p202 = scmp.lt.s32.totalorder %s11, 8
    // Predicated region
    $region21: #{bottleneck_forward.4} parent=5 // pred_check
      %p203 = pneg %p202
    $region22: #{bottleneck_forward.4} parent=5 // pred_check_branch
      %205 = sbr.rel (%p203) target = $region24
    $region23: #{bottleneck_forward.4} parent=5 // pred_region
      // Predicated region
      $region25: #{bottleneck_forward.4} parent=23 // pred_check
        %p206 = pneg %p45
      $region26: #{bottleneck_forward.4} parent=23 // pred_check_branch
        %208 = sbr.rel (%p206) target = $region28
      $region27: #{bottleneck_forward.4} parent=23 // pred_region
        %p209 = scmp.lt.s32.totalorder %s18, 1
        %s210 = scalar_select %p209, %s18, 1
        %p211 = scmp.lt.s32.totalorder %s19, 5
        %s212 = scalar_select %p211, %s19, 5
        %s213 = smul.addr %s212, 20
        %s214 = smul.addr %s210, 120
        %s215 = sadd.s32 %s213, %s214
        %s216 = smul.addr %s215, 4
        %s217 = scalar_lea.vmem %s0, %s216
      $region28: #{bottleneck_forward.4} parent=23 // pred_fallthru
        _
      // Predicated region
      $region29: #{bottleneck_forward.4} parent=23 // pred_check
        %p218 = pneg %p75
      $region30: #{bottleneck_forward.4} parent=23 // pred_check_branch
        %220 = sbr.rel (%p218) target = $region32
      $region31: #{bottleneck_forward.4} parent=23 // pred_region
        %s221 = sadd.s32 %s19, 1
        %p222 = scmp.lt.s32.totalorder %s18, 1
        %s223 = scalar_select %p222, %s18, 1
        %p224 = scmp.lt.s32.totalorder %s221, 5
        %s225 = scalar_select %p224, %s221, 5
        %s226 = smul.addr %s225, 20
        %s227 = smul.addr %s223, 120
        %s228 = sadd.s32 %s226, %s227
        %s229 = smul.addr %s228, 4
        %s230 = scalar_lea.vmem %s1, %s229
        %s231 = sadd.s32 %s19, 1
      $region32: #{bottleneck_forward.4} parent=23 // pred_fallthru
        _
      // Predicated region
      $region33: #{bottleneck_forward.4} parent=23 // pred_check
        %p232 = pneg %p105
      $region34: #{bottleneck_forward.4} parent=23 // pred_check_branch
        %234 = sbr.rel (%p232) target = $region36
      $region35: #{bottleneck_forward.4} parent=23 // pred_region
        %s235 = sadd.s32 %s19, 2
        %p236 = scmp.lt.s32.totalorder %s18, 1
        %s237 = scalar_select %p236, %s18, 1
        %p238 = scmp.lt.s32.totalorder %s235, 5
        %s239 = scalar_select %p238, %s235, 5
        %s240 = smul.addr %s239, 20
        %s241 = smul.addr %s237, 120
        %s242 = sadd.s32 %s240, %s241
        %s243 = smul.addr %s242, 4
        %s244 = scalar_lea.vmem %s2, %s243
        %s245 = sadd.s32 %s19, 2
      $region36: #{bottleneck_forward.4} parent=23 // pred_fallthru
        _
    $region24: #{bottleneck_forward.4} parent=5 // pred_fallthru
      _
    %p246 = scmp.le.s32.totalorder 1, %s11
    %p247 = scmp.lt.s32.totalorder %s11, 9
    %p248 = pnand %p246, %p247
    %p249 = pneg %p248
    // Predicated region
    $region37: #{bottleneck_forward.4} parent=5 // pred_check
      _
    $region38: #{bottleneck_forward.4} parent=5 // pred_check_branch
      %251 = sbr.rel (%p248) target = $region40
    $region39: #{bottleneck_forward.4} parent=5 // pred_region
      %s252 = ssub.s32 %s11, 1
      %p253 = scmp.lt.s32.totalorder %s20, 1
      %s254 = scalar_select %p253, %s20, 1
      %p255 = scmp.lt.s32.totalorder %s21, 5
      %s256 = scalar_select %p255, %s21, 5
      %s257 = smul.addr %s256, 20
      %s258 = smul.addr %s254, 120
      %s259 = sadd.s32 %s257, %s258
      %s260 = smul.addr %s259, 4
      %s261 = scalar_lea.vmem %s0, %s260
      %p262 = pneg %p51
      %p263 = pneg %p48
      %s264 = sadd.s32 %s21, 1
      %p265 = scmp.lt.s32.totalorder %s20, 1
      %s266 = scalar_select %p265, %s20, 1
      %p267 = scmp.lt.s32.totalorder %s264, 5
      %s268 = scalar_select %p267, %s264, 5
      %s269 = smul.addr %s268, 20
      %s270 = smul.addr %s266, 120
      %s271 = sadd.s32 %s269, %s270
      %s272 = smul.addr %s271, 4
      %s273 = scalar_lea.vmem %s1, %s272
      %p274 = pneg %p81
      %p275 = pneg %p78
      %s276 = sadd.s32 %s21, 2
      %p277 = scmp.lt.s32.totalorder %s20, 1
      %s278 = scalar_select %p277, %s20, 1
      %p279 = scmp.lt.s32.totalorder %s276, 5
      %s280 = scalar_select %p279, %s276, 5
      %s281 = smul.addr %s280, 20
      %s282 = smul.addr %s278, 120
      %s283 = sadd.s32 %s281, %s282
      %s284 = smul.addr %s283, 4
      %s285 = scalar_lea.vmem %s2, %s284
      %p286 = pneg %p111
      %p287 = pneg %p108
      %p288 = pneg %p132
      %p289 = pneg %p129
      %p290 = pneg %p153
      %p291 = pneg %p150
      %p292 = pneg %p181
      %p293 = pneg %p178
      %p294 = scmp.lt.s32.totalorder %s20, 1
      %s295 = scalar_select %p294, %s20, 1
      %p296 = scmp.lt.s32.totalorder %s21, 3
      %s297 = scalar_select %p296, %s21, 3
      %s298 = smul.addr %s297, 8
      %s299 = smul.addr %s295, 32
      %s300 = sadd.s32 %s298, %s299
      %s301 = smul.addr %s300, 4
      %s302 = scalar_lea.vmem %s5, %s301
      %p303 = scmp.lt.s32.totalorder %s20, 1
      %s304 = scalar_select %p303, %s20, 1
      %p305 = scmp.lt.s32.totalorder %s21, 5
      %s306 = scalar_select %p305, %s21, 5
      %s307 = smul.addr %s306, 20
      %s308 = smul.addr %s304, 120
      %s309 = sadd.s32 %s307, %s308
      %s310 = smul.addr %s309, 4
      %s311 = scalar_lea.vmem %s0, %s310
      %s312 = sadd.s32 %s21, 1
      %p313 = scmp.lt.s32.totalorder %s20, 1
      %s314 = scalar_select %p313, %s20, 1
      %p315 = scmp.lt.s32.totalorder %s312, 5
      %s316 = scalar_select %p315, %s312, 5
      %s317 = smul.addr %s316, 20
      %s318 = smul.addr %s314, 120
      %s319 = sadd.s32 %s317, %s318
      %s320 = smul.addr %s319, 4
      %s321 = scalar_lea.vmem %s1, %s320
      %s322 = sadd.s32 %s21, 1
      %s323 = sadd.s32 %s21, 2
      %p324 = scmp.lt.s32.totalorder %s20, 1
      %s325 = scalar_select %p324, %s20, 1
      %p326 = scmp.lt.s32.totalorder %s323, 5
      %s327 = scalar_select %p326, %s323, 5
      %s328 = smul.addr %s327, 20
      %s329 = smul.addr %s325, 120
      %s330 = sadd.s32 %s328, %s329
      %s331 = smul.addr %s330, 4
      %s332 = scalar_lea.vmem %s2, %s331
      %s333 = sadd.s32 %s21, 2
      %p334 = scmp.lt.s32.totalorder %s20, 1
      %s335 = scalar_select %p334, %s20, 1
      %p336 = scmp.lt.s32.totalorder %s21, 3
      %s337 = scalar_select %p336, %s21, 3
      %s338 = smul.addr %s337, 8
      %s339 = smul.addr %s335, 32
      %s340 = sadd.s32 %s338, %s339
      %s341 = smul.addr %s340, 4
      %s342 = scalar_lea.vmem %s5, %s341
      %v344 = vld [vmem:[%s311] sm:$0xf]
      %v345 = vld [vmem:[%s311 + $0x8] sm:$0xf]
      %v346 = vld [vmem:[%s311 + $0x10] sm:$0xf]
      %v347 = vld [vmem:[%s311 + $0x18] sm:$0xf]
      %v348 = vld [vmem:[%s311 + $0x20] sm:$0xf]
      %v349 = vld [vmem:[%s311 + $0x28] sm:$0xf]
      %v350 = vld [vmem:[%s311 + $0x30] sm:$0xf]
      %v351 = vld [vmem:[%s311 + $0x38] sm:$0xf]
      %v352 = vld [vmem:[%s3] sm:$0xf]
      %v353 = vld [vmem:[%s3 + $0x4] sm:$0xf]
      %v354 = vld [vmem:[%s311 + $0x4] sm:$0x1]
      %v355 = vld [vmem:[%s311 + $0xc] sm:$0x1]
      %v356 = vld [vmem:[%s311 + $0x14] sm:$0x1]
      %v357 = vld [vmem:[%s311 + $0x1c] sm:$0x1]
      %v358 = vld [vmem:[%s311 + $0x24] sm:$0x1]
      %v359 = vld [vmem:[%s311 + $0x2c] sm:$0x1]
      %v360 = vld [vmem:[%s311 + $0x34] sm:$0x1]
      %v361 = vld [vmem:[%s311 + $0x3c] sm:$0x1]
      %vm362 = vsmask.f32 3328
      %vm363 = vsmask.f32 7440
      %vm364 = vmor %vm362, %vm363
      %v366 = vshrl.u32 %v344, 16
      %v368 = vrot.slane %v366, 4
      %v369 = vshll.u32 %v344, 16
      %v371 = vrot.slane %v369, 5
      %v372 = vor.u32 %v368, %v371
      %v373 = vrot.slane %v372, 4
      %v375 = vshll.u32 %v354, 16
      %v377 = vrot.slane %v375, 5
      %v378 = vsel %vm364, %v373, %v377
      %v380 = vshrl.u32 %v345, 16
      %v382 = vrot.slane %v380, 4
      %v383 = vshll.u32 %v345, 16
      %v385 = vrot.slane %v383, 5
      %v386 = vor.u32 %v382, %v385
      %v387 = vrot.slane %v386, 4
      %v389 = vshll.u32 %v355, 16
      %v391 = vrot.slane %v389, 5
      %v392 = vsel %vm364, %v387, %v391
      %v394 = vshrl.u32 %v346, 16
      %v396 = vrot.slane %v394, 4
      %v397 = vshll.u32 %v346, 16
      %v399 = vrot.slane %v397, 5
      %v400 = vor.u32 %v396, %v399
      %v401 = vrot.slane %v400, 4
      %v403 = vshll.u32 %v356, 16
      %v405 = vrot.slane %v403, 5
      %v406 = vsel %vm364, %v401, %v405
      %v408 = vshrl.u32 %v347, 16
      %v410 = vrot.slane %v408, 4
      %v411 = vshll.u32 %v347, 16
      %v413 = vrot.slane %v411, 5
      %v414 = vor.u32 %v410, %v413
      %v415 = vrot.slane %v414, 4
      %v417 = vshll.u32 %v357, 16
      %v419 = vrot.slane %v417, 5
      %v420 = vsel %vm364, %v415, %v419
      %v422 = vshrl.u32 %v348, 16
      %v424 = vrot.slane %v422, 4
      %v425 = vshll.u32 %v348, 16
      %v427 = vrot.slane %v425, 5
      %v428 = vor.u32 %v424, %v427
      %v429 = vrot.slane %v428, 4
      %v431 = vshll.u32 %v358, 16
      %v433 = vrot.slane %v431, 5
      %v434 = vsel %vm364, %v429, %v433
      %v436 = vshrl.u32 %v349, 16
      %v438 = vrot.slane %v436, 4
      %v439 = vshll.u32 %v349, 16
      %v441 = vrot.slane %v439, 5
      %v442 = vor.u32 %v438, %v441
      %v443 = vrot.slane %v442, 4
      %v445 = vshll.u32 %v359, 16
      %v447 = vrot.slane %v445, 5
      %v448 = vsel %vm364, %v443, %v447
      %v450 = vshrl.u32 %v350, 16
      %v452 = vrot.slane %v450, 4
      %v453 = vshll.u32 %v350, 16
      %v455 = vrot.slane %v453, 5
      %v456 = vor.u32 %v452, %v455
      %v457 = vrot.slane %v456, 4
      %v459 = vshll.u32 %v360, 16
      %v461 = vrot.slane %v459, 5
      %v462 = vsel %vm364, %v457, %v461
      %v464 = vshrl.u32 %v351, 16
      %v466 = vrot.slane %v464, 4
      %v467 = vshll.u32 %v351, 16
      %v469 = vrot.slane %v467, 5
      %v470 = vor.u32 %v466, %v469
      %v471 = vrot.slane %v470, 4
      %v473 = vshll.u32 %v361, 16
      %v475 = vrot.slane %v473, 5
      %v476 = vsel %vm364, %v471, %v475
      %s477 = scalar_lea.vmem %s3, 8
      %v478 = vld [vmem:[%s477] sm:$0xf]
      %v479 = vld [vmem:[%s477 + $0x4] sm:$0xf]
      %v480 = vunpack.c.l.b16 %v378
      %v481 = vunpack.c.l.b16 %v392
      %v482 = vunpack.c.l.b16 %v406
      %v483 = vunpack.c.l.b16 %v420
      %v484 = vunpack.c.l.b16 %v434
      %v485 = vunpack.c.l.b16 %v448
      %v486 = vunpack.c.l.b16 %v462
      %v487 = vunpack.c.l.b16 %v476
      %v488 = vpack.c.b16 %v481, %v480
      %v489 = vpack.c.b16 %v483, %v482
      %v490 = vpack.c.b16 %v485, %v484
      %v491 = vpack.c.b16 %v487, %v486
      %v494 = vunpack.c.l.b16 %v478
      %v495 = vunpack.c.l.b16 %v479
      %v496 = vpack.c.b16 %v495, %v494
      %vm498 = vcmask 130048
      %v500 = vsel %vm498, %v488, 0
      %v503 = vsel %vm498, %v489, 0
      %v506 = vsel %vm498, %v490, 0
      %v509 = vsel %vm498, %v491, 0
      %511 = vmatprep.subr.bf16.mxu0 0
      %512 = vmatpush1.bf16.msra.mxu0 0
      %513 = vmatprep.subr.bf16.mxu0 0
      %514 = vmatpush1.bf16.msra.mxu0 0
      %515 = vmatprep.subr.bf16.mxu0 0
      %516 = vmatpush1.bf16.msra.mxu0 0
      %517 = vmatprep.subr.bf16.mxu0 0
      %518 = vmatpush1.bf16.msra.mxu0 0
      %519 = vmatprep.subr.bf16.mxu0 0
      %520 = vmatpush1.bf16.msra.mxu0 0
      %521 = vmatprep.subr.bf16.mxu0 0
      %522 = vmatpush1.bf16.msra.mxu0 0
      %523 = vmatprep.subr.bf16.mxu0 0
      %524 = vmatpush1.bf16.msra.mxu0 0
      %525 = vmatprep.subr.bf16.mxu0 0
      %526 = vmatpush1.bf16.msra.mxu0 %v496
      %527 = vmatprep.subr.bf16.mxu0 0
      %528 = vmatpush2.bf16.msra.mxu0 0
      %529 = vmatprep.subr.bf16.mxu0 0
      %530 = vmatpush2.bf16.msra.mxu0 0
      %531 = vmatprep.subr.bf16.mxu0 0
      %532 = vmatpush2.bf16.msra.mxu0 0
      %533 = vmatprep.subr.bf16.mxu0 0
      %534 = vmatpush2.bf16.msra.mxu0 0
      %535 = vmatprep.subr.bf16.mxu0 0
      %536 = vmatpush2.bf16.msra.mxu0 0
      %537 = vmatprep.subr.bf16.mxu0 0
      %538 = vmatpush2.bf16.msra.mxu0 0
      %539 = vmatprep.subr.bf16.mxu0 0
      %540 = vmatpush2.bf16.msra.mxu0 0
      %541 = vmatprep.subr.bf16.mxu0 0
      %542 = vmatpush2.bf16.msra.mxu0 0
      %543 = vmatprep.mubr.bf16.mxu0 0
      %544 = vmatmul.mubr.bf16.gmra.mxu0 %v500
      %v545 = vpop.f32.mrf.mxu0
      %v546 = vadd.f32 0.0, %v545
      %v547 = vpop.f32.mrf.mxu0
      %v548 = vpop.f32.mrf.mxu0
      %v549 = vadd.f32 0.0, %v548
      %v550 = vpop.f32.mrf.mxu0
      %551 = vmatprep.mubr.bf16.mxu0 0
      %552 = vmatmul.mubr.bf16.gmra.mxu0 %v503
      %v553 = vpop.f32.mrf.mxu0
      %v554 = vadd.f32 0.0, %v553
      %v555 = vpop.f32.mrf.mxu0
      %v556 = vpop.f32.mrf.mxu0
      %v557 = vadd.f32 0.0, %v556
      %v558 = vpop.f32.mrf.mxu0
      %559 = vmatprep.mubr.bf16.mxu0 0
      %560 = vmatmul.mubr.bf16.gmra.mxu0 %v506
      %v561 = vpop.f32.mrf.mxu0
      %v562 = vadd.f32 0.0, %v561
      %v563 = vpop.f32.mrf.mxu0
      %v564 = vpop.f32.mrf.mxu0
      %v565 = vadd.f32 0.0, %v564
      %v566 = vpop.f32.mrf.mxu0
      %567 = vmatprep.mubr.bf16.mxu0 0
      %568 = vmatmul.mubr.bf16.gmra.mxu0 %v509
      %v569 = vpop.f32.mrf.mxu0
      %v570 = vadd.f32 0.0, %v569
      %v571 = vpop.f32.mrf.mxu0
      %v572 = vpop.f32.mrf.mxu0
      %v573 = vadd.f32 0.0, %v572
      %v574 = vpop.f32.mrf.mxu0
      %575 = vdwg.mxu0
      %v584 = vunpack.c.l.b16 %v344
      %v585 = vunpack.c.l.b16 %v345
      %v586 = vunpack.c.l.b16 %v346
      %v587 = vunpack.c.l.b16 %v347
      %v588 = vunpack.c.l.b16 %v348
      %v589 = vunpack.c.l.b16 %v349
      %v590 = vunpack.c.l.b16 %v350
      %v591 = vunpack.c.l.b16 %v351
      %v592 = vpack.c.b16 %v585, %v584
      %v593 = vpack.c.b16 %v587, %v586
      %v594 = vpack.c.b16 %v589, %v588
      %v595 = vpack.c.b16 %v591, %v590
      %v598 = vunpack.c.l.b16 %v352
      %v599 = vunpack.c.l.b16 %v353
      %v600 = vpack.c.b16 %v599, %v598
      %v603 = vsel %vm498, %v592, 0
      %v606 = vsel %vm498, %v593, 0
      %v609 = vsel %vm498, %v594, 0
      %v612 = vsel %vm498, %v595, 0
      %614 = vmatprep.subr.bf16.mxu0 0
      %615 = vmatpush1.bf16.msra.mxu0 0
      %616 = vmatprep.subr.bf16.mxu0 0
      %617 = vmatpush1.bf16.msra.mxu0 0
      %618 = vmatprep.subr.bf16.mxu0 0
      %619 = vmatpush1.bf16.msra.mxu0 0
      %620 = vmatprep.subr.bf16.mxu0 0
      %621 = vmatpush1.bf16.msra.mxu0 0
      %622 = vmatprep.subr.bf16.mxu0 0
      %623 = vmatpush1.bf16.msra.mxu0 0
      %624 = vmatprep.subr.bf16.mxu0 0
      %625 = vmatpush1.bf16.msra.mxu0 0
      %626 = vmatprep.subr.bf16.mxu0 0
      %627 = vmatpush1.bf16.msra.mxu0 0
      %628 = vmatprep.subr.bf16.mxu0 0
      %629 = vmatpush1.bf16.msra.mxu0 %v600
      %630 = vmatprep.subr.bf16.mxu0 0
      %631 = vmatpush2.bf16.msra.mxu0 0
      %632 = vmatprep.subr.bf16.mxu0 0
      %633 = vmatpush2.bf16.msra.mxu0 0
      %634 = vmatprep.subr.bf16.mxu0 0
      %635 = vmatpush2.bf16.msra.mxu0 0
      %636 = vmatprep.subr.bf16.mxu0 0
      %637 = vmatpush2.bf16.msra.mxu0 0
      %638 = vmatprep.subr.bf16.mxu0 0
      %639 = vmatpush2.bf16.msra.mxu0 0
      %640 = vmatprep.subr.bf16.mxu0 0
      %641 = vmatpush2.bf16.msra.mxu0 0
      %642 = vmatprep.subr.bf16.mxu0 0
      %643 = vmatpush2.bf16.msra.mxu0 0
      %644 = vmatprep.subr.bf16.mxu0 0
      %645 = vmatpush2.bf16.msra.mxu0 0
      %646 = vmatprep.mubr.bf16.mxu0 0
      %647 = vmatmul.mubr.bf16.gmra.mxu0 %v603
      %v648 = vpop.f32.mrf.mxu0
      %v649 = vadd.f32 %v546, %v648
      %v650 = vpop.f32.mrf.mxu0
      %v651 = vpop.f32.mrf.mxu0
      %v652 = vadd.f32 %v549, %v651
      %v653 = vpop.f32.mrf.mxu0
      %654 = vmatprep.mubr.bf16.mxu0 0
      %655 = vmatmul.mubr.bf16.gmra.mxu0 %v606
      %v656 = vpop.f32.mrf.mxu0
      %v657 = vadd.f32 %v554, %v656
      %v658 = vpop.f32.mrf.mxu0
      %v659 = vpop.f32.mrf.mxu0
      %v660 = vadd.f32 %v557, %v659
      %v661 = vpop.f32.mrf.mxu0
      %662 = vmatprep.mubr.bf16.mxu0 0
      %663 = vmatmul.mubr.bf16.gmra.mxu0 %v609
      %v664 = vpop.f32.mrf.mxu0
      %v665 = vadd.f32 %v562, %v664
      %v666 = vpop.f32.mrf.mxu0
      %v667 = vpop.f32.mrf.mxu0
      %v668 = vadd.f32 %v565, %v667
      %v669 = vpop.f32.mrf.mxu0
      %670 = vmatprep.mubr.bf16.mxu0 0
      %671 = vmatmul.mubr.bf16.gmra.mxu0 %v612
      %v672 = vpop.f32.mrf.mxu0
      %v673 = vadd.f32 %v570, %v672
      %v674 = vpop.f32.mrf.mxu0
      %v675 = vpop.f32.mrf.mxu0
      %v676 = vadd.f32 %v573, %v675
      %v677 = vpop.f32.mrf.mxu0
      %678 = vdwg.mxu0
      %v679 = vld [vmem:[%s311] sm:$0xe]
      %v680 = vld [vmem:[%s311 + $0x8] sm:$0xe]
      %v681 = vld [vmem:[%s311 + $0x10] sm:$0xe]
      %v682 = vld [vmem:[%s311 + $0x18] sm:$0xe]
      %v683 = vld [vmem:[%s311 + $0x20] sm:$0xe]
      %v684 = vld [vmem:[%s311 + $0x28] sm:$0xe]
      %v685 = vld [vmem:[%s311 + $0x30] sm:$0xe]
      %v686 = vld [vmem:[%s311 + $0x38] sm:$0xe]
      %vm703 = vcmask 1042432
      %vm704 = vcmask 1046532
      %vm705 = vmor %vm703, %vm704
      %v706 = vrot.slane %v679, 5
      %v707 = vrot.slane %v706, 4
      %v708 = vrot.slane %v354, 5
      %v709 = vsel %vm705, %v707, %v708
      %v710 = vrot.slane %v680, 5
      %v711 = vrot.slane %v710, 4
      %v712 = vrot.slane %v355, 5
      %v713 = vsel %vm705, %v711, %v712
      %v714 = vrot.slane %v681, 5
      %v715 = vrot.slane %v714, 4
      %v716 = vrot.slane %v356, 5
      %v717 = vsel %vm705, %v715, %v716
      %v718 = vrot.slane %v682, 5
      %v719 = vrot.slane %v718, 4
      %v720 = vrot.slane %v357, 5
      %v721 = vsel %vm705, %v719, %v720
      %v722 = vrot.slane %v683, 5
      %v723 = vrot.slane %v722, 4
      %v724 = vrot.slane %v358, 5
      %v725 = vsel %vm705, %v723, %v724
      %v726 = vrot.slane %v684, 5
      %v727 = vrot.slane %v726, 4
      %v728 = vrot.slane %v359, 5
      %v729 = vsel %vm705, %v727, %v728
      %v730 = vrot.slane %v685, 5
      %v731 = vrot.slane %v730, 4
      %v732 = vrot.slane %v360, 5
      %v733 = vsel %vm705, %v731, %v732
      %v734 = vrot.slane %v686, 5
      %v735 = vrot.slane %v734, 4
      %v736 = vrot.slane %v361, 5
      %v737 = vsel %vm705, %v735, %v736
      %s738 = scalar_lea.vmem %s3, 16
      %v739 = vld [vmem:[%s738] sm:$0xf]
      %v740 = vld [vmem:[%s738 + $0x4] sm:$0xf]
      %v741 = vunpack.c.l.b16 %v709
      %v742 = vunpack.c.l.b16 %v713
      %v743 = vunpack.c.l.b16 %v717
      %v744 = vunpack.c.l.b16 %v721
      %v745 = vunpack.c.l.b16 %v725
      %v746 = vunpack.c.l.b16 %v729
      %v747 = vunpack.c.l.b16 %v733
      %v748 = vunpack.c.l.b16 %v737
      %v749 = vpack.c.b16 %v742, %v741
      %v750 = vpack.c.b16 %v744, %v743
      %v751 = vpack.c.b16 %v746, %v745
      %v752 = vpack.c.b16 %v748, %v747
      %v755 = vunpack.c.l.b16 %v739
      %v756 = vunpack.c.l.b16 %v740
      %v757 = vpack.c.b16 %v756, %v755
      %v760 = vsel %vm498, %v749, 0
      %v763 = vsel %vm498, %v750, 0
      %v766 = vsel %vm498, %v751, 0
      %v769 = vsel %vm498, %v752, 0
      %771 = vmatprep.subr.bf16.mxu0 0
      %772 = vmatpush1.bf16.msra.mxu0 0
      %773 = vmatprep.subr.bf16.mxu0 0
      %774 = vmatpush1.bf16.msra.mxu0 0
      %775 = vmatprep.subr.bf16.mxu0 0
      %776 = vmatpush1.bf16.msra.mxu0 0
      %777 = vmatprep.subr.bf16.mxu0 0
      %778 = vmatpush1.bf16.msra.mxu0 0
      %779 = vmatprep.subr.bf16.mxu0 0
      %780 = vmatpush1.bf16.msra.mxu0 0
      %781 = vmatprep.subr.bf16.mxu0 0
      %782 = vmatpush1.bf16.msra.mxu0 0
      %783 = vmatprep.subr.bf16.mxu0 0
      %784 = vmatpush1.bf16.msra.mxu0 0
      %785 = vmatprep.subr.bf16.mxu0 0
      %786 = vmatpush1.bf16.msra.mxu0 %v757
      %787 = vmatprep.subr.bf16.mxu0 0
      %788 = vmatpush2.bf16.msra.mxu0 0
      %789 = vmatprep.subr.bf16.mxu0 0
      %790 = vmatpush2.bf16.msra.mxu0 0
      %791 = vmatprep.subr.bf16.mxu0 0
      %792 = vmatpush2.bf16.msra.mxu0 0
      %793 = vmatprep.subr.bf16.mxu0 0
      %794 = vmatpush2.bf16.msra.mxu0 0
      %795 = vmatprep.subr.bf16.mxu0 0
      %796 = vmatpush2.bf16.msra.mxu0 0
      %797 = vmatprep.subr.bf16.mxu0 0
      %798 = vmatpush2.bf16.msra.mxu0 0
      %799 = vmatprep.subr.bf16.mxu0 0
      %800 = vmatpush2.bf16.msra.mxu0 0
      %801 = vmatprep.subr.bf16.mxu0 0
      %802 = vmatpush2.bf16.msra.mxu0 0
      %803 = vmatprep.mubr.bf16.mxu0 0
      %804 = vmatmul.mubr.bf16.gmra.mxu0 %v760
      %v805 = vpop.f32.mrf.mxu0
      %v806 = vadd.f32 0.0, %v805
      %v807 = vpop.f32.mrf.mxu0
      %v808 = vpop.f32.mrf.mxu0
      %v809 = vadd.f32 0.0, %v808
      %v810 = vpop.f32.mrf.mxu0
      %811 = vmatprep.mubr.bf16.mxu0 0
      %812 = vmatmul.mubr.bf16.gmra.mxu0 %v763
      %v813 = vpop.f32.mrf.mxu0
      %v814 = vadd.f32 0.0, %v813
      %v815 = vpop.f32.mrf.mxu0
      %v816 = vpop.f32.mrf.mxu0
      %v817 = vadd.f32 0.0, %v816
      %v818 = vpop.f32.mrf.mxu0
      %819 = vmatprep.mubr.bf16.mxu0 0
      %820 = vmatmul.mubr.bf16.gmra.mxu0 %v766
      %v821 = vpop.f32.mrf.mxu0
      %v822 = vadd.f32 0.0, %v821
      %v823 = vpop.f32.mrf.mxu0
      %v824 = vpop.f32.mrf.mxu0
      %v825 = vadd.f32 0.0, %v824
      %v826 = vpop.f32.mrf.mxu0
      %827 = vmatprep.mubr.bf16.mxu0 0
      %828 = vmatmul.mubr.bf16.gmra.mxu0 %v769
      %v829 = vpop.f32.mrf.mxu0
      %v830 = vadd.f32 0.0, %v829
      %v831 = vpop.f32.mrf.mxu0
      %v832 = vpop.f32.mrf.mxu0
      %v833 = vadd.f32 0.0, %v832
      %v834 = vpop.f32.mrf.mxu0
      %835 = vdwg.mxu0
      %v836 = vadd.f32 %v649, %v806
      %v837 = vadd.f32 %v652, %v809
      %v838 = vadd.f32 %v657, %v814
      %v839 = vadd.f32 %v660, %v817
      %v840 = vadd.f32 %v665, %v822
      %v841 = vadd.f32 %v668, %v825
      %v842 = vadd.f32 %v673, %v830
      %v843 = vadd.f32 %v676, %v833
      %s844 = scalar_lea.vmem %s311, 8
      %v845 = vld [vmem:[%s844] sm:$0xf]
      %v846 = vld [vmem:[%s844 + $0x8] sm:$0xf]
      %v847 = vld [vmem:[%s844 + $0x10] sm:$0xf]
      %v848 = vld [vmem:[%s844 + $0x18] sm:$0xf]
      %v849 = vld [vmem:[%s844 + $0x20] sm:$0xf]
      %v850 = vld [vmem:[%s844 + $0x28] sm:$0xf]
      %v851 = vld [vmem:[%s844 + $0x30] sm:$0xf]
      %v852 = vld [vmem:[%s844 + $0x38] sm:$0xf]
      %s853 = scalar_lea.vmem %s3, 24
      %v854 = vld [vmem:[%s853] sm:$0xf]
      %v855 = vld [vmem:[%s853 + $0x4] sm:$0xf]
      %v864 = vunpack.c.l.b16 %v845
      %v865 = vunpack.c.l.b16 %v846
      %v866 = vunpack.c.l.b16 %v847
      %v867 = vunpack.c.l.b16 %v848
      %v868 = vunpack.c.l.b16 %v849
      %v869 = vunpack.c.l.b16 %v850
      %v870 = vunpack.c.l.b16 %v851
      %v871 = vunpack.c.l.b16 %v852
      %v872 = vpack.c.b16 %v865, %v864
      %v873 = vpack.c.b16 %v867, %v866
      %v874 = vpack.c.b16 %v869, %v868
      %v875 = vpack.c.b16 %v871, %v870
      %v878 = vunpack.c.l.b16 %v854
      %v879 = vunpack.c.l.b16 %v855
      %v880 = vpack.c.b16 %v879, %v878
      %v883 = vsel %vm498, %v872, 0
      %v886 = vsel %vm498, %v873, 0
      %v889 = vsel %vm498, %v874, 0
      %v892 = vsel %vm498, %v875, 0
      %894 = vmatprep.subr.bf16.mxu0 0
      %895 = vmatpush1.bf16.msra.mxu0 0
      %896 = vmatprep.subr.bf16.mxu0 0
      %897 = vmatpush1.bf16.msra.mxu0 0
      %898 = vmatprep.subr.bf16.mxu0 0
      %899 = vmatpush1.bf16.msra.mxu0 0
      %900 = vmatprep.subr.bf16.mxu0 0
      %901 = vmatpush1.bf16.msra.mxu0 0
      %902 = vmatprep.subr.bf16.mxu0 0
      %903 = vmatpush1.bf16.msra.mxu0 0
      %904 = vmatprep.subr.bf16.mxu0 0
      %905 = vmatpush1.bf16.msra.mxu0 0
      %906 = vmatprep.subr.bf16.mxu0 0
      %907 = vmatpush1.bf16.msra.mxu0 0
      %908 = vmatprep.subr.bf16.mxu0 0
      %909 = vmatpush1.bf16.msra.mxu0 %v880
      %910 = vmatprep.subr.bf16.mxu0 0
      %911 = vmatpush2.bf16.msra.mxu0 0
      %912 = vmatprep.subr.bf16.mxu0 0
      %913 = vmatpush2.bf16.msra.mxu0 0
      %914 = vmatprep.subr.bf16.mxu0 0
      %915 = vmatpush2.bf16.msra.mxu0 0
      %916 = vmatprep.subr.bf16.mxu0 0
      %917 = vmatpush2.bf16.msra.mxu0 0
      %918 = vmatprep.subr.bf16.mxu0 0
      %919 = vmatpush2.bf16.msra.mxu0 0
      %920 = vmatprep.subr.bf16.mxu0 0
      %921 = vmatpush2.bf16.msra.mxu0 0
      %922 = vmatprep.subr.bf16.mxu0 0
      %923 = vmatpush2.bf16.msra.mxu0 0
      %924 = vmatprep.subr.bf16.mxu0 0
      %925 = vmatpush2.bf16.msra.mxu0 0
      %926 = vmatprep.mubr.bf16.mxu0 0
      %927 = vmatmul.mubr.bf16.gmra.mxu0 %v883
      %v928 = vpop.f32.mrf.mxu0
      %v929 = vadd.f32 0.0, %v928
      %v930 = vpop.f32.mrf.mxu0
      %v931 = vpop.f32.mrf.mxu0
      %v932 = vadd.f32 0.0, %v931
      %v933 = vpop.f32.mrf.mxu0
      %934 = vmatprep.mubr.bf16.mxu0 0
      %935 = vmatmul.mubr.bf16.gmra.mxu0 %v886
      %v936 = vpop.f32.mrf.mxu0
      %v937 = vadd.f32 0.0, %v936
      %v938 = vpop.f32.mrf.mxu0
      %v939 = vpop.f32.mrf.mxu0
      %v940 = vadd.f32 0.0, %v939
      %v941 = vpop.f32.mrf.mxu0
      %942 = vmatprep.mubr.bf16.mxu0 0
      %943 = vmatmul.mubr.bf16.gmra.mxu0 %v889
      %v944 = vpop.f32.mrf.mxu0
      %v945 = vadd.f32 0.0, %v944
      %v946 = vpop.f32.mrf.mxu0
      %v947 = vpop.f32.mrf.mxu0
      %v948 = vadd.f32 0.0, %v947
      %v949 = vpop.f32.mrf.mxu0
      %950 = vmatprep.mubr.bf16.mxu0 0
      %951 = vmatmul.mubr.bf16.gmra.mxu0 %v892
      %v952 = vpop.f32.mrf.mxu0
      %v953 = vadd.f32 0.0, %v952
      %v954 = vpop.f32.mrf.mxu0
      %v955 = vpop.f32.mrf.mxu0
      %v956 = vadd.f32 0.0, %v955
      %v957 = vpop.f32.mrf.mxu0
      %958 = vdwg.mxu0
      %v959 = vadd.f32 %v836, %v929
      %v960 = vadd.f32 %v837, %v932
      %v961 = vadd.f32 %v838, %v937
      %v962 = vadd.f32 %v839, %v940
      %v963 = vadd.f32 %v840, %v945
      %v964 = vadd.f32 %v841, %v948
      %v965 = vadd.f32 %v842, %v953
      %v966 = vadd.f32 %v843, %v956
      %v967 = vld [vmem:[%s844] sm:$0xf]
      %v968 = vld [vmem:[%s844 + $0x4] sm:$0x1]
      %v969 = vld [vmem:[%s844 + $0x8] sm:$0xf]
      %v970 = vld [vmem:[%s844 + $0xc] sm:$0x1]
      %v971 = vld [vmem:[%s844 + $0x10] sm:$0xf]
      %v972 = vld [vmem:[%s844 + $0x14] sm:$0x1]
      %v973 = vld [vmem:[%s844 + $0x18] sm:$0xf]
      %v974 = vld [vmem:[%s844 + $0x1c] sm:$0x1]
      %v975 = vld [vmem:[%s844 + $0x20] sm:$0xf]
      %v976 = vld [vmem:[%s844 + $0x24] sm:$0x1]
      %v977 = vld [vmem:[%s844 + $0x28] sm:$0xf]
      %v978 = vld [vmem:[%s844 + $0x2c] sm:$0x1]
      %v979 = vld [vmem:[%s844 + $0x30] sm:$0xf]
      %v980 = vld [vmem:[%s844 + $0x34] sm:$0x1]
      %v981 = vld [vmem:[%s844 + $0x38] sm:$0xf]
      %v982 = vld [vmem:[%s844 + $0x3c] sm:$0x1]
      %v984 = vshrl.u32 %v967, 16
      %v986 = vrot.slane %v984, 4
      %v987 = vshll.u32 %v967, 16
      %v989 = vrot.slane %v987, 5
      %v990 = vor.u32 %v986, %v989
      %v991 = vrot.slane %v990, 4
      %v993 = vshll.u32 %v968, 16
      %v995 = vrot.slane %v993, 5
      %v996 = vsel %vm364, %v991, %v995
      %v998 = vshrl.u32 %v969, 16
      %v1000 = vrot.slane %v998, 4
      %v1001 = vshll.u32 %v969, 16
      %v1003 = vrot.slane %v1001, 5
      %v1004 = vor.u32 %v1000, %v1003
      %v1005 = vrot.slane %v1004, 4
      %v1007 = vshll.u32 %v970, 16
      %v1009 = vrot.slane %v1007, 5
      %v1010 = vsel %vm364, %v1005, %v1009
      %v1012 = vshrl.u32 %v971, 16
      %v1014 = vrot.slane %v1012, 4
      %v1015 = vshll.u32 %v971, 16
      %v1017 = vrot.slane %v1015, 5
      %v1018 = vor.u32 %v1014, %v1017
      %v1019 = vrot.slane %v1018, 4
      %v1021 = vshll.u32 %v972, 16
      %v1023 = vrot.slane %v1021, 5
      %v1024 = vsel %vm364, %v1019, %v1023
      %v1026 = vshrl.u32 %v973, 16
      %v1028 = vrot.slane %v1026, 4
      %v1029 = vshll.u32 %v973, 16
      %v1031 = vrot.slane %v1029, 5
      %v1032 = vor.u32 %v1028, %v1031
      %v1033 = vrot.slane %v1032, 4
      %v1035 = vshll.u32 %v974, 16
      %v1037 = vrot.slane %v1035, 5
      %v1038 = vsel %vm364, %v1033, %v1037
      %v1040 = vshrl.u32 %v975, 16
      %v1042 = vrot.slane %v1040, 4
      %v1043 = vshll.u32 %v975, 16
      %v1045 = vrot.slane %v1043, 5
      %v1046 = vor.u32 %v1042, %v1045
      %v1047 = vrot.slane %v1046, 4
      %v1049 = vshll.u32 %v976, 16
      %v1051 = vrot.slane %v1049, 5
      %v1052 = vsel %vm364, %v1047, %v1051
      %v1054 = vshrl.u32 %v977, 16
      %v1056 = vrot.slane %v1054, 4
      %v1057 = vshll.u32 %v977, 16
      %v1059 = vrot.slane %v1057, 5
      %v1060 = vor.u32 %v1056, %v1059
      %v1061 = vrot.slane %v1060, 4
      %v1063 = vshll.u32 %v978, 16
      %v1065 = vrot.slane %v1063, 5
      %v1066 = vsel %vm364, %v1061, %v1065
      %v1068 = vshrl.u32 %v979, 16
      %v1070 = vrot.slane %v1068, 4
      %v1071 = vshll.u32 %v979, 16
      %v1073 = vrot.slane %v1071, 5
      %v1074 = vor.u32 %v1070, %v1073
      %v1075 = vrot.slane %v1074, 4
      %v1077 = vshll.u32 %v980, 16
      %v1079 = vrot.slane %v1077, 5
      %v1080 = vsel %vm364, %v1075, %v1079
      %v1082 = vshrl.u32 %v981, 16
      %v1084 = vrot.slane %v1082, 4
      %v1085 = vshll.u32 %v981, 16
      %v1087 = vrot.slane %v1085, 5
      %v1088 = vor.u32 %v1084, %v1087
      %v1089 = vrot.slane %v1088, 4
      %v1091 = vshll.u32 %v982, 16
      %v1093 = vrot.slane %v1091, 5
      %v1094 = vsel %vm364, %v1089, %v1093
      %s1095 = scalar_lea.vmem %s3, 32
      %v1096 = vld [vmem:[%s1095] sm:$0xf]
      %v1097 = vld [vmem:[%s1095 + $0x4] sm:$0xf]
      %v1098 = vunpack.c.l.b16 %v996
      %v1099 = vunpack.c.l.b16 %v1010
      %v1100 = vunpack.c.l.b16 %v1024
      %v1101 = vunpack.c.l.b16 %v1038
      %v1102 = vunpack.c.l.b16 %v1052
      %v1103 = vunpack.c.l.b16 %v1066
      %v1104 = vunpack.c.l.b16 %v1080
      %v1105 = vunpack.c.l.b16 %v1094
      %v1106 = vpack.c.b16 %v1099, %v1098
      %v1107 = vpack.c.b16 %v1101, %v1100
      %v1108 = vpack.c.b16 %v1103, %v1102
      %v1109 = vpack.c.b16 %v1105, %v1104
      %v1112 = vunpack.c.l.b16 %v1096
      %v1113 = vunpack.c.l.b16 %v1097
      %v1114 = vpack.c.b16 %v1113, %v1112
      %v1117 = vsel %vm498, %v1106, 0
      %v1120 = vsel %vm498, %v1107, 0
      %v1123 = vsel %vm498, %v1108, 0
      %v1126 = vsel %vm498, %v1109, 0
      %1128 = vmatprep.subr.bf16.mxu0 0
      %1129 = vmatpush1.bf16.msra.mxu0 0
      %1130 = vmatprep.subr.bf16.mxu0 0
      %1131 = vmatpush1.bf16.msra.mxu0 0
      %1132 = vmatprep.subr.bf16.mxu0 0
      %1133 = vmatpush1.bf16.msra.mxu0 0
      %1134 = vmatprep.subr.bf16.mxu0 0
      %1135 = vmatpush1.bf16.msra.mxu0 0
      %1136 = vmatprep.subr.bf16.mxu0 0
      %1137 = vmatpush1.bf16.msra.mxu0 0
      %1138 = vmatprep.subr.bf16.mxu0 0
      %1139 = vmatpush1.bf16.msra.mxu0 0
      %1140 = vmatprep.subr.bf16.mxu0 0
      %1141 = vmatpush1.bf16.msra.mxu0 0
      %1142 = vmatprep.subr.bf16.mxu0 0
      %1143 = vmatpush1.bf16.msra.mxu0 %v1114
      %1144 = vmatprep.subr.bf16.mxu0 0
      %1145 = vmatpush2.bf16.msra.mxu0 0
      %1146 = vmatprep.subr.bf16.mxu0 0
      %1147 = vmatpush2.bf16.msra.mxu0 0
      %1148 = vmatprep.subr.bf16.mxu0 0
      %1149 = vmatpush2.bf16.msra.mxu0 0
      %1150 = vmatprep.subr.bf16.mxu0 0
      %1151 = vmatpush2.bf16.msra.mxu0 0
      %1152 = vmatprep.subr.bf16.mxu0 0
      %1153 = vmatpush2.bf16.msra.mxu0 0
      %1154 = vmatprep.subr.bf16.mxu0 0
      %1155 = vmatpush2.bf16.msra.mxu0 0
      %1156 = vmatprep.subr.bf16.mxu0 0
      %1157 = vmatpush2.bf16.msra.mxu0 0
      %1158 = vmatprep.subr.bf16.mxu0 0
      %1159 = vmatpush2.bf16.msra.mxu0 0
      %1160 = vmatprep.mubr.bf16.mxu0 0
      %1161 = vmatmul.mubr.bf16.gmra.mxu0 %v1117
      %v1162 = vpop.f32.mrf.mxu0
      %v1163 = vadd.f32 0.0, %v1162
      %v1164 = vpop.f32.mrf.mxu0
      %v1165 = vpop.f32.mrf.mxu0
      %v1166 = vadd.f32 0.0, %v1165
      %v1167 = vpop.f32.mrf.mxu0
      %1168 = vmatprep.mubr.bf16.mxu0 0
      %1169 = vmatmul.mubr.bf16.gmra.mxu0 %v1120
      %v1170 = vpop.f32.mrf.mxu0
      %v1171 = vadd.f32 0.0, %v1170
      %v1172 = vpop.f32.mrf.mxu0
      %v1173 = vpop.f32.mrf.mxu0
      %v1174 = vadd.f32 0.0, %v1173
      %v1175 = vpop.f32.mrf.mxu0
      %1176 = vmatprep.mubr.bf16.mxu0 0
      %1177 = vmatmul.mubr.bf16.gmra.mxu0 %v1123
      %v1178 = vpop.f32.mrf.mxu0
      %v1179 = vadd.f32 0.0, %v1178
      %v1180 = vpop.f32.mrf.mxu0
      %v1181 = vpop.f32.mrf.mxu0
      %v1182 = vadd.f32 0.0, %v1181
      %v1183 = vpop.f32.mrf.mxu0
      %1184 = vmatprep.mubr.bf16.mxu0 0
      %1185 = vmatmul.mubr.bf16.gmra.mxu0 %v1126
      %v1186 = vpop.f32.mrf.mxu0
      %v1187 = vadd.f32 0.0, %v1186
      %v1188 = vpop.f32.mrf.mxu0
      %v1189 = vpop.f32.mrf.mxu0
      %v1190 = vadd.f32 0.0, %v1189
      %v1191 = vpop.f32.mrf.mxu0
      %1192 = vdwg.mxu0
      %v1193 = vadd.f32 %v959, %v1163
      %v1194 = vadd.f32 %v960, %v1166
      %v1195 = vadd.f32 %v961, %v1171
      %v1196 = vadd.f32 %v962, %v1174
      %v1197 = vadd.f32 %v963, %v1179
      %v1198 = vadd.f32 %v964, %v1182
      %v1199 = vadd.f32 %v965, %v1187
      %v1200 = vadd.f32 %v966, %v1190
      %v1201 = vld [vmem:[%s844] sm:$0xe]
      %v1202 = vld [vmem:[%s844 + $0x8] sm:$0xe]
      %v1203 = vld [vmem:[%s844 + $0x10] sm:$0xe]
      %v1204 = vld [vmem:[%s844 + $0x18] sm:$0xe]
      %v1205 = vld [vmem:[%s844 + $0x20] sm:$0xe]
      %v1206 = vld [vmem:[%s844 + $0x28] sm:$0xe]
      %v1207 = vld [vmem:[%s844 + $0x30] sm:$0xe]
      %v1208 = vld [vmem:[%s844 + $0x38] sm:$0xe]
      %v1225 = vrot.slane %v1201, 5
      %v1226 = vrot.slane %v1225, 4
      %v1227 = vrot.slane %v968, 5
      %v1228 = vsel %vm705, %v1226, %v1227
      %v1229 = vrot.slane %v1202, 5
      %v1230 = vrot.slane %v1229, 4
      %v1231 = vrot.slane %v970, 5
      %v1232 = vsel %vm705, %v1230, %v1231
      %v1233 = vrot.slane %v1203, 5
      %v1234 = vrot.slane %v1233, 4
      %v1235 = vrot.slane %v972, 5
      %v1236 = vsel %vm705, %v1234, %v1235
      %v1237 = vrot.slane %v1204, 5
      %v1238 = vrot.slane %v1237, 4
      %v1239 = vrot.slane %v974, 5
      %v1240 = vsel %vm705, %v1238, %v1239
      %v1241 = vrot.slane %v1205, 5
      %v1242 = vrot.slane %v1241, 4
      %v1243 = vrot.slane %v976, 5
      %v1244 = vsel %vm705, %v1242, %v1243
      %v1245 = vrot.slane %v1206, 5
      %v1246 = vrot.slane %v1245, 4
      %v1247 = vrot.slane %v978, 5
      %v1248 = vsel %vm705, %v1246, %v1247
      %v1249 = vrot.slane %v1207, 5
      %v1250 = vrot.slane %v1249, 4
      %v1251 = vrot.slane %v980, 5
      %v1252 = vsel %vm705, %v1250, %v1251
      %v1253 = vrot.slane %v1208, 5
      %v1254 = vrot.slane %v1253, 4
      %v1255 = vrot.slane %v982, 5
      %v1256 = vsel %vm705, %v1254, %v1255
      %s1257 = scalar_lea.vmem %s3, 40
      %v1258 = vld [vmem:[%s1257] sm:$0xf]
      %v1259 = vld [vmem:[%s1257 + $0x4] sm:$0xf]
      %v1260 = vunpack.c.l.b16 %v1228
      %v1261 = vunpack.c.l.b16 %v1232
      %v1262 = vunpack.c.l.b16 %v1236
      %v1263 = vunpack.c.l.b16 %v1240
      %v1264 = vunpack.c.l.b16 %v1244
      %v1265 = vunpack.c.l.b16 %v1248
      %v1266 = vunpack.c.l.b16 %v1252
      %v1267 = vunpack.c.l.b16 %v1256
      %v1268 = vpack.c.b16 %v1261, %v1260
      %v1269 = vpack.c.b16 %v1263, %v1262
      %v1270 = vpack.c.b16 %v1265, %v1264
      %v1271 = vpack.c.b16 %v1267, %v1266
      %v1274 = vunpack.c.l.b16 %v1258
      %v1275 = vunpack.c.l.b16 %v1259
      %v1276 = vpack.c.b16 %v1275, %v1274
      %v1279 = vsel %vm498, %v1268, 0
      %v1282 = vsel %vm498, %v1269, 0
      %v1285 = vsel %vm498, %v1270, 0
      %v1288 = vsel %vm498, %v1271, 0
      %1290 = vmatprep.subr.bf16.mxu0 0
      %1291 = vmatpush1.bf16.msra.mxu0 0
      %1292 = vmatprep.subr.bf16.mxu0 0
      %1293 = vmatpush1.bf16.msra.mxu0 0
      %1294 = vmatprep.subr.bf16.mxu0 0
      %1295 = vmatpush1.bf16.msra.mxu0 0
      %1296 = vmatprep.subr.bf16.mxu0 0
      %1297 = vmatpush1.bf16.msra.mxu0 0
      %1298 = vmatprep.subr.bf16.mxu0 0
      %1299 = vmatpush1.bf16.msra.mxu0 0
      %1300 = vmatprep.subr.bf16.mxu0 0
      %1301 = vmatpush1.bf16.msra.mxu0 0
      %1302 = vmatprep.subr.bf16.mxu0 0
      %1303 = vmatpush1.bf16.msra.mxu0 0
      %1304 = vmatprep.subr.bf16.mxu0 0
      %1305 = vmatpush1.bf16.msra.mxu0 %v1276
      %1306 = vmatprep.subr.bf16.mxu0 0
      %1307 = vmatpush2.bf16.msra.mxu0 0
      %1308 = vmatprep.subr.bf16.mxu0 0
      %1309 = vmatpush2.bf16.msra.mxu0 0
      %1310 = vmatprep.subr.bf16.mxu0 0
      %1311 = vmatpush2.bf16.msra.mxu0 0
      %1312 = vmatprep.subr.bf16.mxu0 0
      %1313 = vmatpush2.bf16.msra.mxu0 0
      %1314 = vmatprep.subr.bf16.mxu0 0
      %1315 = vmatpush2.bf16.msra.mxu0 0
      %1316 = vmatprep.subr.bf16.mxu0 0
      %1317 = vmatpush2.bf16.msra.mxu0 0
      %1318 = vmatprep.subr.bf16.mxu0 0
      %1319 = vmatpush2.bf16.msra.mxu0 0
      %1320 = vmatprep.subr.bf16.mxu0 0
      %1321 = vmatpush2.bf16.msra.mxu0 0
      %1322 = vmatprep.mubr.bf16.mxu0 0
      %1323 = vmatmul.mubr.bf16.gmra.mxu0 %v1279
      %v1324 = vpop.f32.mrf.mxu0
      %v1325 = vadd.f32 0.0, %v1324
      %v1326 = vpop.f32.mrf.mxu0
      %v1327 = vpop.f32.mrf.mxu0
      %v1328 = vadd.f32 0.0, %v1327
      %v1329 = vpop.f32.mrf.mxu0
      %1330 = vmatprep.mubr.bf16.mxu0 0
      %1331 = vmatmul.mubr.bf16.gmra.mxu0 %v1282
      %v1332 = vpop.f32.mrf.mxu0
      %v1333 = vadd.f32 0.0, %v1332
      %v1334 = vpop.f32.mrf.mxu0
      %v1335 = vpop.f32.mrf.mxu0
      %v1336 = vadd.f32 0.0, %v1335
      %v1337 = vpop.f32.mrf.mxu0
      %1338 = vmatprep.mubr.bf16.mxu0 0
      %1339 = vmatmul.mubr.bf16.gmra.mxu0 %v1285
      %v1340 = vpop.f32.mrf.mxu0
      %v1341 = vadd.f32 0.0, %v1340
      %v1342 = vpop.f32.mrf.mxu0
      %v1343 = vpop.f32.mrf.mxu0
      %v1344 = vadd.f32 0.0, %v1343
      %v1345 = vpop.f32.mrf.mxu0
      %1346 = vmatprep.mubr.bf16.mxu0 0
      %1347 = vmatmul.mubr.bf16.gmra.mxu0 %v1288
      %v1348 = vpop.f32.mrf.mxu0
      %v1349 = vadd.f32 0.0, %v1348
      %v1350 = vpop.f32.mrf.mxu0
      %v1351 = vpop.f32.mrf.mxu0
      %v1352 = vadd.f32 0.0, %v1351
      %v1353 = vpop.f32.mrf.mxu0
      %1354 = vdwg.mxu0
      %v1355 = vadd.f32 %v1193, %v1325
      %v1356 = vadd.f32 %v1194, %v1328
      %v1357 = vadd.f32 %v1195, %v1333
      %v1358 = vadd.f32 %v1196, %v1336
      %v1359 = vadd.f32 %v1197, %v1341
      %v1360 = vadd.f32 %v1198, %v1344
      %v1361 = vadd.f32 %v1199, %v1349
      %v1362 = vadd.f32 %v1200, %v1352
      %s1363 = scalar_lea.vmem %s311, 16
      %v1364 = vld [vmem:[%s1363] sm:$0xf]
      %v1365 = vld [vmem:[%s1363 + $0x8] sm:$0xf]
      %v1366 = vld [vmem:[%s1363 + $0x10] sm:$0xf]
      %v1367 = vld [vmem:[%s1363 + $0x18] sm:$0xf]
      %v1368 = vld [vmem:[%s1363 + $0x20] sm:$0xf]
      %v1369 = vld [vmem:[%s1363 + $0x28] sm:$0xf]
      %v1370 = vld [vmem:[%s1363 + $0x30] sm:$0xf]
      %v1371 = vld [vmem:[%s1363 + $0x38] sm:$0xf]
      %s1372 = scalar_lea.vmem %s3, 48
      %v1373 = vld [vmem:[%s1372] sm:$0xf]
      %v1374 = vld [vmem:[%s1372 + $0x4] sm:$0xf]
      %v1383 = vunpack.c.l.b16 %v1364
      %v1384 = vunpack.c.l.b16 %v1365
      %v1385 = vunpack.c.l.b16 %v1366
      %v1386 = vunpack.c.l.b16 %v1367
      %v1387 = vunpack.c.l.b16 %v1368
      %v1388 = vunpack.c.l.b16 %v1369
      %v1389 = vunpack.c.l.b16 %v1370
      %v1390 = vunpack.c.l.b16 %v1371
      %v1391 = vpack.c.b16 %v1384, %v1383
      %v1392 = vpack.c.b16 %v1386, %v1385
      %v1393 = vpack.c.b16 %v1388, %v1387
      %v1394 = vpack.c.b16 %v1390, %v1389
      %v1397 = vunpack.c.l.b16 %v1373
      %v1398 = vunpack.c.l.b16 %v1374
      %v1399 = vpack.c.b16 %v1398, %v1397
      %v1402 = vsel %vm498, %v1391, 0
      %v1405 = vsel %vm498, %v1392, 0
      %v1408 = vsel %vm498, %v1393, 0
      %v1411 = vsel %vm498, %v1394, 0
      %1413 = vmatprep.subr.bf16.mxu0 0
      %1414 = vmatpush1.bf16.msra.mxu0 0
      %1415 = vmatprep.subr.bf16.mxu0 0
      %1416 = vmatpush1.bf16.msra.mxu0 0
      %1417 = vmatprep.subr.bf16.mxu0 0
      %1418 = vmatpush1.bf16.msra.mxu0 0
      %1419 = vmatprep.subr.bf16.mxu0 0
      %1420 = vmatpush1.bf16.msra.mxu0 0
      %1421 = vmatprep.subr.bf16.mxu0 0
      %1422 = vmatpush1.bf16.msra.mxu0 0
      %1423 = vmatprep.subr.bf16.mxu0 0
      %1424 = vmatpush1.bf16.msra.mxu0 0
      %1425 = vmatprep.subr.bf16.mxu0 0
      %1426 = vmatpush1.bf16.msra.mxu0 0
      %1427 = vmatprep.subr.bf16.mxu0 0
      %1428 = vmatpush1.bf16.msra.mxu0 %v1399
      %1429 = vmatprep.subr.bf16.mxu0 0
      %1430 = vmatpush2.bf16.msra.mxu0 0
      %1431 = vmatprep.subr.bf16.mxu0 0
      %1432 = vmatpush2.bf16.msra.mxu0 0
      %1433 = vmatprep.subr.bf16.mxu0 0
      %1434 = vmatpush2.bf16.msra.mxu0 0
      %1435 = vmatprep.subr.bf16.mxu0 0
      %1436 = vmatpush2.bf16.msra.mxu0 0
      %1437 = vmatprep.subr.bf16.mxu0 0
      %1438 = vmatpush2.bf16.msra.mxu0 0
      %1439 = vmatprep.subr.bf16.mxu0 0
      %1440 = vmatpush2.bf16.msra.mxu0 0
      %1441 = vmatprep.subr.bf16.mxu0 0
      %1442 = vmatpush2.bf16.msra.mxu0 0
      %1443 = vmatprep.subr.bf16.mxu0 0
      %1444 = vmatpush2.bf16.msra.mxu0 0
      %1445 = vmatprep.mubr.bf16.mxu0 0
      %1446 = vmatmul.mubr.bf16.gmra.mxu0 %v1402
      %v1447 = vpop.f32.mrf.mxu0
      %v1448 = vadd.f32 0.0, %v1447
      %v1449 = vpop.f32.mrf.mxu0
      %v1450 = vpop.f32.mrf.mxu0
      %v1451 = vadd.f32 0.0, %v1450
      %v1452 = vpop.f32.mrf.mxu0
      %1453 = vmatprep.mubr.bf16.mxu0 0
      %1454 = vmatmul.mubr.bf16.gmra.mxu0 %v1405
      %v1455 = vpop.f32.mrf.mxu0
      %v1456 = vadd.f32 0.0, %v1455
      %v1457 = vpop.f32.mrf.mxu0
      %v1458 = vpop.f32.mrf.mxu0
      %v1459 = vadd.f32 0.0, %v1458
      %v1460 = vpop.f32.mrf.mxu0
      %1461 = vmatprep.mubr.bf16.mxu0 0
      %1462 = vmatmul.mubr.bf16.gmra.mxu0 %v1408
      %v1463 = vpop.f32.mrf.mxu0
      %v1464 = vadd.f32 0.0, %v1463
      %v1465 = vpop.f32.mrf.mxu0
      %v1466 = vpop.f32.mrf.mxu0
      %v1467 = vadd.f32 0.0, %v1466
      %v1468 = vpop.f32.mrf.mxu0
      %1469 = vmatprep.mubr.bf16.mxu0 0
      %1470 = vmatmul.mubr.bf16.gmra.mxu0 %v1411
      %v1471 = vpop.f32.mrf.mxu0
      %v1472 = vadd.f32 0.0, %v1471
      %v1473 = vpop.f32.mrf.mxu0
      %v1474 = vpop.f32.mrf.mxu0
      %v1475 = vadd.f32 0.0, %v1474
      %v1476 = vpop.f32.mrf.mxu0
      %1477 = vdwg.mxu0
      %v1478 = vadd.f32 %v1355, %v1448
      %v1479 = vadd.f32 %v1356, %v1451
      %v1480 = vadd.f32 %v1357, %v1456
      %v1481 = vadd.f32 %v1358, %v1459
      %v1482 = vadd.f32 %v1359, %v1464
      %v1483 = vadd.f32 %v1360, %v1467
      %v1484 = vadd.f32 %v1361, %v1472
      %v1485 = vadd.f32 %v1362, %v1475
      %v1486 = vld [vmem:[%s1363] sm:$0xf]
      %v1487 = vld [vmem:[%s1363 + $0x4] sm:$0x1]
      %v1488 = vld [vmem:[%s1363 + $0x8] sm:$0xf]
      %v1489 = vld [vmem:[%s1363 + $0xc] sm:$0x1]
      %v1490 = vld [vmem:[%s1363 + $0x10] sm:$0xf]
      %v1491 = vld [vmem:[%s1363 + $0x14] sm:$0x1]
      %v1492 = vld [vmem:[%s1363 + $0x18] sm:$0xf]
      %v1493 = vld [vmem:[%s1363 + $0x1c] sm:$0x1]
      %v1494 = vld [vmem:[%s1363 + $0x20] sm:$0xf]
      %v1495 = vld [vmem:[%s1363 + $0x24] sm:$0x1]
      %v1496 = vld [vmem:[%s1363 + $0x28] sm:$0xf]
      %v1497 = vld [vmem:[%s1363 + $0x2c] sm:$0x1]
      %v1498 = vld [vmem:[%s1363 + $0x30] sm:$0xf]
      %v1499 = vld [vmem:[%s1363 + $0x34] sm:$0x1]
      %v1500 = vld [vmem:[%s1363 + $0x38] sm:$0xf]
      %v1501 = vld [vmem:[%s1363 + $0x3c] sm:$0x1]
      %v1503 = vshrl.u32 %v1486, 16
      %v1505 = vrot.slane %v1503, 4
      %v1506 = vshll.u32 %v1486, 16
      %v1508 = vrot.slane %v1506, 5
      %v1509 = vor.u32 %v1505, %v1508
      %v1510 = vrot.slane %v1509, 4
      %v1512 = vshll.u32 %v1487, 16
      %v1514 = vrot.slane %v1512, 5
      %v1515 = vsel %vm364, %v1510, %v1514
      %v1517 = vshrl.u32 %v1488, 16
      %v1519 = vrot.slane %v1517, 4
      %v1520 = vshll.u32 %v1488, 16
      %v1522 = vrot.slane %v1520, 5
      %v1523 = vor.u32 %v1519, %v1522
      %v1524 = vrot.slane %v1523, 4
      %v1526 = vshll.u32 %v1489, 16
      %v1528 = vrot.slane %v1526, 5
      %v1529 = vsel %vm364, %v1524, %v1528
      %v1531 = vshrl.u32 %v1490, 16
      %v1533 = vrot.slane %v1531, 4
      %v1534 = vshll.u32 %v1490, 16
      %v1536 = vrot.slane %v1534, 5
      %v1537 = vor.u32 %v1533, %v1536
      %v1538 = vrot.slane %v1537, 4
      %v1540 = vshll.u32 %v1491, 16
      %v1542 = vrot.slane %v1540, 5
      %v1543 = vsel %vm364, %v1538, %v1542
      %v1545 = vshrl.u32 %v1492, 16
      %v1547 = vrot.slane %v1545, 4
      %v1548 = vshll.u32 %v1492, 16
      %v1550 = vrot.slane %v1548, 5
      %v1551 = vor.u32 %v1547, %v1550
      %v1552 = vrot.slane %v1551, 4
      %v1554 = vshll.u32 %v1493, 16
      %v1556 = vrot.slane %v1554, 5
      %v1557 = vsel %vm364, %v1552, %v1556
      %v1559 = vshrl.u32 %v1494, 16
      %v1561 = vrot.slane %v1559, 4
      %v1562 = vshll.u32 %v1494, 16
      %v1564 = vrot.slane %v1562, 5
      %v1565 = vor.u32 %v1561, %v1564
      %v1566 = vrot.slane %v1565, 4
      %v1568 = vshll.u32 %v1495, 16
      %v1570 = vrot.slane %v1568, 5
      %v1571 = vsel %vm364, %v1566, %v1570
      %v1573 = vshrl.u32 %v1496, 16
      %v1575 = vrot.slane %v1573, 4
      %v1576 = vshll.u32 %v1496, 16
      %v1578 = vrot.slane %v1576, 5
      %v1579 = vor.u32 %v1575, %v1578
      %v1580 = vrot.slane %v1579, 4
      %v1582 = vshll.u32 %v1497, 16
      %v1584 = vrot.slane %v1582, 5
      %v1585 = vsel %vm364, %v1580, %v1584
      %v1587 = vshrl.u32 %v1498, 16
      %v1589 = vrot.slane %v1587, 4
      %v1590 = vshll.u32 %v1498, 16
      %v1592 = vrot.slane %v1590, 5
      %v1593 = vor.u32 %v1589, %v1592
      %v1594 = vrot.slane %v1593, 4
      %v1596 = vshll.u32 %v1499, 16
      %v1598 = vrot.slane %v1596, 5
      %v1599 = vsel %vm364, %v1594, %v1598
      %v1601 = vshrl.u32 %v1500, 16
      %v1603 = vrot.slane %v1601, 4
      %v1604 = vshll.u32 %v1500, 16
      %v1606 = vrot.slane %v1604, 5
      %v1607 = vor.u32 %v1603, %v1606
      %v1608 = vrot.slane %v1607, 4
      %v1610 = vshll.u32 %v1501, 16
      %v1612 = vrot.slane %v1610, 5
      %v1613 = vsel %vm364, %v1608, %v1612
      %s1614 = scalar_lea.vmem %s3, 56
      %v1615 = vld [vmem:[%s1614] sm:$0xf]
      %v1616 = vld [vmem:[%s1614 + $0x4] sm:$0xf]
      %v1617 = vunpack.c.l.b16 %v1515
      %v1618 = vunpack.c.l.b16 %v1529
      %v1619 = vunpack.c.l.b16 %v1543
      %v1620 = vunpack.c.l.b16 %v1557
      %v1621 = vunpack.c.l.b16 %v1571
      %v1622 = vunpack.c.l.b16 %v1585
      %v1623 = vunpack.c.l.b16 %v1599
      %v1624 = vunpack.c.l.b16 %v1613
      %v1625 = vpack.c.b16 %v1618, %v1617
      %v1626 = vpack.c.b16 %v1620, %v1619
      %v1627 = vpack.c.b16 %v1622, %v1621
      %v1628 = vpack.c.b16 %v1624, %v1623
      %v1631 = vunpack.c.l.b16 %v1615
      %v1632 = vunpack.c.l.b16 %v1616
      %v1633 = vpack.c.b16 %v1632, %v1631
      %v1636 = vsel %vm498, %v1625, 0
      %v1639 = vsel %vm498, %v1626, 0
      %v1642 = vsel %vm498, %v1627, 0
      %v1645 = vsel %vm498, %v1628, 0
      %1647 = vmatprep.subr.bf16.mxu0 0
      %1648 = vmatpush1.bf16.msra.mxu0 0
      %1649 = vmatprep.subr.bf16.mxu0 0
      %1650 = vmatpush1.bf16.msra.mxu0 0
      %1651 = vmatprep.subr.bf16.mxu0 0
      %1652 = vmatpush1.bf16.msra.mxu0 0
      %1653 = vmatprep.subr.bf16.mxu0 0
      %1654 = vmatpush1.bf16.msra.mxu0 0
      %1655 = vmatprep.subr.bf16.mxu0 0
      %1656 = vmatpush1.bf16.msra.mxu0 0
      %1657 = vmatprep.subr.bf16.mxu0 0
      %1658 = vmatpush1.bf16.msra.mxu0 0
      %1659 = vmatprep.subr.bf16.mxu0 0
      %1660 = vmatpush1.bf16.msra.mxu0 0
      %1661 = vmatprep.subr.bf16.mxu0 0
      %1662 = vmatpush1.bf16.msra.mxu0 %v1633
      %1663 = vmatprep.subr.bf16.mxu0 0
      %1664 = vmatpush2.bf16.msra.mxu0 0
      %1665 = vmatprep.subr.bf16.mxu0 0
      %1666 = vmatpush2.bf16.msra.mxu0 0
      %1667 = vmatprep.subr.bf16.mxu0 0
      %1668 = vmatpush2.bf16.msra.mxu0 0
      %1669 = vmatprep.subr.bf16.mxu0 0
      %1670 = vmatpush2.bf16.msra.mxu0 0
      %1671 = vmatprep.subr.bf16.mxu0 0
      %1672 = vmatpush2.bf16.msra.mxu0 0
      %1673 = vmatprep.subr.bf16.mxu0 0
      %1674 = vmatpush2.bf16.msra.mxu0 0
      %1675 = vmatprep.subr.bf16.mxu0 0
      %1676 = vmatpush2.bf16.msra.mxu0 0
      %1677 = vmatprep.subr.bf16.mxu0 0
      %1678 = vmatpush2.bf16.msra.mxu0 0
      %1679 = vmatprep.mubr.bf16.mxu0 0
      %1680 = vmatmul.mubr.bf16.gmra.mxu0 %v1636
      %v1681 = vpop.f32.mrf.mxu0
      %v1682 = vadd.f32 0.0, %v1681
      %v1683 = vpop.f32.mrf.mxu0
      %v1684 = vpop.f32.mrf.mxu0
      %v1685 = vadd.f32 0.0, %v1684
      %v1686 = vpop.f32.mrf.mxu0
      %1687 = vmatprep.mubr.bf16.mxu0 0
      %1688 = vmatmul.mubr.bf16.gmra.mxu0 %v1639
      %v1689 = vpop.f32.mrf.mxu0
      %v1690 = vadd.f32 0.0, %v1689
      %v1691 = vpop.f32.mrf.mxu0
      %v1692 = vpop.f32.mrf.mxu0
      %v1693 = vadd.f32 0.0, %v1692
      %v1694 = vpop.f32.mrf.mxu0
      %1695 = vmatprep.mubr.bf16.mxu0 0
      %1696 = vmatmul.mubr.bf16.gmra.mxu0 %v1642
      %v1697 = vpop.f32.mrf.mxu0
      %v1698 = vadd.f32 0.0, %v1697
      %v1699 = vpop.f32.mrf.mxu0
      %v1700 = vpop.f32.mrf.mxu0
      %v1701 = vadd.f32 0.0, %v1700
      %v1702 = vpop.f32.mrf.mxu0
      %1703 = vmatprep.mubr.bf16.mxu0 0
      %1704 = vmatmul.mubr.bf16.gmra.mxu0 %v1645
      %v1705 = vpop.f32.mrf.mxu0
      %v1706 = vadd.f32 0.0, %v1705
      %v1707 = vpop.f32.mrf.mxu0
      %v1708 = vpop.f32.mrf.mxu0
      %v1709 = vadd.f32 0.0, %v1708
      %v1710 = vpop.f32.mrf.mxu0
      %1711 = vdwg.mxu0
      %v1712 = vadd.f32 %v1478, %v1682
      %v1713 = vadd.f32 %v1479, %v1685
      %v1714 = vadd.f32 %v1480, %v1690
      %v1715 = vadd.f32 %v1481, %v1693
      %v1716 = vadd.f32 %v1482, %v1698
      %v1717 = vadd.f32 %v1483, %v1701
      %v1718 = vadd.f32 %v1484, %v1706
      %v1719 = vadd.f32 %v1485, %v1709
      %v1720 = vld [vmem:[%s1363] sm:$0xe]
      %v1721 = vld [vmem:[%s1363 + $0x8] sm:$0xe]
      %v1722 = vld [vmem:[%s1363 + $0x10] sm:$0xe]
      %v1723 = vld [vmem:[%s1363 + $0x18] sm:$0xe]
      %v1724 = vld [vmem:[%s1363 + $0x20] sm:$0xe]
      %v1725 = vld [vmem:[%s1363 + $0x28] sm:$0xe]
      %v1726 = vld [vmem:[%s1363 + $0x30] sm:$0xe]
      %v1727 = vld [vmem:[%s1363 + $0x38] sm:$0xe]
      %v1744 = vrot.slane %v1720, 5
      %v1745 = vrot.slane %v1744, 4
      %v1746 = vrot.slane %v1487, 5
      %v1747 = vsel %vm705, %v1745, %v1746
      %v1748 = vrot.slane %v1721, 5
      %v1749 = vrot.slane %v1748, 4
      %v1750 = vrot.slane %v1489, 5
      %v1751 = vsel %vm705, %v1749, %v1750
      %v1752 = vrot.slane %v1722, 5
      %v1753 = vrot.slane %v1752, 4
      %v1754 = vrot.slane %v1491, 5
      %v1755 = vsel %vm705, %v1753, %v1754
      %v1756 = vrot.slane %v1723, 5
      %v1757 = vrot.slane %v1756, 4
      %v1758 = vrot.slane %v1493, 5
      %v1759 = vsel %vm705, %v1757, %v1758
      %v1760 = vrot.slane %v1724, 5
      %v1761 = vrot.slane %v1760, 4
      %v1762 = vrot.slane %v1495, 5
      %v1763 = vsel %vm705, %v1761, %v1762
      %v1764 = vrot.slane %v1725, 5
      %v1765 = vrot.slane %v1764, 4
      %v1766 = vrot.slane %v1497, 5
      %v1767 = vsel %vm705, %v1765, %v1766
      %v1768 = vrot.slane %v1726, 5
      %v1769 = vrot.slane %v1768, 4
      %v1770 = vrot.slane %v1499, 5
      %v1771 = vsel %vm705, %v1769, %v1770
      %v1772 = vrot.slane %v1727, 5
      %v1773 = vrot.slane %v1772, 4
      %v1774 = vrot.slane %v1501, 5
      %v1775 = vsel %vm705, %v1773, %v1774
      %s1776 = scalar_lea.vmem %s3, 64
      %v1777 = vld [vmem:[%s1776] sm:$0xf]
      %v1778 = vld [vmem:[%s1776 + $0x4] sm:$0xf]
      %v1779 = vunpack.c.l.b16 %v1747
      %v1780 = vunpack.c.l.b16 %v1751
      %v1781 = vunpack.c.l.b16 %v1755
      %v1782 = vunpack.c.l.b16 %v1759
      %v1783 = vunpack.c.l.b16 %v1763
      %v1784 = vunpack.c.l.b16 %v1767
      %v1785 = vunpack.c.l.b16 %v1771
      %v1786 = vunpack.c.l.b16 %v1775
      %v1787 = vpack.c.b16 %v1780, %v1779
      %v1788 = vpack.c.b16 %v1782, %v1781
      %v1789 = vpack.c.b16 %v1784, %v1783
      %v1790 = vpack.c.b16 %v1786, %v1785
      %v1793 = vunpack.c.l.b16 %v1777
      %v1794 = vunpack.c.l.b16 %v1778
      %v1795 = vpack.c.b16 %v1794, %v1793
      %v1798 = vsel %vm498, %v1787, 0
      %v1801 = vsel %vm498, %v1788, 0
      %v1804 = vsel %vm498, %v1789, 0
      %v1807 = vsel %vm498, %v1790, 0
      %1809 = vmatprep.subr.bf16.mxu0 0
      %1810 = vmatpush1.bf16.msra.mxu0 0
      %1811 = vmatprep.subr.bf16.mxu0 0
      %1812 = vmatpush1.bf16.msra.mxu0 0
      %1813 = vmatprep.subr.bf16.mxu0 0
      %1814 = vmatpush1.bf16.msra.mxu0 0
      %1815 = vmatprep.subr.bf16.mxu0 0
      %1816 = vmatpush1.bf16.msra.mxu0 0
      %1817 = vmatprep.subr.bf16.mxu0 0
      %1818 = vmatpush1.bf16.msra.mxu0 0
      %1819 = vmatprep.subr.bf16.mxu0 0
      %1820 = vmatpush1.bf16.msra.mxu0 0
      %1821 = vmatprep.subr.bf16.mxu0 0
      %1822 = vmatpush1.bf16.msra.mxu0 0
      %1823 = vmatprep.subr.bf16.mxu0 0
      %1824 = vmatpush1.bf16.msra.mxu0 %v1795
      %1825 = vmatprep.subr.bf16.mxu0 0
      %1826 = vmatpush2.bf16.msra.mxu0 0
      %1827 = vmatprep.subr.bf16.mxu0 0
      %1828 = vmatpush2.bf16.msra.mxu0 0
      %1829 = vmatprep.subr.bf16.mxu0 0
      %1830 = vmatpush2.bf16.msra.mxu0 0
      %1831 = vmatprep.subr.bf16.mxu0 0
      %1832 = vmatpush2.bf16.msra.mxu0 0
      %1833 = vmatprep.subr.bf16.mxu0 0
      %1834 = vmatpush2.bf16.msra.mxu0 0
      %1835 = vmatprep.subr.bf16.mxu0 0
      %1836 = vmatpush2.bf16.msra.mxu0 0
      %1837 = vmatprep.subr.bf16.mxu0 0
      %1838 = vmatpush2.bf16.msra.mxu0 0
      %1839 = vmatprep.subr.bf16.mxu0 0
      %1840 = vmatpush2.bf16.msra.mxu0 0
      %1841 = vmatprep.mubr.bf16.mxu0 0
      %1842 = vmatmul.mubr.bf16.gmra.mxu0 %v1798
      %v1843 = vpop.f32.mrf.mxu0
      %v1844 = vadd.f32 0.0, %v1843
      %v1845 = vpop.f32.mrf.mxu0
      %v1846 = vpop.f32.mrf.mxu0
      %v1847 = vadd.f32 0.0, %v1846
      %v1848 = vpop.f32.mrf.mxu0
      %1849 = vmatprep.mubr.bf16.mxu0 0
      %1850 = vmatmul.mubr.bf16.gmra.mxu0 %v1801
      %v1851 = vpop.f32.mrf.mxu0
      %v1852 = vadd.f32 0.0, %v1851
      %v1853 = vpop.f32.mrf.mxu0
      %v1854 = vpop.f32.mrf.mxu0
      %v1855 = vadd.f32 0.0, %v1854
      %v1856 = vpop.f32.mrf.mxu0
      %1857 = vmatprep.mubr.bf16.mxu0 0
      %1858 = vmatmul.mubr.bf16.gmra.mxu0 %v1804
      %v1859 = vpop.f32.mrf.mxu0
      %v1860 = vadd.f32 0.0, %v1859
      %v1861 = vpop.f32.mrf.mxu0
      %v1862 = vpop.f32.mrf.mxu0
      %v1863 = vadd.f32 0.0, %v1862
      %v1864 = vpop.f32.mrf.mxu0
      %1865 = vmatprep.mubr.bf16.mxu0 0
      %1866 = vmatmul.mubr.bf16.gmra.mxu0 %v1807
      %v1867 = vpop.f32.mrf.mxu0
      %v1868 = vadd.f32 0.0, %v1867
      %v1869 = vpop.f32.mrf.mxu0
      %v1870 = vpop.f32.mrf.mxu0
      %v1871 = vadd.f32 0.0, %v1870
      %v1872 = vpop.f32.mrf.mxu0
      %1873 = vdwg.mxu0
      %v1874 = vadd.f32 %v1712, %v1844
      %v1875 = vadd.f32 %v1713, %v1847
      %v1876 = vadd.f32 %v1714, %v1852
      %v1877 = vadd.f32 %v1715, %v1855
      %v1878 = vadd.f32 %v1716, %v1860
      %v1879 = vadd.f32 %v1717, %v1863
      %v1880 = vadd.f32 %v1718, %v1868
      %v1881 = vadd.f32 %v1719, %v1871
      %v1882 = vld [vmem:[%s321] sm:$0xf]
      %v1883 = vld [vmem:[%s321 + $0x8] sm:$0xf]
      %v1884 = vld [vmem:[%s321 + $0x10] sm:$0xf]
      %v1885 = vld [vmem:[%s321 + $0x18] sm:$0xf]
      %v1886 = vld [vmem:[%s321 + $0x20] sm:$0xf]
      %v1887 = vld [vmem:[%s321 + $0x28] sm:$0xf]
      %v1888 = vld [vmem:[%s321 + $0x30] sm:$0xf]
      %v1889 = vld [vmem:[%s321 + $0x38] sm:$0xf]
      %s1890 = scalar_lea.vmem %s3, 72
      %v1891 = vld [vmem:[%s1890] sm:$0xf]
      %v1892 = vld [vmem:[%s1890 + $0x4] sm:$0xf]
      %v1901 = vunpack.c.l.b16 %v1882
      %v1902 = vunpack.c.l.b16 %v1883
      %v1903 = vunpack.c.l.b16 %v1884
      %v1904 = vunpack.c.l.b16 %v1885
      %v1905 = vunpack.c.l.b16 %v1886
      %v1906 = vunpack.c.l.b16 %v1887
      %v1907 = vunpack.c.l.b16 %v1888
      %v1908 = vunpack.c.l.b16 %v1889
      %v1909 = vpack.c.b16 %v1902, %v1901
      %v1910 = vpack.c.b16 %v1904, %v1903
      %v1911 = vpack.c.b16 %v1906, %v1905
      %v1912 = vpack.c.b16 %v1908, %v1907
      %v1915 = vunpack.c.l.b16 %v1891
      %v1916 = vunpack.c.l.b16 %v1892
      %v1917 = vpack.c.b16 %v1916, %v1915
      %v1920 = vsel %vm498, %v1909, 0
      %v1923 = vsel %vm498, %v1910, 0
      %v1926 = vsel %vm498, %v1911, 0
      %v1929 = vsel %vm498, %v1912, 0
      %1931 = vmatprep.subr.bf16.mxu0 0
      %1932 = vmatpush1.bf16.msra.mxu0 0
      %1933 = vmatprep.subr.bf16.mxu0 0
      %1934 = vmatpush1.bf16.msra.mxu0 0
      %1935 = vmatprep.subr.bf16.mxu0 0
      %1936 = vmatpush1.bf16.msra.mxu0 0
      %1937 = vmatprep.subr.bf16.mxu0 0
      %1938 = vmatpush1.bf16.msra.mxu0 0
      %1939 = vmatprep.subr.bf16.mxu0 0
      %1940 = vmatpush1.bf16.msra.mxu0 0
      %1941 = vmatprep.subr.bf16.mxu0 0
      %1942 = vmatpush1.bf16.msra.mxu0 0
      %1943 = vmatprep.subr.bf16.mxu0 0
      %1944 = vmatpush1.bf16.msra.mxu0 0
      %1945 = vmatprep.subr.bf16.mxu0 0
      %1946 = vmatpush1.bf16.msra.mxu0 %v1917
      %1947 = vmatprep.subr.bf16.mxu0 0
      %1948 = vmatpush2.bf16.msra.mxu0 0
      %1949 = vmatprep.subr.bf16.mxu0 0
      %1950 = vmatpush2.bf16.msra.mxu0 0
      %1951 = vmatprep.subr.bf16.mxu0 0
      %1952 = vmatpush2.bf16.msra.mxu0 0
      %1953 = vmatprep.subr.bf16.mxu0 0
      %1954 = vmatpush2.bf16.msra.mxu0 0
      %1955 = vmatprep.subr.bf16.mxu0 0
      %1956 = vmatpush2.bf16.msra.mxu0 0
      %1957 = vmatprep.subr.bf16.mxu0 0
      %1958 = vmatpush2.bf16.msra.mxu0 0
      %1959 = vmatprep.subr.bf16.mxu0 0
      %1960 = vmatpush2.bf16.msra.mxu0 0
      %1961 = vmatprep.subr.bf16.mxu0 0
      %1962 = vmatpush2.bf16.msra.mxu0 0
      %1963 = vmatprep.mubr.bf16.mxu0 0
      %1964 = vmatmul.mubr.bf16.gmra.mxu0 %v1920
      %v1965 = vpop.f32.mrf.mxu0
      %v1966 = vadd.f32 0.0, %v1965
      %v1967 = vpop.f32.mrf.mxu0
      %v1968 = vpop.f32.mrf.mxu0
      %v1969 = vadd.f32 0.0, %v1968
      %v1970 = vpop.f32.mrf.mxu0
      %1971 = vmatprep.mubr.bf16.mxu0 0
      %1972 = vmatmul.mubr.bf16.gmra.mxu0 %v1923
      %v1973 = vpop.f32.mrf.mxu0
      %v1974 = vadd.f32 0.0, %v1973
      %v1975 = vpop.f32.mrf.mxu0
      %v1976 = vpop.f32.mrf.mxu0
      %v1977 = vadd.f32 0.0, %v1976
      %v1978 = vpop.f32.mrf.mxu0
      %1979 = vmatprep.mubr.bf16.mxu0 0
      %1980 = vmatmul.mubr.bf16.gmra.mxu0 %v1926
      %v1981 = vpop.f32.mrf.mxu0
      %v1982 = vadd.f32 0.0, %v1981
      %v1983 = vpop.f32.mrf.mxu0
      %v1984 = vpop.f32.mrf.mxu0
      %v1985 = vadd.f32 0.0, %v1984
      %v1986 = vpop.f32.mrf.mxu0
      %1987 = vmatprep.mubr.bf16.mxu0 0
      %1988 = vmatmul.mubr.bf16.gmra.mxu0 %v1929
      %v1989 = vpop.f32.mrf.mxu0
      %v1990 = vadd.f32 0.0, %v1989
      %v1991 = vpop.f32.mrf.mxu0
      %v1992 = vpop.f32.mrf.mxu0
      %v1993 = vadd.f32 0.0, %v1992
      %v1994 = vpop.f32.mrf.mxu0
      %1995 = vdwg.mxu0
      %v1996 = vadd.f32 %v1874, %v1966
      %v1997 = vadd.f32 %v1875, %v1969
      %v1998 = vadd.f32 %v1876, %v1974
      %v1999 = vadd.f32 %v1877, %v1977
      %v2000 = vadd.f32 %v1878, %v1982
      %v2001 = vadd.f32 %v1879, %v1985
      %v2002 = vadd.f32 %v1880, %v1990
      %v2003 = vadd.f32 %v1881, %v1993
      %v2004 = vld [vmem:[%s321] sm:$0xf]
      %v2005 = vld [vmem:[%s321 + $0x4] sm:$0x1]
      %v2006 = vld [vmem:[%s321 + $0x8] sm:$0xf]
      %v2007 = vld [vmem:[%s321 + $0xc] sm:$0x1]
      %v2008 = vld [vmem:[%s321 + $0x10] sm:$0xf]
      %v2009 = vld [vmem:[%s321 + $0x14] sm:$0x1]
      %v2010 = vld [vmem:[%s321 + $0x18] sm:$0xf]
      %v2011 = vld [vmem:[%s321 + $0x1c] sm:$0x1]
      %v2012 = vld [vmem:[%s321 + $0x20] sm:$0xf]
      %v2013 = vld [vmem:[%s321 + $0x24] sm:$0x1]
      %v2014 = vld [vmem:[%s321 + $0x28] sm:$0xf]
      %v2015 = vld [vmem:[%s321 + $0x2c] sm:$0x1]
      %v2016 = vld [vmem:[%s321 + $0x30] sm:$0xf]
      %v2017 = vld [vmem:[%s321 + $0x34] sm:$0x1]
      %v2018 = vld [vmem:[%s321 + $0x38] sm:$0xf]
      %v2019 = vld [vmem:[%s321 + $0x3c] sm:$0x1]
      %v2021 = vshrl.u32 %v2004, 16
      %v2023 = vrot.slane %v2021, 4
      %v2024 = vshll.u32 %v2004, 16
      %v2026 = vrot.slane %v2024, 5
      %v2027 = vor.u32 %v2023, %v2026
      %v2028 = vrot.slane %v2027, 4
      %v2030 = vshll.u32 %v2005, 16
      %v2032 = vrot.slane %v2030, 5
      %v2033 = vsel %vm364, %v2028, %v2032
      %v2035 = vshrl.u32 %v2006, 16
      %v2037 = vrot.slane %v2035, 4
      %v2038 = vshll.u32 %v2006, 16
      %v2040 = vrot.slane %v2038, 5
      %v2041 = vor.u32 %v2037, %v2040
      %v2042 = vrot.slane %v2041, 4
      %v2044 = vshll.u32 %v2007, 16
      %v2046 = vrot.slane %v2044, 5
      %v2047 = vsel %vm364, %v2042, %v2046
      %v2049 = vshrl.u32 %v2008, 16
      %v2051 = vrot.slane %v2049, 4
      %v2052 = vshll.u32 %v2008, 16
      %v2054 = vrot.slane %v2052, 5
      %v2055 = vor.u32 %v2051, %v2054
      %v2056 = vrot.slane %v2055, 4
      %v2058 = vshll.u32 %v2009, 16
      %v2060 = vrot.slane %v2058, 5
      %v2061 = vsel %vm364, %v2056, %v2060
      %v2063 = vshrl.u32 %v2010, 16
      %v2065 = vrot.slane %v2063, 4
      %v2066 = vshll.u32 %v2010, 16
      %v2068 = vrot.slane %v2066, 5
      %v2069 = vor.u32 %v2065, %v2068
      %v2070 = vrot.slane %v2069, 4
      %v2072 = vshll.u32 %v2011, 16
      %v2074 = vrot.slane %v2072, 5
      %v2075 = vsel %vm364, %v2070, %v2074
      %v2077 = vshrl.u32 %v2012, 16
      %v2079 = vrot.slane %v2077, 4
      %v2080 = vshll.u32 %v2012, 16
      %v2082 = vrot.slane %v2080, 5
      %v2083 = vor.u32 %v2079, %v2082
      %v2084 = vrot.slane %v2083, 4
      %v2086 = vshll.u32 %v2013, 16
      %v2088 = vrot.slane %v2086, 5
      %v2089 = vsel %vm364, %v2084, %v2088
      %v2091 = vshrl.u32 %v2014, 16
      %v2093 = vrot.slane %v2091, 4
      %v2094 = vshll.u32 %v2014, 16
      %v2096 = vrot.slane %v2094, 5
      %v2097 = vor.u32 %v2093, %v2096
      %v2098 = vrot.slane %v2097, 4
      %v2100 = vshll.u32 %v2015, 16
      %v2102 = vrot.slane %v2100, 5
      %v2103 = vsel %vm364, %v2098, %v2102
      %v2105 = vshrl.u32 %v2016, 16
      %v2107 = vrot.slane %v2105, 4
      %v2108 = vshll.u32 %v2016, 16
      %v2110 = vrot.slane %v2108, 5
      %v2111 = vor.u32 %v2107, %v2110
      %v2112 = vrot.slane %v2111, 4
      %v2114 = vshll.u32 %v2017, 16
      %v2116 = vrot.slane %v2114, 5
      %v2117 = vsel %vm364, %v2112, %v2116
      %v2119 = vshrl.u32 %v2018, 16
      %v2121 = vrot.slane %v2119, 4
      %v2122 = vshll.u32 %v2018, 16
      %v2124 = vrot.slane %v2122, 5
      %v2125 = vor.u32 %v2121, %v2124
      %v2126 = vrot.slane %v2125, 4
      %v2128 = vshll.u32 %v2019, 16
      %v2130 = vrot.slane %v2128, 5
      %v2131 = vsel %vm364, %v2126, %v2130
      %s2132 = scalar_lea.vmem %s3, 80
      %v2133 = vld [vmem:[%s2132] sm:$0xf]
      %v2134 = vld [vmem:[%s2132 + $0x4] sm:$0xf]
      %v2135 = vunpack.c.l.b16 %v2033
      %v2136 = vunpack.c.l.b16 %v2047
      %v2137 = vunpack.c.l.b16 %v2061
      %v2138 = vunpack.c.l.b16 %v2075
      %v2139 = vunpack.c.l.b16 %v2089
      %v2140 = vunpack.c.l.b16 %v2103
      %v2141 = vunpack.c.l.b16 %v2117
      %v2142 = vunpack.c.l.b16 %v2131
      %v2143 = vpack.c.b16 %v2136, %v2135
      %v2144 = vpack.c.b16 %v2138, %v2137
      %v2145 = vpack.c.b16 %v2140, %v2139
      %v2146 = vpack.c.b16 %v2142, %v2141
      %v2149 = vunpack.c.l.b16 %v2133
      %v2150 = vunpack.c.l.b16 %v2134
      %v2151 = vpack.c.b16 %v2150, %v2149
      %v2154 = vsel %vm498, %v2143, 0
      %v2157 = vsel %vm498, %v2144, 0
      %v2160 = vsel %vm498, %v2145, 0
      %v2163 = vsel %vm498, %v2146, 0
      %2165 = vmatprep.subr.bf16.mxu0 0
      %2166 = vmatpush1.bf16.msra.mxu0 0
      %2167 = vmatprep.subr.bf16.mxu0 0
      %2168 = vmatpush1.bf16.msra.mxu0 0
      %2169 = vmatprep.subr.bf16.mxu0 0
      %2170 = vmatpush1.bf16.msra.mxu0 0
      %2171 = vmatprep.subr.bf16.mxu0 0
      %2172 = vmatpush1.bf16.msra.mxu0 0
      %2173 = vmatprep.subr.bf16.mxu0 0
      %2174 = vmatpush1.bf16.msra.mxu0 0
      %2175 = vmatprep.subr.bf16.mxu0 0
      %2176 = vmatpush1.bf16.msra.mxu0 0
      %2177 = vmatprep.subr.bf16.mxu0 0
      %2178 = vmatpush1.bf16.msra.mxu0 0
      %2179 = vmatprep.subr.bf16.mxu0 0
      %2180 = vmatpush1.bf16.msra.mxu0 %v2151
      %2181 = vmatprep.subr.bf16.mxu0 0
      %2182 = vmatpush2.bf16.msra.mxu0 0
      %2183 = vmatprep.subr.bf16.mxu0 0
      %2184 = vmatpush2.bf16.msra.mxu0 0
      %2185 = vmatprep.subr.bf16.mxu0 0
      %2186 = vmatpush2.bf16.msra.mxu0 0
      %2187 = vmatprep.subr.bf16.mxu0 0
      %2188 = vmatpush2.bf16.msra.mxu0 0
      %2189 = vmatprep.subr.bf16.mxu0 0
      %2190 = vmatpush2.bf16.msra.mxu0 0
      %2191 = vmatprep.subr.bf16.mxu0 0
      %2192 = vmatpush2.bf16.msra.mxu0 0
      %2193 = vmatprep.subr.bf16.mxu0 0
      %2194 = vmatpush2.bf16.msra.mxu0 0
      %2195 = vmatprep.subr.bf16.mxu0 0
      %2196 = vmatpush2.bf16.msra.mxu0 0
      %2197 = vmatprep.mubr.bf16.mxu0 0
      %2198 = vmatmul.mubr.bf16.gmra.mxu0 %v2154
      %v2199 = vpop.f32.mrf.mxu0
      %v2200 = vadd.f32 0.0, %v2199
      %v2201 = vpop.f32.mrf.mxu0
      %v2202 = vpop.f32.mrf.mxu0
      %v2203 = vadd.f32 0.0, %v2202
      %v2204 = vpop.f32.mrf.mxu0
      %2205 = vmatprep.mubr.bf16.mxu0 0
      %2206 = vmatmul.mubr.bf16.gmra.mxu0 %v2157
      %v2207 = vpop.f32.mrf.mxu0
      %v2208 = vadd.f32 0.0, %v2207
      %v2209 = vpop.f32.mrf.mxu0
      %v2210 = vpop.f32.mrf.mxu0
      %v2211 = vadd.f32 0.0, %v2210
      %v2212 = vpop.f32.mrf.mxu0
      %2213 = vmatprep.mubr.bf16.mxu0 0
      %2214 = vmatmul.mubr.bf16.gmra.mxu0 %v2160
      %v2215 = vpop.f32.mrf.mxu0
      %v2216 = vadd.f32 0.0, %v2215
      %v2217 = vpop.f32.mrf.mxu0
      %v2218 = vpop.f32.mrf.mxu0
      %v2219 = vadd.f32 0.0, %v2218
      %v2220 = vpop.f32.mrf.mxu0
      %2221 = vmatprep.mubr.bf16.mxu0 0
      %2222 = vmatmul.mubr.bf16.gmra.mxu0 %v2163
      %v2223 = vpop.f32.mrf.mxu0
      %v2224 = vadd.f32 0.0, %v2223
      %v2225 = vpop.f32.mrf.mxu0
      %v2226 = vpop.f32.mrf.mxu0
      %v2227 = vadd.f32 0.0, %v2226
      %v2228 = vpop.f32.mrf.mxu0
      %2229 = vdwg.mxu0
      %v2230 = vadd.f32 %v1996, %v2200
      %v2231 = vadd.f32 %v1997, %v2203
      %v2232 = vadd.f32 %v1998, %v2208
      %v2233 = vadd.f32 %v1999, %v2211
      %v2234 = vadd.f32 %v2000, %v2216
      %v2235 = vadd.f32 %v2001, %v2219
      %v2236 = vadd.f32 %v2002, %v2224
      %v2237 = vadd.f32 %v2003, %v2227
      %v2238 = vld [vmem:[%s321] sm:$0xe]
      %v2239 = vld [vmem:[%s321 + $0x8] sm:$0xe]
      %v2240 = vld [vmem:[%s321 + $0x10] sm:$0xe]
      %v2241 = vld [vmem:[%s321 + $0x18] sm:$0xe]
      %v2242 = vld [vmem:[%s321 + $0x20] sm:$0xe]
      %v2243 = vld [vmem:[%s321 + $0x28] sm:$0xe]
      %v2244 = vld [vmem:[%s321 + $0x30] sm:$0xe]
      %v2245 = vld [vmem:[%s321 + $0x38] sm:$0xe]
      %v2262 = vrot.slane %v2238, 5
      %v2263 = vrot.slane %v2262, 4
      %v2264 = vrot.slane %v2005, 5
      %v2265 = vsel %vm705, %v2263, %v2264
      %v2266 = vrot.slane %v2239, 5
      %v2267 = vrot.slane %v2266, 4
      %v2268 = vrot.slane %v2007, 5
      %v2269 = vsel %vm705, %v2267, %v2268
      %v2270 = vrot.slane %v2240, 5
      %v2271 = vrot.slane %v2270, 4
      %v2272 = vrot.slane %v2009, 5
      %v2273 = vsel %vm705, %v2271, %v2272
      %v2274 = vrot.slane %v2241, 5
      %v2275 = vrot.slane %v2274, 4
      %v2276 = vrot.slane %v2011, 5
      %v2277 = vsel %vm705, %v2275, %v2276
      %v2278 = vrot.slane %v2242, 5
      %v2279 = vrot.slane %v2278, 4
      %v2280 = vrot.slane %v2013, 5
      %v2281 = vsel %vm705, %v2279, %v2280
      %v2282 = vrot.slane %v2243, 5
      %v2283 = vrot.slane %v2282, 4
      %v2284 = vrot.slane %v2015, 5
      %v2285 = vsel %vm705, %v2283, %v2284
      %v2286 = vrot.slane %v2244, 5
      %v2287 = vrot.slane %v2286, 4
      %v2288 = vrot.slane %v2017, 5
      %v2289 = vsel %vm705, %v2287, %v2288
      %v2290 = vrot.slane %v2245, 5
      %v2291 = vrot.slane %v2290, 4
      %v2292 = vrot.slane %v2019, 5
      %v2293 = vsel %vm705, %v2291, %v2292
      %s2294 = scalar_lea.vmem %s3, 88
      %v2295 = vld [vmem:[%s2294] sm:$0xf]
      %v2296 = vld [vmem:[%s2294 + $0x4] sm:$0xf]
      %v2297 = vunpack.c.l.b16 %v2265
      %v2298 = vunpack.c.l.b16 %v2269
      %v2299 = vunpack.c.l.b16 %v2273
      %v2300 = vunpack.c.l.b16 %v2277
      %v2301 = vunpack.c.l.b16 %v2281
      %v2302 = vunpack.c.l.b16 %v2285
      %v2303 = vunpack.c.l.b16 %v2289
      %v2304 = vunpack.c.l.b16 %v2293
      %v2305 = vpack.c.b16 %v2298, %v2297
      %v2306 = vpack.c.b16 %v2300, %v2299
      %v2307 = vpack.c.b16 %v2302, %v2301
      %v2308 = vpack.c.b16 %v2304, %v2303
      %v2311 = vunpack.c.l.b16 %v2295
      %v2312 = vunpack.c.l.b16 %v2296
      %v2313 = vpack.c.b16 %v2312, %v2311
      %v2316 = vsel %vm498, %v2305, 0
      %v2319 = vsel %vm498, %v2306, 0
      %v2322 = vsel %vm498, %v2307, 0
      %v2325 = vsel %vm498, %v2308, 0
      %2327 = vmatprep.subr.bf16.mxu0 0
      %2328 = vmatpush1.bf16.msra.mxu0 0
      %2329 = vmatprep.subr.bf16.mxu0 0
      %2330 = vmatpush1.bf16.msra.mxu0 0
      %2331 = vmatprep.subr.bf16.mxu0 0
      %2332 = vmatpush1.bf16.msra.mxu0 0
      %2333 = vmatprep.subr.bf16.mxu0 0
      %2334 = vmatpush1.bf16.msra.mxu0 0
      %2335 = vmatprep.subr.bf16.mxu0 0
      %2336 = vmatpush1.bf16.msra.mxu0 0
      %2337 = vmatprep.subr.bf16.mxu0 0
      %2338 = vmatpush1.bf16.msra.mxu0 0
      %2339 = vmatprep.subr.bf16.mxu0 0
      %2340 = vmatpush1.bf16.msra.mxu0 0
      %2341 = vmatprep.subr.bf16.mxu0 0
      %2342 = vmatpush1.bf16.msra.mxu0 %v2313
      %2343 = vmatprep.subr.bf16.mxu0 0
      %2344 = vmatpush2.bf16.msra.mxu0 0
      %2345 = vmatprep.subr.bf16.mxu0 0
      %2346 = vmatpush2.bf16.msra.mxu0 0
      %2347 = vmatprep.subr.bf16.mxu0 0
      %2348 = vmatpush2.bf16.msra.mxu0 0
      %2349 = vmatprep.subr.bf16.mxu0 0
      %2350 = vmatpush2.bf16.msra.mxu0 0
      %2351 = vmatprep.subr.bf16.mxu0 0
      %2352 = vmatpush2.bf16.msra.mxu0 0
      %2353 = vmatprep.subr.bf16.mxu0 0
      %2354 = vmatpush2.bf16.msra.mxu0 0
      %2355 = vmatprep.subr.bf16.mxu0 0
      %2356 = vmatpush2.bf16.msra.mxu0 0
      %2357 = vmatprep.subr.bf16.mxu0 0
      %2358 = vmatpush2.bf16.msra.mxu0 0
      %2359 = vmatprep.mubr.bf16.mxu0 0
      %2360 = vmatmul.mubr.bf16.gmra.mxu0 %v2316
      %v2361 = vpop.f32.mrf.mxu0
      %v2362 = vadd.f32 0.0, %v2361
      %v2363 = vpop.f32.mrf.mxu0
      %v2364 = vpop.f32.mrf.mxu0
      %v2365 = vadd.f32 0.0, %v2364
      %v2366 = vpop.f32.mrf.mxu0
      %2367 = vmatprep.mubr.bf16.mxu0 0
      %2368 = vmatmul.mubr.bf16.gmra.mxu0 %v2319
      %v2369 = vpop.f32.mrf.mxu0
      %v2370 = vadd.f32 0.0, %v2369
      %v2371 = vpop.f32.mrf.mxu0
      %v2372 = vpop.f32.mrf.mxu0
      %v2373 = vadd.f32 0.0, %v2372
      %v2374 = vpop.f32.mrf.mxu0
      %2375 = vmatprep.mubr.bf16.mxu0 0
      %2376 = vmatmul.mubr.bf16.gmra.mxu0 %v2322
      %v2377 = vpop.f32.mrf.mxu0
      %v2378 = vadd.f32 0.0, %v2377
      %v2379 = vpop.f32.mrf.mxu0
      %v2380 = vpop.f32.mrf.mxu0
      %v2381 = vadd.f32 0.0, %v2380
      %v2382 = vpop.f32.mrf.mxu0
      %2383 = vmatprep.mubr.bf16.mxu0 0
      %2384 = vmatmul.mubr.bf16.gmra.mxu0 %v2325
      %v2385 = vpop.f32.mrf.mxu0
      %v2386 = vadd.f32 0.0, %v2385
      %v2387 = vpop.f32.mrf.mxu0
      %v2388 = vpop.f32.mrf.mxu0
      %v2389 = vadd.f32 0.0, %v2388
      %v2390 = vpop.f32.mrf.mxu0
      %2391 = vdwg.mxu0
      %v2392 = vadd.f32 %v2230, %v2362
      %v2393 = vadd.f32 %v2231, %v2365
      %v2394 = vadd.f32 %v2232, %v2370
      %v2395 = vadd.f32 %v2233, %v2373
      %v2396 = vadd.f32 %v2234, %v2378
      %v2397 = vadd.f32 %v2235, %v2381
      %v2398 = vadd.f32 %v2236, %v2386
      %v2399 = vadd.f32 %v2237, %v2389
      %s2400 = scalar_lea.vmem %s321, 8
      %v2401 = vld [vmem:[%s2400] sm:$0xf]
      %v2402 = vld [vmem:[%s2400 + $0x8] sm:$0xf]
      %v2403 = vld [vmem:[%s2400 + $0x10] sm:$0xf]
      %v2404 = vld [vmem:[%s2400 + $0x18] sm:$0xf]
      %v2405 = vld [vmem:[%s2400 + $0x20] sm:$0xf]
      %v2406 = vld [vmem:[%s2400 + $0x28] sm:$0xf]
      %v2407 = vld [vmem:[%s2400 + $0x30] sm:$0xf]
      %v2408 = vld [vmem:[%s2400 + $0x38] sm:$0xf]
      %s2409 = scalar_lea.vmem %s3, 96
      %v2410 = vld [vmem:[%s2409] sm:$0xf]
      %v2411 = vld [vmem:[%s2409 + $0x4] sm:$0xf]
      %v2420 = vunpack.c.l.b16 %v2401
      %v2421 = vunpack.c.l.b16 %v2402
      %v2422 = vunpack.c.l.b16 %v2403
      %v2423 = vunpack.c.l.b16 %v2404
      %v2424 = vunpack.c.l.b16 %v2405
      %v2425 = vunpack.c.l.b16 %v2406
      %v2426 = vunpack.c.l.b16 %v2407
      %v2427 = vunpack.c.l.b16 %v2408
      %v2428 = vpack.c.b16 %v2421, %v2420
      %v2429 = vpack.c.b16 %v2423, %v2422
      %v2430 = vpack.c.b16 %v2425, %v2424
      %v2431 = vpack.c.b16 %v2427, %v2426
      %v2434 = vunpack.c.l.b16 %v2410
      %v2435 = vunpack.c.l.b16 %v2411
      %v2436 = vpack.c.b16 %v2435, %v2434
      %v2439 = vsel %vm498, %v2428, 0
      %v2442 = vsel %vm498, %v2429, 0
      %v2445 = vsel %vm498, %v2430, 0
      %v2448 = vsel %vm498, %v2431, 0
      %2450 = vmatprep.subr.bf16.mxu0 0
      %2451 = vmatpush1.bf16.msra.mxu0 0
      %2452 = vmatprep.subr.bf16.mxu0 0
      %2453 = vmatpush1.bf16.msra.mxu0 0
      %2454 = vmatprep.subr.bf16.mxu0 0
      %2455 = vmatpush1.bf16.msra.mxu0 0
      %2456 = vmatprep.subr.bf16.mxu0 0
      %2457 = vmatpush1.bf16.msra.mxu0 0
      %2458 = vmatprep.subr.bf16.mxu0 0
      %2459 = vmatpush1.bf16.msra.mxu0 0
      %2460 = vmatprep.subr.bf16.mxu0 0
      %2461 = vmatpush1.bf16.msra.mxu0 0
      %2462 = vmatprep.subr.bf16.mxu0 0
      %2463 = vmatpush1.bf16.msra.mxu0 0
      %2464 = vmatprep.subr.bf16.mxu0 0
      %2465 = vmatpush1.bf16.msra.mxu0 %v2436
      %2466 = vmatprep.subr.bf16.mxu0 0
      %2467 = vmatpush2.bf16.msra.mxu0 0
      %2468 = vmatprep.subr.bf16.mxu0 0
      %2469 = vmatpush2.bf16.msra.mxu0 0
      %2470 = vmatprep.subr.bf16.mxu0 0
      %2471 = vmatpush2.bf16.msra.mxu0 0
      %2472 = vmatprep.subr.bf16.mxu0 0
      %2473 = vmatpush2.bf16.msra.mxu0 0
      %2474 = vmatprep.subr.bf16.mxu0 0
      %2475 = vmatpush2.bf16.msra.mxu0 0
      %2476 = vmatprep.subr.bf16.mxu0 0
      %2477 = vmatpush2.bf16.msra.mxu0 0
      %2478 = vmatprep.subr.bf16.mxu0 0
      %2479 = vmatpush2.bf16.msra.mxu0 0
      %2480 = vmatprep.subr.bf16.mxu0 0
      %2481 = vmatpush2.bf16.msra.mxu0 0
      %2482 = vmatprep.mubr.bf16.mxu0 0
      %2483 = vmatmul.mubr.bf16.gmra.mxu0 %v2439
      %v2484 = vpop.f32.mrf.mxu0
      %v2485 = vadd.f32 0.0, %v2484
      %v2486 = vpop.f32.mrf.mxu0
      %v2487 = vpop.f32.mrf.mxu0
      %v2488 = vadd.f32 0.0, %v2487
      %v2489 = vpop.f32.mrf.mxu0
      %2490 = vmatprep.mubr.bf16.mxu0 0
      %2491 = vmatmul.mubr.bf16.gmra.mxu0 %v2442
      %v2492 = vpop.f32.mrf.mxu0
      %v2493 = vadd.f32 0.0, %v2492
      %v2494 = vpop.f32.mrf.mxu0
      %v2495 = vpop.f32.mrf.mxu0
      %v2496 = vadd.f32 0.0, %v2495
      %v2497 = vpop.f32.mrf.mxu0
      %2498 = vmatprep.mubr.bf16.mxu0 0
      %2499 = vmatmul.mubr.bf16.gmra.mxu0 %v2445
      %v2500 = vpop.f32.mrf.mxu0
      %v2501 = vadd.f32 0.0, %v2500
      %v2502 = vpop.f32.mrf.mxu0
      %v2503 = vpop.f32.mrf.mxu0
      %v2504 = vadd.f32 0.0, %v2503
      %v2505 = vpop.f32.mrf.mxu0
      %2506 = vmatprep.mubr.bf16.mxu0 0
      %2507 = vmatmul.mubr.bf16.gmra.mxu0 %v2448
      %v2508 = vpop.f32.mrf.mxu0
      %v2509 = vadd.f32 0.0, %v2508
      %v2510 = vpop.f32.mrf.mxu0
      %v2511 = vpop.f32.mrf.mxu0
      %v2512 = vadd.f32 0.0, %v2511
      %v2513 = vpop.f32.mrf.mxu0
      %2514 = vdwg.mxu0
      %v2515 = vadd.f32 %v2392, %v2485
      %v2516 = vadd.f32 %v2393, %v2488
      %v2517 = vadd.f32 %v2394, %v2493
      %v2518 = vadd.f32 %v2395, %v2496
      %v2519 = vadd.f32 %v2396, %v2501
      %v2520 = vadd.f32 %v2397, %v2504
      %v2521 = vadd.f32 %v2398, %v2509
      %v2522 = vadd.f32 %v2399, %v2512
      %v2523 = vld [vmem:[%s2400] sm:$0xf]
      %v2524 = vld [vmem:[%s2400 + $0x4] sm:$0x1]
      %v2525 = vld [vmem:[%s2400 + $0x8] sm:$0xf]
      %v2526 = vld [vmem:[%s2400 + $0xc] sm:$0x1]
      %v2527 = vld [vmem:[%s2400 + $0x10] sm:$0xf]
      %v2528 = vld [vmem:[%s2400 + $0x14] sm:$0x1]
      %v2529 = vld [vmem:[%s2400 + $0x18] sm:$0xf]
      %v2530 = vld [vmem:[%s2400 + $0x1c] sm:$0x1]
      %v2531 = vld [vmem:[%s2400 + $0x20] sm:$0xf]
      %v2532 = vld [vmem:[%s2400 + $0x24] sm:$0x1]
      %v2533 = vld [vmem:[%s2400 + $0x28] sm:$0xf]
      %v2534 = vld [vmem:[%s2400 + $0x2c] sm:$0x1]
      %v2535 = vld [vmem:[%s2400 + $0x30] sm:$0xf]
      %v2536 = vld [vmem:[%s2400 + $0x34] sm:$0x1]
      %v2537 = vld [vmem:[%s2400 + $0x38] sm:$0xf]
      %v2538 = vld [vmem:[%s2400 + $0x3c] sm:$0x1]
      %v2540 = vshrl.u32 %v2523, 16
      %v2542 = vrot.slane %v2540, 4
      %v2543 = vshll.u32 %v2523, 16
      %v2545 = vrot.slane %v2543, 5
      %v2546 = vor.u32 %v2542, %v2545
      %v2547 = vrot.slane %v2546, 4
      %v2549 = vshll.u32 %v2524, 16
      %v2551 = vrot.slane %v2549, 5
      %v2552 = vsel %vm364, %v2547, %v2551
      %v2554 = vshrl.u32 %v2525, 16
      %v2556 = vrot.slane %v2554, 4
      %v2557 = vshll.u32 %v2525, 16
      %v2559 = vrot.slane %v2557, 5
      %v2560 = vor.u32 %v2556, %v2559
      %v2561 = vrot.slane %v2560, 4
      %v2563 = vshll.u32 %v2526, 16
      %v2565 = vrot.slane %v2563, 5
      %v2566 = vsel %vm364, %v2561, %v2565
      %v2568 = vshrl.u32 %v2527, 16
      %v2570 = vrot.slane %v2568, 4
      %v2571 = vshll.u32 %v2527, 16
      %v2573 = vrot.slane %v2571, 5
      %v2574 = vor.u32 %v2570, %v2573
      %v2575 = vrot.slane %v2574, 4
      %v2577 = vshll.u32 %v2528, 16
      %v2579 = vrot.slane %v2577, 5
      %v2580 = vsel %vm364, %v2575, %v2579
      %v2582 = vshrl.u32 %v2529, 16
      %v2584 = vrot.slane %v2582, 4
      %v2585 = vshll.u32 %v2529, 16
      %v2587 = vrot.slane %v2585, 5
      %v2588 = vor.u32 %v2584, %v2587
      %v2589 = vrot.slane %v2588, 4
      %v2591 = vshll.u32 %v2530, 16
      %v2593 = vrot.slane %v2591, 5
      %v2594 = vsel %vm364, %v2589, %v2593
      %v2596 = vshrl.u32 %v2531, 16
      %v2598 = vrot.slane %v2596, 4
      %v2599 = vshll.u32 %v2531, 16
      %v2601 = vrot.slane %v2599, 5
      %v2602 = vor.u32 %v2598, %v2601
      %v2603 = vrot.slane %v2602, 4
      %v2605 = vshll.u32 %v2532, 16
      %v2607 = vrot.slane %v2605, 5
      %v2608 = vsel %vm364, %v2603, %v2607
      %v2610 = vshrl.u32 %v2533, 16
      %v2612 = vrot.slane %v2610, 4
      %v2613 = vshll.u32 %v2533, 16
      %v2615 = vrot.slane %v2613, 5
      %v2616 = vor.u32 %v2612, %v2615
      %v2617 = vrot.slane %v2616, 4
      %v2619 = vshll.u32 %v2534, 16
      %v2621 = vrot.slane %v2619, 5
      %v2622 = vsel %vm364, %v2617, %v2621
      %v2624 = vshrl.u32 %v2535, 16
      %v2626 = vrot.slane %v2624, 4
      %v2627 = vshll.u32 %v2535, 16
      %v2629 = vrot.slane %v2627, 5
      %v2630 = vor.u32 %v2626, %v2629
      %v2631 = vrot.slane %v2630, 4
      %v2633 = vshll.u32 %v2536, 16
      %v2635 = vrot.slane %v2633, 5
      %v2636 = vsel %vm364, %v2631, %v2635
      %v2638 = vshrl.u32 %v2537, 16
      %v2640 = vrot.slane %v2638, 4
      %v2641 = vshll.u32 %v2537, 16
      %v2643 = vrot.slane %v2641, 5
      %v2644 = vor.u32 %v2640, %v2643
      %v2645 = vrot.slane %v2644, 4
      %v2647 = vshll.u32 %v2538, 16
      %v2649 = vrot.slane %v2647, 5
      %v2650 = vsel %vm364, %v2645, %v2649
      %s2651 = scalar_lea.vmem %s3, 104
      %v2652 = vld [vmem:[%s2651] sm:$0xf]
      %v2653 = vld [vmem:[%s2651 + $0x4] sm:$0xf]
      %v2654 = vunpack.c.l.b16 %v2552
      %v2655 = vunpack.c.l.b16 %v2566
      %v2656 = vunpack.c.l.b16 %v2580
      %v2657 = vunpack.c.l.b16 %v2594
      %v2658 = vunpack.c.l.b16 %v2608
      %v2659 = vunpack.c.l.b16 %v2622
      %v2660 = vunpack.c.l.b16 %v2636
      %v2661 = vunpack.c.l.b16 %v2650
      %v2662 = vpack.c.b16 %v2655, %v2654
      %v2663 = vpack.c.b16 %v2657, %v2656
      %v2664 = vpack.c.b16 %v2659, %v2658
      %v2665 = vpack.c.b16 %v2661, %v2660
      %v2668 = vunpack.c.l.b16 %v2652
      %v2669 = vunpack.c.l.b16 %v2653
      %v2670 = vpack.c.b16 %v2669, %v2668
      %v2673 = vsel %vm498, %v2662, 0
      %v2676 = vsel %vm498, %v2663, 0
      %v2679 = vsel %vm498, %v2664, 0
      %v2682 = vsel %vm498, %v2665, 0
      %2684 = vmatprep.subr.bf16.mxu0 0
      %2685 = vmatpush1.bf16.msra.mxu0 0
      %2686 = vmatprep.subr.bf16.mxu0 0
      %2687 = vmatpush1.bf16.msra.mxu0 0
      %2688 = vmatprep.subr.bf16.mxu0 0
      %2689 = vmatpush1.bf16.msra.mxu0 0
      %2690 = vmatprep.subr.bf16.mxu0 0
      %2691 = vmatpush1.bf16.msra.mxu0 0
      %2692 = vmatprep.subr.bf16.mxu0 0
      %2693 = vmatpush1.bf16.msra.mxu0 0
      %2694 = vmatprep.subr.bf16.mxu0 0
      %2695 = vmatpush1.bf16.msra.mxu0 0
      %2696 = vmatprep.subr.bf16.mxu0 0
      %2697 = vmatpush1.bf16.msra.mxu0 0
      %2698 = vmatprep.subr.bf16.mxu0 0
      %2699 = vmatpush1.bf16.msra.mxu0 %v2670
      %2700 = vmatprep.subr.bf16.mxu0 0
      %2701 = vmatpush2.bf16.msra.mxu0 0
      %2702 = vmatprep.subr.bf16.mxu0 0
      %2703 = vmatpush2.bf16.msra.mxu0 0
      %2704 = vmatprep.subr.bf16.mxu0 0
      %2705 = vmatpush2.bf16.msra.mxu0 0
      %2706 = vmatprep.subr.bf16.mxu0 0
      %2707 = vmatpush2.bf16.msra.mxu0 0
      %2708 = vmatprep.subr.bf16.mxu0 0
      %2709 = vmatpush2.bf16.msra.mxu0 0
      %2710 = vmatprep.subr.bf16.mxu0 0
      %2711 = vmatpush2.bf16.msra.mxu0 0
      %2712 = vmatprep.subr.bf16.mxu0 0
      %2713 = vmatpush2.bf16.msra.mxu0 0
      %2714 = vmatprep.subr.bf16.mxu0 0
      %2715 = vmatpush2.bf16.msra.mxu0 0
      %2716 = vmatprep.mubr.bf16.mxu0 0
      %2717 = vmatmul.mubr.bf16.gmra.mxu0 %v2673
      %v2718 = vpop.f32.mrf.mxu0
      %v2719 = vadd.f32 0.0, %v2718
      %v2720 = vpop.f32.mrf.mxu0
      %v2721 = vpop.f32.mrf.mxu0
      %v2722 = vadd.f32 0.0, %v2721
      %v2723 = vpop.f32.mrf.mxu0
      %2724 = vmatprep.mubr.bf16.mxu0 0
      %2725 = vmatmul.mubr.bf16.gmra.mxu0 %v2676
      %v2726 = vpop.f32.mrf.mxu0
      %v2727 = vadd.f32 0.0, %v2726
      %v2728 = vpop.f32.mrf.mxu0
      %v2729 = vpop.f32.mrf.mxu0
      %v2730 = vadd.f32 0.0, %v2729
      %v2731 = vpop.f32.mrf.mxu0
      %2732 = vmatprep.mubr.bf16.mxu0 0
      %2733 = vmatmul.mubr.bf16.gmra.mxu0 %v2679
      %v2734 = vpop.f32.mrf.mxu0
      %v2735 = vadd.f32 0.0, %v2734
      %v2736 = vpop.f32.mrf.mxu0
      %v2737 = vpop.f32.mrf.mxu0
      %v2738 = vadd.f32 0.0, %v2737
      %v2739 = vpop.f32.mrf.mxu0
      %2740 = vmatprep.mubr.bf16.mxu0 0
      %2741 = vmatmul.mubr.bf16.gmra.mxu0 %v2682
      %v2742 = vpop.f32.mrf.mxu0
      %v2743 = vadd.f32 0.0, %v2742
      %v2744 = vpop.f32.mrf.mxu0
      %v2745 = vpop.f32.mrf.mxu0
      %v2746 = vadd.f32 0.0, %v2745
      %v2747 = vpop.f32.mrf.mxu0
      %2748 = vdwg.mxu0
      %v2749 = vadd.f32 %v2515, %v2719
      %v2750 = vadd.f32 %v2516, %v2722
      %v2751 = vadd.f32 %v2517, %v2727
      %v2752 = vadd.f32 %v2518, %v2730
      %v2753 = vadd.f32 %v2519, %v2735
      %v2754 = vadd.f32 %v2520, %v2738
      %v2755 = vadd.f32 %v2521, %v2743
      %v2756 = vadd.f32 %v2522, %v2746
      %v2757 = vld [vmem:[%s2400] sm:$0xe]
      %v2758 = vld [vmem:[%s2400 + $0x8] sm:$0xe]
      %v2759 = vld [vmem:[%s2400 + $0x10] sm:$0xe]
      %v2760 = vld [vmem:[%s2400 + $0x18] sm:$0xe]
      %v2761 = vld [vmem:[%s2400 + $0x20] sm:$0xe]
      %v2762 = vld [vmem:[%s2400 + $0x28] sm:$0xe]
      %v2763 = vld [vmem:[%s2400 + $0x30] sm:$0xe]
      %v2764 = vld [vmem:[%s2400 + $0x38] sm:$0xe]
      %v2781 = vrot.slane %v2757, 5
      %v2782 = vrot.slane %v2781, 4
      %v2783 = vrot.slane %v2524, 5
      %v2784 = vsel %vm705, %v2782, %v2783
      %v2785 = vrot.slane %v2758, 5
      %v2786 = vrot.slane %v2785, 4
      %v2787 = vrot.slane %v2526, 5
      %v2788 = vsel %vm705, %v2786, %v2787
      %v2789 = vrot.slane %v2759, 5
      %v2790 = vrot.slane %v2789, 4
      %v2791 = vrot.slane %v2528, 5
      %v2792 = vsel %vm705, %v2790, %v2791
      %v2793 = vrot.slane %v2760, 5
      %v2794 = vrot.slane %v2793, 4
      %v2795 = vrot.slane %v2530, 5
      %v2796 = vsel %vm705, %v2794, %v2795
      %v2797 = vrot.slane %v2761, 5
      %v2798 = vrot.slane %v2797, 4
      %v2799 = vrot.slane %v2532, 5
      %v2800 = vsel %vm705, %v2798, %v2799
      %v2801 = vrot.slane %v2762, 5
      %v2802 = vrot.slane %v2801, 4
      %v2803 = vrot.slane %v2534, 5
      %v2804 = vsel %vm705, %v2802, %v2803
      %v2805 = vrot.slane %v2763, 5
      %v2806 = vrot.slane %v2805, 4
      %v2807 = vrot.slane %v2536, 5
      %v2808 = vsel %vm705, %v2806, %v2807
      %v2809 = vrot.slane %v2764, 5
      %v2810 = vrot.slane %v2809, 4
      %v2811 = vrot.slane %v2538, 5
      %v2812 = vsel %vm705, %v2810, %v2811
      %s2813 = scalar_lea.vmem %s3, 112
      %v2814 = vld [vmem:[%s2813] sm:$0xf]
      %v2815 = vld [vmem:[%s2813 + $0x4] sm:$0xf]
      %v2816 = vunpack.c.l.b16 %v2784
      %v2817 = vunpack.c.l.b16 %v2788
      %v2818 = vunpack.c.l.b16 %v2792
      %v2819 = vunpack.c.l.b16 %v2796
      %v2820 = vunpack.c.l.b16 %v2800
      %v2821 = vunpack.c.l.b16 %v2804
      %v2822 = vunpack.c.l.b16 %v2808
      %v2823 = vunpack.c.l.b16 %v2812
      %v2824 = vpack.c.b16 %v2817, %v2816
      %v2825 = vpack.c.b16 %v2819, %v2818
      %v2826 = vpack.c.b16 %v2821, %v2820
      %v2827 = vpack.c.b16 %v2823, %v2822
      %v2830 = vunpack.c.l.b16 %v2814
      %v2831 = vunpack.c.l.b16 %v2815
      %v2832 = vpack.c.b16 %v2831, %v2830
      %v2835 = vsel %vm498, %v2824, 0
      %v2838 = vsel %vm498, %v2825, 0
      %v2841 = vsel %vm498, %v2826, 0
      %v2844 = vsel %vm498, %v2827, 0
      %2846 = vmatprep.subr.bf16.mxu0 0
      %2847 = vmatpush1.bf16.msra.mxu0 0
      %2848 = vmatprep.subr.bf16.mxu0 0
      %2849 = vmatpush1.bf16.msra.mxu0 0
      %2850 = vmatprep.subr.bf16.mxu0 0
      %2851 = vmatpush1.bf16.msra.mxu0 0
      %2852 = vmatprep.subr.bf16.mxu0 0
      %2853 = vmatpush1.bf16.msra.mxu0 0
      %2854 = vmatprep.subr.bf16.mxu0 0
      %2855 = vmatpush1.bf16.msra.mxu0 0
      %2856 = vmatprep.subr.bf16.mxu0 0
      %2857 = vmatpush1.bf16.msra.mxu0 0
      %2858 = vmatprep.subr.bf16.mxu0 0
      %2859 = vmatpush1.bf16.msra.mxu0 0
      %2860 = vmatprep.subr.bf16.mxu0 0
      %2861 = vmatpush1.bf16.msra.mxu0 %v2832
      %2862 = vmatprep.subr.bf16.mxu0 0
      %2863 = vmatpush2.bf16.msra.mxu0 0
      %2864 = vmatprep.subr.bf16.mxu0 0
      %2865 = vmatpush2.bf16.msra.mxu0 0
      %2866 = vmatprep.subr.bf16.mxu0 0
      %2867 = vmatpush2.bf16.msra.mxu0 0
      %2868 = vmatprep.subr.bf16.mxu0 0
      %2869 = vmatpush2.bf16.msra.mxu0 0
      %2870 = vmatprep.subr.bf16.mxu0 0
      %2871 = vmatpush2.bf16.msra.mxu0 0
      %2872 = vmatprep.subr.bf16.mxu0 0
      %2873 = vmatpush2.bf16.msra.mxu0 0
      %2874 = vmatprep.subr.bf16.mxu0 0
      %2875 = vmatpush2.bf16.msra.mxu0 0
      %2876 = vmatprep.subr.bf16.mxu0 0
      %2877 = vmatpush2.bf16.msra.mxu0 0
      %2878 = vmatprep.mubr.bf16.mxu0 0
      %2879 = vmatmul.mubr.bf16.gmra.mxu0 %v2835
      %v2880 = vpop.f32.mrf.mxu0
      %v2881 = vadd.f32 0.0, %v2880
      %v2882 = vpop.f32.mrf.mxu0
      %v2883 = vpop.f32.mrf.mxu0
      %v2884 = vadd.f32 0.0, %v2883
      %v2885 = vpop.f32.mrf.mxu0
      %2886 = vmatprep.mubr.bf16.mxu0 0
      %2887 = vmatmul.mubr.bf16.gmra.mxu0 %v2838
      %v2888 = vpop.f32.mrf.mxu0
      %v2889 = vadd.f32 0.0, %v2888
      %v2890 = vpop.f32.mrf.mxu0
      %v2891 = vpop.f32.mrf.mxu0
      %v2892 = vadd.f32 0.0, %v2891
      %v2893 = vpop.f32.mrf.mxu0
      %2894 = vmatprep.mubr.bf16.mxu0 0
      %2895 = vmatmul.mubr.bf16.gmra.mxu0 %v2841
      %v2896 = vpop.f32.mrf.mxu0
      %v2897 = vadd.f32 0.0, %v2896
      %v2898 = vpop.f32.mrf.mxu0
      %v2899 = vpop.f32.mrf.mxu0
      %v2900 = vadd.f32 0.0, %v2899
      %v2901 = vpop.f32.mrf.mxu0
      %2902 = vmatprep.mubr.bf16.mxu0 0
      %2903 = vmatmul.mubr.bf16.gmra.mxu0 %v2844
      %v2904 = vpop.f32.mrf.mxu0
      %v2905 = vadd.f32 0.0, %v2904
      %v2906 = vpop.f32.mrf.mxu0
      %v2907 = vpop.f32.mrf.mxu0
      %v2908 = vadd.f32 0.0, %v2907
      %v2909 = vpop.f32.mrf.mxu0
      %2910 = vdwg.mxu0
      %v2911 = vadd.f32 %v2749, %v2881
      %v2912 = vadd.f32 %v2750, %v2884
      %v2913 = vadd.f32 %v2751, %v2889
      %v2914 = vadd.f32 %v2752, %v2892
      %v2915 = vadd.f32 %v2753, %v2897
      %v2916 = vadd.f32 %v2754, %v2900
      %v2917 = vadd.f32 %v2755, %v2905
      %v2918 = vadd.f32 %v2756, %v2908
      %s2919 = scalar_lea.vmem %s321, 16
      %v2920 = vld [vmem:[%s2919] sm:$0xf]
      %v2921 = vld [vmem:[%s2919 + $0x8] sm:$0xf]
      %v2922 = vld [vmem:[%s2919 + $0x10] sm:$0xf]
      %v2923 = vld [vmem:[%s2919 + $0x18] sm:$0xf]
      %v2924 = vld [vmem:[%s2919 + $0x20] sm:$0xf]
      %v2925 = vld [vmem:[%s2919 + $0x28] sm:$0xf]
      %v2926 = vld [vmem:[%s2919 + $0x30] sm:$0xf]
      %v2927 = vld [vmem:[%s2919 + $0x38] sm:$0xf]
      %s2928 = scalar_lea.vmem %s3, 120
      %v2929 = vld [vmem:[%s2928] sm:$0xf]
      %v2930 = vld [vmem:[%s2928 + $0x4] sm:$0xf]
      %v2939 = vunpack.c.l.b16 %v2920
      %v2940 = vunpack.c.l.b16 %v2921
      %v2941 = vunpack.c.l.b16 %v2922
      %v2942 = vunpack.c.l.b16 %v2923
      %v2943 = vunpack.c.l.b16 %v2924
      %v2944 = vunpack.c.l.b16 %v2925
      %v2945 = vunpack.c.l.b16 %v2926
      %v2946 = vunpack.c.l.b16 %v2927
      %v2947 = vpack.c.b16 %v2940, %v2939
      %v2948 = vpack.c.b16 %v2942, %v2941
      %v2949 = vpack.c.b16 %v2944, %v2943
      %v2950 = vpack.c.b16 %v2946, %v2945
      %v2953 = vunpack.c.l.b16 %v2929
      %v2954 = vunpack.c.l.b16 %v2930
      %v2955 = vpack.c.b16 %v2954, %v2953
      %v2958 = vsel %vm498, %v2947, 0
      %v2961 = vsel %vm498, %v2948, 0
      %v2964 = vsel %vm498, %v2949, 0
      %v2967 = vsel %vm498, %v2950, 0
      %2969 = vmatprep.subr.bf16.mxu0 0
      %2970 = vmatpush1.bf16.msra.mxu0 0
      %2971 = vmatprep.subr.bf16.mxu0 0
      %2972 = vmatpush1.bf16.msra.mxu0 0
      %2973 = vmatprep.subr.bf16.mxu0 0
      %2974 = vmatpush1.bf16.msra.mxu0 0
      %2975 = vmatprep.subr.bf16.mxu0 0
      %2976 = vmatpush1.bf16.msra.mxu0 0
      %2977 = vmatprep.subr.bf16.mxu0 0
      %2978 = vmatpush1.bf16.msra.mxu0 0
      %2979 = vmatprep.subr.bf16.mxu0 0
      %2980 = vmatpush1.bf16.msra.mxu0 0
      %2981 = vmatprep.subr.bf16.mxu0 0
      %2982 = vmatpush1.bf16.msra.mxu0 0
      %2983 = vmatprep.subr.bf16.mxu0 0
      %2984 = vmatpush1.bf16.msra.mxu0 %v2955
      %2985 = vmatprep.subr.bf16.mxu0 0
      %2986 = vmatpush2.bf16.msra.mxu0 0
      %2987 = vmatprep.subr.bf16.mxu0 0
      %2988 = vmatpush2.bf16.msra.mxu0 0
      %2989 = vmatprep.subr.bf16.mxu0 0
      %2990 = vmatpush2.bf16.msra.mxu0 0
      %2991 = vmatprep.subr.bf16.mxu0 0
      %2992 = vmatpush2.bf16.msra.mxu0 0
      %2993 = vmatprep.subr.bf16.mxu0 0
      %2994 = vmatpush2.bf16.msra.mxu0 0
      %2995 = vmatprep.subr.bf16.mxu0 0
      %2996 = vmatpush2.bf16.msra.mxu0 0
      %2997 = vmatprep.subr.bf16.mxu0 0
      %2998 = vmatpush2.bf16.msra.mxu0 0
      %2999 = vmatprep.subr.bf16.mxu0 0
      %3000 = vmatpush2.bf16.msra.mxu0 0
      %3001 = vmatprep.mubr.bf16.mxu0 0
      %3002 = vmatmul.mubr.bf16.gmra.mxu0 %v2958
      %v3003 = vpop.f32.mrf.mxu0
      %v3004 = vadd.f32 0.0, %v3003
      %v3005 = vpop.f32.mrf.mxu0
      %v3006 = vpop.f32.mrf.mxu0
      %v3007 = vadd.f32 0.0, %v3006
      %v3008 = vpop.f32.mrf.mxu0
      %3009 = vmatprep.mubr.bf16.mxu0 0
      %3010 = vmatmul.mubr.bf16.gmra.mxu0 %v2961
      %v3011 = vpop.f32.mrf.mxu0
      %v3012 = vadd.f32 0.0, %v3011
      %v3013 = vpop.f32.mrf.mxu0
      %v3014 = vpop.f32.mrf.mxu0
      %v3015 = vadd.f32 0.0, %v3014
      %v3016 = vpop.f32.mrf.mxu0
      %3017 = vmatprep.mubr.bf16.mxu0 0
      %3018 = vmatmul.mubr.bf16.gmra.mxu0 %v2964
      %v3019 = vpop.f32.mrf.mxu0
      %v3020 = vadd.f32 0.0, %v3019
      %v3021 = vpop.f32.mrf.mxu0
      %v3022 = vpop.f32.mrf.mxu0
      %v3023 = vadd.f32 0.0, %v3022
      %v3024 = vpop.f32.mrf.mxu0
      %3025 = vmatprep.mubr.bf16.mxu0 0
      %3026 = vmatmul.mubr.bf16.gmra.mxu0 %v2967
      %v3027 = vpop.f32.mrf.mxu0
      %v3028 = vadd.f32 0.0, %v3027
      %v3029 = vpop.f32.mrf.mxu0
      %v3030 = vpop.f32.mrf.mxu0
      %v3031 = vadd.f32 0.0, %v3030
      %v3032 = vpop.f32.mrf.mxu0
      %3033 = vdwg.mxu0
      %v3034 = vadd.f32 %v2911, %v3004
      %v3035 = vadd.f32 %v2912, %v3007
      %v3036 = vadd.f32 %v2913, %v3012
      %v3037 = vadd.f32 %v2914, %v3015
      %v3038 = vadd.f32 %v2915, %v3020
      %v3039 = vadd.f32 %v2916, %v3023
      %v3040 = vadd.f32 %v2917, %v3028
      %v3041 = vadd.f32 %v2918, %v3031
      %v3042 = vld [vmem:[%s2919] sm:$0xf]
      %v3043 = vld [vmem:[%s2919 + $0x4] sm:$0x1]
      %v3044 = vld [vmem:[%s2919 + $0x8] sm:$0xf]
      %v3045 = vld [vmem:[%s2919 + $0xc] sm:$0x1]
      %v3046 = vld [vmem:[%s2919 + $0x10] sm:$0xf]
      %v3047 = vld [vmem:[%s2919 + $0x14] sm:$0x1]
      %v3048 = vld [vmem:[%s2919 + $0x18] sm:$0xf]
      %v3049 = vld [vmem:[%s2919 + $0x1c] sm:$0x1]
      %v3050 = vld [vmem:[%s2919 + $0x20] sm:$0xf]
      %v3051 = vld [vmem:[%s2919 + $0x24] sm:$0x1]
      %v3052 = vld [vmem:[%s2919 + $0x28] sm:$0xf]
      %v3053 = vld [vmem:[%s2919 + $0x2c] sm:$0x1]
      %v3054 = vld [vmem:[%s2919 + $0x30] sm:$0xf]
      %v3055 = vld [vmem:[%s2919 + $0x34] sm:$0x1]
      %v3056 = vld [vmem:[%s2919 + $0x38] sm:$0xf]
      %v3057 = vld [vmem:[%s2919 + $0x3c] sm:$0x1]
      %v3059 = vshrl.u32 %v3042, 16
      %v3061 = vrot.slane %v3059, 4
      %v3062 = vshll.u32 %v3042, 16
      %v3064 = vrot.slane %v3062, 5
      %v3065 = vor.u32 %v3061, %v3064
      %v3066 = vrot.slane %v3065, 4
      %v3068 = vshll.u32 %v3043, 16
      %v3070 = vrot.slane %v3068, 5
      %v3071 = vsel %vm364, %v3066, %v3070
      %v3073 = vshrl.u32 %v3044, 16
      %v3075 = vrot.slane %v3073, 4
      %v3076 = vshll.u32 %v3044, 16
      %v3078 = vrot.slane %v3076, 5
      %v3079 = vor.u32 %v3075, %v3078
      %v3080 = vrot.slane %v3079, 4
      %v3082 = vshll.u32 %v3045, 16
      %v3084 = vrot.slane %v3082, 5
      %v3085 = vsel %vm364, %v3080, %v3084
      %v3087 = vshrl.u32 %v3046, 16
      %v3089 = vrot.slane %v3087, 4
      %v3090 = vshll.u32 %v3046, 16
      %v3092 = vrot.slane %v3090, 5
      %v3093 = vor.u32 %v3089, %v3092
      %v3094 = vrot.slane %v3093, 4
      %v3096 = vshll.u32 %v3047, 16
      %v3098 = vrot.slane %v3096, 5
      %v3099 = vsel %vm364, %v3094, %v3098
      %v3101 = vshrl.u32 %v3048, 16
      %v3103 = vrot.slane %v3101, 4
      %v3104 = vshll.u32 %v3048, 16
      %v3106 = vrot.slane %v3104, 5
      %v3107 = vor.u32 %v3103, %v3106
      %v3108 = vrot.slane %v3107, 4
      %v3110 = vshll.u32 %v3049, 16
      %v3112 = vrot.slane %v3110, 5
      %v3113 = vsel %vm364, %v3108, %v3112
      %v3115 = vshrl.u32 %v3050, 16
      %v3117 = vrot.slane %v3115, 4
      %v3118 = vshll.u32 %v3050, 16
      %v3120 = vrot.slane %v3118, 5
      %v3121 = vor.u32 %v3117, %v3120
      %v3122 = vrot.slane %v3121, 4
      %v3124 = vshll.u32 %v3051, 16
      %v3126 = vrot.slane %v3124, 5
      %v3127 = vsel %vm364, %v3122, %v3126
      %v3129 = vshrl.u32 %v3052, 16
      %v3131 = vrot.slane %v3129, 4
      %v3132 = vshll.u32 %v3052, 16
      %v3134 = vrot.slane %v3132, 5
      %v3135 = vor.u32 %v3131, %v3134
      %v3136 = vrot.slane %v3135, 4
      %v3138 = vshll.u32 %v3053, 16
      %v3140 = vrot.slane %v3138, 5
      %v3141 = vsel %vm364, %v3136, %v3140
      %v3143 = vshrl.u32 %v3054, 16
      %v3145 = vrot.slane %v3143, 4
      %v3146 = vshll.u32 %v3054, 16
      %v3148 = vrot.slane %v3146, 5
      %v3149 = vor.u32 %v3145, %v3148
      %v3150 = vrot.slane %v3149, 4
      %v3152 = vshll.u32 %v3055, 16
      %v3154 = vrot.slane %v3152, 5
      %v3155 = vsel %vm364, %v3150, %v3154
      %v3157 = vshrl.u32 %v3056, 16
      %v3159 = vrot.slane %v3157, 4
      %v3160 = vshll.u32 %v3056, 16
      %v3162 = vrot.slane %v3160, 5
      %v3163 = vor.u32 %v3159, %v3162
      %v3164 = vrot.slane %v3163, 4
      %v3166 = vshll.u32 %v3057, 16
      %v3168 = vrot.slane %v3166, 5
      %v3169 = vsel %vm364, %v3164, %v3168
      %s3170 = scalar_lea.vmem %s3, 128
      %v3171 = vld [vmem:[%s3170] sm:$0xf]
      %v3172 = vld [vmem:[%s3170 + $0x4] sm:$0xf]
      %v3173 = vunpack.c.l.b16 %v3071
      %v3174 = vunpack.c.l.b16 %v3085
      %v3175 = vunpack.c.l.b16 %v3099
      %v3176 = vunpack.c.l.b16 %v3113
      %v3177 = vunpack.c.l.b16 %v3127
      %v3178 = vunpack.c.l.b16 %v3141
      %v3179 = vunpack.c.l.b16 %v3155
      %v3180 = vunpack.c.l.b16 %v3169
      %v3181 = vpack.c.b16 %v3174, %v3173
      %v3182 = vpack.c.b16 %v3176, %v3175
      %v3183 = vpack.c.b16 %v3178, %v3177
      %v3184 = vpack.c.b16 %v3180, %v3179
      %v3187 = vunpack.c.l.b16 %v3171
      %v3188 = vunpack.c.l.b16 %v3172
      %v3189 = vpack.c.b16 %v3188, %v3187
      %v3192 = vsel %vm498, %v3181, 0
      %v3195 = vsel %vm498, %v3182, 0
      %v3198 = vsel %vm498, %v3183, 0
      %v3201 = vsel %vm498, %v3184, 0
      %3203 = vmatprep.subr.bf16.mxu0 0
      %3204 = vmatpush1.bf16.msra.mxu0 0
      %3205 = vmatprep.subr.bf16.mxu0 0
      %3206 = vmatpush1.bf16.msra.mxu0 0
      %3207 = vmatprep.subr.bf16.mxu0 0
      %3208 = vmatpush1.bf16.msra.mxu0 0
      %3209 = vmatprep.subr.bf16.mxu0 0
      %3210 = vmatpush1.bf16.msra.mxu0 0
      %3211 = vmatprep.subr.bf16.mxu0 0
      %3212 = vmatpush1.bf16.msra.mxu0 0
      %3213 = vmatprep.subr.bf16.mxu0 0
      %3214 = vmatpush1.bf16.msra.mxu0 0
      %3215 = vmatprep.subr.bf16.mxu0 0
      %3216 = vmatpush1.bf16.msra.mxu0 0
      %3217 = vmatprep.subr.bf16.mxu0 0
      %3218 = vmatpush1.bf16.msra.mxu0 %v3189
      %3219 = vmatprep.subr.bf16.mxu0 0
      %3220 = vmatpush2.bf16.msra.mxu0 0
      %3221 = vmatprep.subr.bf16.mxu0 0
      %3222 = vmatpush2.bf16.msra.mxu0 0
      %3223 = vmatprep.subr.bf16.mxu0 0
      %3224 = vmatpush2.bf16.msra.mxu0 0
      %3225 = vmatprep.subr.bf16.mxu0 0
      %3226 = vmatpush2.bf16.msra.mxu0 0
      %3227 = vmatprep.subr.bf16.mxu0 0
      %3228 = vmatpush2.bf16.msra.mxu0 0
      %3229 = vmatprep.subr.bf16.mxu0 0
      %3230 = vmatpush2.bf16.msra.mxu0 0
      %3231 = vmatprep.subr.bf16.mxu0 0
      %3232 = vmatpush2.bf16.msra.mxu0 0
      %3233 = vmatprep.subr.bf16.mxu0 0
      %3234 = vmatpush2.bf16.msra.mxu0 0
      %3235 = vmatprep.mubr.bf16.mxu0 0
      %3236 = vmatmul.mubr.bf16.gmra.mxu0 %v3192
      %v3237 = vpop.f32.mrf.mxu0
      %v3238 = vadd.f32 0.0, %v3237
      %v3239 = vpop.f32.mrf.mxu0
      %v3240 = vpop.f32.mrf.mxu0
      %v3241 = vadd.f32 0.0, %v3240
      %v3242 = vpop.f32.mrf.mxu0
      %3243 = vmatprep.mubr.bf16.mxu0 0
      %3244 = vmatmul.mubr.bf16.gmra.mxu0 %v3195
      %v3245 = vpop.f32.mrf.mxu0
      %v3246 = vadd.f32 0.0, %v3245
      %v3247 = vpop.f32.mrf.mxu0
      %v3248 = vpop.f32.mrf.mxu0
      %v3249 = vadd.f32 0.0, %v3248
      %v3250 = vpop.f32.mrf.mxu0
      %3251 = vmatprep.mubr.bf16.mxu0 0
      %3252 = vmatmul.mubr.bf16.gmra.mxu0 %v3198
      %v3253 = vpop.f32.mrf.mxu0
      %v3254 = vadd.f32 0.0, %v3253
      %v3255 = vpop.f32.mrf.mxu0
      %v3256 = vpop.f32.mrf.mxu0
      %v3257 = vadd.f32 0.0, %v3256
      %v3258 = vpop.f32.mrf.mxu0
      %3259 = vmatprep.mubr.bf16.mxu0 0
      %3260 = vmatmul.mubr.bf16.gmra.mxu0 %v3201
      %v3261 = vpop.f32.mrf.mxu0
      %v3262 = vadd.f32 0.0, %v3261
      %v3263 = vpop.f32.mrf.mxu0
      %v3264 = vpop.f32.mrf.mxu0
      %v3265 = vadd.f32 0.0, %v3264
      %v3266 = vpop.f32.mrf.mxu0
      %3267 = vdwg.mxu0
      %v3268 = vadd.f32 %v3034, %v3238
      %v3269 = vadd.f32 %v3035, %v3241
      %v3270 = vadd.f32 %v3036, %v3246
      %v3271 = vadd.f32 %v3037, %v3249
      %v3272 = vadd.f32 %v3038, %v3254
      %v3273 = vadd.f32 %v3039, %v3257
      %v3274 = vadd.f32 %v3040, %v3262
      %v3275 = vadd.f32 %v3041, %v3265
      %v3276 = vld [vmem:[%s2919] sm:$0xe]
      %v3277 = vld [vmem:[%s2919 + $0x8] sm:$0xe]
      %v3278 = vld [vmem:[%s2919 + $0x10] sm:$0xe]
      %v3279 = vld [vmem:[%s2919 + $0x18] sm:$0xe]
      %v3280 = vld [vmem:[%s2919 + $0x20] sm:$0xe]
      %v3281 = vld [vmem:[%s2919 + $0x28] sm:$0xe]
      %v3282 = vld [vmem:[%s2919 + $0x30] sm:$0xe]
      %v3283 = vld [vmem:[%s2919 + $0x38] sm:$0xe]
      %v3300 = vrot.slane %v3276, 5
      %v3301 = vrot.slane %v3300, 4
      %v3302 = vrot.slane %v3043, 5
      %v3303 = vsel %vm705, %v3301, %v3302
      %v3304 = vrot.slane %v3277, 5
      %v3305 = vrot.slane %v3304, 4
      %v3306 = vrot.slane %v3045, 5
      %v3307 = vsel %vm705, %v3305, %v3306
      %v3308 = vrot.slane %v3278, 5
      %v3309 = vrot.slane %v3308, 4
      %v3310 = vrot.slane %v3047, 5
      %v3311 = vsel %vm705, %v3309, %v3310
      %v3312 = vrot.slane %v3279, 5
      %v3313 = vrot.slane %v3312, 4
      %v3314 = vrot.slane %v3049, 5
      %v3315 = vsel %vm705, %v3313, %v3314
      %v3316 = vrot.slane %v3280, 5
      %v3317 = vrot.slane %v3316, 4
      %v3318 = vrot.slane %v3051, 5
      %v3319 = vsel %vm705, %v3317, %v3318
      %v3320 = vrot.slane %v3281, 5
      %v3321 = vrot.slane %v3320, 4
      %v3322 = vrot.slane %v3053, 5
      %v3323 = vsel %vm705, %v3321, %v3322
      %v3324 = vrot.slane %v3282, 5
      %v3325 = vrot.slane %v3324, 4
      %v3326 = vrot.slane %v3055, 5
      %v3327 = vsel %vm705, %v3325, %v3326
      %v3328 = vrot.slane %v3283, 5
      %v3329 = vrot.slane %v3328, 4
      %v3330 = vrot.slane %v3057, 5
      %v3331 = vsel %vm705, %v3329, %v3330
      %s3332 = scalar_lea.vmem %s3, 136
      %v3333 = vld [vmem:[%s3332] sm:$0xf]
      %v3334 = vld [vmem:[%s3332 + $0x4] sm:$0xf]
      %v3335 = vunpack.c.l.b16 %v3303
      %v3336 = vunpack.c.l.b16 %v3307
      %v3337 = vunpack.c.l.b16 %v3311
      %v3338 = vunpack.c.l.b16 %v3315
      %v3339 = vunpack.c.l.b16 %v3319
      %v3340 = vunpack.c.l.b16 %v3323
      %v3341 = vunpack.c.l.b16 %v3327
      %v3342 = vunpack.c.l.b16 %v3331
      %v3343 = vpack.c.b16 %v3336, %v3335
      %v3344 = vpack.c.b16 %v3338, %v3337
      %v3345 = vpack.c.b16 %v3340, %v3339
      %v3346 = vpack.c.b16 %v3342, %v3341
      %v3349 = vunpack.c.l.b16 %v3333
      %v3350 = vunpack.c.l.b16 %v3334
      %v3351 = vpack.c.b16 %v3350, %v3349
      %v3354 = vsel %vm498, %v3343, 0
      %v3357 = vsel %vm498, %v3344, 0
      %v3360 = vsel %vm498, %v3345, 0
      %v3363 = vsel %vm498, %v3346, 0
      %3365 = vmatprep.subr.bf16.mxu0 0
      %3366 = vmatpush1.bf16.msra.mxu0 0
      %3367 = vmatprep.subr.bf16.mxu0 0
      %3368 = vmatpush1.bf16.msra.mxu0 0
      %3369 = vmatprep.subr.bf16.mxu0 0
      %3370 = vmatpush1.bf16.msra.mxu0 0
      %3371 = vmatprep.subr.bf16.mxu0 0
      %3372 = vmatpush1.bf16.msra.mxu0 0
      %3373 = vmatprep.subr.bf16.mxu0 0
      %3374 = vmatpush1.bf16.msra.mxu0 0
      %3375 = vmatprep.subr.bf16.mxu0 0
      %3376 = vmatpush1.bf16.msra.mxu0 0
      %3377 = vmatprep.subr.bf16.mxu0 0
      %3378 = vmatpush1.bf16.msra.mxu0 0
      %3379 = vmatprep.subr.bf16.mxu0 0
      %3380 = vmatpush1.bf16.msra.mxu0 %v3351
      %3381 = vmatprep.subr.bf16.mxu0 0
      %3382 = vmatpush2.bf16.msra.mxu0 0
      %3383 = vmatprep.subr.bf16.mxu0 0
      %3384 = vmatpush2.bf16.msra.mxu0 0
      %3385 = vmatprep.subr.bf16.mxu0 0
      %3386 = vmatpush2.bf16.msra.mxu0 0
      %3387 = vmatprep.subr.bf16.mxu0 0
      %3388 = vmatpush2.bf16.msra.mxu0 0
      %3389 = vmatprep.subr.bf16.mxu0 0
      %3390 = vmatpush2.bf16.msra.mxu0 0
      %3391 = vmatprep.subr.bf16.mxu0 0
      %3392 = vmatpush2.bf16.msra.mxu0 0
      %3393 = vmatprep.subr.bf16.mxu0 0
      %3394 = vmatpush2.bf16.msra.mxu0 0
      %3395 = vmatprep.subr.bf16.mxu0 0
      %3396 = vmatpush2.bf16.msra.mxu0 0
      %3397 = vmatprep.mubr.bf16.mxu0 0
      %3398 = vmatmul.mubr.bf16.gmra.mxu0 %v3354
      %v3399 = vpop.f32.mrf.mxu0
      %v3400 = vadd.f32 0.0, %v3399
      %v3401 = vpop.f32.mrf.mxu0
      %v3402 = vpop.f32.mrf.mxu0
      %v3403 = vadd.f32 0.0, %v3402
      %v3404 = vpop.f32.mrf.mxu0
      %3405 = vmatprep.mubr.bf16.mxu0 0
      %3406 = vmatmul.mubr.bf16.gmra.mxu0 %v3357
      %v3407 = vpop.f32.mrf.mxu0
      %v3408 = vadd.f32 0.0, %v3407
      %v3409 = vpop.f32.mrf.mxu0
      %v3410 = vpop.f32.mrf.mxu0
      %v3411 = vadd.f32 0.0, %v3410
      %v3412 = vpop.f32.mrf.mxu0
      %3413 = vmatprep.mubr.bf16.mxu0 0
      %3414 = vmatmul.mubr.bf16.gmra.mxu0 %v3360
      %v3415 = vpop.f32.mrf.mxu0
      %v3416 = vadd.f32 0.0, %v3415
      %v3417 = vpop.f32.mrf.mxu0
      %v3418 = vpop.f32.mrf.mxu0
      %v3419 = vadd.f32 0.0, %v3418
      %v3420 = vpop.f32.mrf.mxu0
      %3421 = vmatprep.mubr.bf16.mxu0 0
      %3422 = vmatmul.mubr.bf16.gmra.mxu0 %v3363
      %v3423 = vpop.f32.mrf.mxu0
      %v3424 = vadd.f32 0.0, %v3423
      %v3425 = vpop.f32.mrf.mxu0
      %v3426 = vpop.f32.mrf.mxu0
      %v3427 = vadd.f32 0.0, %v3426
      %v3428 = vpop.f32.mrf.mxu0
      %3429 = vdwg.mxu0
      %v3430 = vadd.f32 %v3268, %v3400
      %v3431 = vadd.f32 %v3269, %v3403
      %v3432 = vadd.f32 %v3270, %v3408
      %v3433 = vadd.f32 %v3271, %v3411
      %v3434 = vadd.f32 %v3272, %v3416
      %v3435 = vadd.f32 %v3273, %v3419
      %v3436 = vadd.f32 %v3274, %v3424
      %v3437 = vadd.f32 %v3275, %v3427
      %v3438 = vld [vmem:[%s332] sm:$0xf]
      %v3439 = vld [vmem:[%s332 + $0x8] sm:$0xf]
      %v3440 = vld [vmem:[%s332 + $0x10] sm:$0xf]
      %v3441 = vld [vmem:[%s332 + $0x18] sm:$0xf]
      %v3442 = vld [vmem:[%s332 + $0x20] sm:$0xf]
      %v3443 = vld [vmem:[%s332 + $0x28] sm:$0xf]
      %v3444 = vld [vmem:[%s332 + $0x30] sm:$0xf]
      %v3445 = vld [vmem:[%s332 + $0x38] sm:$0xf]
      %s3446 = scalar_lea.vmem %s3, 144
      %v3447 = vld [vmem:[%s3446] sm:$0xf]
      %v3448 = vld [vmem:[%s3446 + $0x4] sm:$0xf]
      %v3457 = vunpack.c.l.b16 %v3438
      %v3458 = vunpack.c.l.b16 %v3439
      %v3459 = vunpack.c.l.b16 %v3440
      %v3460 = vunpack.c.l.b16 %v3441
      %v3461 = vunpack.c.l.b16 %v3442
      %v3462 = vunpack.c.l.b16 %v3443
      %v3463 = vunpack.c.l.b16 %v3444
      %v3464 = vunpack.c.l.b16 %v3445
      %v3465 = vpack.c.b16 %v3458, %v3457
      %v3466 = vpack.c.b16 %v3460, %v3459
      %v3467 = vpack.c.b16 %v3462, %v3461
      %v3468 = vpack.c.b16 %v3464, %v3463
      %v3471 = vunpack.c.l.b16 %v3447
      %v3472 = vunpack.c.l.b16 %v3448
      %v3473 = vpack.c.b16 %v3472, %v3471
      %v3476 = vsel %vm498, %v3465, 0
      %v3479 = vsel %vm498, %v3466, 0
      %v3482 = vsel %vm498, %v3467, 0
      %v3485 = vsel %vm498, %v3468, 0
      %3487 = vmatprep.subr.bf16.mxu0 0
      %3488 = vmatpush1.bf16.msra.mxu0 0
      %3489 = vmatprep.subr.bf16.mxu0 0
      %3490 = vmatpush1.bf16.msra.mxu0 0
      %3491 = vmatprep.subr.bf16.mxu0 0
      %3492 = vmatpush1.bf16.msra.mxu0 0
      %3493 = vmatprep.subr.bf16.mxu0 0
      %3494 = vmatpush1.bf16.msra.mxu0 0
      %3495 = vmatprep.subr.bf16.mxu0 0
      %3496 = vmatpush1.bf16.msra.mxu0 0
      %3497 = vmatprep.subr.bf16.mxu0 0
      %3498 = vmatpush1.bf16.msra.mxu0 0
      %3499 = vmatprep.subr.bf16.mxu0 0
      %3500 = vmatpush1.bf16.msra.mxu0 0
      %3501 = vmatprep.subr.bf16.mxu0 0
      %3502 = vmatpush1.bf16.msra.mxu0 %v3473
      %3503 = vmatprep.subr.bf16.mxu0 0
      %3504 = vmatpush2.bf16.msra.mxu0 0
      %3505 = vmatprep.subr.bf16.mxu0 0
      %3506 = vmatpush2.bf16.msra.mxu0 0
      %3507 = vmatprep.subr.bf16.mxu0 0
      %3508 = vmatpush2.bf16.msra.mxu0 0
      %3509 = vmatprep.subr.bf16.mxu0 0
      %3510 = vmatpush2.bf16.msra.mxu0 0
      %3511 = vmatprep.subr.bf16.mxu0 0
      %3512 = vmatpush2.bf16.msra.mxu0 0
      %3513 = vmatprep.subr.bf16.mxu0 0
      %3514 = vmatpush2.bf16.msra.mxu0 0
      %3515 = vmatprep.subr.bf16.mxu0 0
      %3516 = vmatpush2.bf16.msra.mxu0 0
      %3517 = vmatprep.subr.bf16.mxu0 0
      %3518 = vmatpush2.bf16.msra.mxu0 0
      %3519 = vmatprep.mubr.bf16.mxu0 0
      %3520 = vmatmul.mubr.bf16.gmra.mxu0 %v3476
      %v3521 = vpop.f32.mrf.mxu0
      %v3522 = vadd.f32 0.0, %v3521
      %v3523 = vpop.f32.mrf.mxu0
      %v3524 = vpop.f32.mrf.mxu0
      %v3525 = vadd.f32 0.0, %v3524
      %v3526 = vpop.f32.mrf.mxu0
      %3527 = vmatprep.mubr.bf16.mxu0 0
      %3528 = vmatmul.mubr.bf16.gmra.mxu0 %v3479
      %v3529 = vpop.f32.mrf.mxu0
      %v3530 = vadd.f32 0.0, %v3529
      %v3531 = vpop.f32.mrf.mxu0
      %v3532 = vpop.f32.mrf.mxu0
      %v3533 = vadd.f32 0.0, %v3532
      %v3534 = vpop.f32.mrf.mxu0
      %3535 = vmatprep.mubr.bf16.mxu0 0
      %3536 = vmatmul.mubr.bf16.gmra.mxu0 %v3482
      %v3537 = vpop.f32.mrf.mxu0
      %v3538 = vadd.f32 0.0, %v3537
      %v3539 = vpop.f32.mrf.mxu0
      %v3540 = vpop.f32.mrf.mxu0
      %v3541 = vadd.f32 0.0, %v3540
      %v3542 = vpop.f32.mrf.mxu0
      %3543 = vmatprep.mubr.bf16.mxu0 0
      %3544 = vmatmul.mubr.bf16.gmra.mxu0 %v3485
      %v3545 = vpop.f32.mrf.mxu0
      %v3546 = vadd.f32 0.0, %v3545
      %v3547 = vpop.f32.mrf.mxu0
      %v3548 = vpop.f32.mrf.mxu0
      %v3549 = vadd.f32 0.0, %v3548
      %v3550 = vpop.f32.mrf.mxu0
      %3551 = vdwg.mxu0
      %v3552 = vadd.f32 %v3430, %v3522
      %v3553 = vadd.f32 %v3431, %v3525
      %v3554 = vadd.f32 %v3432, %v3530
      %v3555 = vadd.f32 %v3433, %v3533
      %v3556 = vadd.f32 %v3434, %v3538
      %v3557 = vadd.f32 %v3435, %v3541
      %v3558 = vadd.f32 %v3436, %v3546
      %v3559 = vadd.f32 %v3437, %v3549
      %v3560 = vld [vmem:[%s332] sm:$0xf]
      %v3561 = vld [vmem:[%s332 + $0x4] sm:$0x1]
      %v3562 = vld [vmem:[%s332 + $0x8] sm:$0xf]
      %v3563 = vld [vmem:[%s332 + $0xc] sm:$0x1]
      %v3564 = vld [vmem:[%s332 + $0x10] sm:$0xf]
      %v3565 = vld [vmem:[%s332 + $0x14] sm:$0x1]
      %v3566 = vld [vmem:[%s332 + $0x18] sm:$0xf]
      %v3567 = vld [vmem:[%s332 + $0x1c] sm:$0x1]
      %v3568 = vld [vmem:[%s332 + $0x20] sm:$0xf]
      %v3569 = vld [vmem:[%s332 + $0x24] sm:$0x1]
      %v3570 = vld [vmem:[%s332 + $0x28] sm:$0xf]
      %v3571 = vld [vmem:[%s332 + $0x2c] sm:$0x1]
      %v3572 = vld [vmem:[%s332 + $0x30] sm:$0xf]
      %v3573 = vld [vmem:[%s332 + $0x34] sm:$0x1]
      %v3574 = vld [vmem:[%s332 + $0x38] sm:$0xf]
      %v3575 = vld [vmem:[%s332 + $0x3c] sm:$0x1]
      %v3577 = vshrl.u32 %v3560, 16
      %v3579 = vrot.slane %v3577, 4
      %v3580 = vshll.u32 %v3560, 16
      %v3582 = vrot.slane %v3580, 5
      %v3583 = vor.u32 %v3579, %v3582
      %v3584 = vrot.slane %v3583, 4
      %v3586 = vshll.u32 %v3561, 16
      %v3588 = vrot.slane %v3586, 5
      %v3589 = vsel %vm364, %v3584, %v3588
      %v3591 = vshrl.u32 %v3562, 16
      %v3593 = vrot.slane %v3591, 4
      %v3594 = vshll.u32 %v3562, 16
      %v3596 = vrot.slane %v3594, 5
      %v3597 = vor.u32 %v3593, %v3596
      %v3598 = vrot.slane %v3597, 4
      %v3600 = vshll.u32 %v3563, 16
      %v3602 = vrot.slane %v3600, 5
      %v3603 = vsel %vm364, %v3598, %v3602
      %v3605 = vshrl.u32 %v3564, 16
      %v3607 = vrot.slane %v3605, 4
      %v3608 = vshll.u32 %v3564, 16
      %v3610 = vrot.slane %v3608, 5
      %v3611 = vor.u32 %v3607, %v3610
      %v3612 = vrot.slane %v3611, 4
      %v3614 = vshll.u32 %v3565, 16
      %v3616 = vrot.slane %v3614, 5
      %v3617 = vsel %vm364, %v3612, %v3616
      %v3619 = vshrl.u32 %v3566, 16
      %v3621 = vrot.slane %v3619, 4
      %v3622 = vshll.u32 %v3566, 16
      %v3624 = vrot.slane %v3622, 5
      %v3625 = vor.u32 %v3621, %v3624
      %v3626 = vrot.slane %v3625, 4
      %v3628 = vshll.u32 %v3567, 16
      %v3630 = vrot.slane %v3628, 5
      %v3631 = vsel %vm364, %v3626, %v3630
      %v3633 = vshrl.u32 %v3568, 16
      %v3635 = vrot.slane %v3633, 4
      %v3636 = vshll.u32 %v3568, 16
      %v3638 = vrot.slane %v3636, 5
      %v3639 = vor.u32 %v3635, %v3638
      %v3640 = vrot.slane %v3639, 4
      %v3642 = vshll.u32 %v3569, 16
      %v3644 = vrot.slane %v3642, 5
      %v3645 = vsel %vm364, %v3640, %v3644
      %v3647 = vshrl.u32 %v3570, 16
      %v3649 = vrot.slane %v3647, 4
      %v3650 = vshll.u32 %v3570, 16
      %v3652 = vrot.slane %v3650, 5
      %v3653 = vor.u32 %v3649, %v3652
      %v3654 = vrot.slane %v3653, 4
      %v3656 = vshll.u32 %v3571, 16
      %v3658 = vrot.slane %v3656, 5
      %v3659 = vsel %vm364, %v3654, %v3658
      %v3661 = vshrl.u32 %v3572, 16
      %v3663 = vrot.slane %v3661, 4
      %v3664 = vshll.u32 %v3572, 16
      %v3666 = vrot.slane %v3664, 5
      %v3667 = vor.u32 %v3663, %v3666
      %v3668 = vrot.slane %v3667, 4
      %v3670 = vshll.u32 %v3573, 16
      %v3672 = vrot.slane %v3670, 5
      %v3673 = vsel %vm364, %v3668, %v3672
      %v3675 = vshrl.u32 %v3574, 16
      %v3677 = vrot.slane %v3675, 4
      %v3678 = vshll.u32 %v3574, 16
      %v3680 = vrot.slane %v3678, 5
      %v3681 = vor.u32 %v3677, %v3680
      %v3682 = vrot.slane %v3681, 4
      %v3684 = vshll.u32 %v3575, 16
      %v3686 = vrot.slane %v3684, 5
      %v3687 = vsel %vm364, %v3682, %v3686
      %s3688 = scalar_lea.vmem %s3, 152
      %v3689 = vld [vmem:[%s3688] sm:$0xf]
      %v3690 = vld [vmem:[%s3688 + $0x4] sm:$0xf]
      %v3691 = vunpack.c.l.b16 %v3589
      %v3692 = vunpack.c.l.b16 %v3603
      %v3693 = vunpack.c.l.b16 %v3617
      %v3694 = vunpack.c.l.b16 %v3631
      %v3695 = vunpack.c.l.b16 %v3645
      %v3696 = vunpack.c.l.b16 %v3659
      %v3697 = vunpack.c.l.b16 %v3673
      %v3698 = vunpack.c.l.b16 %v3687
      %v3699 = vpack.c.b16 %v3692, %v3691
      %v3700 = vpack.c.b16 %v3694, %v3693
      %v3701 = vpack.c.b16 %v3696, %v3695
      %v3702 = vpack.c.b16 %v3698, %v3697
      %v3705 = vunpack.c.l.b16 %v3689
      %v3706 = vunpack.c.l.b16 %v3690
      %v3707 = vpack.c.b16 %v3706, %v3705
      %v3710 = vsel %vm498, %v3699, 0
      %v3713 = vsel %vm498, %v3700, 0
      %v3716 = vsel %vm498, %v3701, 0
      %v3719 = vsel %vm498, %v3702, 0
      %3721 = vmatprep.subr.bf16.mxu0 0
      %3722 = vmatpush1.bf16.msra.mxu0 0
      %3723 = vmatprep.subr.bf16.mxu0 0
      %3724 = vmatpush1.bf16.msra.mxu0 0
      %3725 = vmatprep.subr.bf16.mxu0 0
      %3726 = vmatpush1.bf16.msra.mxu0 0
      %3727 = vmatprep.subr.bf16.mxu0 0
      %3728 = vmatpush1.bf16.msra.mxu0 0
      %3729 = vmatprep.subr.bf16.mxu0 0
      %3730 = vmatpush1.bf16.msra.mxu0 0
      %3731 = vmatprep.subr.bf16.mxu0 0
      %3732 = vmatpush1.bf16.msra.mxu0 0
      %3733 = vmatprep.subr.bf16.mxu0 0
      %3734 = vmatpush1.bf16.msra.mxu0 0
      %3735 = vmatprep.subr.bf16.mxu0 0
      %3736 = vmatpush1.bf16.msra.mxu0 %v3707
      %3737 = vmatprep.subr.bf16.mxu0 0
      %3738 = vmatpush2.bf16.msra.mxu0 0
      %3739 = vmatprep.subr.bf16.mxu0 0
      %3740 = vmatpush2.bf16.msra.mxu0 0
      %3741 = vmatprep.subr.bf16.mxu0 0
      %3742 = vmatpush2.bf16.msra.mxu0 0
      %3743 = vmatprep.subr.bf16.mxu0 0
      %3744 = vmatpush2.bf16.msra.mxu0 0
      %3745 = vmatprep.subr.bf16.mxu0 0
      %3746 = vmatpush2.bf16.msra.mxu0 0
      %3747 = vmatprep.subr.bf16.mxu0 0
      %3748 = vmatpush2.bf16.msra.mxu0 0
      %3749 = vmatprep.subr.bf16.mxu0 0
      %3750 = vmatpush2.bf16.msra.mxu0 0
      %3751 = vmatprep.subr.bf16.mxu0 0
      %3752 = vmatpush2.bf16.msra.mxu0 0
      %3753 = vmatprep.mubr.bf16.mxu0 0
      %3754 = vmatmul.mubr.bf16.gmra.mxu0 %v3710
      %v3755 = vpop.f32.mrf.mxu0
      %v3756 = vadd.f32 0.0, %v3755
      %v3757 = vpop.f32.mrf.mxu0
      %v3758 = vpop.f32.mrf.mxu0
      %v3759 = vadd.f32 0.0, %v3758
      %v3760 = vpop.f32.mrf.mxu0
      %3761 = vmatprep.mubr.bf16.mxu0 0
      %3762 = vmatmul.mubr.bf16.gmra.mxu0 %v3713
      %v3763 = vpop.f32.mrf.mxu0
      %v3764 = vadd.f32 0.0, %v3763
      %v3765 = vpop.f32.mrf.mxu0
      %v3766 = vpop.f32.mrf.mxu0
      %v3767 = vadd.f32 0.0, %v3766
      %v3768 = vpop.f32.mrf.mxu0
      %3769 = vmatprep.mubr.bf16.mxu0 0
      %3770 = vmatmul.mubr.bf16.gmra.mxu0 %v3716
      %v3771 = vpop.f32.mrf.mxu0
      %v3772 = vadd.f32 0.0, %v3771
      %v3773 = vpop.f32.mrf.mxu0
      %v3774 = vpop.f32.mrf.mxu0
      %v3775 = vadd.f32 0.0, %v3774
      %v3776 = vpop.f32.mrf.mxu0
      %3777 = vmatprep.mubr.bf16.mxu0 0
      %3778 = vmatmul.mubr.bf16.gmra.mxu0 %v3719
      %v3779 = vpop.f32.mrf.mxu0
      %v3780 = vadd.f32 0.0, %v3779
      %v3781 = vpop.f32.mrf.mxu0
      %v3782 = vpop.f32.mrf.mxu0
      %v3783 = vadd.f32 0.0, %v3782
      %v3784 = vpop.f32.mrf.mxu0
      %3785 = vdwg.mxu0
      %v3786 = vadd.f32 %v3552, %v3756
      %v3787 = vadd.f32 %v3553, %v3759
      %v3788 = vadd.f32 %v3554, %v3764
      %v3789 = vadd.f32 %v3555, %v3767
      %v3790 = vadd.f32 %v3556, %v3772
      %v3791 = vadd.f32 %v3557, %v3775
      %v3792 = vadd.f32 %v3558, %v3780
      %v3793 = vadd.f32 %v3559, %v3783
      %v3794 = vld [vmem:[%s332] sm:$0xe]
      %v3795 = vld [vmem:[%s332 + $0x8] sm:$0xe]
      %v3796 = vld [vmem:[%s332 + $0x10] sm:$0xe]
      %v3797 = vld [vmem:[%s332 + $0x18] sm:$0xe]
      %v3798 = vld [vmem:[%s332 + $0x20] sm:$0xe]
      %v3799 = vld [vmem:[%s332 + $0x28] sm:$0xe]
      %v3800 = vld [vmem:[%s332 + $0x30] sm:$0xe]
      %v3801 = vld [vmem:[%s332 + $0x38] sm:$0xe]
      %v3818 = vrot.slane %v3794, 5
      %v3819 = vrot.slane %v3818, 4
      %v3820 = vrot.slane %v3561, 5
      %v3821 = vsel %vm705, %v3819, %v3820
      %v3822 = vrot.slane %v3795, 5
      %v3823 = vrot.slane %v3822, 4
      %v3824 = vrot.slane %v3563, 5
      %v3825 = vsel %vm705, %v3823, %v3824
      %v3826 = vrot.slane %v3796, 5
      %v3827 = vrot.slane %v3826, 4
      %v3828 = vrot.slane %v3565, 5
      %v3829 = vsel %vm705, %v3827, %v3828
      %v3830 = vrot.slane %v3797, 5
      %v3831 = vrot.slane %v3830, 4
      %v3832 = vrot.slane %v3567, 5
      %v3833 = vsel %vm705, %v3831, %v3832
      %v3834 = vrot.slane %v3798, 5
      %v3835 = vrot.slane %v3834, 4
      %v3836 = vrot.slane %v3569, 5
      %v3837 = vsel %vm705, %v3835, %v3836
      %v3838 = vrot.slane %v3799, 5
      %v3839 = vrot.slane %v3838, 4
      %v3840 = vrot.slane %v3571, 5
      %v3841 = vsel %vm705, %v3839, %v3840
      %v3842 = vrot.slane %v3800, 5
      %v3843 = vrot.slane %v3842, 4
      %v3844 = vrot.slane %v3573, 5
      %v3845 = vsel %vm705, %v3843, %v3844
      %v3846 = vrot.slane %v3801, 5
      %v3847 = vrot.slane %v3846, 4
      %v3848 = vrot.slane %v3575, 5
      %v3849 = vsel %vm705, %v3847, %v3848
      %s3850 = scalar_lea.vmem %s3, 160
      %v3851 = vld [vmem:[%s3850] sm:$0xf]
      %v3852 = vld [vmem:[%s3850 + $0x4] sm:$0xf]
      %v3853 = vunpack.c.l.b16 %v3821
      %v3854 = vunpack.c.l.b16 %v3825
      %v3855 = vunpack.c.l.b16 %v3829
      %v3856 = vunpack.c.l.b16 %v3833
      %v3857 = vunpack.c.l.b16 %v3837
      %v3858 = vunpack.c.l.b16 %v3841
      %v3859 = vunpack.c.l.b16 %v3845
      %v3860 = vunpack.c.l.b16 %v3849
      %v3861 = vpack.c.b16 %v3854, %v3853
      %v3862 = vpack.c.b16 %v3856, %v3855
      %v3863 = vpack.c.b16 %v3858, %v3857
      %v3864 = vpack.c.b16 %v3860, %v3859
      %v3867 = vunpack.c.l.b16 %v3851
      %v3868 = vunpack.c.l.b16 %v3852
      %v3869 = vpack.c.b16 %v3868, %v3867
      %v3872 = vsel %vm498, %v3861, 0
      %v3875 = vsel %vm498, %v3862, 0
      %v3878 = vsel %vm498, %v3863, 0
      %v3881 = vsel %vm498, %v3864, 0
      %3883 = vmatprep.subr.bf16.mxu0 0
      %3884 = vmatpush1.bf16.msra.mxu0 0
      %3885 = vmatprep.subr.bf16.mxu0 0
      %3886 = vmatpush1.bf16.msra.mxu0 0
      %3887 = vmatprep.subr.bf16.mxu0 0
      %3888 = vmatpush1.bf16.msra.mxu0 0
      %3889 = vmatprep.subr.bf16.mxu0 0
      %3890 = vmatpush1.bf16.msra.mxu0 0
      %3891 = vmatprep.subr.bf16.mxu0 0
      %3892 = vmatpush1.bf16.msra.mxu0 0
      %3893 = vmatprep.subr.bf16.mxu0 0
      %3894 = vmatpush1.bf16.msra.mxu0 0
      %3895 = vmatprep.subr.bf16.mxu0 0
      %3896 = vmatpush1.bf16.msra.mxu0 0
      %3897 = vmatprep.subr.bf16.mxu0 0
      %3898 = vmatpush1.bf16.msra.mxu0 %v3869
      %3899 = vmatprep.subr.bf16.mxu0 0
      %3900 = vmatpush2.bf16.msra.mxu0 0
      %3901 = vmatprep.subr.bf16.mxu0 0
      %3902 = vmatpush2.bf16.msra.mxu0 0
      %3903 = vmatprep.subr.bf16.mxu0 0
      %3904 = vmatpush2.bf16.msra.mxu0 0
      %3905 = vmatprep.subr.bf16.mxu0 0
      %3906 = vmatpush2.bf16.msra.mxu0 0
      %3907 = vmatprep.subr.bf16.mxu0 0
      %3908 = vmatpush2.bf16.msra.mxu0 0
      %3909 = vmatprep.subr.bf16.mxu0 0
      %3910 = vmatpush2.bf16.msra.mxu0 0
      %3911 = vmatprep.subr.bf16.mxu0 0
      %3912 = vmatpush2.bf16.msra.mxu0 0
      %3913 = vmatprep.subr.bf16.mxu0 0
      %3914 = vmatpush2.bf16.msra.mxu0 0
      %3915 = vmatprep.mubr.bf16.mxu0 0
      %3916 = vmatmul.mubr.bf16.gmra.mxu0 %v3872
      %v3917 = vpop.f32.mrf.mxu0
      %v3918 = vadd.f32 0.0, %v3917
      %v3919 = vpop.f32.mrf.mxu0
      %v3920 = vpop.f32.mrf.mxu0
      %v3921 = vadd.f32 0.0, %v3920
      %v3922 = vpop.f32.mrf.mxu0
      %3923 = vmatprep.mubr.bf16.mxu0 0
      %3924 = vmatmul.mubr.bf16.gmra.mxu0 %v3875
      %v3925 = vpop.f32.mrf.mxu0
      %v3926 = vadd.f32 0.0, %v3925
      %v3927 = vpop.f32.mrf.mxu0
      %v3928 = vpop.f32.mrf.mxu0
      %v3929 = vadd.f32 0.0, %v3928
      %v3930 = vpop.f32.mrf.mxu0
      %3931 = vmatprep.mubr.bf16.mxu0 0
      %3932 = vmatmul.mubr.bf16.gmra.mxu0 %v3878
      %v3933 = vpop.f32.mrf.mxu0
      %v3934 = vadd.f32 0.0, %v3933
      %v3935 = vpop.f32.mrf.mxu0
      %v3936 = vpop.f32.mrf.mxu0
      %v3937 = vadd.f32 0.0, %v3936
      %v3938 = vpop.f32.mrf.mxu0
      %3939 = vmatprep.mubr.bf16.mxu0 0
      %3940 = vmatmul.mubr.bf16.gmra.mxu0 %v3881
      %v3941 = vpop.f32.mrf.mxu0
      %v3942 = vadd.f32 0.0, %v3941
      %v3943 = vpop.f32.mrf.mxu0
      %v3944 = vpop.f32.mrf.mxu0
      %v3945 = vadd.f32 0.0, %v3944
      %v3946 = vpop.f32.mrf.mxu0
      %3947 = vdwg.mxu0
      %v3948 = vadd.f32 %v3786, %v3918
      %v3949 = vadd.f32 %v3787, %v3921
      %v3950 = vadd.f32 %v3788, %v3926
      %v3951 = vadd.f32 %v3789, %v3929
      %v3952 = vadd.f32 %v3790, %v3934
      %v3953 = vadd.f32 %v3791, %v3937
      %v3954 = vadd.f32 %v3792, %v3942
      %v3955 = vadd.f32 %v3793, %v3945
      %s3956 = scalar_lea.vmem %s332, 8
      %v3957 = vld [vmem:[%s3956] sm:$0xf]
      %v3958 = vld [vmem:[%s3956 + $0x8] sm:$0xf]
      %v3959 = vld [vmem:[%s3956 + $0x10] sm:$0xf]
      %v3960 = vld [vmem:[%s3956 + $0x18] sm:$0xf]
      %v3961 = vld [vmem:[%s3956 + $0x20] sm:$0xf]
      %v3962 = vld [vmem:[%s3956 + $0x28] sm:$0xf]
      %v3963 = vld [vmem:[%s3956 + $0x30] sm:$0xf]
      %v3964 = vld [vmem:[%s3956 + $0x38] sm:$0xf]
      %s3965 = scalar_lea.vmem %s3, 168
      %v3966 = vld [vmem:[%s3965] sm:$0xf]
      %v3967 = vld [vmem:[%s3965 + $0x4] sm:$0xf]
      %v3976 = vunpack.c.l.b16 %v3957
      %v3977 = vunpack.c.l.b16 %v3958
      %v3978 = vunpack.c.l.b16 %v3959
      %v3979 = vunpack.c.l.b16 %v3960
      %v3980 = vunpack.c.l.b16 %v3961
      %v3981 = vunpack.c.l.b16 %v3962
      %v3982 = vunpack.c.l.b16 %v3963
      %v3983 = vunpack.c.l.b16 %v3964
      %v3984 = vpack.c.b16 %v3977, %v3976
      %v3985 = vpack.c.b16 %v3979, %v3978
      %v3986 = vpack.c.b16 %v3981, %v3980
      %v3987 = vpack.c.b16 %v3983, %v3982
      %v3990 = vunpack.c.l.b16 %v3966
      %v3991 = vunpack.c.l.b16 %v3967
      %v3992 = vpack.c.b16 %v3991, %v3990
      %v3995 = vsel %vm498, %v3984, 0
      %v3998 = vsel %vm498, %v3985, 0
      %v4001 = vsel %vm498, %v3986, 0
      %v4004 = vsel %vm498, %v3987, 0
      %4006 = vmatprep.subr.bf16.mxu0 0
      %4007 = vmatpush1.bf16.msra.mxu0 0
      %4008 = vmatprep.subr.bf16.mxu0 0
      %4009 = vmatpush1.bf16.msra.mxu0 0
      %4010 = vmatprep.subr.bf16.mxu0 0
      %4011 = vmatpush1.bf16.msra.mxu0 0
      %4012 = vmatprep.subr.bf16.mxu0 0
      %4013 = vmatpush1.bf16.msra.mxu0 0
      %4014 = vmatprep.subr.bf16.mxu0 0
      %4015 = vmatpush1.bf16.msra.mxu0 0
      %4016 = vmatprep.subr.bf16.mxu0 0
      %4017 = vmatpush1.bf16.msra.mxu0 0
      %4018 = vmatprep.subr.bf16.mxu0 0
      %4019 = vmatpush1.bf16.msra.mxu0 0
      %4020 = vmatprep.subr.bf16.mxu0 0
      %4021 = vmatpush1.bf16.msra.mxu0 %v3992
      %4022 = vmatprep.subr.bf16.mxu0 0
      %4023 = vmatpush2.bf16.msra.mxu0 0
      %4024 = vmatprep.subr.bf16.mxu0 0
      %4025 = vmatpush2.bf16.msra.mxu0 0
      %4026 = vmatprep.subr.bf16.mxu0 0
      %4027 = vmatpush2.bf16.msra.mxu0 0
      %4028 = vmatprep.subr.bf16.mxu0 0
      %4029 = vmatpush2.bf16.msra.mxu0 0
      %4030 = vmatprep.subr.bf16.mxu0 0
      %4031 = vmatpush2.bf16.msra.mxu0 0
      %4032 = vmatprep.subr.bf16.mxu0 0
      %4033 = vmatpush2.bf16.msra.mxu0 0
      %4034 = vmatprep.subr.bf16.mxu0 0
      %4035 = vmatpush2.bf16.msra.mxu0 0
      %4036 = vmatprep.subr.bf16.mxu0 0
      %4037 = vmatpush2.bf16.msra.mxu0 0
      %4038 = vmatprep.mubr.bf16.mxu0 0
      %4039 = vmatmul.mubr.bf16.gmra.mxu0 %v3995
      %v4040 = vpop.f32.mrf.mxu0
      %v4041 = vadd.f32 0.0, %v4040
      %v4042 = vpop.f32.mrf.mxu0
      %v4043 = vpop.f32.mrf.mxu0
      %v4044 = vadd.f32 0.0, %v4043
      %v4045 = vpop.f32.mrf.mxu0
      %4046 = vmatprep.mubr.bf16.mxu0 0
      %4047 = vmatmul.mubr.bf16.gmra.mxu0 %v3998
      %v4048 = vpop.f32.mrf.mxu0
      %v4049 = vadd.f32 0.0, %v4048
      %v4050 = vpop.f32.mrf.mxu0
      %v4051 = vpop.f32.mrf.mxu0
      %v4052 = vadd.f32 0.0, %v4051
      %v4053 = vpop.f32.mrf.mxu0
      %4054 = vmatprep.mubr.bf16.mxu0 0
      %4055 = vmatmul.mubr.bf16.gmra.mxu0 %v4001
      %v4056 = vpop.f32.mrf.mxu0
      %v4057 = vadd.f32 0.0, %v4056
      %v4058 = vpop.f32.mrf.mxu0
      %v4059 = vpop.f32.mrf.mxu0
      %v4060 = vadd.f32 0.0, %v4059
      %v4061 = vpop.f32.mrf.mxu0
      %4062 = vmatprep.mubr.bf16.mxu0 0
      %4063 = vmatmul.mubr.bf16.gmra.mxu0 %v4004
      %v4064 = vpop.f32.mrf.mxu0
      %v4065 = vadd.f32 0.0, %v4064
      %v4066 = vpop.f32.mrf.mxu0
      %v4067 = vpop.f32.mrf.mxu0
      %v4068 = vadd.f32 0.0, %v4067
      %v4069 = vpop.f32.mrf.mxu0
      %4070 = vdwg.mxu0
      %v4071 = vadd.f32 %v3948, %v4041
      %v4072 = vadd.f32 %v3949, %v4044
      %v4073 = vadd.f32 %v3950, %v4049
      %v4074 = vadd.f32 %v3951, %v4052
      %v4075 = vadd.f32 %v3952, %v4057
      %v4076 = vadd.f32 %v3953, %v4060
      %v4077 = vadd.f32 %v3954, %v4065
      %v4078 = vadd.f32 %v3955, %v4068
      %v4079 = vld [vmem:[%s3956] sm:$0xf]
      %v4080 = vld [vmem:[%s3956 + $0x4] sm:$0x1]
      %v4081 = vld [vmem:[%s3956 + $0x8] sm:$0xf]
      %v4082 = vld [vmem:[%s3956 + $0xc] sm:$0x1]
      %v4083 = vld [vmem:[%s3956 + $0x10] sm:$0xf]
      %v4084 = vld [vmem:[%s3956 + $0x14] sm:$0x1]
      %v4085 = vld [vmem:[%s3956 + $0x18] sm:$0xf]
      %v4086 = vld [vmem:[%s3956 + $0x1c] sm:$0x1]
      %v4087 = vld [vmem:[%s3956 + $0x20] sm:$0xf]
      %v4088 = vld [vmem:[%s3956 + $0x24] sm:$0x1]
      %v4089 = vld [vmem:[%s3956 + $0x28] sm:$0xf]
      %v4090 = vld [vmem:[%s3956 + $0x2c] sm:$0x1]
      %v4091 = vld [vmem:[%s3956 + $0x30] sm:$0xf]
      %v4092 = vld [vmem:[%s3956 + $0x34] sm:$0x1]
      %v4093 = vld [vmem:[%s3956 + $0x38] sm:$0xf]
      %v4094 = vld [vmem:[%s3956 + $0x3c] sm:$0x1]
      %v4096 = vshrl.u32 %v4079, 16
      %v4098 = vrot.slane %v4096, 4
      %v4099 = vshll.u32 %v4079, 16
      %v4101 = vrot.slane %v4099, 5
      %v4102 = vor.u32 %v4098, %v4101
      %v4103 = vrot.slane %v4102, 4
      %v4105 = vshll.u32 %v4080, 16
      %v4107 = vrot.slane %v4105, 5
      %v4108 = vsel %vm364, %v4103, %v4107
      %v4110 = vshrl.u32 %v4081, 16
      %v4112 = vrot.slane %v4110, 4
      %v4113 = vshll.u32 %v4081, 16
      %v4115 = vrot.slane %v4113, 5
      %v4116 = vor.u32 %v4112, %v4115
      %v4117 = vrot.slane %v4116, 4
      %v4119 = vshll.u32 %v4082, 16
      %v4121 = vrot.slane %v4119, 5
      %v4122 = vsel %vm364, %v4117, %v4121
      %v4124 = vshrl.u32 %v4083, 16
      %v4126 = vrot.slane %v4124, 4
      %v4127 = vshll.u32 %v4083, 16
      %v4129 = vrot.slane %v4127, 5
      %v4130 = vor.u32 %v4126, %v4129
      %v4131 = vrot.slane %v4130, 4
      %v4133 = vshll.u32 %v4084, 16
      %v4135 = vrot.slane %v4133, 5
      %v4136 = vsel %vm364, %v4131, %v4135
      %v4138 = vshrl.u32 %v4085, 16
      %v4140 = vrot.slane %v4138, 4
      %v4141 = vshll.u32 %v4085, 16
      %v4143 = vrot.slane %v4141, 5
      %v4144 = vor.u32 %v4140, %v4143
      %v4145 = vrot.slane %v4144, 4
      %v4147 = vshll.u32 %v4086, 16
      %v4149 = vrot.slane %v4147, 5
      %v4150 = vsel %vm364, %v4145, %v4149
      %v4152 = vshrl.u32 %v4087, 16
      %v4154 = vrot.slane %v4152, 4
      %v4155 = vshll.u32 %v4087, 16
      %v4157 = vrot.slane %v4155, 5
      %v4158 = vor.u32 %v4154, %v4157
      %v4159 = vrot.slane %v4158, 4
      %v4161 = vshll.u32 %v4088, 16
      %v4163 = vrot.slane %v4161, 5
      %v4164 = vsel %vm364, %v4159, %v4163
      %v4166 = vshrl.u32 %v4089, 16
      %v4168 = vrot.slane %v4166, 4
      %v4169 = vshll.u32 %v4089, 16
      %v4171 = vrot.slane %v4169, 5
      %v4172 = vor.u32 %v4168, %v4171
      %v4173 = vrot.slane %v4172, 4
      %v4175 = vshll.u32 %v4090, 16
      %v4177 = vrot.slane %v4175, 5
      %v4178 = vsel %vm364, %v4173, %v4177
      %v4180 = vshrl.u32 %v4091, 16
      %v4182 = vrot.slane %v4180, 4
      %v4183 = vshll.u32 %v4091, 16
      %v4185 = vrot.slane %v4183, 5
      %v4186 = vor.u32 %v4182, %v4185
      %v4187 = vrot.slane %v4186, 4
      %v4189 = vshll.u32 %v4092, 16
      %v4191 = vrot.slane %v4189, 5
      %v4192 = vsel %vm364, %v4187, %v4191
      %v4194 = vshrl.u32 %v4093, 16
      %v4196 = vrot.slane %v4194, 4
      %v4197 = vshll.u32 %v4093, 16
      %v4199 = vrot.slane %v4197, 5
      %v4200 = vor.u32 %v4196, %v4199
      %v4201 = vrot.slane %v4200, 4
      %v4203 = vshll.u32 %v4094, 16
      %v4205 = vrot.slane %v4203, 5
      %v4206 = vsel %vm364, %v4201, %v4205
      %s4207 = scalar_lea.vmem %s3, 176
      %v4208 = vld [vmem:[%s4207] sm:$0xf]
      %v4209 = vld [vmem:[%s4207 + $0x4] sm:$0xf]
      %v4210 = vunpack.c.l.b16 %v4108
      %v4211 = vunpack.c.l.b16 %v4122
      %v4212 = vunpack.c.l.b16 %v4136
      %v4213 = vunpack.c.l.b16 %v4150
      %v4214 = vunpack.c.l.b16 %v4164
      %v4215 = vunpack.c.l.b16 %v4178
      %v4216 = vunpack.c.l.b16 %v4192
      %v4217 = vunpack.c.l.b16 %v4206
      %v4218 = vpack.c.b16 %v4211, %v4210
      %v4219 = vpack.c.b16 %v4213, %v4212
      %v4220 = vpack.c.b16 %v4215, %v4214
      %v4221 = vpack.c.b16 %v4217, %v4216
      %v4224 = vunpack.c.l.b16 %v4208
      %v4225 = vunpack.c.l.b16 %v4209
      %v4226 = vpack.c.b16 %v4225, %v4224
      %v4229 = vsel %vm498, %v4218, 0
      %v4232 = vsel %vm498, %v4219, 0
      %v4235 = vsel %vm498, %v4220, 0
      %v4238 = vsel %vm498, %v4221, 0
      %4240 = vmatprep.subr.bf16.mxu0 0
      %4241 = vmatpush1.bf16.msra.mxu0 0
      %4242 = vmatprep.subr.bf16.mxu0 0
      %4243 = vmatpush1.bf16.msra.mxu0 0
      %4244 = vmatprep.subr.bf16.mxu0 0
      %4245 = vmatpush1.bf16.msra.mxu0 0
      %4246 = vmatprep.subr.bf16.mxu0 0
      %4247 = vmatpush1.bf16.msra.mxu0 0
      %4248 = vmatprep.subr.bf16.mxu0 0
      %4249 = vmatpush1.bf16.msra.mxu0 0
      %4250 = vmatprep.subr.bf16.mxu0 0
      %4251 = vmatpush1.bf16.msra.mxu0 0
      %4252 = vmatprep.subr.bf16.mxu0 0
      %4253 = vmatpush1.bf16.msra.mxu0 0
      %4254 = vmatprep.subr.bf16.mxu0 0
      %4255 = vmatpush1.bf16.msra.mxu0 %v4226
      %4256 = vmatprep.subr.bf16.mxu0 0
      %4257 = vmatpush2.bf16.msra.mxu0 0
      %4258 = vmatprep.subr.bf16.mxu0 0
      %4259 = vmatpush2.bf16.msra.mxu0 0
      %4260 = vmatprep.subr.bf16.mxu0 0
      %4261 = vmatpush2.bf16.msra.mxu0 0
      %4262 = vmatprep.subr.bf16.mxu0 0
      %4263 = vmatpush2.bf16.msra.mxu0 0
      %4264 = vmatprep.subr.bf16.mxu0 0
      %4265 = vmatpush2.bf16.msra.mxu0 0
      %4266 = vmatprep.subr.bf16.mxu0 0
      %4267 = vmatpush2.bf16.msra.mxu0 0
      %4268 = vmatprep.subr.bf16.mxu0 0
      %4269 = vmatpush2.bf16.msra.mxu0 0
      %4270 = vmatprep.subr.bf16.mxu0 0
      %4271 = vmatpush2.bf16.msra.mxu0 0
      %4272 = vmatprep.mubr.bf16.mxu0 0
      %4273 = vmatmul.mubr.bf16.gmra.mxu0 %v4229
      %v4274 = vpop.f32.mrf.mxu0
      %v4275 = vadd.f32 0.0, %v4274
      %v4276 = vpop.f32.mrf.mxu0
      %v4277 = vpop.f32.mrf.mxu0
      %v4278 = vadd.f32 0.0, %v4277
      %v4279 = vpop.f32.mrf.mxu0
      %4280 = vmatprep.mubr.bf16.mxu0 0
      %4281 = vmatmul.mubr.bf16.gmra.mxu0 %v4232
      %v4282 = vpop.f32.mrf.mxu0
      %v4283 = vadd.f32 0.0, %v4282
      %v4284 = vpop.f32.mrf.mxu0
      %v4285 = vpop.f32.mrf.mxu0
      %v4286 = vadd.f32 0.0, %v4285
      %v4287 = vpop.f32.mrf.mxu0
      %4288 = vmatprep.mubr.bf16.mxu0 0
      %4289 = vmatmul.mubr.bf16.gmra.mxu0 %v4235
      %v4290 = vpop.f32.mrf.mxu0
      %v4291 = vadd.f32 0.0, %v4290
      %v4292 = vpop.f32.mrf.mxu0
      %v4293 = vpop.f32.mrf.mxu0
      %v4294 = vadd.f32 0.0, %v4293
      %v4295 = vpop.f32.mrf.mxu0
      %4296 = vmatprep.mubr.bf16.mxu0 0
      %4297 = vmatmul.mubr.bf16.gmra.mxu0 %v4238
      %v4298 = vpop.f32.mrf.mxu0
      %v4299 = vadd.f32 0.0, %v4298
      %v4300 = vpop.f32.mrf.mxu0
      %v4301 = vpop.f32.mrf.mxu0
      %v4302 = vadd.f32 0.0, %v4301
      %v4303 = vpop.f32.mrf.mxu0
      %4304 = vdwg.mxu0
      %v4305 = vadd.f32 %v4071, %v4275
      %v4306 = vadd.f32 %v4072, %v4278
      %v4307 = vadd.f32 %v4073, %v4283
      %v4308 = vadd.f32 %v4074, %v4286
      %v4309 = vadd.f32 %v4075, %v4291
      %v4310 = vadd.f32 %v4076, %v4294
      %v4311 = vadd.f32 %v4077, %v4299
      %v4312 = vadd.f32 %v4078, %v4302
      %v4313 = vld [vmem:[%s3956] sm:$0xe]
      %v4314 = vld [vmem:[%s3956 + $0x8] sm:$0xe]
      %v4315 = vld [vmem:[%s3956 + $0x10] sm:$0xe]
      %v4316 = vld [vmem:[%s3956 + $0x18] sm:$0xe]
      %v4317 = vld [vmem:[%s3956 + $0x20] sm:$0xe]
      %v4318 = vld [vmem:[%s3956 + $0x28] sm:$0xe]
      %v4319 = vld [vmem:[%s3956 + $0x30] sm:$0xe]
      %v4320 = vld [vmem:[%s3956 + $0x38] sm:$0xe]
      %v4337 = vrot.slane %v4313, 5
      %v4338 = vrot.slane %v4337, 4
      %v4339 = vrot.slane %v4080, 5
      %v4340 = vsel %vm705, %v4338, %v4339
      %v4341 = vrot.slane %v4314, 5
      %v4342 = vrot.slane %v4341, 4
      %v4343 = vrot.slane %v4082, 5
      %v4344 = vsel %vm705, %v4342, %v4343
      %v4345 = vrot.slane %v4315, 5
      %v4346 = vrot.slane %v4345, 4
      %v4347 = vrot.slane %v4084, 5
      %v4348 = vsel %vm705, %v4346, %v4347
      %v4349 = vrot.slane %v4316, 5
      %v4350 = vrot.slane %v4349, 4
      %v4351 = vrot.slane %v4086, 5
      %v4352 = vsel %vm705, %v4350, %v4351
      %v4353 = vrot.slane %v4317, 5
      %v4354 = vrot.slane %v4353, 4
      %v4355 = vrot.slane %v4088, 5
      %v4356 = vsel %vm705, %v4354, %v4355
      %v4357 = vrot.slane %v4318, 5
      %v4358 = vrot.slane %v4357, 4
      %v4359 = vrot.slane %v4090, 5
      %v4360 = vsel %vm705, %v4358, %v4359
      %v4361 = vrot.slane %v4319, 5
      %v4362 = vrot.slane %v4361, 4
      %v4363 = vrot.slane %v4092, 5
      %v4364 = vsel %vm705, %v4362, %v4363
      %v4365 = vrot.slane %v4320, 5
      %v4366 = vrot.slane %v4365, 4
      %v4367 = vrot.slane %v4094, 5
      %v4368 = vsel %vm705, %v4366, %v4367
      %s4369 = scalar_lea.vmem %s3, 184
      %v4370 = vld [vmem:[%s4369] sm:$0xf]
      %v4371 = vld [vmem:[%s4369 + $0x4] sm:$0xf]
      %v4372 = vunpack.c.l.b16 %v4340
      %v4373 = vunpack.c.l.b16 %v4344
      %v4374 = vunpack.c.l.b16 %v4348
      %v4375 = vunpack.c.l.b16 %v4352
      %v4376 = vunpack.c.l.b16 %v4356
      %v4377 = vunpack.c.l.b16 %v4360
      %v4378 = vunpack.c.l.b16 %v4364
      %v4379 = vunpack.c.l.b16 %v4368
      %v4380 = vpack.c.b16 %v4373, %v4372
      %v4381 = vpack.c.b16 %v4375, %v4374
      %v4382 = vpack.c.b16 %v4377, %v4376
      %v4383 = vpack.c.b16 %v4379, %v4378
      %v4386 = vunpack.c.l.b16 %v4370
      %v4387 = vunpack.c.l.b16 %v4371
      %v4388 = vpack.c.b16 %v4387, %v4386
      %v4391 = vsel %vm498, %v4380, 0
      %v4394 = vsel %vm498, %v4381, 0
      %v4397 = vsel %vm498, %v4382, 0
      %v4400 = vsel %vm498, %v4383, 0
      %4402 = vmatprep.subr.bf16.mxu0 0
      %4403 = vmatpush1.bf16.msra.mxu0 0
      %4404 = vmatprep.subr.bf16.mxu0 0
      %4405 = vmatpush1.bf16.msra.mxu0 0
      %4406 = vmatprep.subr.bf16.mxu0 0
      %4407 = vmatpush1.bf16.msra.mxu0 0
      %4408 = vmatprep.subr.bf16.mxu0 0
      %4409 = vmatpush1.bf16.msra.mxu0 0
      %4410 = vmatprep.subr.bf16.mxu0 0
      %4411 = vmatpush1.bf16.msra.mxu0 0
      %4412 = vmatprep.subr.bf16.mxu0 0
      %4413 = vmatpush1.bf16.msra.mxu0 0
      %4414 = vmatprep.subr.bf16.mxu0 0
      %4415 = vmatpush1.bf16.msra.mxu0 0
      %4416 = vmatprep.subr.bf16.mxu0 0
      %4417 = vmatpush1.bf16.msra.mxu0 %v4388
      %4418 = vmatprep.subr.bf16.mxu0 0
      %4419 = vmatpush2.bf16.msra.mxu0 0
      %4420 = vmatprep.subr.bf16.mxu0 0
      %4421 = vmatpush2.bf16.msra.mxu0 0
      %4422 = vmatprep.subr.bf16.mxu0 0
      %4423 = vmatpush2.bf16.msra.mxu0 0
      %4424 = vmatprep.subr.bf16.mxu0 0
      %4425 = vmatpush2.bf16.msra.mxu0 0
      %4426 = vmatprep.subr.bf16.mxu0 0
      %4427 = vmatpush2.bf16.msra.mxu0 0
      %4428 = vmatprep.subr.bf16.mxu0 0
      %4429 = vmatpush2.bf16.msra.mxu0 0
      %4430 = vmatprep.subr.bf16.mxu0 0
      %4431 = vmatpush2.bf16.msra.mxu0 0
      %4432 = vmatprep.subr.bf16.mxu0 0
      %4433 = vmatpush2.bf16.msra.mxu0 0
      %4434 = vmatprep.mubr.bf16.mxu0 0
      %4435 = vmatmul.mubr.bf16.gmra.mxu0 %v4391
      %v4436 = vpop.f32.mrf.mxu0
      %v4437 = vadd.f32 0.0, %v4436
      %v4438 = vpop.f32.mrf.mxu0
      %v4439 = vpop.f32.mrf.mxu0
      %v4440 = vadd.f32 0.0, %v4439
      %v4441 = vpop.f32.mrf.mxu0
      %4442 = vmatprep.mubr.bf16.mxu0 0
      %4443 = vmatmul.mubr.bf16.gmra.mxu0 %v4394
      %v4444 = vpop.f32.mrf.mxu0
      %v4445 = vadd.f32 0.0, %v4444
      %v4446 = vpop.f32.mrf.mxu0
      %v4447 = vpop.f32.mrf.mxu0
      %v4448 = vadd.f32 0.0, %v4447
      %v4449 = vpop.f32.mrf.mxu0
      %4450 = vmatprep.mubr.bf16.mxu0 0
      %4451 = vmatmul.mubr.bf16.gmra.mxu0 %v4397
      %v4452 = vpop.f32.mrf.mxu0
      %v4453 = vadd.f32 0.0, %v4452
      %v4454 = vpop.f32.mrf.mxu0
      %v4455 = vpop.f32.mrf.mxu0
      %v4456 = vadd.f32 0.0, %v4455
      %v4457 = vpop.f32.mrf.mxu0
      %4458 = vmatprep.mubr.bf16.mxu0 0
      %4459 = vmatmul.mubr.bf16.gmra.mxu0 %v4400
      %v4460 = vpop.f32.mrf.mxu0
      %v4461 = vadd.f32 0.0, %v4460
      %v4462 = vpop.f32.mrf.mxu0
      %v4463 = vpop.f32.mrf.mxu0
      %v4464 = vadd.f32 0.0, %v4463
      %v4465 = vpop.f32.mrf.mxu0
      %4466 = vdwg.mxu0
      %v4467 = vadd.f32 %v4305, %v4437
      %v4468 = vadd.f32 %v4306, %v4440
      %v4469 = vadd.f32 %v4307, %v4445
      %v4470 = vadd.f32 %v4308, %v4448
      %v4471 = vadd.f32 %v4309, %v4453
      %v4472 = vadd.f32 %v4310, %v4456
      %v4473 = vadd.f32 %v4311, %v4461
      %v4474 = vadd.f32 %v4312, %v4464
      %s4475 = scalar_lea.vmem %s332, 16
      %v4476 = vld [vmem:[%s4475] sm:$0xf]
      %v4477 = vld [vmem:[%s4475 + $0x8] sm:$0xf]
      %v4478 = vld [vmem:[%s4475 + $0x10] sm:$0xf]
      %v4479 = vld [vmem:[%s4475 + $0x18] sm:$0xf]
      %v4480 = vld [vmem:[%s4475 + $0x20] sm:$0xf]
      %v4481 = vld [vmem:[%s4475 + $0x28] sm:$0xf]
      %v4482 = vld [vmem:[%s4475 + $0x30] sm:$0xf]
      %v4483 = vld [vmem:[%s4475 + $0x38] sm:$0xf]
      %s4484 = scalar_lea.vmem %s3, 192
      %v4485 = vld [vmem:[%s4484] sm:$0xf]
      %v4486 = vld [vmem:[%s4484 + $0x4] sm:$0xf]
      %v4495 = vunpack.c.l.b16 %v4476
      %v4496 = vunpack.c.l.b16 %v4477
      %v4497 = vunpack.c.l.b16 %v4478
      %v4498 = vunpack.c.l.b16 %v4479
      %v4499 = vunpack.c.l.b16 %v4480
      %v4500 = vunpack.c.l.b16 %v4481
      %v4501 = vunpack.c.l.b16 %v4482
      %v4502 = vunpack.c.l.b16 %v4483
      %v4503 = vpack.c.b16 %v4496, %v4495
      %v4504 = vpack.c.b16 %v4498, %v4497
      %v4505 = vpack.c.b16 %v4500, %v4499
      %v4506 = vpack.c.b16 %v4502, %v4501
      %v4509 = vunpack.c.l.b16 %v4485
      %v4510 = vunpack.c.l.b16 %v4486
      %v4511 = vpack.c.b16 %v4510, %v4509
      %v4514 = vsel %vm498, %v4503, 0
      %v4517 = vsel %vm498, %v4504, 0
      %v4520 = vsel %vm498, %v4505, 0
      %v4523 = vsel %vm498, %v4506, 0
      %4525 = vmatprep.subr.bf16.mxu0 0
      %4526 = vmatpush1.bf16.msra.mxu0 0
      %4527 = vmatprep.subr.bf16.mxu0 0
      %4528 = vmatpush1.bf16.msra.mxu0 0
      %4529 = vmatprep.subr.bf16.mxu0 0
      %4530 = vmatpush1.bf16.msra.mxu0 0
      %4531 = vmatprep.subr.bf16.mxu0 0
      %4532 = vmatpush1.bf16.msra.mxu0 0
      %4533 = vmatprep.subr.bf16.mxu0 0
      %4534 = vmatpush1.bf16.msra.mxu0 0
      %4535 = vmatprep.subr.bf16.mxu0 0
      %4536 = vmatpush1.bf16.msra.mxu0 0
      %4537 = vmatprep.subr.bf16.mxu0 0
      %4538 = vmatpush1.bf16.msra.mxu0 0
      %4539 = vmatprep.subr.bf16.mxu0 0
      %4540 = vmatpush1.bf16.msra.mxu0 %v4511
      %4541 = vmatprep.subr.bf16.mxu0 0
      %4542 = vmatpush2.bf16.msra.mxu0 0
      %4543 = vmatprep.subr.bf16.mxu0 0
      %4544 = vmatpush2.bf16.msra.mxu0 0
      %4545 = vmatprep.subr.bf16.mxu0 0
      %4546 = vmatpush2.bf16.msra.mxu0 0
      %4547 = vmatprep.subr.bf16.mxu0 0
      %4548 = vmatpush2.bf16.msra.mxu0 0
      %4549 = vmatprep.subr.bf16.mxu0 0
      %4550 = vmatpush2.bf16.msra.mxu0 0
      %4551 = vmatprep.subr.bf16.mxu0 0
      %4552 = vmatpush2.bf16.msra.mxu0 0
      %4553 = vmatprep.subr.bf16.mxu0 0
      %4554 = vmatpush2.bf16.msra.mxu0 0
      %4555 = vmatprep.subr.bf16.mxu0 0
      %4556 = vmatpush2.bf16.msra.mxu0 0
      %4557 = vmatprep.mubr.bf16.mxu0 0
      %4558 = vmatmul.mubr.bf16.gmra.mxu0 %v4514
      %v4559 = vpop.f32.mrf.mxu0
      %v4560 = vadd.f32 0.0, %v4559
      %v4561 = vpop.f32.mrf.mxu0
      %v4562 = vpop.f32.mrf.mxu0
      %v4563 = vadd.f32 0.0, %v4562
      %v4564 = vpop.f32.mrf.mxu0
      %4565 = vmatprep.mubr.bf16.mxu0 0
      %4566 = vmatmul.mubr.bf16.gmra.mxu0 %v4517
      %v4567 = vpop.f32.mrf.mxu0
      %v4568 = vadd.f32 0.0, %v4567
      %v4569 = vpop.f32.mrf.mxu0
      %v4570 = vpop.f32.mrf.mxu0
      %v4571 = vadd.f32 0.0, %v4570
      %v4572 = vpop.f32.mrf.mxu0
      %4573 = vmatprep.mubr.bf16.mxu0 0
      %4574 = vmatmul.mubr.bf16.gmra.mxu0 %v4520
      %v4575 = vpop.f32.mrf.mxu0
      %v4576 = vadd.f32 0.0, %v4575
      %v4577 = vpop.f32.mrf.mxu0
      %v4578 = vpop.f32.mrf.mxu0
      %v4579 = vadd.f32 0.0, %v4578
      %v4580 = vpop.f32.mrf.mxu0
      %4581 = vmatprep.mubr.bf16.mxu0 0
      %4582 = vmatmul.mubr.bf16.gmra.mxu0 %v4523
      %v4583 = vpop.f32.mrf.mxu0
      %v4584 = vadd.f32 0.0, %v4583
      %v4585 = vpop.f32.mrf.mxu0
      %v4586 = vpop.f32.mrf.mxu0
      %v4587 = vadd.f32 0.0, %v4586
      %v4588 = vpop.f32.mrf.mxu0
      %4589 = vdwg.mxu0
      %v4590 = vadd.f32 %v4467, %v4560
      %v4591 = vadd.f32 %v4468, %v4563
      %v4592 = vadd.f32 %v4469, %v4568
      %v4593 = vadd.f32 %v4470, %v4571
      %v4594 = vadd.f32 %v4471, %v4576
      %v4595 = vadd.f32 %v4472, %v4579
      %v4596 = vadd.f32 %v4473, %v4584
      %v4597 = vadd.f32 %v4474, %v4587
      %v4598 = vld [vmem:[%s4475] sm:$0xf]
      %v4599 = vld [vmem:[%s4475 + $0x4] sm:$0x1]
      %v4600 = vld [vmem:[%s4475 + $0x8] sm:$0xf]
      %v4601 = vld [vmem:[%s4475 + $0xc] sm:$0x1]
      %v4602 = vld [vmem:[%s4475 + $0x10] sm:$0xf]
      %v4603 = vld [vmem:[%s4475 + $0x14] sm:$0x1]
      %v4604 = vld [vmem:[%s4475 + $0x18] sm:$0xf]
      %v4605 = vld [vmem:[%s4475 + $0x1c] sm:$0x1]
      %v4606 = vld [vmem:[%s4475 + $0x20] sm:$0xf]
      %v4607 = vld [vmem:[%s4475 + $0x24] sm:$0x1]
      %v4608 = vld [vmem:[%s4475 + $0x28] sm:$0xf]
      %v4609 = vld [vmem:[%s4475 + $0x2c] sm:$0x1]
      %v4610 = vld [vmem:[%s4475 + $0x30] sm:$0xf]
      %v4611 = vld [vmem:[%s4475 + $0x34] sm:$0x1]
      %v4612 = vld [vmem:[%s4475 + $0x38] sm:$0xf]
      %v4613 = vld [vmem:[%s4475 + $0x3c] sm:$0x1]
      %v4615 = vshrl.u32 %v4598, 16
      %v4617 = vrot.slane %v4615, 4
      %v4618 = vshll.u32 %v4598, 16
      %v4620 = vrot.slane %v4618, 5
      %v4621 = vor.u32 %v4617, %v4620
      %v4622 = vrot.slane %v4621, 4
      %v4624 = vshll.u32 %v4599, 16
      %v4626 = vrot.slane %v4624, 5
      %v4627 = vsel %vm364, %v4622, %v4626
      %v4629 = vshrl.u32 %v4600, 16
      %v4631 = vrot.slane %v4629, 4
      %v4632 = vshll.u32 %v4600, 16
      %v4634 = vrot.slane %v4632, 5
      %v4635 = vor.u32 %v4631, %v4634
      %v4636 = vrot.slane %v4635, 4
      %v4638 = vshll.u32 %v4601, 16
      %v4640 = vrot.slane %v4638, 5
      %v4641 = vsel %vm364, %v4636, %v4640
      %v4643 = vshrl.u32 %v4602, 16
      %v4645 = vrot.slane %v4643, 4
      %v4646 = vshll.u32 %v4602, 16
      %v4648 = vrot.slane %v4646, 5
      %v4649 = vor.u32 %v4645, %v4648
      %v4650 = vrot.slane %v4649, 4
      %v4652 = vshll.u32 %v4603, 16
      %v4654 = vrot.slane %v4652, 5
      %v4655 = vsel %vm364, %v4650, %v4654
      %v4657 = vshrl.u32 %v4604, 16
      %v4659 = vrot.slane %v4657, 4
      %v4660 = vshll.u32 %v4604, 16
      %v4662 = vrot.slane %v4660, 5
      %v4663 = vor.u32 %v4659, %v4662
      %v4664 = vrot.slane %v4663, 4
      %v4666 = vshll.u32 %v4605, 16
      %v4668 = vrot.slane %v4666, 5
      %v4669 = vsel %vm364, %v4664, %v4668
      %v4671 = vshrl.u32 %v4606, 16
      %v4673 = vrot.slane %v4671, 4
      %v4674 = vshll.u32 %v4606, 16
      %v4676 = vrot.slane %v4674, 5
      %v4677 = vor.u32 %v4673, %v4676
      %v4678 = vrot.slane %v4677, 4
      %v4680 = vshll.u32 %v4607, 16
      %v4682 = vrot.slane %v4680, 5
      %v4683 = vsel %vm364, %v4678, %v4682
      %v4685 = vshrl.u32 %v4608, 16
      %v4687 = vrot.slane %v4685, 4
      %v4688 = vshll.u32 %v4608, 16
      %v4690 = vrot.slane %v4688, 5
      %v4691 = vor.u32 %v4687, %v4690
      %v4692 = vrot.slane %v4691, 4
      %v4694 = vshll.u32 %v4609, 16
      %v4696 = vrot.slane %v4694, 5
      %v4697 = vsel %vm364, %v4692, %v4696
      %v4699 = vshrl.u32 %v4610, 16
      %v4701 = vrot.slane %v4699, 4
      %v4702 = vshll.u32 %v4610, 16
      %v4704 = vrot.slane %v4702, 5
      %v4705 = vor.u32 %v4701, %v4704
      %v4706 = vrot.slane %v4705, 4
      %v4708 = vshll.u32 %v4611, 16
      %v4710 = vrot.slane %v4708, 5
      %v4711 = vsel %vm364, %v4706, %v4710
      %v4713 = vshrl.u32 %v4612, 16
      %v4715 = vrot.slane %v4713, 4
      %v4716 = vshll.u32 %v4612, 16
      %v4718 = vrot.slane %v4716, 5
      %v4719 = vor.u32 %v4715, %v4718
      %v4720 = vrot.slane %v4719, 4
      %v4722 = vshll.u32 %v4613, 16
      %v4724 = vrot.slane %v4722, 5
      %v4725 = vsel %vm364, %v4720, %v4724
      %s4726 = scalar_lea.vmem %s3, 200
      %v4727 = vld [vmem:[%s4726] sm:$0xf]
      %v4728 = vld [vmem:[%s4726 + $0x4] sm:$0xf]
      %v4729 = vunpack.c.l.b16 %v4627
      %v4730 = vunpack.c.l.b16 %v4641
      %v4731 = vunpack.c.l.b16 %v4655
      %v4732 = vunpack.c.l.b16 %v4669
      %v4733 = vunpack.c.l.b16 %v4683
      %v4734 = vunpack.c.l.b16 %v4697
      %v4735 = vunpack.c.l.b16 %v4711
      %v4736 = vunpack.c.l.b16 %v4725
      %v4737 = vpack.c.b16 %v4730, %v4729
      %v4738 = vpack.c.b16 %v4732, %v4731
      %v4739 = vpack.c.b16 %v4734, %v4733
      %v4740 = vpack.c.b16 %v4736, %v4735
      %v4743 = vunpack.c.l.b16 %v4727
      %v4744 = vunpack.c.l.b16 %v4728
      %v4745 = vpack.c.b16 %v4744, %v4743
      %v4748 = vsel %vm498, %v4737, 0
      %v4751 = vsel %vm498, %v4738, 0
      %v4754 = vsel %vm498, %v4739, 0
      %v4757 = vsel %vm498, %v4740, 0
      %4759 = vmatprep.subr.bf16.mxu0 0
      %4760 = vmatpush1.bf16.msra.mxu0 0
      %4761 = vmatprep.subr.bf16.mxu0 0
      %4762 = vmatpush1.bf16.msra.mxu0 0
      %4763 = vmatprep.subr.bf16.mxu0 0
      %4764 = vmatpush1.bf16.msra.mxu0 0
      %4765 = vmatprep.subr.bf16.mxu0 0
      %4766 = vmatpush1.bf16.msra.mxu0 0
      %4767 = vmatprep.subr.bf16.mxu0 0
      %4768 = vmatpush1.bf16.msra.mxu0 0
      %4769 = vmatprep.subr.bf16.mxu0 0
      %4770 = vmatpush1.bf16.msra.mxu0 0
      %4771 = vmatprep.subr.bf16.mxu0 0
      %4772 = vmatpush1.bf16.msra.mxu0 0
      %4773 = vmatprep.subr.bf16.mxu0 0
      %4774 = vmatpush1.bf16.msra.mxu0 %v4745
      %4775 = vmatprep.subr.bf16.mxu0 0
      %4776 = vmatpush2.bf16.msra.mxu0 0
      %4777 = vmatprep.subr.bf16.mxu0 0
      %4778 = vmatpush2.bf16.msra.mxu0 0
      %4779 = vmatprep.subr.bf16.mxu0 0
      %4780 = vmatpush2.bf16.msra.mxu0 0
      %4781 = vmatprep.subr.bf16.mxu0 0
      %4782 = vmatpush2.bf16.msra.mxu0 0
      %4783 = vmatprep.subr.bf16.mxu0 0
      %4784 = vmatpush2.bf16.msra.mxu0 0
      %4785 = vmatprep.subr.bf16.mxu0 0
      %4786 = vmatpush2.bf16.msra.mxu0 0
      %4787 = vmatprep.subr.bf16.mxu0 0
      %4788 = vmatpush2.bf16.msra.mxu0 0
      %4789 = vmatprep.subr.bf16.mxu0 0
      %4790 = vmatpush2.bf16.msra.mxu0 0
      %4791 = vmatprep.mubr.bf16.mxu0 0
      %4792 = vmatmul.mubr.bf16.gmra.mxu0 %v4748
      %v4793 = vpop.f32.mrf.mxu0
      %v4794 = vadd.f32 0.0, %v4793
      %v4795 = vpop.f32.mrf.mxu0
      %v4796 = vpop.f32.mrf.mxu0
      %v4797 = vadd.f32 0.0, %v4796
      %v4798 = vpop.f32.mrf.mxu0
      %4799 = vmatprep.mubr.bf16.mxu0 0
      %4800 = vmatmul.mubr.bf16.gmra.mxu0 %v4751
      %v4801 = vpop.f32.mrf.mxu0
      %v4802 = vadd.f32 0.0, %v4801
      %v4803 = vpop.f32.mrf.mxu0
      %v4804 = vpop.f32.mrf.mxu0
      %v4805 = vadd.f32 0.0, %v4804
      %v4806 = vpop.f32.mrf.mxu0
      %4807 = vmatprep.mubr.bf16.mxu0 0
      %4808 = vmatmul.mubr.bf16.gmra.mxu0 %v4754
      %v4809 = vpop.f32.mrf.mxu0
      %v4810 = vadd.f32 0.0, %v4809
      %v4811 = vpop.f32.mrf.mxu0
      %v4812 = vpop.f32.mrf.mxu0
      %v4813 = vadd.f32 0.0, %v4812
      %v4814 = vpop.f32.mrf.mxu0
      %4815 = vmatprep.mubr.bf16.mxu0 0
      %4816 = vmatmul.mubr.bf16.gmra.mxu0 %v4757
      %v4817 = vpop.f32.mrf.mxu0
      %v4818 = vadd.f32 0.0, %v4817
      %v4819 = vpop.f32.mrf.mxu0
      %v4820 = vpop.f32.mrf.mxu0
      %v4821 = vadd.f32 0.0, %v4820
      %v4822 = vpop.f32.mrf.mxu0
      %4823 = vdwg.mxu0
      %v4824 = vadd.f32 %v4590, %v4794
      %v4825 = vadd.f32 %v4591, %v4797
      %v4826 = vadd.f32 %v4592, %v4802
      %v4827 = vadd.f32 %v4593, %v4805
      %v4828 = vadd.f32 %v4594, %v4810
      %v4829 = vadd.f32 %v4595, %v4813
      %v4830 = vadd.f32 %v4596, %v4818
      %v4831 = vadd.f32 %v4597, %v4821
      %v4832 = vld [vmem:[%s4475] sm:$0xe]
      %v4833 = vld [vmem:[%s4475 + $0x8] sm:$0xe]
      %v4834 = vld [vmem:[%s4475 + $0x10] sm:$0xe]
      %v4835 = vld [vmem:[%s4475 + $0x18] sm:$0xe]
      %v4836 = vld [vmem:[%s4475 + $0x20] sm:$0xe]
      %v4837 = vld [vmem:[%s4475 + $0x28] sm:$0xe]
      %v4838 = vld [vmem:[%s4475 + $0x30] sm:$0xe]
      %v4839 = vld [vmem:[%s4475 + $0x38] sm:$0xe]
      %v4856 = vrot.slane %v4832, 5
      %v4857 = vrot.slane %v4856, 4
      %v4858 = vrot.slane %v4599, 5
      %v4859 = vsel %vm705, %v4857, %v4858
      %v4860 = vrot.slane %v4833, 5
      %v4861 = vrot.slane %v4860, 4
      %v4862 = vrot.slane %v4601, 5
      %v4863 = vsel %vm705, %v4861, %v4862
      %v4864 = vrot.slane %v4834, 5
      %v4865 = vrot.slane %v4864, 4
      %v4866 = vrot.slane %v4603, 5
      %v4867 = vsel %vm705, %v4865, %v4866
      %v4868 = vrot.slane %v4835, 5
      %v4869 = vrot.slane %v4868, 4
      %v4870 = vrot.slane %v4605, 5
      %v4871 = vsel %vm705, %v4869, %v4870
      %v4872 = vrot.slane %v4836, 5
      %v4873 = vrot.slane %v4872, 4
      %v4874 = vrot.slane %v4607, 5
      %v4875 = vsel %vm705, %v4873, %v4874
      %v4876 = vrot.slane %v4837, 5
      %v4877 = vrot.slane %v4876, 4
      %v4878 = vrot.slane %v4609, 5
      %v4879 = vsel %vm705, %v4877, %v4878
      %v4880 = vrot.slane %v4838, 5
      %v4881 = vrot.slane %v4880, 4
      %v4882 = vrot.slane %v4611, 5
      %v4883 = vsel %vm705, %v4881, %v4882
      %v4884 = vrot.slane %v4839, 5
      %v4885 = vrot.slane %v4884, 4
      %v4886 = vrot.slane %v4613, 5
      %v4887 = vsel %vm705, %v4885, %v4886
      %s4888 = scalar_lea.vmem %s3, 208
      %v4889 = vld [vmem:[%s4888] sm:$0xf]
      %v4890 = vld [vmem:[%s4888 + $0x4] sm:$0xf]
      %v4891 = vunpack.c.l.b16 %v4859
      %v4892 = vunpack.c.l.b16 %v4863
      %v4893 = vunpack.c.l.b16 %v4867
      %v4894 = vunpack.c.l.b16 %v4871
      %v4895 = vunpack.c.l.b16 %v4875
      %v4896 = vunpack.c.l.b16 %v4879
      %v4897 = vunpack.c.l.b16 %v4883
      %v4898 = vunpack.c.l.b16 %v4887
      %v4899 = vpack.c.b16 %v4892, %v4891
      %v4900 = vpack.c.b16 %v4894, %v4893
      %v4901 = vpack.c.b16 %v4896, %v4895
      %v4902 = vpack.c.b16 %v4898, %v4897
      %v4905 = vunpack.c.l.b16 %v4889
      %v4906 = vunpack.c.l.b16 %v4890
      %v4907 = vpack.c.b16 %v4906, %v4905
      %v4910 = vsel %vm498, %v4899, 0
      %v4913 = vsel %vm498, %v4900, 0
      %v4916 = vsel %vm498, %v4901, 0
      %v4919 = vsel %vm498, %v4902, 0
      %4921 = vmatprep.subr.bf16.mxu0 0
      %4922 = vmatpush1.bf16.msra.mxu0 0
      %4923 = vmatprep.subr.bf16.mxu0 0
      %4924 = vmatpush1.bf16.msra.mxu0 0
      %4925 = vmatprep.subr.bf16.mxu0 0
      %4926 = vmatpush1.bf16.msra.mxu0 0
      %4927 = vmatprep.subr.bf16.mxu0 0
      %4928 = vmatpush1.bf16.msra.mxu0 0
      %4929 = vmatprep.subr.bf16.mxu0 0
      %4930 = vmatpush1.bf16.msra.mxu0 0
      %4931 = vmatprep.subr.bf16.mxu0 0
      %4932 = vmatpush1.bf16.msra.mxu0 0
      %4933 = vmatprep.subr.bf16.mxu0 0
      %4934 = vmatpush1.bf16.msra.mxu0 0
      %4935 = vmatprep.subr.bf16.mxu0 0
      %4936 = vmatpush1.bf16.msra.mxu0 %v4907
      %4937 = vmatprep.subr.bf16.mxu0 0
      %4938 = vmatpush2.bf16.msra.mxu0 0
      %4939 = vmatprep.subr.bf16.mxu0 0
      %4940 = vmatpush2.bf16.msra.mxu0 0
      %4941 = vmatprep.subr.bf16.mxu0 0
      %4942 = vmatpush2.bf16.msra.mxu0 0
      %4943 = vmatprep.subr.bf16.mxu0 0
      %4944 = vmatpush2.bf16.msra.mxu0 0
      %4945 = vmatprep.subr.bf16.mxu0 0
      %4946 = vmatpush2.bf16.msra.mxu0 0
      %4947 = vmatprep.subr.bf16.mxu0 0
      %4948 = vmatpush2.bf16.msra.mxu0 0
      %4949 = vmatprep.subr.bf16.mxu0 0
      %4950 = vmatpush2.bf16.msra.mxu0 0
      %4951 = vmatprep.subr.bf16.mxu0 0
      %4952 = vmatpush2.bf16.msra.mxu0 0
      %4953 = vmatprep.mubr.bf16.mxu0 0
      %4954 = vmatmul.mubr.bf16.gmra.mxu0 %v4910
      %v4955 = vpop.f32.mrf.mxu0
      %v4956 = vadd.f32 0.0, %v4955
      %v4957 = vpop.f32.mrf.mxu0
      %v4958 = vpop.f32.mrf.mxu0
      %v4959 = vadd.f32 0.0, %v4958
      %v4960 = vpop.f32.mrf.mxu0
      %4961 = vmatprep.mubr.bf16.mxu0 0
      %4962 = vmatmul.mubr.bf16.gmra.mxu0 %v4913
      %v4963 = vpop.f32.mrf.mxu0
      %v4964 = vadd.f32 0.0, %v4963
      %v4965 = vpop.f32.mrf.mxu0
      %v4966 = vpop.f32.mrf.mxu0
      %v4967 = vadd.f32 0.0, %v4966
      %v4968 = vpop.f32.mrf.mxu0
      %4969 = vmatprep.mubr.bf16.mxu0 0
      %4970 = vmatmul.mubr.bf16.gmra.mxu0 %v4916
      %v4971 = vpop.f32.mrf.mxu0
      %v4972 = vadd.f32 0.0, %v4971
      %v4973 = vpop.f32.mrf.mxu0
      %v4974 = vpop.f32.mrf.mxu0
      %v4975 = vadd.f32 0.0, %v4974
      %v4976 = vpop.f32.mrf.mxu0
      %4977 = vmatprep.mubr.bf16.mxu0 0
      %4978 = vmatmul.mubr.bf16.gmra.mxu0 %v4919
      %v4979 = vpop.f32.mrf.mxu0
      %v4980 = vadd.f32 0.0, %v4979
      %v4981 = vpop.f32.mrf.mxu0
      %v4982 = vpop.f32.mrf.mxu0
      %v4983 = vadd.f32 0.0, %v4982
      %v4984 = vpop.f32.mrf.mxu0
      %4985 = vdwg.mxu0
      %v4986 = vadd.f32 %v4824, %v4956
      %v4987 = vadd.f32 %v4825, %v4959
      %v4988 = vadd.f32 %v4826, %v4964
      %v4989 = vadd.f32 %v4827, %v4967
      %v4990 = vadd.f32 %v4828, %v4972
      %v4991 = vadd.f32 %v4829, %v4975
      %v4992 = vadd.f32 %v4830, %v4980
      %v4993 = vadd.f32 %v4831, %v4983
      %v4994 = vld [vmem:[%s4] sm:$0x1]
      %v4996 = vlaneseq
      %v4997 = vshrl.u32 %v4996, 7
      %v4998 = vsub.s32 0, %v4997
      %v4999 = vrot.slane %v4994, %v4998
      %v5001 = vadd.f32 %v4986, %v4999
      %v5002 = vadd.f32 %v4987, %v4999
      %v5003 = vadd.f32 %v4988, %v4999
      %v5004 = vadd.f32 %v4989, %v4999
      %v5005 = vadd.f32 %v4990, %v4999
      %v5006 = vadd.f32 %v4991, %v4999
      %v5007 = vadd.f32 %v4992, %v4999
      %v5008 = vadd.f32 %v4993, %v4999
      %v5009 = vmax.f32 %v5001, 0.0
      %v5010 = vmax.f32 %v5002, 0.0
      %v5011 = vmax.f32 %v5003, 0.0
      %v5012 = vmax.f32 %v5004, 0.0
      %v5013 = vmax.f32 %v5005, 0.0
      %v5014 = vmax.f32 %v5006, 0.0
      %v5015 = vmax.f32 %v5007, 0.0
      %v5016 = vmax.f32 %v5008, 0.0
      %v5017 = vpack.c.bf16 %v5010, %v5009
      %v5018 = vpack.c.bf16 %v5012, %v5011
      %v5019 = vpack.c.bf16 %v5014, %v5013
      %v5020 = vpack.c.bf16 %v5016, %v5015
      %v5025 = vunpack.c.l.b16 %v5017
      %v5026 = vunpack.c.h.b16 %v5017
      %v5027 = vunpack.c.l.b16 %v5018
      %v5028 = vunpack.c.h.b16 %v5018
      %v5029 = vunpack.c.l.b16 %v5019
      %v5030 = vunpack.c.h.b16 %v5019
      %v5031 = vunpack.c.l.b16 %v5020
      %v5032 = vunpack.c.h.b16 %v5020
      %v5033 = vpack.c.b16 %v5025, %v5025
      %v5034 = vpack.c.b16 %v5026, %v5026
      %v5035 = vpack.c.b16 %v5027, %v5027
      %v5036 = vpack.c.b16 %v5028, %v5028
      %v5037 = vpack.c.b16 %v5029, %v5029
      %v5038 = vpack.c.b16 %v5030, %v5030
      %v5039 = vpack.c.b16 %v5031, %v5031
      %v5040 = vpack.c.b16 %v5032, %v5032
      %vm5049 = vcmask 125952
      %5050 = vst.msk [vmem:[%s342] sm:$0xf] %vm5049, %v5033
      %5051 = vst.msk [vmem:[%s342 + $0x4] sm:$0xf] %vm5049, %v5034
      %5052 = vst.msk [vmem:[%s342 + $0x8] sm:$0xf] %vm5049, %v5035
      %5053 = vst.msk [vmem:[%s342 + $0xc] sm:$0xf] %vm5049, %v5036
      %5054 = vst.msk [vmem:[%s342 + $0x10] sm:$0xf] %vm5049, %v5037
      %5055 = vst.msk [vmem:[%s342 + $0x14] sm:$0xf] %vm5049, %v5038
      %5056 = vst.msk [vmem:[%s342 + $0x18] sm:$0xf] %vm5049, %v5039
      %5057 = vst.msk [vmem:[%s342 + $0x1c] sm:$0xf] %vm5049, %v5040
      %p5058 = scmp.lt.s32.totalorder %s20, 1
      %s5059 = scalar_select %p5058, %s20, 1
      %p5060 = scmp.lt.s32.totalorder %s21, 3
      %s5061 = scalar_select %p5060, %s21, 3
      %s5062 = smul.addr %s5061, 8
      %s5063 = smul.addr %s5059, 32
      %s5064 = sadd.s32 %s5062, %s5063
      %s5065 = smul.addr %s5064, 4
      %s5066 = scalar_lea.vmem %s5, %s5065
      // Predicated region
      $region41: #{bottleneck_forward.4} parent=39 // pred_check
        %p5067 = pneg %p178
      $region42: #{bottleneck_forward.4} parent=39 // pred_check_branch
        %5069 = sbr.rel (%p5067) target = $region44
      $region43: #{bottleneck_forward.4} parent=39 // pred_region
        _
      $region44: #{bottleneck_forward.4} parent=39 // pred_fallthru
        _
    $region40: #{bottleneck_forward.4} parent=5 // pred_fallthru
      _
    %p5070 = scmp.le.s32.totalorder 2, %s11
    // Predicated region
    $region45: #{bottleneck_forward.4} parent=5 // pred_check
      %p5071 = pneg %p5070
    $region46: #{bottleneck_forward.4} parent=5 // pred_check_branch
      %5073 = sbr.rel (%p5071) target = $region48
    $region47: #{bottleneck_forward.4} parent=5 // pred_region
      %s5074 = ssub.s32 %s11, 2
      // Predicated region
      $region49: #{bottleneck_forward.4} parent=47 // pred_check
        %p5075 = pneg %p184
      $region50: #{bottleneck_forward.4} parent=47 // pred_check_branch
        %5077 = sbr.rel (%p5075) target = $region52
      $region51: #{bottleneck_forward.4} parent=47 // pred_region
        %p5078 = scmp.lt.s32.totalorder %s22, 1
        %s5079 = scalar_select %p5078, %s22, 1
        %p5080 = scmp.lt.s32.totalorder %s23, 3
        %s5081 = scalar_select %p5080, %s23, 3
        %s5082 = smul.addr %s5081, 8
        %s5083 = smul.addr %s5079, 32
        %s5084 = sadd.s32 %s5082, %s5083
        %s5085 = smul.addr %s5084, 4
        %s5086 = scalar_lea.vmem %s5, %s5085
      $region52: #{bottleneck_forward.4} parent=47 // pred_fallthru
        _
    $region48: #{bottleneck_forward.4} parent=5 // pred_fallthru
      _
  $region6: #{bottleneck_forward.4} parent=0 // loop_footer
    %s15 = sadd.s32 1, %s11
  $region7: #{bottleneck_forward.4} parent=0 // loop_footer_branch
    %10 = sbr.rel target = $region3
  $region8: #{bottleneck_forward.4} parent=0 // loop_exit
    _

</llo_original>
